<compile_context>
chip_gen: v7x
topology: tpu7x:2x2x1
jax: 0.10.0
libtpu: 0.0.40
codegen_flags: <defaults>
</compile_context>

<pallas_src>
import functools

import jax
import jax.numpy as jnp
from jax.experimental import pallas as pl
from jax.experimental.pallas import tpu as pltpu


def _se_basic_block_kernel(
    x_ref,       # (Bt, H, W*Cin)       f32   lane-dense input block
    w1_ref,      # (3, W*Cin, W*Cout)   bf16  conv1 block-Toeplitz weights (per dy)
    s1_ref,      # (1, W*Cout)          f32   BN1 scale, tiled over x
    b1_ref,      # (1, W*Cout)          f32   BN1 shift, tiled over x
    w2_ref,      # (3, W*Cout, W*Cout)  bf16  conv2 block-Toeplitz weights
    s2_ref,      # (1, W*Cout)          f32   BN2 scale, tiled over x
    b2_ref,      # (1, W*Cout)          f32   BN2 shift, tiled over x
    wse1_ref,    # (W*Cout, Cr)         f32   mean-pool * BN2-scale folded into SE fc1
    bse1_ref,    # (1, Cr)              f32   BN2-shift folded into SE fc1 bias
    wse2_ref,    # (Cr, W*Cout)         f32   SE fc2, tiled over x
    o_ref,       # (Bt, H, W*Cout)      f32   lane-dense output block
    pad_ref,     # scratch VMEM (Bt, H+2, W*Cout) bf16: row-halo padded activations
    *,
    Bt, H, W, C,
):
    f32 = jnp.float32
    bf16 = jnp.bfloat16
    L = W * C
    M = Bt * H

    # Zero ONLY the two halo rows (interior rows are fully overwritten below).
    # Re-done every grid step so the kernel stays correct when the "parallel"
    # batch axis is split across TensorCores.
    zrow = jnp.zeros((Bt, 1, L), bf16)
    pad_ref[:, 0:1, :] = zrow
    pad_ref[:, H + 1:H + 2, :] = zrow

    def conv3x3(w_ref):
        # 3x3 SAME conv as 3 row-level MXU matmuls against block-Toeplitz
        # weights: each LHS row is a whole padded image row (W*C lanes); the
        # dx taps and the zero column-padding are baked into the weights, so
        # no im2col gather / lane-splitting relayout is ever materialised.
        acc = None
        for dy in range(3):
            lhs = pad_ref[:, dy:dy + H, :].reshape(M, L)          # bf16
            t = jnp.dot(lhs, w_ref[dy], preferred_element_type=f32)
            acc = t if dy == 0 else acc + t
        return acc                                                # (M, W*C) f32

    # ---------------- conv1 -> BN1 -> ReLU (all lane-dense) -------------------
    pad_ref[:, 1:1 + H, :] = x_ref[...].astype(bf16)
    out1 = jnp.maximum(conv3x3(w1_ref) * s1_ref[...] + b1_ref[...], 0.0)

    # ---------------- conv2 (BN2 folded into the SE tail below) ---------------
    pad_ref[:, 1:1 + H, :] = out1.reshape(Bt, H, L).astype(bf16)
    acc2 = conv3x3(w2_ref)                                        # (M, W*C) f32

    # ---------------- SE: squeeze + excitation ---------------------------------
    # mean_{y,x}(acc2*s2 + b2) @ wse1 is folded into wse1_ref/bse1_ref in the
    # wrapper (linearity), so the squeeze is a sublane row-sum + a tiny matmul.
    row_sum = acc2.reshape(Bt, H, L).sum(axis=1)                  # (Bt, W*C)
    h = jnp.maximum(
        jnp.dot(row_sum, wse1_ref[...], preferred_element_type=f32)
        + bse1_ref[...], 0.0)                                     # (Bt, Cr)
    # fc2 is pre-tiled over x, so sigmoid() comes out already x-tiled and no
    # in-kernel (Bt, C) -> (Bt, W*C) lane broadcast is needed.
    se = jax.nn.sigmoid(jnp.dot(h, wse2_ref[...],
                                preferred_element_type=f32))      # (Bt, W*C)

    # ---------------- fused BN2*SE scale + shift + residual + ReLU ------------
    scale = (s2_ref[...] * se)[:, None, :]                        # (Bt, 1, W*C)
    shift = (b2_ref[...] * se)[:, None, :]
    out = jnp.maximum(acc2.reshape(Bt, H, L) * scale + shift + x_ref[...], 0.0)
    o_ref[...] = out.astype(o_ref.dtype)                          # unmasked 512-lane store


def _banded_conv_weight(w, W):
    """(3, 3, Cin, Cout) HWIO conv weights -> (3, W*Cin, W*Cout) block-Toeplitz.

    out[dy, xin*Cin + ci, xout*Cout + co] = w[dy, xin - xout + 1, ci, co] when
    that dx offset lies in [0, 3), else 0 — i.e. the dx taps and the SAME
    column zero-padding are baked into the weight, so the kernel's matmul LHS
    is just a whole (row-halo padded) image row.
    """
    _, _, Cin, Cout = w.shape
    blk = w.reshape(3, 3 * Cin, Cout)                              # (dy, dx*ci, co)
    rows = jnp.arange(W)[:, None] * Cin + jnp.arange(3 * Cin)[None, :]
    wb = jnp.zeros((3, W, (W + 2) * Cin, Cout), jnp.float32)
    wb = wb.at[:, jnp.arange(W)[:, None], rows, :].set(
        jnp.broadcast_to(blk[:, None], (3, W, 3 * Cin, Cout)))
    wb = wb.transpose(0, 2, 1, 3).reshape(3, (W + 2) * Cin, W * Cout)
    # Drop the left/right column halo (those LHS columns would be zero anyway).
    return wb[:, Cin:(W + 1) * Cin, :].astype(jnp.bfloat16)


def _default_batch_tile(B):
    # v5e / v6e: single TensorCore -> merge the whole batch into one grid step
    # (removes per-step overhead + exposed DMA prologue).  v7x: keep the batch
    # axis "parallel" with Bt = B/2 so both TensorCores get work.
    try:
        kind = jax.devices()[0].device_kind.lower()
        if ("v7" in kind or "7x" in kind) and B % 2 == 0:
            return max(1, B // 2)
    except Exception:
        pass
    return B


def se_basic_block(x_nhwc, params, *, bt=None):
    """x_nhwc: (B, H, W, Cin) float32. stride=1, downsample=None => Cin == Cout."""
    B, H, W, Cin = x_nhwc.shape
    Cout = params["w1"].shape[-1]
    Cr = params["wse1"].shape[-1]
    assert Cin == Cout, "residual path requires Cin == Cout (downsample=None)"
    # TODO(synk): stride>1 / downsample branch of SEBasicBlock not implemented
    # (reference configuration uses stride=1, downsample=None).

    if bt is None:
        bt = _default_batch_tile(B)
    assert B % bt == 0

    # Lane-dense activations: trailing dim = W*C (512) so every DMA / store is
    # full-lane and unmasked.
    x2d = x_nhwc.reshape(B, H, W * Cin)

    # Conv weights -> block-Toeplitz row-matmul form, bf16 (f32 MXU accumulate).
    w1b = _banded_conv_weight(params["w1"], W)                     # (3, W*Cin, W*Cout)
    w2b = _banded_conv_weight(params["w2"], W)                     # (3, W*Cout, W*Cout)

    # BN scale/shift pre-tiled over x so they broadcast over lane-dense rows.
    s1t = jnp.tile(params["s1"], (1, W))
    b1t = jnp.tile(params["b1"], (1, W))
    s2t = jnp.tile(params["s2"], (1, W))
    b2t = jnp.tile(params["b2"], (1, W))

    # SE squeeze folded: h = relu(row_sum @ wse1_f + bse1) with the 1/(H*W)
    # mean, the x-sum and the BN2 affine all folded into wse1_f / bse1.
    wse1_f = jnp.tile(params["s2"].reshape(Cout, 1) * params["wse1"] / (H * W),
                      (W, 1))                                      # (W*Cout, Cr)
    bse1 = params["b2"] @ params["wse1"]                           # (1, Cr)
    wse2_t = jnp.tile(params["wse2"], (1, W))                      # (Cr, W*Cout)

    kernel = functools.partial(_se_basic_block_kernel, Bt=bt, H=H, W=W, C=Cout)
    full = lambda shape: pl.BlockSpec(shape, lambda i: (0,) * len(shape))

    flops = 2 * 2 * B * H * W * (9 * Cin) * Cout                   # the two convs
    bytes_accessed = ((x2d.size + B * H * W * Cout) * 4
                      + (w1b.size + w2b.size) * 2
                      + (s1t.size + b1t.size + s2t.size + b2t.size
                         + wse1_f.size + bse1.size + wse2_t.size) * 4)

    out = pl.pallas_call(
        kernel,
        out_shape=jax.ShapeDtypeStruct((B, H, W * Cout), x_nhwc.dtype),
        grid_spec=pltpu.PrefetchScalarGridSpec(
            num_scalar_prefetch=0,
            grid=(B // bt,),
            in_specs=[
                pl.BlockSpec((bt, H, W * Cin), lambda i: (i, 0, 0)),
                full((3, W * Cin, W * Cout)),
                full((1, W * Cout)),
                full((1, W * Cout)),
                full((3, W * Cout, W * Cout)),
                full((1, W * Cout)),
                full((1, W * Cout)),
                full((W * Cout, Cr)),
                full((1, Cr)),
                full((Cr, W * Cout)),
            ],
            out_specs=pl.BlockSpec((bt, H, W * Cout), lambda i: (i, 0, 0)),
            scratch_shapes=[
                pltpu.VMEM((bt, H + 2, W * Cout), jnp.bfloat16),
            ],
        ),
        compiler_params=pltpu.CompilerParams(
            dimension_semantics=("parallel",),
        ),
        cost_estimate=pl.CostEstimate(
            flops=flops,
            transcendentals=B * W * Cout,
            bytes_accessed=bytes_accessed,
        ),
    )(x2d, w1b, s1t, b1t, w2b, s2t, b2t, wse1_f, bse1, wse2_t)

    return out.reshape(B, H, W, Cout)


def ref_forward(x_nhwc, params):
    """Plain-JAX reference of the same forward pass (NHWC, f32 everywhere)."""
    conv = lambda x, w: jax.lax.conv_general_dilated(
        x, w, window_strides=(1, 1), padding="SAME",
        dimension_numbers=("NHWC", "HWIO", "NHWC"),
    )
    out = conv(x_nhwc, params["w1"]) * params["s1"] + params["b1"]
    out = jnp.maximum(out, 0.0)
    out = conv(out, params["w2"]) * params["s2"] + params["b2"]
    y = out.mean(axis=(1, 2))                                      # (B, C)
    y = jnp.maximum(y @ params["wse1"], 0.0)
    y = jax.nn.sigmoid(y @ params["wse2"])
    out = out * y[:, None, None, :]
    out = out + x_nhwc
    return jnp.maximum(out, 0.0)


def make_params(key, inplanes, planes, r=16):
    eps = 1e-5
    ks = jax.random.split(key, 12)
    cr = max(planes // r, 1)

    def bn(kg, kb, km, kv, c):
        gamma = jax.random.uniform(kg, (c,), jnp.float32, 0.5, 1.5)
        beta = 0.1 * jax.random.normal(kb, (c,), jnp.float32)
        mean = 0.1 * jax.random.normal(km, (c,), jnp.float32)
        var = jax.random.uniform(kv, (c,), jnp.float32, 0.5, 1.5)
        scale = gamma / jnp.sqrt(var + eps)
        shift = beta - mean * scale
        return scale.reshape(1, c), shift.reshape(1, c)

    s1, b1 = bn(ks[0], ks[1], ks[2], ks[3], planes)
    s2, b2 = bn(ks[4], ks[5], ks[6], ks[7], planes)
    return dict(
        w1=0.1 * jax.random.normal(ks[8], (3, 3, inplanes, planes), jnp.float32),
        w2=0.1 * jax.random.normal(ks[9], (3, 3, planes, planes), jnp.float32),
        s1=s1, b1=b1, s2=s2, b2=b2,
        wse1=0.2 * jax.random.normal(ks[10], (planes, cr), jnp.float32),
        wse2=0.2 * jax.random.normal(ks[11], (cr, planes), jnp.float32),
    )


if __name__ == "__main__":
    # SEBasicBlock(inplanes=32, planes=32, stride=1, downsample=None, r=16)
    B, C, H, W = 2, 32, 16, 16
    key = jax.random.PRNGKey(0)
    kx, kp = jax.random.split(key)

    x_nchw = jax.random.normal(kx, (B, C, H, W), jnp.float32)      # PyTorch layout
    x_nhwc = jnp.transpose(x_nchw, (0, 2, 3, 1))                   # kernel layout
    params = make_params(kp, inplanes=C, planes=C, r=16)

    out = jax.block_until_ready(se_basic_block(x_nhwc, params))
    ref = jax.block_until_ready(ref_forward(x_nhwc, params))

    assert out.shape == (B, H, W, C)
    # bf16 MXU path: compare against the f32 reference with a looser tolerance.
    assert jnp.allclose(out, ref, rtol=3e-2, atol=1e-1), (
        float(jnp.max(jnp.abs(out - ref)))
    )
    print("KERNEL_OK")
</pallas_src>

<mosaic_0001>
module attributes {stable_mosaic.version = 11 : i64} {
  func.func @_se_basic_block_kernel(%arg0: i32, %arg1: memref<2x16x512xf32, #tpu.memory_space<vmem>>, %arg2: memref<3x512x512xbf16, #tpu.memory_space<vmem>>, %arg3: memref<1x512xf32, #tpu.memory_space<vmem>>, %arg4: memref<1x512xf32, #tpu.memory_space<vmem>>, %arg5: memref<3x512x512xbf16, #tpu.memory_space<vmem>>, %arg6: memref<1x512xf32, #tpu.memory_space<vmem>>, %arg7: memref<1x512xf32, #tpu.memory_space<vmem>>, %arg8: memref<512x2xf32, #tpu.memory_space<vmem>>, %arg9: memref<1x2xf32, #tpu.memory_space<vmem>>, %arg10: memref<2x512xf32, #tpu.memory_space<vmem>>, %arg11: memref<2x16x512xf32, #tpu.memory_space<vmem>>, %arg12: memref<2x18x512xbf16, #tpu.memory_space<vmem>>) attributes {dimension_semantics = [#tpu.dimension_semantics<parallel>], iteration_bounds = array<i64: 1>, scalar_prefetch = 0 : i64, scratch_operands = 1 : i64, tpu.core_type = #tpu.core_type<tc>, window_params = [{transform_indices = @transform_0, window_bounds = array<i64: 2, 16, 512>}, {pipeline_mode = #tpu.pipeline_mode<synchronous>, transform_indices = @transform_1, window_bounds = array<i64: 3, 512, 512>}, {pipeline_mode = #tpu.pipeline_mode<synchronous>, transform_indices = @transform_2, window_bounds = array<i64: 1, 512>}, {pipeline_mode = #tpu.pipeline_mode<synchronous>, transform_indices = @transform_3, window_bounds = array<i64: 1, 512>}, {pipeline_mode = #tpu.pipeline_mode<synchronous>, transform_indices = @transform_4, window_bounds = array<i64: 3, 512, 512>}, {pipeline_mode = #tpu.pipeline_mode<synchronous>, transform_indices = @transform_5, window_bounds = array<i64: 1, 512>}, {pipeline_mode = #tpu.pipeline_mode<synchronous>, transform_indices = @transform_6, window_bounds = array<i64: 1, 512>}, {pipeline_mode = #tpu.pipeline_mode<synchronous>, transform_indices = @transform_7, window_bounds = array<i64: 512, 2>}, {pipeline_mode = #tpu.pipeline_mode<synchronous>, transform_indices = @transform_8, window_bounds = array<i64: 1, 2>}, {pipeline_mode = #tpu.pipeline_mode<synchronous>, transform_indices = @transform_9, window_bounds = array<i64: 2, 512>}, {transform_indices = @transform_10, window_bounds = array<i64: 2, 16, 512>}]} {
    %cst = arith.constant 0.000000e+00 : bf16
    %0 = vector.broadcast %cst : bf16 to vector<2x1x512xbf16>
    %c0 = arith.constant 0 : index
    %c0_0 = arith.constant 0 : index
    %c0_1 = arith.constant 0 : index
    %1 = vector.load %arg12[%c0, %c0_0, %c0_1] : memref<2x18x512xbf16, #tpu.memory_space<vmem>>, vector<2x1x512xbf16>
    tpu.vector_store %arg12[%c0, %c0_0, %c0_1], %0 {strides = array<i32>} : memref<2x18x512xbf16, #tpu.memory_space<vmem>>, vector<2x1x512xbf16>,
    %c0_2 = arith.constant 0 : index
    %c17 = arith.constant 17 : index
    %c0_3 = arith.constant 0 : index
    %2 = vector.load %arg12[%c0_2, %c17, %c0_3] : memref<2x18x512xbf16, #tpu.memory_space<vmem>>, vector<2x1x512xbf16>
    tpu.vector_store %arg12[%c0_2, %c17, %c0_3], %0 {strides = array<i32>} : memref<2x18x512xbf16, #tpu.memory_space<vmem>>, vector<2x1x512xbf16>,
    %c0_4 = arith.constant 0 : index
    %c0_5 = arith.constant 0 : index
    %c0_6 = arith.constant 0 : index
    %3 = vector.load %arg1[%c0_4, %c0_5, %c0_6] : memref<2x16x512xf32, #tpu.memory_space<vmem>>, vector<2x16x512xf32>
    %4 = arith.truncf %3 : vector<2x16x512xf32> to vector<2x16x512xbf16>
    %c0_7 = arith.constant 0 : index
    %c1 = arith.constant 1 : index
    %c0_8 = arith.constant 0 : index
    %5 = vector.load %arg12[%c0_7, %c1, %c0_8] : memref<2x18x512xbf16, #tpu.memory_space<vmem>>, vector<2x16x512xbf16>
    tpu.vector_store %arg12[%c0_7, %c1, %c0_8], %4 {strides = array<i32>} : memref<2x18x512xbf16, #tpu.memory_space<vmem>>, vector<2x16x512xbf16>,
    %c0_9 = arith.constant 0 : index
    %c0_10 = arith.constant 0 : index
    %c0_11 = arith.constant 0 : index
    %6 = vector.load %arg12[%c0_9, %c0_10, %c0_11] : memref<2x18x512xbf16, #tpu.memory_space<vmem>>, vector<2x16x512xbf16>
    %7 = vector.shape_cast %6 : vector<2x16x512xbf16> to vector<32x512xbf16>
    %c0_12 = arith.constant 0 : index
    %c0_13 = arith.constant 0 : index
    %c0_14 = arith.constant 0 : index
    %8 = vector.load %arg2[%c0_12, %c0_13, %c0_14] : memref<3x512x512xbf16, #tpu.memory_space<vmem>>, vector<1x512x512xbf16>
    %9 = vector.shape_cast %8 : vector<1x512x512xbf16> to vector<512x512xbf16>
    %cst_15 = arith.constant dense<0.000000e+00> : vector<32x512xf32>
    %10 = tpu.matmul %7, %9, %cst_15 {dimension_numbers = #tpu.dot_dimension_numbers<[1], [0], [0], [1], [0, 0, 1, 1], [], []>} : vector<32x512xbf16>, vector<512x512xbf16>, vector<32x512xf32> -> vector<32x512xf32>
    %c0_16 = arith.constant 0 : index
    %c1_17 = arith.constant 1 : index
    %c0_18 = arith.constant 0 : index
    %11 = vector.load %arg12[%c0_16, %c1_17, %c0_18] : memref<2x18x512xbf16, #tpu.memory_space<vmem>>, vector<2x16x512xbf16>
    %12 = vector.shape_cast %11 : vector<2x16x512xbf16> to vector<32x512xbf16>
    %c1_19 = arith.constant 1 : index
    %c0_20 = arith.constant 0 : index
    %c0_21 = arith.constant 0 : index
    %13 = vector.load %arg2[%c1_19, %c0_20, %c0_21] : memref<3x512x512xbf16, #tpu.memory_space<vmem>>, vector<1x512x512xbf16>
    %14 = vector.shape_cast %13 : vector<1x512x512xbf16> to vector<512x512xbf16>
    %cst_22 = arith.constant dense<0.000000e+00> : vector<32x512xf32>
    %15 = tpu.matmul %12, %14, %cst_22 {dimension_numbers = #tpu.dot_dimension_numbers<[1], [0], [0], [1], [0, 0, 1, 1], [], []>} : vector<32x512xbf16>, vector<512x512xbf16>, vector<32x512xf32> -> vector<32x512xf32>
    %16 = arith.addf %10, %15 : vector<32x512xf32>
    %c0_23 = arith.constant 0 : index
    %c2 = arith.constant 2 : index
    %c0_24 = arith.constant 0 : index
    %17 = vector.load %arg12[%c0_23, %c2, %c0_24] : memref<2x18x512xbf16, #tpu.memory_space<vmem>>, vector<2x16x512xbf16>
    %18 = vector.shape_cast %17 : vector<2x16x512xbf16> to vector<32x512xbf16>
    %c2_25 = arith.constant 2 : index
    %c0_26 = arith.constant 0 : index
    %c0_27 = arith.constant 0 : index
    %19 = vector.load %arg2[%c2_25, %c0_26, %c0_27] : memref<3x512x512xbf16, #tpu.memory_space<vmem>>, vector<1x512x512xbf16>
    %20 = vector.shape_cast %19 : vector<1x512x512xbf16> to vector<512x512xbf16>
    %cst_28 = arith.constant dense<0.000000e+00> : vector<32x512xf32>
    %21 = tpu.matmul %18, %20, %cst_28 {dimension_numbers = #tpu.dot_dimension_numbers<[1], [0], [0], [1], [0, 0, 1, 1], [], []>} : vector<32x512xbf16>, vector<512x512xbf16>, vector<32x512xf32> -> vector<32x512xf32>
    %22 = arith.addf %16, %21 : vector<32x512xf32>
    %c0_29 = arith.constant 0 : index
    %c0_30 = arith.constant 0 : index
    %23 = vector.load %arg3[%c0_29, %c0_30] : memref<1x512xf32, #tpu.memory_space<vmem>>, vector<1x512xf32>
    %24 = vector.broadcast %23 : vector<1x512xf32> to vector<32x512xf32>
    %25 = arith.mulf %22, %24 : vector<32x512xf32>
    %c0_31 = arith.constant 0 : index
    %c0_32 = arith.constant 0 : index
    %26 = vector.load %arg4[%c0_31, %c0_32] : memref<1x512xf32, #tpu.memory_space<vmem>>, vector<1x512xf32>
    %27 = vector.broadcast %26 : vector<1x512xf32> to vector<32x512xf32>
    %28 = arith.addf %25, %27 : vector<32x512xf32>
    %cst_33 = arith.constant 0.000000e+00 : f32
    %29 = vector.broadcast %cst_33 : f32 to vector<32x512xf32>
    %30 = arith.maximumf %28, %29 : vector<32x512xf32>
    %31 = vector.shape_cast %30 : vector<32x512xf32> to vector<2x16x512xf32>
    %32 = arith.truncf %31 : vector<2x16x512xf32> to vector<2x16x512xbf16>
    %c0_34 = arith.constant 0 : index
    %c1_35 = arith.constant 1 : index
    %c0_36 = arith.constant 0 : index
    %33 = vector.load %arg12[%c0_34, %c1_35, %c0_36] : memref<2x18x512xbf16, #tpu.memory_space<vmem>>, vector<2x16x512xbf16>
    tpu.vector_store %arg12[%c0_34, %c1_35, %c0_36], %32 {strides = array<i32>} : memref<2x18x512xbf16, #tpu.memory_space<vmem>>, vector<2x16x512xbf16>,
    %c0_37 = arith.constant 0 : index
    %c0_38 = arith.constant 0 : index
    %c0_39 = arith.constant 0 : index
    %34 = vector.load %arg12[%c0_37, %c0_38, %c0_39] : memref<2x18x512xbf16, #tpu.memory_space<vmem>>, vector<2x16x512xbf16>
    %35 = vector.shape_cast %34 : vector<2x16x512xbf16> to vector<32x512xbf16>
    %c0_40 = arith.constant 0 : index
    %c0_41 = arith.constant 0 : index
    %c0_42 = arith.constant 0 : index
    %36 = vector.load %arg5[%c0_40, %c0_41, %c0_42] : memref<3x512x512xbf16, #tpu.memory_space<vmem>>, vector<1x512x512xbf16>
    %37 = vector.shape_cast %36 : vector<1x512x512xbf16> to vector<512x512xbf16>
    %cst_43 = arith.constant dense<0.000000e+00> : vector<32x512xf32>
    %38 = tpu.matmul %35, %37, %cst_43 {dimension_numbers = #tpu.dot_dimension_numbers<[1], [0], [0], [1], [0, 0, 1, 1], [], []>} : vector<32x512xbf16>, vector<512x512xbf16>, vector<32x512xf32> -> vector<32x512xf32>
    %c0_44 = arith.constant 0 : index
    %c1_45 = arith.constant 1 : index
    %c0_46 = arith.constant 0 : index
    %39 = vector.load %arg12[%c0_44, %c1_45, %c0_46] : memref<2x18x512xbf16, #tpu.memory_space<vmem>>, vector<2x16x512xbf16>
    %40 = vector.shape_cast %39 : vector<2x16x512xbf16> to vector<32x512xbf16>
    %c1_47 = arith.constant 1 : index
    %c0_48 = arith.constant 0 : index
    %c0_49 = arith.constant 0 : index
    %41 = vector.load %arg5[%c1_47, %c0_48, %c0_49] : memref<3x512x512xbf16, #tpu.memory_space<vmem>>, vector<1x512x512xbf16>
    %42 = vector.shape_cast %41 : vector<1x512x512xbf16> to vector<512x512xbf16>
    %cst_50 = arith.constant dense<0.000000e+00> : vector<32x512xf32>
    %43 = tpu.matmul %40, %42, %cst_50 {dimension_numbers = #tpu.dot_dimension_numbers<[1], [0], [0], [1], [0, 0, 1, 1], [], []>} : vector<32x512xbf16>, vector<512x512xbf16>, vector<32x512xf32> -> vector<32x512xf32>
    %44 = arith.addf %38, %43 : vector<32x512xf32>
    %c0_51 = arith.constant 0 : index
    %c2_52 = arith.constant 2 : index
    %c0_53 = arith.constant 0 : index
    %45 = vector.load %arg12[%c0_51, %c2_52, %c0_53] : memref<2x18x512xbf16, #tpu.memory_space<vmem>>, vector<2x16x512xbf16>
    %46 = vector.shape_cast %45 : vector<2x16x512xbf16> to vector<32x512xbf16>
    %c2_54 = arith.constant 2 : index
    %c0_55 = arith.constant 0 : index
    %c0_56 = arith.constant 0 : index
    %47 = vector.load %arg5[%c2_54, %c0_55, %c0_56] : memref<3x512x512xbf16, #tpu.memory_space<vmem>>, vector<1x512x512xbf16>
    %48 = vector.shape_cast %47 : vector<1x512x512xbf16> to vector<512x512xbf16>
    %cst_57 = arith.constant dense<0.000000e+00> : vector<32x512xf32>
    %49 = tpu.matmul %46, %48, %cst_57 {dimension_numbers = #tpu.dot_dimension_numbers<[1], [0], [0], [1], [0, 0, 1, 1], [], []>} : vector<32x512xbf16>, vector<512x512xbf16>, vector<32x512xf32> -> vector<32x512xf32>
    %50 = arith.addf %44, %49 : vector<32x512xf32>
    %51 = vector.shape_cast %50 : vector<32x512xf32> to vector<2x16x512xf32>
    %cst_58 = arith.constant dense<0.000000e+00> : vector<2x512xf32>
    %52 = vector.multi_reduction <add>, %51, %cst_58 [1] : vector<2x16x512xf32> to vector<2x512xf32>
    %c0_59 = arith.constant 0 : index
    %c0_60 = arith.constant 0 : index
    %53 = vector.load %arg8[%c0_59, %c0_60] : memref<512x2xf32, #tpu.memory_space<vmem>>, vector<512x2xf32>
    %cst_61 = arith.constant dense<0.000000e+00> : vector<2x2xf32>
    %54 = tpu.matmul %52, %53, %cst_61 {dimension_numbers = #tpu.dot_dimension_numbers<[1], [0], [0], [1], [0, 0, 1, 1], [], []>} : vector<2x512xf32>, vector<512x2xf32>, vector<2x2xf32> -> vector<2x2xf32>
    %c0_62 = arith.constant 0 : index
    %c0_63 = arith.constant 0 : index
    %55 = vector.load %arg9[%c0_62, %c0_63] : memref<1x2xf32, #tpu.memory_space<vmem>>, vector<1x2xf32>
    %56 = vector.broadcast %55 : vector<1x2xf32> to vector<2x2xf32>
    %57 = arith.addf %54, %56 : vector<2x2xf32>
    %cst_64 = arith.constant 0.000000e+00 : f32
    %58 = vector.broadcast %cst_64 : f32 to vector<2x2xf32>
    %59 = arith.maximumf %57, %58 : vector<2x2xf32>
    %c0_65 = arith.constant 0 : index
    %c0_66 = arith.constant 0 : index
    %60 = vector.load %arg10[%c0_65, %c0_66] : memref<2x512xf32, #tpu.memory_space<vmem>>, vector<2x512xf32>
    %cst_67 = arith.constant dense<0.000000e+00> : vector<2x512xf32>
    %61 = tpu.matmul %59, %60, %cst_67 {dimension_numbers = #tpu.dot_dimension_numbers<[1], [0], [0], [1], [0, 0, 1, 1], [], []>} : vector<2x2xf32>, vector<2x512xf32>, vector<2x512xf32> -> vector<2x512xf32>
    %62 = arith.negf %61 : vector<2x512xf32>
    %63 = math.exp %62 : vector<2x512xf32>
    %cst_68 = arith.constant 1.000000e+00 : f32
    %64 = vector.broadcast %cst_68 : f32 to vector<2x512xf32>
    %65 = arith.addf %64, %63 : vector<2x512xf32>
    %66 = arith.divf %64, %65 : vector<2x512xf32>
    %c0_69 = arith.constant 0 : index
    %c0_70 = arith.constant 0 : index
    %67 = vector.load %arg6[%c0_69, %c0_70] : memref<1x512xf32, #tpu.memory_space<vmem>>, vector<1x512xf32>
    %68 = vector.broadcast %67 : vector<1x512xf32> to vector<2x512xf32>
    %69 = arith.mulf %68, %66 : vector<2x512xf32>
    %70 = vector.shape_cast %69 : vector<2x512xf32> to vector<2x1x512xf32>
    %c0_71 = arith.constant 0 : index
    %c0_72 = arith.constant 0 : index
    %71 = vector.load %arg7[%c0_71, %c0_72] : memref<1x512xf32, #tpu.memory_space<vmem>>, vector<1x512xf32>
    %72 = vector.broadcast %71 : vector<1x512xf32> to vector<2x512xf32>
    %73 = arith.mulf %72, %66 : vector<2x512xf32>
    %74 = vector.shape_cast %73 : vector<2x512xf32> to vector<2x1x512xf32>
    %75 = vector.shape_cast %50 : vector<32x512xf32> to vector<2x16x512xf32>
    %76 = vector.broadcast %70 : vector<2x1x512xf32> to vector<2x16x512xf32>
    %77 = arith.mulf %75, %76 : vector<2x16x512xf32>
    %78 = vector.broadcast %74 : vector<2x1x512xf32> to vector<2x16x512xf32>
    %79 = arith.addf %77, %78 : vector<2x16x512xf32>
    %c0_73 = arith.constant 0 : index
    %c0_74 = arith.constant 0 : index
    %c0_75 = arith.constant 0 : index
    %80 = vector.load %arg1[%c0_73, %c0_74, %c0_75] : memref<2x16x512xf32, #tpu.memory_space<vmem>>, vector<2x16x512xf32>
    %81 = arith.addf %79, %80 : vector<2x16x512xf32>
    %cst_76 = arith.constant 0.000000e+00 : f32
    %82 = vector.broadcast %cst_76 : f32 to vector<2x16x512xf32>
    %83 = arith.maximumf %81, %82 : vector<2x16x512xf32>
    %c0_77 = arith.constant 0 : index
    %c0_78 = arith.constant 0 : index
    %c0_79 = arith.constant 0 : index
    %84 = vector.load %arg11[%c0_77, %c0_78, %c0_79] : memref<2x16x512xf32, #tpu.memory_space<vmem>>, vector<2x16x512xf32>
    tpu.vector_store %arg11[%c0_77, %c0_78, %c0_79], %83 {strides = array<i32>} : memref<2x16x512xf32, #tpu.memory_space<vmem>>, vector<2x16x512xf32>,
    return
  }
  func.func @transform_0(%arg0: i32) -> (i32, i32, i32) {
    %c0_i32 = arith.constant 0 : i32
    %c0_i32_0 = arith.constant 0 : i32
    %c0_i32_1 = arith.constant 0 : i32
    return %arg0, %c0_i32, %c0_i32_0 : i32, i32, i32
  }
  func.func @transform_1(%arg0: i32) -> (i32, i32, i32) {
    %c0_i32 = arith.constant 0 : i32
    %c0_i32_0 = arith.constant 0 : i32
    %c0_i32_1 = arith.constant 0 : i32
    %c0_i32_2 = arith.constant 0 : i32
    return %c0_i32, %c0_i32_0, %c0_i32_1 : i32, i32, i32
  }
  func.func @transform_2(%arg0: i32) -> (i32, i32) {
    %c0_i32 = arith.constant 0 : i32
    %c0_i32_0 = arith.constant 0 : i32
    %c0_i32_1 = arith.constant 0 : i32
    return %c0_i32, %c0_i32_0 : i32, i32
  }
  func.func @transform_3(%arg0: i32) -> (i32, i32) {
    %c0_i32 = arith.constant 0 : i32
    %c0_i32_0 = arith.constant 0 : i32
    %c0_i32_1 = arith.constant 0 : i32
    return %c0_i32, %c0_i32_0 : i32, i32
  }
  func.func @transform_4(%arg0: i32) -> (i32, i32, i32) {
    %c0_i32 = arith.constant 0 : i32
    %c0_i32_0 = arith.constant 0 : i32
    %c0_i32_1 = arith.constant 0 : i32
    %c0_i32_2 = arith.constant 0 : i32
    return %c0_i32, %c0_i32_0, %c0_i32_1 : i32, i32, i32
  }
  func.func @transform_5(%arg0: i32) -> (i32, i32) {
    %c0_i32 = arith.constant 0 : i32
    %c0_i32_0 = arith.constant 0 : i32
    %c0_i32_1 = arith.constant 0 : i32
    return %c0_i32, %c0_i32_0 : i32, i32
  }
  func.func @transform_6(%arg0: i32) -> (i32, i32) {
    %c0_i32 = arith.constant 0 : i32
    %c0_i32_0 = arith.constant 0 : i32
    %c0_i32_1 = arith.constant 0 : i32
    return %c0_i32, %c0_i32_0 : i32, i32
  }
  func.func @transform_7(%arg0: i32) -> (i32, i32) {
    %c0_i32 = arith.constant 0 : i32
    %c0_i32_0 = arith.constant 0 : i32
    %c0_i32_1 = arith.constant 0 : i32
    return %c0_i32, %c0_i32_0 : i32, i32
  }
  func.func @transform_8(%arg0: i32) -> (i32, i32) {
    %c0_i32 = arith.constant 0 : i32
    %c0_i32_0 = arith.constant 0 : i32
    %c0_i32_1 = arith.constant 0 : i32
    return %c0_i32, %c0_i32_0 : i32, i32
  }
  func.func @transform_9(%arg0: i32) -> (i32, i32) {
    %c0_i32 = arith.constant 0 : i32
    %c0_i32_0 = arith.constant 0 : i32
    %c0_i32_1 = arith.constant 0 : i32
    return %c0_i32, %c0_i32_0 : i32, i32
  }
  func.func @transform_10(%arg0: i32) -> (i32, i32, i32) {
    %c0_i32 = arith.constant 0 : i32
    %c0_i32_0 = arith.constant 0 : i32
    %c0_i32_1 = arith.constant 0 : i32
    return %arg0, %c0_i32, %c0_i32_0 : i32, i32, i32
  }
}

</mosaic_0001>

<llo_original>
// kernel: tpu_custom_call.1
$region0: #{tpu_custom_call.1}
  #allocation0 [shape = 'u32[]', space=smem, size = 0x4, offset = 0x4, fixed_abs, tag = 'smem constant byte address 0x4 - core index']
  #allocation1 [shape = 'u32[144,128]{1,0:T(1,128)}', space=vmem, size = 0x12000, scoped, tag = 'internal scratch']
  #allocation2 [shape = 'bf16[2,18,512]{2,1,0:T(8,128)(2,1)}', space=vmem, size = 0xc000, scoped, tag = 'scratch operand']
  %s0 = inlined_call_operand.hbm [shape: f32[2,16,512], index: 0, kind: input, shape index: {}]
  %s1 = inlined_call_operand.hbm [shape: bf16[3,512,512], index: 1, kind: input, shape index: {}]
  %s2 = inlined_call_operand.hbm [shape: f32[1,512], index: 2, kind: input, shape index: {}]
  %s3 = inlined_call_operand.hbm [shape: f32[1,512], index: 3, kind: input, shape index: {}]
  %s4 = inlined_call_operand.hbm [shape: bf16[3,512,512], index: 4, kind: input, shape index: {}]
  %s5 = inlined_call_operand.hbm [shape: f32[1,512], index: 5, kind: input, shape index: {}]
  %s6 = inlined_call_operand.hbm [shape: f32[1,512], index: 6, kind: input, shape index: {}]
  %s7 = inlined_call_operand.vmem [shape: f32[512,2], index: 7, kind: input, shape index: {}]
  %s8 = inlined_call_operand.hbm [shape: f32[1,2], index: 8, kind: input, shape index: {}]
  %s9 = inlined_call_operand.hbm [shape: f32[2,512], index: 9, kind: input, shape index: {}]
  %s10 = inlined_call_operand.hbm [shape: f32[2,16,512], index: 10, kind: output, shape index: {}]
  %s11 = sld [smem:[#allocation0]]
  $region86: #{tpu_custom_call.1} parent=0
    _
  %s13 = ssub.s32 1, %s11
  %s14 = scalar_select 0, %s13, %s11
  $region1: #{tpu_custom_call.1} parent=0
    #allocation3 [shape = 'u8[65536]{0}', space=vmem, size = 0x10000, scoped, tag = 'input window, operand 0, single buffered']
    #allocation4 [shape = 's32[1]{0}', space=sflag, size = 0x4, scoped, tag = 'scoped memory for tpu_custom_call.1']
    #allocation5 [shape = 's32[1]{0}', space=sflag, size = 0x4, scoped, tag = 'scoped memory for tpu_custom_call.1']
    #allocation6 [shape = 'u8[1572864]{0}', space=vmem, size = 0x180000, scoped, tag = 'input window, operand 1, single buffered']
    #allocation7 [shape = 's32[1]{0}', space=sflag, size = 0x4, scoped, tag = 'scoped memory for tpu_custom_call.1']
    #allocation8 [shape = 'u8[2048]{0}', space=vmem, size = 0x800, scoped, tag = 'input window, operand 2, single buffered']
    #allocation9 [shape = 'u8[2048]{0}', space=vmem, size = 0x800, scoped, tag = 'input window, operand 3, single buffered']
    #allocation10 [shape = 's32[1]{0}', space=sflag, size = 0x4, scoped, tag = 'scoped memory for tpu_custom_call.1']
    #allocation11 [shape = 'u8[1572864]{0}', space=vmem, size = 0x180000, scoped, tag = 'input window, operand 4, single buffered']
    #allocation12 [shape = 'u8[2048]{0}', space=vmem, size = 0x800, scoped, tag = 'input window, operand 5, single buffered']
    #allocation13 [shape = 's32[1]{0}', space=sflag, size = 0x4, scoped, tag = 'scoped memory for tpu_custom_call.1']
    #allocation14 [shape = 'u8[2048]{0}', space=vmem, size = 0x800, scoped, tag = 'input window, operand 6, single buffered']
    #allocation15 [shape = 'u8[512]{0}', space=vmem, size = 0x400, scoped, tag = 'input window, operand 8, single buffered']
    #allocation16 [shape = 's32[1]{0}', space=sflag, size = 0x4, scoped, tag = 'scoped memory for tpu_custom_call.1']
    #allocation17 [shape = 'u8[4096]{0}', space=vmem, size = 0x1000, scoped, tag = 'input window, operand 9, single buffered']
    #allocation18 [shape = 'u8[65536]{0}', space=vmem, size = 0x10000, scoped, tag = 'output window, operand 0, single buffered']
    %15 = vsyncpa [#allocation4], 0
    %16 = vsyncpa [#allocation7], 0
    %17 = vsyncpa [#allocation10], 0
    %18 = vsyncpa [#allocation13], 0
    %19 = vsyncpa [#allocation16], 0
    %20 = vsyncpa [#allocation5], 0
    // Predicated region
    $region2: #{tpu_custom_call.1} parent=1 // pred_check
      _
    $region3: #{tpu_custom_call.1} parent=1 // pred_check_branch
      %22 = sbr.rel (0) target = $region5
    $region4: #{tpu_custom_call.1} parent=1 // pred_region
      %s24 = ssub.s32 2048, 2048
      %25 = vsyncadd [#allocation4], %s24
      %s26 = sshll.u32 [#allocation3], 4
      %s27 = int_to_ptr.vmem [resolvable:$true] %s26
      %32 = dma.hbm_to_vmem [thread:$0]  %s0, 2048, %s27, [#allocation4], 512, 512, 32
    $region5: #{tpu_custom_call.1} parent=1 // pred_fallthru
      _
    // Predicated region
    $region6: #{tpu_custom_call.1} parent=1 // pred_check
      _
    $region7: #{tpu_custom_call.1} parent=1 // pred_check_branch
      %34 = sbr.rel (0) target = $region9
    $region8: #{tpu_custom_call.1} parent=1 // pred_region
      %s36 = ssub.s32 49152, 49152
      %37 = vsyncadd [#allocation7], %s36
      %s38 = sshll.u32 [#allocation6], 4
      %s39 = int_to_ptr.vmem [resolvable:$true] %s38
      %44 = dma.hbm_to_vmem [thread:$0]  %s1, 49152, %s39, [#allocation7], 256, 256, 16
    $region9: #{tpu_custom_call.1} parent=1 // pred_fallthru
      _
    // Predicated region
    $region10: #{tpu_custom_call.1} parent=1 // pred_check
      _
    $region11: #{tpu_custom_call.1} parent=1 // pred_check_branch
      %46 = sbr.rel (0) target = $region13
    $region12: #{tpu_custom_call.1} parent=1 // pred_region
      %s48 = ssub.s32 64, 64
      %49 = vsyncadd [#allocation7], %s48
      %s51 = sshll.u32 [#allocation8], 4
      %s52 = int_to_ptr.vmem [resolvable:$true] %s51
      %54 = dma.hbm_to_vmem [thread:$0]  %s2, 64, %s52, [#allocation7]
    $region13: #{tpu_custom_call.1} parent=1 // pred_fallthru
      _
    // Predicated region
    $region14: #{tpu_custom_call.1} parent=1 // pred_check
      _
    $region15: #{tpu_custom_call.1} parent=1 // pred_check_branch
      %56 = sbr.rel (0) target = $region17
    $region16: #{tpu_custom_call.1} parent=1 // pred_region
      %s58 = ssub.s32 64, 64
      %59 = vsyncadd [#allocation10], %s58
      %s61 = sshll.u32 [#allocation9], 4
      %s62 = int_to_ptr.vmem [resolvable:$true] %s61
      %64 = dma.hbm_to_vmem [thread:$0]  %s3, 64, %s62, [#allocation10]
    $region17: #{tpu_custom_call.1} parent=1 // pred_fallthru
      _
    // Predicated region
    $region18: #{tpu_custom_call.1} parent=1 // pred_check
      _
    $region19: #{tpu_custom_call.1} parent=1 // pred_check_branch
      %66 = sbr.rel (0) target = $region21
    $region20: #{tpu_custom_call.1} parent=1 // pred_region
      %s68 = ssub.s32 49152, 49152
      %69 = vsyncadd [#allocation10], %s68
      %s70 = sshll.u32 [#allocation11], 4
      %s71 = int_to_ptr.vmem [resolvable:$true] %s70
      %76 = dma.hbm_to_vmem [thread:$0]  %s4, 49152, %s71, [#allocation10], 256, 256, 16
    $region21: #{tpu_custom_call.1} parent=1 // pred_fallthru
      _
    // Predicated region
    $region22: #{tpu_custom_call.1} parent=1 // pred_check
      _
    $region23: #{tpu_custom_call.1} parent=1 // pred_check_branch
      %78 = sbr.rel (0) target = $region25
    $region24: #{tpu_custom_call.1} parent=1 // pred_region
      %s80 = ssub.s32 64, 64
      %81 = vsyncadd [#allocation13], %s80
      %s83 = sshll.u32 [#allocation12], 4
      %s84 = int_to_ptr.vmem [resolvable:$true] %s83
      %86 = dma.hbm_to_vmem [thread:$0]  %s5, 64, %s84, [#allocation13]
    $region25: #{tpu_custom_call.1} parent=1 // pred_fallthru
      _
    // Predicated region
    $region26: #{tpu_custom_call.1} parent=1 // pred_check
      _
    $region27: #{tpu_custom_call.1} parent=1 // pred_check_branch
      %88 = sbr.rel (0) target = $region29
    $region28: #{tpu_custom_call.1} parent=1 // pred_region
      %s90 = ssub.s32 64, 64
      %91 = vsyncadd [#allocation13], %s90
      %s93 = sshll.u32 [#allocation14], 4
      %s94 = int_to_ptr.vmem [resolvable:$true] %s93
      %96 = dma.hbm_to_vmem [thread:$0]  %s6, 64, %s94, [#allocation13]
    $region29: #{tpu_custom_call.1} parent=1 // pred_fallthru
      _
    // Predicated region
    $region30: #{tpu_custom_call.1} parent=1 // pred_check
      _
    $region31: #{tpu_custom_call.1} parent=1 // pred_check_branch
      %98 = sbr.rel (0) target = $region33
    $region32: #{tpu_custom_call.1} parent=1 // pred_region
      _
    $region33: #{tpu_custom_call.1} parent=1 // pred_fallthru
      _
    // Predicated region
    $region34: #{tpu_custom_call.1} parent=1 // pred_check
      _
    $region35: #{tpu_custom_call.1} parent=1 // pred_check_branch
      %100 = sbr.rel (0) target = $region37
    $region36: #{tpu_custom_call.1} parent=1 // pred_region
      %s102 = ssub.s32 16, 16
      %103 = vsyncadd [#allocation16], %s102
      %s105 = sshll.u32 [#allocation15], 4
      %s106 = int_to_ptr.vmem [resolvable:$true] %s105
      %108 = dma.hbm_to_vmem [thread:$0]  %s8, 16, %s106, [#allocation16]
    $region37: #{tpu_custom_call.1} parent=1 // pred_fallthru
      _
    // Predicated region
    $region38: #{tpu_custom_call.1} parent=1 // pred_check
      _
    $region39: #{tpu_custom_call.1} parent=1 // pred_check_branch
      %110 = sbr.rel (0) target = $region41
    $region40: #{tpu_custom_call.1} parent=1 // pred_region
      %s112 = ssub.s32 128, 128
      %113 = vsyncadd [#allocation16], %s112
      %s115 = sshll.u32 [#allocation17], 4
      %s116 = int_to_ptr.vmem [resolvable:$true] %s115
      %118 = dma.hbm_to_vmem [thread:$0]  %s9, 128, %s116, [#allocation16]
    $region41: #{tpu_custom_call.1} parent=1 // pred_fallthru
      _
    // Predicated region
    $region42: #{tpu_custom_call.1} parent=1 // pred_check
      _
    $region43: #{tpu_custom_call.1} parent=1 // pred_check_branch
      %120 = sbr.rel (0) target = $region45
    $region44: #{tpu_custom_call.1} parent=1 // pred_region
      %121 = dma.done [#allocation4], 2048
    $region45: #{tpu_custom_call.1} parent=1 // pred_fallthru
      _
    // Predicated region
    $region46: #{tpu_custom_call.1} parent=1 // pred_check
      _
    $region47: #{tpu_custom_call.1} parent=1 // pred_check_branch
      %123 = sbr.rel (0) target = $region49
    $region48: #{tpu_custom_call.1} parent=1 // pred_region
      %124 = dma.done [#allocation7], 49152
    $region49: #{tpu_custom_call.1} parent=1 // pred_fallthru
      _
    // Predicated region
    $region50: #{tpu_custom_call.1} parent=1 // pred_check
      _
    $region51: #{tpu_custom_call.1} parent=1 // pred_check_branch
      %126 = sbr.rel (0) target = $region53
    $region52: #{tpu_custom_call.1} parent=1 // pred_region
      %127 = dma.done [#allocation7], 64
    $region53: #{tpu_custom_call.1} parent=1 // pred_fallthru
      _
    // Predicated region
    $region54: #{tpu_custom_call.1} parent=1 // pred_check
      _
    $region55: #{tpu_custom_call.1} parent=1 // pred_check_branch
      %129 = sbr.rel (0) target = $region57
    $region56: #{tpu_custom_call.1} parent=1 // pred_region
      %130 = dma.done [#allocation10], 64
    $region57: #{tpu_custom_call.1} parent=1 // pred_fallthru
      _
    // Predicated region
    $region58: #{tpu_custom_call.1} parent=1 // pred_check
      _
    $region59: #{tpu_custom_call.1} parent=1 // pred_check_branch
      %132 = sbr.rel (0) target = $region61
    $region60: #{tpu_custom_call.1} parent=1 // pred_region
      %133 = dma.done [#allocation10], 49152
    $region61: #{tpu_custom_call.1} parent=1 // pred_fallthru
      _
    // Predicated region
    $region62: #{tpu_custom_call.1} parent=1 // pred_check
      _
    $region63: #{tpu_custom_call.1} parent=1 // pred_check_branch
      %135 = sbr.rel (0) target = $region65
    $region64: #{tpu_custom_call.1} parent=1 // pred_region
      %136 = dma.done [#allocation13], 64
    $region65: #{tpu_custom_call.1} parent=1 // pred_fallthru
      _
    // Predicated region
    $region66: #{tpu_custom_call.1} parent=1 // pred_check
      _
    $region67: #{tpu_custom_call.1} parent=1 // pred_check_branch
      %138 = sbr.rel (0) target = $region69
    $region68: #{tpu_custom_call.1} parent=1 // pred_region
      %139 = dma.done [#allocation13], 64
    $region69: #{tpu_custom_call.1} parent=1 // pred_fallthru
      _
    // Predicated region
    $region70: #{tpu_custom_call.1} parent=1 // pred_check
      _
    $region71: #{tpu_custom_call.1} parent=1 // pred_check_branch
      %141 = sbr.rel (0) target = $region73
    $region72: #{tpu_custom_call.1} parent=1 // pred_region
      %142 = dma.done [#allocation16], 16
    $region73: #{tpu_custom_call.1} parent=1 // pred_fallthru
      _
    // Predicated region
    $region74: #{tpu_custom_call.1} parent=1 // pred_check
      _
    $region75: #{tpu_custom_call.1} parent=1 // pred_check_branch
      %144 = sbr.rel (0) target = $region77
    $region76: #{tpu_custom_call.1} parent=1 // pred_region
      %145 = dma.done [#allocation16], 128
    $region77: #{tpu_custom_call.1} parent=1 // pred_fallthru
      _
    %vm147 = vcmask 1040384
    %vm148 = vsmask.f32 256
    %vm149 = vmand %vm147, %vm148
    %vm150 = vcmask 1044484
    %vm151 = vsmask.f32 4352
    %vm152 = vmand %vm150, %vm151
    %vm153 = vmor %vm152, %vm149
    %v154 = vld [vmem:[#allocation2] sm:$0x11]
    %v155 = vsel %vm153, 0, %v154
    %156 = vst [vmem:[#allocation2] sm:$0x11] %v155
    %v157 = vld [vmem:[#allocation2 + $0x8] sm:$0x11]
    %v158 = vsel %vm153, 0, %v157
    %159 = vst [vmem:[#allocation2 + $0x8] sm:$0x11] %v158
    %v160 = vld [vmem:[#allocation2 + $0x30] sm:$0x11]
    %v161 = vsel %vm153, 0, %v160
    %162 = vst [vmem:[#allocation2 + $0x30] sm:$0x11] %v161
    %v163 = vld [vmem:[#allocation2 + $0x38] sm:$0x11]
    %v164 = vsel %vm153, 0, %v163
    %165 = vst [vmem:[#allocation2 + $0x38] sm:$0x11] %v164
    %vm166 = vsmask.f32 7938
    %vm167 = vmand %vm147, %vm166
    %vm168 = vsmask.f32 7954
    %vm169 = vmand %vm150, %vm168
    %vm170 = vmor %vm169, %vm167
    %v171 = vld [vmem:[#allocation2 + $0x20] sm:$0x11]
    %v172 = vsel %vm170, 0, %v171
    %173 = vst [vmem:[#allocation2 + $0x20] sm:$0x11] %v172
    %v174 = vld [vmem:[#allocation2 + $0x28] sm:$0x11]
    %v175 = vsel %vm170, 0, %v174
    %176 = vst [vmem:[#allocation2 + $0x28] sm:$0x11] %v175
    %v177 = vld [vmem:[#allocation2 + $0x50] sm:$0x11]
    %v178 = vsel %vm170, 0, %v177
    %179 = vst [vmem:[#allocation2 + $0x50] sm:$0x11] %v178
    %v180 = vld [vmem:[#allocation2 + $0x58] sm:$0x11]
    %v181 = vsel %vm170, 0, %v180
    %182 = vst [vmem:[#allocation2 + $0x58] sm:$0x11] %v181
    %v183 = vld [vmem:[#allocation3] sm:$0xff]
    %v184 = vld [vmem:[#allocation3 + $0x8] sm:$0xff]
    %v185 = vld [vmem:[#allocation3 + $0x10] sm:$0xff]
    %v186 = vld [vmem:[#allocation3 + $0x18] sm:$0xff]
    %v187 = vld [vmem:[#allocation3 + $0x20] sm:$0xff]
    %v188 = vld [vmem:[#allocation3 + $0x28] sm:$0xff]
    %v189 = vld [vmem:[#allocation3 + $0x30] sm:$0xff]
    %v190 = vld [vmem:[#allocation3 + $0x38] sm:$0xff]
    %v191 = vld [vmem:[#allocation3 + $0x40] sm:$0xff]
    %v192 = vld [vmem:[#allocation3 + $0x48] sm:$0xff]
    %v193 = vld [vmem:[#allocation3 + $0x50] sm:$0xff]
    %v194 = vld [vmem:[#allocation3 + $0x58] sm:$0xff]
    %v195 = vld [vmem:[#allocation3 + $0x60] sm:$0xff]
    %v196 = vld [vmem:[#allocation3 + $0x68] sm:$0xff]
    %v197 = vld [vmem:[#allocation3 + $0x70] sm:$0xff]
    %v198 = vld [vmem:[#allocation3 + $0x78] sm:$0xff]
    %v199 = vpack.c.bf16 %v187, %v183
    %v200 = vpack.c.bf16 %v188, %v184
    %v201 = vpack.c.bf16 %v189, %v185
    %v202 = vpack.c.bf16 %v190, %v186
    %v203 = vpack.c.bf16 %v195, %v191
    %v204 = vpack.c.bf16 %v196, %v192
    %v205 = vpack.c.bf16 %v197, %v193
    %v206 = vpack.c.bf16 %v198, %v194
    %v215 = vunpack.c.l.b16 %v199
    %v216 = vunpack.c.l.b16 %v200
    %v217 = vunpack.c.l.b16 %v201
    %v218 = vunpack.c.l.b16 %v202
    %v219 = vunpack.c.h.b16 %v199
    %v220 = vunpack.c.h.b16 %v200
    %v221 = vunpack.c.h.b16 %v201
    %v222 = vunpack.c.h.b16 %v202
    %v223 = vunpack.c.l.b16 %v203
    %v224 = vunpack.c.l.b16 %v204
    %v225 = vunpack.c.l.b16 %v205
    %v226 = vunpack.c.l.b16 %v206
    %v227 = vunpack.c.h.b16 %v203
    %v228 = vunpack.c.h.b16 %v204
    %v229 = vunpack.c.h.b16 %v205
    %v230 = vunpack.c.h.b16 %v206
    %v231 = vpack.c.b16 %v216, %v215
    %v232 = vpack.c.b16 %v218, %v217
    %v233 = vpack.c.b16 %v220, %v219
    %v234 = vpack.c.b16 %v222, %v221
    %v235 = vpack.c.b16 %v224, %v223
    %v236 = vpack.c.b16 %v226, %v225
    %v237 = vpack.c.b16 %v228, %v227
    %v238 = vpack.c.b16 %v230, %v229
    %vm239 = vsmask.f32 4368
    %vm240 = vmor %vm148, %vm239
    %v242 = vshrl.u32 %v231, 16
    %v244 = vrot.slane %v242, 7
    %v245 = vshll.u32 %v231, 16
    %v247 = vor.u32 %v244, %v245
    %v249 = vshrl.u32 %v232, 16
    %v251 = vrot.slane %v249, 7
    %v252 = vshll.u32 %v232, 16
    %v254 = vor.u32 %v251, %v252
    %v255 = vrot.slane %v244, 4
    %v257 = vshrl.u32 %v233, 16
    %v259 = vrot.slane %v257, 7
    %v260 = vshll.u32 %v233, 16
    %v262 = vor.u32 %v259, %v260
    %v263 = vsel %vm240, %v255, %v262
    %v264 = vrot.slane %v251, 4
    %v266 = vshrl.u32 %v234, 16
    %v268 = vrot.slane %v266, 7
    %v269 = vshll.u32 %v234, 16
    %v271 = vor.u32 %v268, %v269
    %v272 = vsel %vm240, %v264, %v271
    %v273 = vrot.slane %v259, 4
    %v274 = vrot.slane %v268, 4
    %v276 = vshrl.u32 %v235, 16
    %v278 = vrot.slane %v276, 7
    %v279 = vshll.u32 %v235, 16
    %v281 = vor.u32 %v278, %v279
    %v283 = vshrl.u32 %v236, 16
    %v285 = vrot.slane %v283, 7
    %v286 = vshll.u32 %v236, 16
    %v288 = vor.u32 %v285, %v286
    %v289 = vrot.slane %v278, 4
    %v291 = vshrl.u32 %v237, 16
    %v293 = vrot.slane %v291, 7
    %v294 = vshll.u32 %v237, 16
    %v296 = vor.u32 %v293, %v294
    %v297 = vsel %vm240, %v289, %v296
    %v298 = vrot.slane %v285, 4
    %v300 = vshrl.u32 %v238, 16
    %v302 = vrot.slane %v300, 7
    %v303 = vshll.u32 %v238, 16
    %v305 = vor.u32 %v302, %v303
    %v306 = vsel %vm240, %v298, %v305
    %v307 = vrot.slane %v293, 4
    %v308 = vrot.slane %v302, 4
    %vm321 = vcmask 1043456
    %vm322 = vmand %vm321, %vm166
    %vm323 = vcmask 1047556
    %vm324 = vmand %vm323, %vm168
    %vm325 = vmor %vm324, %vm322
    %v326 = vld [vmem:[#allocation2] sm:$0xff]
    %v327 = vsel %vm325, %v247, %v326
    %328 = vst [vmem:[#allocation2] sm:$0xff] %v327
    %v329 = vld [vmem:[#allocation2 + $0x8] sm:$0xff]
    %v330 = vsel %vm325, %v254, %v329
    %331 = vst [vmem:[#allocation2 + $0x8] sm:$0xff] %v330
    %332 = vst [vmem:[#allocation2 + $0x10] sm:$0xff] %v263
    %333 = vst [vmem:[#allocation2 + $0x18] sm:$0xff] %v272
    %v334 = vld [vmem:[#allocation2 + $0x20] sm:$0x11]
    %v335 = vsel %vm153, %v273, %v334
    %336 = vst [vmem:[#allocation2 + $0x20] sm:$0x11] %v335
    %v337 = vld [vmem:[#allocation2 + $0x28] sm:$0x11]
    %v338 = vsel %vm153, %v274, %v337
    %339 = vst [vmem:[#allocation2 + $0x28] sm:$0x11] %v338
    %v340 = vld [vmem:[#allocation2 + $0x30] sm:$0xff]
    %v341 = vsel %vm325, %v281, %v340
    %342 = vst [vmem:[#allocation2 + $0x30] sm:$0xff] %v341
    %v343 = vld [vmem:[#allocation2 + $0x38] sm:$0xff]
    %v344 = vsel %vm325, %v288, %v343
    %345 = vst [vmem:[#allocation2 + $0x38] sm:$0xff] %v344
    %346 = vst [vmem:[#allocation2 + $0x40] sm:$0xff] %v297
    %347 = vst [vmem:[#allocation2 + $0x48] sm:$0xff] %v306
    %v348 = vld [vmem:[#allocation2 + $0x50] sm:$0x11]
    %v349 = vsel %vm153, %v307, %v348
    %350 = vst [vmem:[#allocation2 + $0x50] sm:$0x11] %v349
    %v351 = vld [vmem:[#allocation2 + $0x58] sm:$0x11]
    %v352 = vsel %vm153, %v308, %v351
    %353 = vst [vmem:[#allocation2 + $0x58] sm:$0x11] %v352
    %v354 = vld [vmem:[#allocation2] sm:$0xff]
    %v355 = vld [vmem:[#allocation2 + $0x8] sm:$0xff]
    %v356 = vld [vmem:[#allocation2 + $0x10] sm:$0xff]
    %v357 = vld [vmem:[#allocation2 + $0x18] sm:$0xff]
    %v358 = vld [vmem:[#allocation2 + $0x30] sm:$0xff]
    %v359 = vld [vmem:[#allocation2 + $0x38] sm:$0xff]
    %v360 = vld [vmem:[#allocation2 + $0x40] sm:$0xff]
    %v361 = vld [vmem:[#allocation2 + $0x48] sm:$0xff]
    %v362 = vld [vmem:[#allocation6] sm:$0xff]
    %v363 = vld [vmem:[#allocation6 + $0x8] sm:$0xff]
    %v364 = vld [vmem:[#allocation6 + $0x10] sm:$0xff]
    %v365 = vld [vmem:[#allocation6 + $0x18] sm:$0xff]
    %v366 = vld [vmem:[#allocation6 + $0x20] sm:$0xff]
    %v367 = vld [vmem:[#allocation6 + $0x28] sm:$0xff]
    %v368 = vld [vmem:[#allocation6 + $0x30] sm:$0xff]
    %v369 = vld [vmem:[#allocation6 + $0x38] sm:$0xff]
    %v370 = vld [vmem:[#allocation6 + $0x40] sm:$0xff]
    %v371 = vld [vmem:[#allocation6 + $0x48] sm:$0xff]
    %v372 = vld [vmem:[#allocation6 + $0x50] sm:$0xff]
    %v373 = vld [vmem:[#allocation6 + $0x58] sm:$0xff]
    %v374 = vld [vmem:[#allocation6 + $0x60] sm:$0xff]
    %v375 = vld [vmem:[#allocation6 + $0x68] sm:$0xff]
    %v376 = vld [vmem:[#allocation6 + $0x70] sm:$0xff]
    %v377 = vld [vmem:[#allocation6 + $0x78] sm:$0xff]
    %v378 = vld [vmem:[#allocation6 + $0x80] sm:$0xff]
    %v379 = vld [vmem:[#allocation6 + $0x88] sm:$0xff]
    %v380 = vld [vmem:[#allocation6 + $0x90] sm:$0xff]
    %v381 = vld [vmem:[#allocation6 + $0x98] sm:$0xff]
    %v382 = vld [vmem:[#allocation6 + $0xa0] sm:$0xff]
    %v383 = vld [vmem:[#allocation6 + $0xa8] sm:$0xff]
    %v384 = vld [vmem:[#allocation6 + $0xb0] sm:$0xff]
    %v385 = vld [vmem:[#allocation6 + $0xb8] sm:$0xff]
    %v386 = vld [vmem:[#allocation6 + $0xc0] sm:$0xff]
    %v387 = vld [vmem:[#allocation6 + $0xc8] sm:$0xff]
    %v388 = vld [vmem:[#allocation6 + $0xd0] sm:$0xff]
    %v389 = vld [vmem:[#allocation6 + $0xd8] sm:$0xff]
    %v390 = vld [vmem:[#allocation6 + $0xe0] sm:$0xff]
    %v391 = vld [vmem:[#allocation6 + $0xe8] sm:$0xff]
    %v392 = vld [vmem:[#allocation6 + $0xf0] sm:$0xff]
    %v393 = vld [vmem:[#allocation6 + $0xf8] sm:$0xff]
    %v394 = vld [vmem:[#allocation6 + $0x100] sm:$0xff]
    %v395 = vld [vmem:[#allocation6 + $0x108] sm:$0xff]
    %v396 = vld [vmem:[#allocation6 + $0x110] sm:$0xff]
    %v397 = vld [vmem:[#allocation6 + $0x118] sm:$0xff]
    %v398 = vld [vmem:[#allocation6 + $0x120] sm:$0xff]
    %v399 = vld [vmem:[#allocation6 + $0x128] sm:$0xff]
    %v400 = vld [vmem:[#allocation6 + $0x130] sm:$0xff]
    %v401 = vld [vmem:[#allocation6 + $0x138] sm:$0xff]
    %v402 = vld [vmem:[#allocation6 + $0x140] sm:$0xff]
    %v403 = vld [vmem:[#allocation6 + $0x148] sm:$0xff]
    %v404 = vld [vmem:[#allocation6 + $0x150] sm:$0xff]
    %v405 = vld [vmem:[#allocation6 + $0x158] sm:$0xff]
    %v406 = vld [vmem:[#allocation6 + $0x160] sm:$0xff]
    %v407 = vld [vmem:[#allocation6 + $0x168] sm:$0xff]
    %v408 = vld [vmem:[#allocation6 + $0x170] sm:$0xff]
    %v409 = vld [vmem:[#allocation6 + $0x178] sm:$0xff]
    %v410 = vld [vmem:[#allocation6 + $0x180] sm:$0xff]
    %v411 = vld [vmem:[#allocation6 + $0x188] sm:$0xff]
    %v412 = vld [vmem:[#allocation6 + $0x190] sm:$0xff]
    %v413 = vld [vmem:[#allocation6 + $0x198] sm:$0xff]
    %v414 = vld [vmem:[#allocation6 + $0x1a0] sm:$0xff]
    %v415 = vld [vmem:[#allocation6 + $0x1a8] sm:$0xff]
    %v416 = vld [vmem:[#allocation6 + $0x1b0] sm:$0xff]
    %v417 = vld [vmem:[#allocation6 + $0x1b8] sm:$0xff]
    %v418 = vld [vmem:[#allocation6 + $0x1c0] sm:$0xff]
    %v419 = vld [vmem:[#allocation6 + $0x1c8] sm:$0xff]
    %v420 = vld [vmem:[#allocation6 + $0x1d0] sm:$0xff]
    %v421 = vld [vmem:[#allocation6 + $0x1d8] sm:$0xff]
    %v422 = vld [vmem:[#allocation6 + $0x1e0] sm:$0xff]
    %v423 = vld [vmem:[#allocation6 + $0x1e8] sm:$0xff]
    %v424 = vld [vmem:[#allocation6 + $0x1f0] sm:$0xff]
    %v425 = vld [vmem:[#allocation6 + $0x1f8] sm:$0xff]
    %v426 = vld [vmem:[#allocation6 + $0x200] sm:$0xff]
    %v427 = vld [vmem:[#allocation6 + $0x208] sm:$0xff]
    %v428 = vld [vmem:[#allocation6 + $0x210] sm:$0xff]
    %v429 = vld [vmem:[#allocation6 + $0x218] sm:$0xff]
    %v430 = vld [vmem:[#allocation6 + $0x220] sm:$0xff]
    %v431 = vld [vmem:[#allocation6 + $0x228] sm:$0xff]
    %v432 = vld [vmem:[#allocation6 + $0x230] sm:$0xff]
    %v433 = vld [vmem:[#allocation6 + $0x238] sm:$0xff]
    %v434 = vld [vmem:[#allocation6 + $0x240] sm:$0xff]
    %v435 = vld [vmem:[#allocation6 + $0x248] sm:$0xff]
    %v436 = vld [vmem:[#allocation6 + $0x250] sm:$0xff]
    %v437 = vld [vmem:[#allocation6 + $0x258] sm:$0xff]
    %v438 = vld [vmem:[#allocation6 + $0x260] sm:$0xff]
    %v439 = vld [vmem:[#allocation6 + $0x268] sm:$0xff]
    %v440 = vld [vmem:[#allocation6 + $0x270] sm:$0xff]
    %v441 = vld [vmem:[#allocation6 + $0x278] sm:$0xff]
    %v442 = vld [vmem:[#allocation6 + $0x280] sm:$0xff]
    %v443 = vld [vmem:[#allocation6 + $0x288] sm:$0xff]
    %v444 = vld [vmem:[#allocation6 + $0x290] sm:$0xff]
    %v445 = vld [vmem:[#allocation6 + $0x298] sm:$0xff]
    %v446 = vld [vmem:[#allocation6 + $0x2a0] sm:$0xff]
    %v447 = vld [vmem:[#allocation6 + $0x2a8] sm:$0xff]
    %v448 = vld [vmem:[#allocation6 + $0x2b0] sm:$0xff]
    %v449 = vld [vmem:[#allocation6 + $0x2b8] sm:$0xff]
    %v450 = vld [vmem:[#allocation6 + $0x2c0] sm:$0xff]
    %v451 = vld [vmem:[#allocation6 + $0x2c8] sm:$0xff]
    %v452 = vld [vmem:[#allocation6 + $0x2d0] sm:$0xff]
    %v453 = vld [vmem:[#allocation6 + $0x2d8] sm:$0xff]
    %v454 = vld [vmem:[#allocation6 + $0x2e0] sm:$0xff]
    %v455 = vld [vmem:[#allocation6 + $0x2e8] sm:$0xff]
    %v456 = vld [vmem:[#allocation6 + $0x2f0] sm:$0xff]
    %v457 = vld [vmem:[#allocation6 + $0x2f8] sm:$0xff]
    %v458 = vld [vmem:[#allocation6 + $0x300] sm:$0xff]
    %v459 = vld [vmem:[#allocation6 + $0x308] sm:$0xff]
    %v460 = vld [vmem:[#allocation6 + $0x310] sm:$0xff]
    %v461 = vld [vmem:[#allocation6 + $0x318] sm:$0xff]
    %v462 = vld [vmem:[#allocation6 + $0x320] sm:$0xff]
    %v463 = vld [vmem:[#allocation6 + $0x328] sm:$0xff]
    %v464 = vld [vmem:[#allocation6 + $0x330] sm:$0xff]
    %v465 = vld [vmem:[#allocation6 + $0x338] sm:$0xff]
    %v466 = vld [vmem:[#allocation6 + $0x340] sm:$0xff]
    %v467 = vld [vmem:[#allocation6 + $0x348] sm:$0xff]
    %v468 = vld [vmem:[#allocation6 + $0x350] sm:$0xff]
    %v469 = vld [vmem:[#allocation6 + $0x358] sm:$0xff]
    %v470 = vld [vmem:[#allocation6 + $0x360] sm:$0xff]
    %v471 = vld [vmem:[#allocation6 + $0x368] sm:$0xff]
    %v472 = vld [vmem:[#allocation6 + $0x370] sm:$0xff]
    %v473 = vld [vmem:[#allocation6 + $0x378] sm:$0xff]
    %v474 = vld [vmem:[#allocation6 + $0x380] sm:$0xff]
    %v475 = vld [vmem:[#allocation6 + $0x388] sm:$0xff]
    %v476 = vld [vmem:[#allocation6 + $0x390] sm:$0xff]
    %v477 = vld [vmem:[#allocation6 + $0x398] sm:$0xff]
    %v478 = vld [vmem:[#allocation6 + $0x3a0] sm:$0xff]
    %v479 = vld [vmem:[#allocation6 + $0x3a8] sm:$0xff]
    %v480 = vld [vmem:[#allocation6 + $0x3b0] sm:$0xff]
    %v481 = vld [vmem:[#allocation6 + $0x3b8] sm:$0xff]
    %v482 = vld [vmem:[#allocation6 + $0x3c0] sm:$0xff]
    %v483 = vld [vmem:[#allocation6 + $0x3c8] sm:$0xff]
    %v484 = vld [vmem:[#allocation6 + $0x3d0] sm:$0xff]
    %v485 = vld [vmem:[#allocation6 + $0x3d8] sm:$0xff]
    %v486 = vld [vmem:[#allocation6 + $0x3e0] sm:$0xff]
    %v487 = vld [vmem:[#allocation6 + $0x3e8] sm:$0xff]
    %v488 = vld [vmem:[#allocation6 + $0x3f0] sm:$0xff]
    %v489 = vld [vmem:[#allocation6 + $0x3f8] sm:$0xff]
    %v490 = vld [vmem:[#allocation2 + $0x20] sm:$0x11]
    %v491 = vld [vmem:[#allocation2 + $0x28] sm:$0x11]
    %v492 = vld [vmem:[#allocation2 + $0x50] sm:$0x11]
    %v493 = vld [vmem:[#allocation2 + $0x58] sm:$0x11]
    %vm494 = vsmask.f32 3328
    %vm495 = vsmask.f32 7440
    %vm496 = vmor %vm494, %vm495
    %v498 = vshrl.u32 %v354, 16
    %v500 = vrot.slane %v498, 4
    %v501 = vshll.u32 %v354, 16
    %v503 = vrot.slane %v501, 5
    %v504 = vor.u32 %v500, %v503
    %v505 = vrot.slane %v504, 4
    %v507 = vshll.u32 %v356, 16
    %v509 = vrot.slane %v507, 5
    %v510 = vsel %vm496, %v505, %v509
    %v512 = vshrl.u32 %v355, 16
    %v514 = vrot.slane %v512, 4
    %v515 = vshll.u32 %v355, 16
    %v517 = vrot.slane %v515, 5
    %v518 = vor.u32 %v514, %v517
    %v519 = vrot.slane %v518, 4
    %v521 = vshll.u32 %v357, 16
    %v523 = vrot.slane %v521, 5
    %v524 = vsel %vm496, %v519, %v523
    %v525 = vshrl.u32 %v356, 16
    %v527 = vrot.slane %v525, 4
    %v528 = vor.u32 %v527, %v509
    %v529 = vrot.slane %v528, 4
    %v531 = vshll.u32 %v490, 16
    %v533 = vrot.slane %v531, 5
    %v534 = vsel %vm496, %v529, %v533
    %v535 = vshrl.u32 %v357, 16
    %v537 = vrot.slane %v535, 4
    %v538 = vor.u32 %v537, %v523
    %v539 = vrot.slane %v538, 4
    %v541 = vshll.u32 %v491, 16
    %v543 = vrot.slane %v541, 5
    %v544 = vsel %vm496, %v539, %v543
    %v546 = vshrl.u32 %v358, 16
    %v548 = vrot.slane %v546, 4
    %v549 = vshll.u32 %v358, 16
    %v551 = vrot.slane %v549, 5
    %v552 = vor.u32 %v548, %v551
    %v553 = vrot.slane %v552, 4
    %v555 = vshll.u32 %v360, 16
    %v557 = vrot.slane %v555, 5
    %v558 = vsel %vm496, %v553, %v557
    %v560 = vshrl.u32 %v359, 16
    %v562 = vrot.slane %v560, 4
    %v563 = vshll.u32 %v359, 16
    %v565 = vrot.slane %v563, 5
    %v566 = vor.u32 %v562, %v565
    %v567 = vrot.slane %v566, 4
    %v569 = vshll.u32 %v361, 16
    %v571 = vrot.slane %v569, 5
    %v572 = vsel %vm496, %v567, %v571
    %v573 = vshrl.u32 %v360, 16
    %v575 = vrot.slane %v573, 4
    %v576 = vor.u32 %v575, %v557
    %v577 = vrot.slane %v576, 4
    %v579 = vshll.u32 %v492, 16
    %v581 = vrot.slane %v579, 5
    %v582 = vsel %vm496, %v577, %v581
    %v583 = vshrl.u32 %v361, 16
    %v585 = vrot.slane %v583, 4
    %v586 = vor.u32 %v585, %v571
    %v587 = vrot.slane %v586, 4
    %v589 = vshll.u32 %v493, 16
    %v591 = vrot.slane %v589, 5
    %v592 = vsel %vm496, %v587, %v591
    %s593 = scalar_lea.vmem [#allocation6], 1024
    %v594 = vld [vmem:[%s593] sm:$0xff]
    %v595 = vld [vmem:[%s593 + $0x8] sm:$0xff]
    %v596 = vld [vmem:[%s593 + $0x10] sm:$0xff]
    %v597 = vld [vmem:[%s593 + $0x18] sm:$0xff]
    %v598 = vld [vmem:[%s593 + $0x20] sm:$0xff]
    %v599 = vld [vmem:[%s593 + $0x28] sm:$0xff]
    %v600 = vld [vmem:[%s593 + $0x30] sm:$0xff]
    %v601 = vld [vmem:[%s593 + $0x38] sm:$0xff]
    %v602 = vld [vmem:[%s593 + $0x40] sm:$0xff]
    %v603 = vld [vmem:[%s593 + $0x48] sm:$0xff]
    %v604 = vld [vmem:[%s593 + $0x50] sm:$0xff]
    %v605 = vld [vmem:[%s593 + $0x58] sm:$0xff]
    %v606 = vld [vmem:[%s593 + $0x60] sm:$0xff]
    %v607 = vld [vmem:[%s593 + $0x68] sm:$0xff]
    %v608 = vld [vmem:[%s593 + $0x70] sm:$0xff]
    %v609 = vld [vmem:[%s593 + $0x78] sm:$0xff]
    %v610 = vld [vmem:[%s593 + $0x80] sm:$0xff]
    %v611 = vld [vmem:[%s593 + $0x88] sm:$0xff]
    %v612 = vld [vmem:[%s593 + $0x90] sm:$0xff]
    %v613 = vld [vmem:[%s593 + $0x98] sm:$0xff]
    %v614 = vld [vmem:[%s593 + $0xa0] sm:$0xff]
    %v615 = vld [vmem:[%s593 + $0xa8] sm:$0xff]
    %v616 = vld [vmem:[%s593 + $0xb0] sm:$0xff]
    %v617 = vld [vmem:[%s593 + $0xb8] sm:$0xff]
    %v618 = vld [vmem:[%s593 + $0xc0] sm:$0xff]
    %v619 = vld [vmem:[%s593 + $0xc8] sm:$0xff]
    %v620 = vld [vmem:[%s593 + $0xd0] sm:$0xff]
    %v621 = vld [vmem:[%s593 + $0xd8] sm:$0xff]
    %v622 = vld [vmem:[%s593 + $0xe0] sm:$0xff]
    %v623 = vld [vmem:[%s593 + $0xe8] sm:$0xff]
    %v624 = vld [vmem:[%s593 + $0xf0] sm:$0xff]
    %v625 = vld [vmem:[%s593 + $0xf8] sm:$0xff]
    %v626 = vld [vmem:[%s593 + $0x100] sm:$0xff]
    %v627 = vld [vmem:[%s593 + $0x108] sm:$0xff]
    %v628 = vld [vmem:[%s593 + $0x110] sm:$0xff]
    %v629 = vld [vmem:[%s593 + $0x118] sm:$0xff]
    %v630 = vld [vmem:[%s593 + $0x120] sm:$0xff]
    %v631 = vld [vmem:[%s593 + $0x128] sm:$0xff]
    %v632 = vld [vmem:[%s593 + $0x130] sm:$0xff]
    %v633 = vld [vmem:[%s593 + $0x138] sm:$0xff]
    %v634 = vld [vmem:[%s593 + $0x140] sm:$0xff]
    %v635 = vld [vmem:[%s593 + $0x148] sm:$0xff]
    %v636 = vld [vmem:[%s593 + $0x150] sm:$0xff]
    %v637 = vld [vmem:[%s593 + $0x158] sm:$0xff]
    %v638 = vld [vmem:[%s593 + $0x160] sm:$0xff]
    %v639 = vld [vmem:[%s593 + $0x168] sm:$0xff]
    %v640 = vld [vmem:[%s593 + $0x170] sm:$0xff]
    %v641 = vld [vmem:[%s593 + $0x178] sm:$0xff]
    %v642 = vld [vmem:[%s593 + $0x180] sm:$0xff]
    %v643 = vld [vmem:[%s593 + $0x188] sm:$0xff]
    %v644 = vld [vmem:[%s593 + $0x190] sm:$0xff]
    %v645 = vld [vmem:[%s593 + $0x198] sm:$0xff]
    %v646 = vld [vmem:[%s593 + $0x1a0] sm:$0xff]
    %v647 = vld [vmem:[%s593 + $0x1a8] sm:$0xff]
    %v648 = vld [vmem:[%s593 + $0x1b0] sm:$0xff]
    %v649 = vld [vmem:[%s593 + $0x1b8] sm:$0xff]
    %v650 = vld [vmem:[%s593 + $0x1c0] sm:$0xff]
    %v651 = vld [vmem:[%s593 + $0x1c8] sm:$0xff]
    %v652 = vld [vmem:[%s593 + $0x1d0] sm:$0xff]
    %v653 = vld [vmem:[%s593 + $0x1d8] sm:$0xff]
    %v654 = vld [vmem:[%s593 + $0x1e0] sm:$0xff]
    %v655 = vld [vmem:[%s593 + $0x1e8] sm:$0xff]
    %v656 = vld [vmem:[%s593 + $0x1f0] sm:$0xff]
    %v657 = vld [vmem:[%s593 + $0x1f8] sm:$0xff]
    %v658 = vld [vmem:[%s593 + $0x200] sm:$0xff]
    %v659 = vld [vmem:[%s593 + $0x208] sm:$0xff]
    %v660 = vld [vmem:[%s593 + $0x210] sm:$0xff]
    %v661 = vld [vmem:[%s593 + $0x218] sm:$0xff]
    %v662 = vld [vmem:[%s593 + $0x220] sm:$0xff]
    %v663 = vld [vmem:[%s593 + $0x228] sm:$0xff]
    %v664 = vld [vmem:[%s593 + $0x230] sm:$0xff]
    %v665 = vld [vmem:[%s593 + $0x238] sm:$0xff]
    %v666 = vld [vmem:[%s593 + $0x240] sm:$0xff]
    %v667 = vld [vmem:[%s593 + $0x248] sm:$0xff]
    %v668 = vld [vmem:[%s593 + $0x250] sm:$0xff]
    %v669 = vld [vmem:[%s593 + $0x258] sm:$0xff]
    %v670 = vld [vmem:[%s593 + $0x260] sm:$0xff]
    %v671 = vld [vmem:[%s593 + $0x268] sm:$0xff]
    %v672 = vld [vmem:[%s593 + $0x270] sm:$0xff]
    %v673 = vld [vmem:[%s593 + $0x278] sm:$0xff]
    %v674 = vld [vmem:[%s593 + $0x280] sm:$0xff]
    %v675 = vld [vmem:[%s593 + $0x288] sm:$0xff]
    %v676 = vld [vmem:[%s593 + $0x290] sm:$0xff]
    %v677 = vld [vmem:[%s593 + $0x298] sm:$0xff]
    %v678 = vld [vmem:[%s593 + $0x2a0] sm:$0xff]
    %v679 = vld [vmem:[%s593 + $0x2a8] sm:$0xff]
    %v680 = vld [vmem:[%s593 + $0x2b0] sm:$0xff]
    %v681 = vld [vmem:[%s593 + $0x2b8] sm:$0xff]
    %v682 = vld [vmem:[%s593 + $0x2c0] sm:$0xff]
    %v683 = vld [vmem:[%s593 + $0x2c8] sm:$0xff]
    %v684 = vld [vmem:[%s593 + $0x2d0] sm:$0xff]
    %v685 = vld [vmem:[%s593 + $0x2d8] sm:$0xff]
    %v686 = vld [vmem:[%s593 + $0x2e0] sm:$0xff]
    %v687 = vld [vmem:[%s593 + $0x2e8] sm:$0xff]
    %v688 = vld [vmem:[%s593 + $0x2f0] sm:$0xff]
    %v689 = vld [vmem:[%s593 + $0x2f8] sm:$0xff]
    %v690 = vld [vmem:[%s593 + $0x300] sm:$0xff]
    %v691 = vld [vmem:[%s593 + $0x308] sm:$0xff]
    %v692 = vld [vmem:[%s593 + $0x310] sm:$0xff]
    %v693 = vld [vmem:[%s593 + $0x318] sm:$0xff]
    %v694 = vld [vmem:[%s593 + $0x320] sm:$0xff]
    %v695 = vld [vmem:[%s593 + $0x328] sm:$0xff]
    %v696 = vld [vmem:[%s593 + $0x330] sm:$0xff]
    %v697 = vld [vmem:[%s593 + $0x338] sm:$0xff]
    %v698 = vld [vmem:[%s593 + $0x340] sm:$0xff]
    %v699 = vld [vmem:[%s593 + $0x348] sm:$0xff]
    %v700 = vld [vmem:[%s593 + $0x350] sm:$0xff]
    %v701 = vld [vmem:[%s593 + $0x358] sm:$0xff]
    %v702 = vld [vmem:[%s593 + $0x360] sm:$0xff]
    %v703 = vld [vmem:[%s593 + $0x368] sm:$0xff]
    %v704 = vld [vmem:[%s593 + $0x370] sm:$0xff]
    %v705 = vld [vmem:[%s593 + $0x378] sm:$0xff]
    %v706 = vld [vmem:[%s593 + $0x380] sm:$0xff]
    %v707 = vld [vmem:[%s593 + $0x388] sm:$0xff]
    %v708 = vld [vmem:[%s593 + $0x390] sm:$0xff]
    %v709 = vld [vmem:[%s593 + $0x398] sm:$0xff]
    %v710 = vld [vmem:[%s593 + $0x3a0] sm:$0xff]
    %v711 = vld [vmem:[%s593 + $0x3a8] sm:$0xff]
    %v712 = vld [vmem:[%s593 + $0x3b0] sm:$0xff]
    %v713 = vld [vmem:[%s593 + $0x3b8] sm:$0xff]
    %v714 = vld [vmem:[%s593 + $0x3c0] sm:$0xff]
    %v715 = vld [vmem:[%s593 + $0x3c8] sm:$0xff]
    %v716 = vld [vmem:[%s593 + $0x3d0] sm:$0xff]
    %v717 = vld [vmem:[%s593 + $0x3d8] sm:$0xff]
    %v718 = vld [vmem:[%s593 + $0x3e0] sm:$0xff]
    %v719 = vld [vmem:[%s593 + $0x3e8] sm:$0xff]
    %v720 = vld [vmem:[%s593 + $0x3f0] sm:$0xff]
    %v721 = vld [vmem:[%s593 + $0x3f8] sm:$0xff]
    %v722 = vunpack.c.l.b16 %v510
    %v723 = vunpack.c.h.b16 %v510
    %v724 = vunpack.c.l.b16 %v524
    %v725 = vunpack.c.h.b16 %v524
    %v726 = vunpack.c.l.b16 %v534
    %v727 = vunpack.c.h.b16 %v534
    %v728 = vunpack.c.l.b16 %v544
    %v729 = vunpack.c.h.b16 %v544
    %v730 = vunpack.c.l.b16 %v558
    %v731 = vunpack.c.h.b16 %v558
    %v732 = vunpack.c.l.b16 %v572
    %v733 = vunpack.c.h.b16 %v572
    %v734 = vunpack.c.l.b16 %v582
    %v735 = vunpack.c.h.b16 %v582
    %v736 = vunpack.c.l.b16 %v592
    %v737 = vunpack.c.h.b16 %v592
    %v738 = vpack.c.b16 %v726, %v722
    %v739 = vpack.c.b16 %v727, %v723
    %v740 = vpack.c.b16 %v728, %v724
    %v741 = vpack.c.b16 %v729, %v725
    %v742 = vpack.c.b16 %v734, %v730
    %v743 = vpack.c.b16 %v735, %v731
    %v744 = vpack.c.b16 %v736, %v732
    %v745 = vpack.c.b16 %v737, %v733
    %v882 = vunpack.c.l.b16 %v594
    %v883 = vunpack.c.h.b16 %v594
    %v884 = vunpack.c.l.b16 %v595
    %v885 = vunpack.c.h.b16 %v595
    %v886 = vunpack.c.l.b16 %v596
    %v887 = vunpack.c.h.b16 %v596
    %v888 = vunpack.c.l.b16 %v597
    %v889 = vunpack.c.h.b16 %v597
    %v890 = vunpack.c.l.b16 %v598
    %v891 = vunpack.c.h.b16 %v598
    %v892 = vunpack.c.l.b16 %v599
    %v893 = vunpack.c.h.b16 %v599
    %v894 = vunpack.c.l.b16 %v600
    %v895 = vunpack.c.h.b16 %v600
    %v896 = vunpack.c.l.b16 %v601
    %v897 = vunpack.c.h.b16 %v601
    %v898 = vunpack.c.l.b16 %v602
    %v899 = vunpack.c.h.b16 %v602
    %v900 = vunpack.c.l.b16 %v603
    %v901 = vunpack.c.h.b16 %v603
    %v902 = vunpack.c.l.b16 %v604
    %v903 = vunpack.c.h.b16 %v604
    %v904 = vunpack.c.l.b16 %v605
    %v905 = vunpack.c.h.b16 %v605
    %v906 = vunpack.c.l.b16 %v606
    %v907 = vunpack.c.h.b16 %v606
    %v908 = vunpack.c.l.b16 %v607
    %v909 = vunpack.c.h.b16 %v607
    %v910 = vunpack.c.l.b16 %v608
    %v911 = vunpack.c.h.b16 %v608
    %v912 = vunpack.c.l.b16 %v609
    %v913 = vunpack.c.h.b16 %v609
    %v914 = vunpack.c.l.b16 %v610
    %v915 = vunpack.c.h.b16 %v610
    %v916 = vunpack.c.l.b16 %v611
    %v917 = vunpack.c.h.b16 %v611
    %v918 = vunpack.c.l.b16 %v612
    %v919 = vunpack.c.h.b16 %v612
    %v920 = vunpack.c.l.b16 %v613
    %v921 = vunpack.c.h.b16 %v613
    %v922 = vunpack.c.l.b16 %v614
    %v923 = vunpack.c.h.b16 %v614
    %v924 = vunpack.c.l.b16 %v615
    %v925 = vunpack.c.h.b16 %v615
    %v926 = vunpack.c.l.b16 %v616
    %v927 = vunpack.c.h.b16 %v616
    %v928 = vunpack.c.l.b16 %v617
    %v929 = vunpack.c.h.b16 %v617
    %v930 = vunpack.c.l.b16 %v618
    %v931 = vunpack.c.h.b16 %v618
    %v932 = vunpack.c.l.b16 %v619
    %v933 = vunpack.c.h.b16 %v619
    %v934 = vunpack.c.l.b16 %v620
    %v935 = vunpack.c.h.b16 %v620
    %v936 = vunpack.c.l.b16 %v621
    %v937 = vunpack.c.h.b16 %v621
    %v938 = vunpack.c.l.b16 %v622
    %v939 = vunpack.c.h.b16 %v622
    %v940 = vunpack.c.l.b16 %v623
    %v941 = vunpack.c.h.b16 %v623
    %v942 = vunpack.c.l.b16 %v624
    %v943 = vunpack.c.h.b16 %v624
    %v944 = vunpack.c.l.b16 %v625
    %v945 = vunpack.c.h.b16 %v625
    %v946 = vunpack.c.l.b16 %v626
    %v947 = vunpack.c.h.b16 %v626
    %v948 = vunpack.c.l.b16 %v627
    %v949 = vunpack.c.h.b16 %v627
    %v950 = vunpack.c.l.b16 %v628
    %v951 = vunpack.c.h.b16 %v628
    %v952 = vunpack.c.l.b16 %v629
    %v953 = vunpack.c.h.b16 %v629
    %v954 = vunpack.c.l.b16 %v630
    %v955 = vunpack.c.h.b16 %v630
    %v956 = vunpack.c.l.b16 %v631
    %v957 = vunpack.c.h.b16 %v631
    %v958 = vunpack.c.l.b16 %v632
    %v959 = vunpack.c.h.b16 %v632
    %v960 = vunpack.c.l.b16 %v633
    %v961 = vunpack.c.h.b16 %v633
    %v962 = vunpack.c.l.b16 %v634
    %v963 = vunpack.c.h.b16 %v634
    %v964 = vunpack.c.l.b16 %v635
    %v965 = vunpack.c.h.b16 %v635
    %v966 = vunpack.c.l.b16 %v636
    %v967 = vunpack.c.h.b16 %v636
    %v968 = vunpack.c.l.b16 %v637
    %v969 = vunpack.c.h.b16 %v637
    %v970 = vunpack.c.l.b16 %v638
    %v971 = vunpack.c.h.b16 %v638
    %v972 = vunpack.c.l.b16 %v639
    %v973 = vunpack.c.h.b16 %v639
    %v974 = vunpack.c.l.b16 %v640
    %v975 = vunpack.c.h.b16 %v640
    %v976 = vunpack.c.l.b16 %v641
    %v977 = vunpack.c.h.b16 %v641
    %v978 = vunpack.c.l.b16 %v642
    %v979 = vunpack.c.h.b16 %v642
    %v980 = vunpack.c.l.b16 %v643
    %v981 = vunpack.c.h.b16 %v643
    %v982 = vunpack.c.l.b16 %v644
    %v983 = vunpack.c.h.b16 %v644
    %v984 = vunpack.c.l.b16 %v645
    %v985 = vunpack.c.h.b16 %v645
    %v986 = vunpack.c.l.b16 %v646
    %v987 = vunpack.c.h.b16 %v646
    %v988 = vunpack.c.l.b16 %v647
    %v989 = vunpack.c.h.b16 %v647
    %v990 = vunpack.c.l.b16 %v648
    %v991 = vunpack.c.h.b16 %v648
    %v992 = vunpack.c.l.b16 %v649
    %v993 = vunpack.c.h.b16 %v649
    %v994 = vunpack.c.l.b16 %v650
    %v995 = vunpack.c.h.b16 %v650
    %v996 = vunpack.c.l.b16 %v651
    %v997 = vunpack.c.h.b16 %v651
    %v998 = vunpack.c.l.b16 %v652
    %v999 = vunpack.c.h.b16 %v652
    %v1000 = vunpack.c.l.b16 %v653
    %v1001 = vunpack.c.h.b16 %v653
    %v1002 = vunpack.c.l.b16 %v654
    %v1003 = vunpack.c.h.b16 %v654
    %v1004 = vunpack.c.l.b16 %v655
    %v1005 = vunpack.c.h.b16 %v655
    %v1006 = vunpack.c.l.b16 %v656
    %v1007 = vunpack.c.h.b16 %v656
    %v1008 = vunpack.c.l.b16 %v657
    %v1009 = vunpack.c.h.b16 %v657
    %v1010 = vunpack.c.l.b16 %v658
    %v1011 = vunpack.c.h.b16 %v658
    %v1012 = vunpack.c.l.b16 %v659
    %v1013 = vunpack.c.h.b16 %v659
    %v1014 = vunpack.c.l.b16 %v660
    %v1015 = vunpack.c.h.b16 %v660
    %v1016 = vunpack.c.l.b16 %v661
    %v1017 = vunpack.c.h.b16 %v661
    %v1018 = vunpack.c.l.b16 %v662
    %v1019 = vunpack.c.h.b16 %v662
    %v1020 = vunpack.c.l.b16 %v663
    %v1021 = vunpack.c.h.b16 %v663
    %v1022 = vunpack.c.l.b16 %v664
    %v1023 = vunpack.c.h.b16 %v664
    %v1024 = vunpack.c.l.b16 %v665
    %v1025 = vunpack.c.h.b16 %v665
    %v1026 = vunpack.c.l.b16 %v666
    %v1027 = vunpack.c.h.b16 %v666
    %v1028 = vunpack.c.l.b16 %v667
    %v1029 = vunpack.c.h.b16 %v667
    %v1030 = vunpack.c.l.b16 %v668
    %v1031 = vunpack.c.h.b16 %v668
    %v1032 = vunpack.c.l.b16 %v669
    %v1033 = vunpack.c.h.b16 %v669
    %v1034 = vunpack.c.l.b16 %v670
    %v1035 = vunpack.c.h.b16 %v670
    %v1036 = vunpack.c.l.b16 %v671
    %v1037 = vunpack.c.h.b16 %v671
    %v1038 = vunpack.c.l.b16 %v672
    %v1039 = vunpack.c.h.b16 %v672
    %v1040 = vunpack.c.l.b16 %v673
    %v1041 = vunpack.c.h.b16 %v673
    %v1042 = vunpack.c.l.b16 %v674
    %v1043 = vunpack.c.h.b16 %v674
    %v1044 = vunpack.c.l.b16 %v675
    %v1045 = vunpack.c.h.b16 %v675
    %v1046 = vunpack.c.l.b16 %v676
    %v1047 = vunpack.c.h.b16 %v676
    %v1048 = vunpack.c.l.b16 %v677
    %v1049 = vunpack.c.h.b16 %v677
    %v1050 = vunpack.c.l.b16 %v678
    %v1051 = vunpack.c.h.b16 %v678
    %v1052 = vunpack.c.l.b16 %v679
    %v1053 = vunpack.c.h.b16 %v679
    %v1054 = vunpack.c.l.b16 %v680
    %v1055 = vunpack.c.h.b16 %v680
    %v1056 = vunpack.c.l.b16 %v681
    %v1057 = vunpack.c.h.b16 %v681
    %v1058 = vunpack.c.l.b16 %v682
    %v1059 = vunpack.c.h.b16 %v682
    %v1060 = vunpack.c.l.b16 %v683
    %v1061 = vunpack.c.h.b16 %v683
    %v1062 = vunpack.c.l.b16 %v684
    %v1063 = vunpack.c.h.b16 %v684
    %v1064 = vunpack.c.l.b16 %v685
    %v1065 = vunpack.c.h.b16 %v685
    %v1066 = vunpack.c.l.b16 %v686
    %v1067 = vunpack.c.h.b16 %v686
    %v1068 = vunpack.c.l.b16 %v687
    %v1069 = vunpack.c.h.b16 %v687
    %v1070 = vunpack.c.l.b16 %v688
    %v1071 = vunpack.c.h.b16 %v688
    %v1072 = vunpack.c.l.b16 %v689
    %v1073 = vunpack.c.h.b16 %v689
    %v1074 = vunpack.c.l.b16 %v690
    %v1075 = vunpack.c.h.b16 %v690
    %v1076 = vunpack.c.l.b16 %v691
    %v1077 = vunpack.c.h.b16 %v691
    %v1078 = vunpack.c.l.b16 %v692
    %v1079 = vunpack.c.h.b16 %v692
    %v1080 = vunpack.c.l.b16 %v693
    %v1081 = vunpack.c.h.b16 %v693
    %v1082 = vunpack.c.l.b16 %v694
    %v1083 = vunpack.c.h.b16 %v694
    %v1084 = vunpack.c.l.b16 %v695
    %v1085 = vunpack.c.h.b16 %v695
    %v1086 = vunpack.c.l.b16 %v696
    %v1087 = vunpack.c.h.b16 %v696
    %v1088 = vunpack.c.l.b16 %v697
    %v1089 = vunpack.c.h.b16 %v697
    %v1090 = vunpack.c.l.b16 %v698
    %v1091 = vunpack.c.h.b16 %v698
    %v1092 = vunpack.c.l.b16 %v699
    %v1093 = vunpack.c.h.b16 %v699
    %v1094 = vunpack.c.l.b16 %v700
    %v1095 = vunpack.c.h.b16 %v700
    %v1096 = vunpack.c.l.b16 %v701
    %v1097 = vunpack.c.h.b16 %v701
    %v1098 = vunpack.c.l.b16 %v702
    %v1099 = vunpack.c.h.b16 %v702
    %v1100 = vunpack.c.l.b16 %v703
    %v1101 = vunpack.c.h.b16 %v703
    %v1102 = vunpack.c.l.b16 %v704
    %v1103 = vunpack.c.h.b16 %v704
    %v1104 = vunpack.c.l.b16 %v705
    %v1105 = vunpack.c.h.b16 %v705
    %v1106 = vunpack.c.l.b16 %v706
    %v1107 = vunpack.c.h.b16 %v706
    %v1108 = vunpack.c.l.b16 %v707
    %v1109 = vunpack.c.h.b16 %v707
    %v1110 = vunpack.c.l.b16 %v708
    %v1111 = vunpack.c.h.b16 %v708
    %v1112 = vunpack.c.l.b16 %v709
    %v1113 = vunpack.c.h.b16 %v709
    %v1114 = vunpack.c.l.b16 %v710
    %v1115 = vunpack.c.h.b16 %v710
    %v1116 = vunpack.c.l.b16 %v711
    %v1117 = vunpack.c.h.b16 %v711
    %v1118 = vunpack.c.l.b16 %v712
    %v1119 = vunpack.c.h.b16 %v712
    %v1120 = vunpack.c.l.b16 %v713
    %v1121 = vunpack.c.h.b16 %v713
    %v1122 = vunpack.c.l.b16 %v714
    %v1123 = vunpack.c.h.b16 %v714
    %v1124 = vunpack.c.l.b16 %v715
    %v1125 = vunpack.c.h.b16 %v715
    %v1126 = vunpack.c.l.b16 %v716
    %v1127 = vunpack.c.h.b16 %v716
    %v1128 = vunpack.c.l.b16 %v717
    %v1129 = vunpack.c.h.b16 %v717
    %v1130 = vunpack.c.l.b16 %v718
    %v1131 = vunpack.c.h.b16 %v718
    %v1132 = vunpack.c.l.b16 %v719
    %v1133 = vunpack.c.h.b16 %v719
    %v1134 = vunpack.c.l.b16 %v720
    %v1135 = vunpack.c.h.b16 %v720
    %v1136 = vunpack.c.l.b16 %v721
    %v1137 = vunpack.c.h.b16 %v721
    %v1138 = vpack.c.b16 %v886, %v882
    %v1139 = vpack.c.b16 %v887, %v883
    %v1140 = vpack.c.b16 %v888, %v884
    %v1141 = vpack.c.b16 %v889, %v885
    %v1142 = vpack.c.b16 %v894, %v890
    %v1143 = vpack.c.b16 %v895, %v891
    %v1144 = vpack.c.b16 %v896, %v892
    %v1145 = vpack.c.b16 %v897, %v893
    %v1146 = vpack.c.b16 %v902, %v898
    %v1147 = vpack.c.b16 %v903, %v899
    %v1148 = vpack.c.b16 %v904, %v900
    %v1149 = vpack.c.b16 %v905, %v901
    %v1150 = vpack.c.b16 %v910, %v906
    %v1151 = vpack.c.b16 %v911, %v907
    %v1152 = vpack.c.b16 %v912, %v908
    %v1153 = vpack.c.b16 %v913, %v909
    %v1154 = vpack.c.b16 %v918, %v914
    %v1155 = vpack.c.b16 %v919, %v915
    %v1156 = vpack.c.b16 %v920, %v916
    %v1157 = vpack.c.b16 %v921, %v917
    %v1158 = vpack.c.b16 %v926, %v922
    %v1159 = vpack.c.b16 %v927, %v923
    %v1160 = vpack.c.b16 %v928, %v924
    %v1161 = vpack.c.b16 %v929, %v925
    %v1162 = vpack.c.b16 %v934, %v930
    %v1163 = vpack.c.b16 %v935, %v931
    %v1164 = vpack.c.b16 %v936, %v932
    %v1165 = vpack.c.b16 %v937, %v933
    %v1166 = vpack.c.b16 %v942, %v938
    %v1167 = vpack.c.b16 %v943, %v939
    %v1168 = vpack.c.b16 %v944, %v940
    %v1169 = vpack.c.b16 %v945, %v941
    %v1170 = vpack.c.b16 %v950, %v946
    %v1171 = vpack.c.b16 %v951, %v947
    %v1172 = vpack.c.b16 %v952, %v948
    %v1173 = vpack.c.b16 %v953, %v949
    %v1174 = vpack.c.b16 %v958, %v954
    %v1175 = vpack.c.b16 %v959, %v955
    %v1176 = vpack.c.b16 %v960, %v956
    %v1177 = vpack.c.b16 %v961, %v957
    %v1178 = vpack.c.b16 %v966, %v962
    %v1179 = vpack.c.b16 %v967, %v963
    %v1180 = vpack.c.b16 %v968, %v964
    %v1181 = vpack.c.b16 %v969, %v965
    %v1182 = vpack.c.b16 %v974, %v970
    %v1183 = vpack.c.b16 %v975, %v971
    %v1184 = vpack.c.b16 %v976, %v972
    %v1185 = vpack.c.b16 %v977, %v973
    %v1186 = vpack.c.b16 %v982, %v978
    %v1187 = vpack.c.b16 %v983, %v979
    %v1188 = vpack.c.b16 %v984, %v980
    %v1189 = vpack.c.b16 %v985, %v981
    %v1190 = vpack.c.b16 %v990, %v986
    %v1191 = vpack.c.b16 %v991, %v987
    %v1192 = vpack.c.b16 %v992, %v988
    %v1193 = vpack.c.b16 %v993, %v989
    %v1194 = vpack.c.b16 %v998, %v994
    %v1195 = vpack.c.b16 %v999, %v995
    %v1196 = vpack.c.b16 %v1000, %v996
    %v1197 = vpack.c.b16 %v1001, %v997
    %v1198 = vpack.c.b16 %v1006, %v1002
    %v1199 = vpack.c.b16 %v1007, %v1003
    %v1200 = vpack.c.b16 %v1008, %v1004
    %v1201 = vpack.c.b16 %v1009, %v1005
    %v1202 = vpack.c.b16 %v1014, %v1010
    %v1203 = vpack.c.b16 %v1015, %v1011
    %v1204 = vpack.c.b16 %v1016, %v1012
    %v1205 = vpack.c.b16 %v1017, %v1013
    %v1206 = vpack.c.b16 %v1022, %v1018
    %v1207 = vpack.c.b16 %v1023, %v1019
    %v1208 = vpack.c.b16 %v1024, %v1020
    %v1209 = vpack.c.b16 %v1025, %v1021
    %v1210 = vpack.c.b16 %v1030, %v1026
    %v1211 = vpack.c.b16 %v1031, %v1027
    %v1212 = vpack.c.b16 %v1032, %v1028
    %v1213 = vpack.c.b16 %v1033, %v1029
    %v1214 = vpack.c.b16 %v1038, %v1034
    %v1215 = vpack.c.b16 %v1039, %v1035
    %v1216 = vpack.c.b16 %v1040, %v1036
    %v1217 = vpack.c.b16 %v1041, %v1037
    %v1218 = vpack.c.b16 %v1046, %v1042
    %v1219 = vpack.c.b16 %v1047, %v1043
    %v1220 = vpack.c.b16 %v1048, %v1044
    %v1221 = vpack.c.b16 %v1049, %v1045
    %v1222 = vpack.c.b16 %v1054, %v1050
    %v1223 = vpack.c.b16 %v1055, %v1051
    %v1224 = vpack.c.b16 %v1056, %v1052
    %v1225 = vpack.c.b16 %v1057, %v1053
    %v1226 = vpack.c.b16 %v1062, %v1058
    %v1227 = vpack.c.b16 %v1063, %v1059
    %v1228 = vpack.c.b16 %v1064, %v1060
    %v1229 = vpack.c.b16 %v1065, %v1061
    %v1230 = vpack.c.b16 %v1070, %v1066
    %v1231 = vpack.c.b16 %v1071, %v1067
    %v1232 = vpack.c.b16 %v1072, %v1068
    %v1233 = vpack.c.b16 %v1073, %v1069
    %v1234 = vpack.c.b16 %v1078, %v1074
    %v1235 = vpack.c.b16 %v1079, %v1075
    %v1236 = vpack.c.b16 %v1080, %v1076
    %v1237 = vpack.c.b16 %v1081, %v1077
    %v1238 = vpack.c.b16 %v1086, %v1082
    %v1239 = vpack.c.b16 %v1087, %v1083
    %v1240 = vpack.c.b16 %v1088, %v1084
    %v1241 = vpack.c.b16 %v1089, %v1085
    %v1242 = vpack.c.b16 %v1094, %v1090
    %v1243 = vpack.c.b16 %v1095, %v1091
    %v1244 = vpack.c.b16 %v1096, %v1092
    %v1245 = vpack.c.b16 %v1097, %v1093
    %v1246 = vpack.c.b16 %v1102, %v1098
    %v1247 = vpack.c.b16 %v1103, %v1099
    %v1248 = vpack.c.b16 %v1104, %v1100
    %v1249 = vpack.c.b16 %v1105, %v1101
    %v1250 = vpack.c.b16 %v1110, %v1106
    %v1251 = vpack.c.b16 %v1111, %v1107
    %v1252 = vpack.c.b16 %v1112, %v1108
    %v1253 = vpack.c.b16 %v1113, %v1109
    %v1254 = vpack.c.b16 %v1118, %v1114
    %v1255 = vpack.c.b16 %v1119, %v1115
    %v1256 = vpack.c.b16 %v1120, %v1116
    %v1257 = vpack.c.b16 %v1121, %v1117
    %v1258 = vpack.c.b16 %v1126, %v1122
    %v1259 = vpack.c.b16 %v1127, %v1123
    %v1260 = vpack.c.b16 %v1128, %v1124
    %v1261 = vpack.c.b16 %v1129, %v1125
    %v1262 = vpack.c.b16 %v1134, %v1130
    %v1263 = vpack.c.b16 %v1135, %v1131
    %v1264 = vpack.c.b16 %v1136, %v1132
    %v1265 = vpack.c.b16 %v1137, %v1133
    %1394 = vmatprep.subr.bf16.mxu0 %v1139
    %1395 = vmatpush1.bf16.msra.mxu0 %v1138
    %1396 = vmatprep.subr.bf16.mxu0 %v1143
    %1397 = vmatpush1.bf16.msra.mxu0 %v1142
    %1398 = vmatprep.subr.bf16.mxu0 %v1147
    %1399 = vmatpush1.bf16.msra.mxu0 %v1146
    %1400 = vmatprep.subr.bf16.mxu0 %v1151
    %1401 = vmatpush1.bf16.msra.mxu0 %v1150
    %1402 = vmatprep.subr.bf16.mxu0 %v1155
    %1403 = vmatpush1.bf16.msra.mxu0 %v1154
    %1404 = vmatprep.subr.bf16.mxu0 %v1159
    %1405 = vmatpush1.bf16.msra.mxu0 %v1158
    %1406 = vmatprep.subr.bf16.mxu0 %v1163
    %1407 = vmatpush1.bf16.msra.mxu0 %v1162
    %1408 = vmatprep.subr.bf16.mxu0 %v1167
    %1409 = vmatpush1.bf16.msra.mxu0 %v1166
    %1410 = vmatprep.subr.bf16.mxu0 %v1171
    %1411 = vmatpush1.bf16.msra.mxu0 %v1170
    %1412 = vmatprep.subr.bf16.mxu0 %v1175
    %1413 = vmatpush1.bf16.msra.mxu0 %v1174
    %1414 = vmatprep.subr.bf16.mxu0 %v1179
    %1415 = vmatpush1.bf16.msra.mxu0 %v1178
    %1416 = vmatprep.subr.bf16.mxu0 %v1183
    %1417 = vmatpush1.bf16.msra.mxu0 %v1182
    %1418 = vmatprep.subr.bf16.mxu0 %v1187
    %1419 = vmatpush1.bf16.msra.mxu0 %v1186
    %1420 = vmatprep.subr.bf16.mxu0 %v1191
    %1421 = vmatpush1.bf16.msra.mxu0 %v1190
    %1422 = vmatprep.subr.bf16.mxu0 %v1195
    %1423 = vmatpush1.bf16.msra.mxu0 %v1194
    %1424 = vmatprep.subr.bf16.mxu0 %v1199
    %1425 = vmatpush1.bf16.msra.mxu0 %v1198
    %1426 = vmatprep.mubr.bf16.mxu0 %v739
    %1427 = vmatmul.mubr.bf16.gmra.mrb[0].mxu0 %v738
    %v1428 = vpop.f32.mrb[0].mxu0
    %v1429 = vadd.f32 0.0, %v1428
    %v1430 = vpop.f32.mrb[0].mxu0
    %v1431 = vadd.f32 0.0, %v1430
    %v1432 = vpop.f32.mrb[0].mxu0
    %v1433 = vadd.f32 0.0, %v1432
    %v1434 = vpop.f32.mrb[0].mxu0
    %v1435 = vadd.f32 0.0, %v1434
    %1436 = vmatprep.mubr.bf16.mxu0 %v743
    %1437 = vmatmul.mubr.bf16.gmra.mrb[0].mxu0 %v742
    %v1438 = vpop.f32.mrb[0].mxu0
    %v1439 = vadd.f32 0.0, %v1438
    %v1440 = vpop.f32.mrb[0].mxu0
    %v1441 = vadd.f32 0.0, %v1440
    %v1442 = vpop.f32.mrb[0].mxu0
    %v1443 = vadd.f32 0.0, %v1442
    %v1444 = vpop.f32.mrb[0].mxu0
    %v1445 = vadd.f32 0.0, %v1444
    %1446 = vdwg.mxu0
    %1447 = vmatprep.subr.bf16.mxu0 %v1203
    %1448 = vmatpush1.bf16.msra.mxu0 %v1202
    %1449 = vmatprep.subr.bf16.mxu0 %v1207
    %1450 = vmatpush1.bf16.msra.mxu0 %v1206
    %1451 = vmatprep.subr.bf16.mxu0 %v1211
    %1452 = vmatpush1.bf16.msra.mxu0 %v1210
    %1453 = vmatprep.subr.bf16.mxu0 %v1215
    %1454 = vmatpush1.bf16.msra.mxu0 %v1214
    %1455 = vmatprep.subr.bf16.mxu0 %v1219
    %1456 = vmatpush1.bf16.msra.mxu0 %v1218
    %1457 = vmatprep.subr.bf16.mxu0 %v1223
    %1458 = vmatpush1.bf16.msra.mxu0 %v1222
    %1459 = vmatprep.subr.bf16.mxu0 %v1227
    %1460 = vmatpush1.bf16.msra.mxu0 %v1226
    %1461 = vmatprep.subr.bf16.mxu0 %v1231
    %1462 = vmatpush1.bf16.msra.mxu0 %v1230
    %1463 = vmatprep.subr.bf16.mxu0 %v1235
    %1464 = vmatpush1.bf16.msra.mxu0 %v1234
    %1465 = vmatprep.subr.bf16.mxu0 %v1239
    %1466 = vmatpush1.bf16.msra.mxu0 %v1238
    %1467 = vmatprep.subr.bf16.mxu0 %v1243
    %1468 = vmatpush1.bf16.msra.mxu0 %v1242
    %1469 = vmatprep.subr.bf16.mxu0 %v1247
    %1470 = vmatpush1.bf16.msra.mxu0 %v1246
    %1471 = vmatprep.subr.bf16.mxu0 %v1251
    %1472 = vmatpush1.bf16.msra.mxu0 %v1250
    %1473 = vmatprep.subr.bf16.mxu0 %v1255
    %1474 = vmatpush1.bf16.msra.mxu0 %v1254
    %1475 = vmatprep.subr.bf16.mxu0 %v1259
    %1476 = vmatpush1.bf16.msra.mxu0 %v1258
    %1477 = vmatprep.subr.bf16.mxu0 %v1263
    %1478 = vmatpush1.bf16.msra.mxu0 %v1262
    %1479 = vmatprep.mubr.bf16.mxu0 %v741
    %1480 = vmatmul.mubr.bf16.gmra.mrb[0].mxu0 %v740
    %v1481 = vpop.f32.mrb[0].mxu0
    %v1482 = vadd.f32 %v1429, %v1481
    %v1483 = vpop.f32.mrb[0].mxu0
    %v1484 = vadd.f32 %v1431, %v1483
    %v1485 = vpop.f32.mrb[0].mxu0
    %v1486 = vadd.f32 %v1433, %v1485
    %v1487 = vpop.f32.mrb[0].mxu0
    %v1488 = vadd.f32 %v1435, %v1487
    %1489 = vmatprep.mubr.bf16.mxu0 %v745
    %1490 = vmatmul.mubr.bf16.gmra.mrb[0].mxu0 %v744
    %v1491 = vpop.f32.mrb[0].mxu0
    %v1492 = vadd.f32 %v1439, %v1491
    %v1493 = vpop.f32.mrb[0].mxu0
    %v1494 = vadd.f32 %v1441, %v1493
    %v1495 = vpop.f32.mrb[0].mxu0
    %v1496 = vadd.f32 %v1443, %v1495
    %v1497 = vpop.f32.mrb[0].mxu0
    %v1498 = vadd.f32 %v1445, %v1497
    %1499 = vdwg.mxu0
    %1500 = vmatprep.subr.bf16.mxu0 %v1141
    %1501 = vmatpush1.bf16.msra.mxu0 %v1140
    %1502 = vmatprep.subr.bf16.mxu0 %v1145
    %1503 = vmatpush1.bf16.msra.mxu0 %v1144
    %1504 = vmatprep.subr.bf16.mxu0 %v1149
    %1505 = vmatpush1.bf16.msra.mxu0 %v1148
    %1506 = vmatprep.subr.bf16.mxu0 %v1153
    %1507 = vmatpush1.bf16.msra.mxu0 %v1152
    %1508 = vmatprep.subr.bf16.mxu0 %v1157
    %1509 = vmatpush1.bf16.msra.mxu0 %v1156
    %1510 = vmatprep.subr.bf16.mxu0 %v1161
    %1511 = vmatpush1.bf16.msra.mxu0 %v1160
    %1512 = vmatprep.subr.bf16.mxu0 %v1165
    %1513 = vmatpush1.bf16.msra.mxu0 %v1164
    %1514 = vmatprep.subr.bf16.mxu0 %v1169
    %1515 = vmatpush1.bf16.msra.mxu0 %v1168
    %1516 = vmatprep.subr.bf16.mxu0 %v1173
    %1517 = vmatpush1.bf16.msra.mxu0 %v1172
    %1518 = vmatprep.subr.bf16.mxu0 %v1177
    %1519 = vmatpush1.bf16.msra.mxu0 %v1176
    %1520 = vmatprep.subr.bf16.mxu0 %v1181
    %1521 = vmatpush1.bf16.msra.mxu0 %v1180
    %1522 = vmatprep.subr.bf16.mxu0 %v1185
    %1523 = vmatpush1.bf16.msra.mxu0 %v1184
    %1524 = vmatprep.subr.bf16.mxu0 %v1189
    %1525 = vmatpush1.bf16.msra.mxu0 %v1188
    %1526 = vmatprep.subr.bf16.mxu0 %v1193
    %1527 = vmatpush1.bf16.msra.mxu0 %v1192
    %1528 = vmatprep.subr.bf16.mxu0 %v1197
    %1529 = vmatpush1.bf16.msra.mxu0 %v1196
    %1530 = vmatprep.subr.bf16.mxu0 %v1201
    %1531 = vmatpush1.bf16.msra.mxu0 %v1200
    %1532 = vmatprep.mubr.bf16.mxu0 %v739
    %1533 = vmatmul.mubr.bf16.gmra.mrb[0].mxu0 %v738
    %v1534 = vpop.f32.mrb[0].mxu0
    %v1535 = vadd.f32 0.0, %v1534
    %v1536 = vpop.f32.mrb[0].mxu0
    %v1537 = vadd.f32 0.0, %v1536
    %v1538 = vpop.f32.mrb[0].mxu0
    %v1539 = vadd.f32 0.0, %v1538
    %v1540 = vpop.f32.mrb[0].mxu0
    %v1541 = vadd.f32 0.0, %v1540
    %1542 = vmatprep.mubr.bf16.mxu0 %v743
    %1543 = vmatmul.mubr.bf16.gmra.mrb[0].mxu0 %v742
    %v1544 = vpop.f32.mrb[0].mxu0
    %v1545 = vadd.f32 0.0, %v1544
    %v1546 = vpop.f32.mrb[0].mxu0
    %v1547 = vadd.f32 0.0, %v1546
    %v1548 = vpop.f32.mrb[0].mxu0
    %v1549 = vadd.f32 0.0, %v1548
    %v1550 = vpop.f32.mrb[0].mxu0
    %v1551 = vadd.f32 0.0, %v1550
    %1552 = vdwg.mxu0
    %1553 = vmatprep.subr.bf16.mxu0 %v1205
    %1554 = vmatpush1.bf16.msra.mxu0 %v1204
    %1555 = vmatprep.subr.bf16.mxu0 %v1209
    %1556 = vmatpush1.bf16.msra.mxu0 %v1208
    %1557 = vmatprep.subr.bf16.mxu0 %v1213
    %1558 = vmatpush1.bf16.msra.mxu0 %v1212
    %1559 = vmatprep.subr.bf16.mxu0 %v1217
    %1560 = vmatpush1.bf16.msra.mxu0 %v1216
    %1561 = vmatprep.subr.bf16.mxu0 %v1221
    %1562 = vmatpush1.bf16.msra.mxu0 %v1220
    %1563 = vmatprep.subr.bf16.mxu0 %v1225
    %1564 = vmatpush1.bf16.msra.mxu0 %v1224
    %1565 = vmatprep.subr.bf16.mxu0 %v1229
    %1566 = vmatpush1.bf16.msra.mxu0 %v1228
    %1567 = vmatprep.subr.bf16.mxu0 %v1233
    %1568 = vmatpush1.bf16.msra.mxu0 %v1232
    %1569 = vmatprep.subr.bf16.mxu0 %v1237
    %1570 = vmatpush1.bf16.msra.mxu0 %v1236
    %1571 = vmatprep.subr.bf16.mxu0 %v1241
    %1572 = vmatpush1.bf16.msra.mxu0 %v1240
    %1573 = vmatprep.subr.bf16.mxu0 %v1245
    %1574 = vmatpush1.bf16.msra.mxu0 %v1244
    %1575 = vmatprep.subr.bf16.mxu0 %v1249
    %1576 = vmatpush1.bf16.msra.mxu0 %v1248
    %1577 = vmatprep.subr.bf16.mxu0 %v1253
    %1578 = vmatpush1.bf16.msra.mxu0 %v1252
    %1579 = vmatprep.subr.bf16.mxu0 %v1257
    %1580 = vmatpush1.bf16.msra.mxu0 %v1256
    %1581 = vmatprep.subr.bf16.mxu0 %v1261
    %1582 = vmatpush1.bf16.msra.mxu0 %v1260
    %1583 = vmatprep.subr.bf16.mxu0 %v1265
    %1584 = vmatpush1.bf16.msra.mxu0 %v1264
    %1585 = vmatprep.mubr.bf16.mxu0 %v741
    %1586 = vmatmul.mubr.bf16.gmra.mrb[0].mxu0 %v740
    %v1587 = vpop.f32.mrb[0].mxu0
    %v1588 = vadd.f32 %v1535, %v1587
    %v1589 = vpop.f32.mrb[0].mxu0
    %v1590 = vadd.f32 %v1537, %v1589
    %v1591 = vpop.f32.mrb[0].mxu0
    %v1592 = vadd.f32 %v1539, %v1591
    %v1593 = vpop.f32.mrb[0].mxu0
    %v1594 = vadd.f32 %v1541, %v1593
    %1595 = vmatprep.mubr.bf16.mxu0 %v745
    %1596 = vmatmul.mubr.bf16.gmra.mrb[0].mxu0 %v744
    %v1597 = vpop.f32.mrb[0].mxu0
    %v1598 = vadd.f32 %v1545, %v1597
    %v1599 = vpop.f32.mrb[0].mxu0
    %v1600 = vadd.f32 %v1547, %v1599
    %v1601 = vpop.f32.mrb[0].mxu0
    %v1602 = vadd.f32 %v1549, %v1601
    %v1603 = vpop.f32.mrb[0].mxu0
    %v1604 = vadd.f32 %v1551, %v1603
    %1605 = vdwg.mxu0
    %v1614 = vunpack.c.l.b16 %v354
    %v1615 = vunpack.c.h.b16 %v354
    %v1616 = vunpack.c.l.b16 %v355
    %v1617 = vunpack.c.h.b16 %v355
    %v1618 = vunpack.c.l.b16 %v356
    %v1619 = vunpack.c.h.b16 %v356
    %v1620 = vunpack.c.l.b16 %v357
    %v1621 = vunpack.c.h.b16 %v357
    %v1622 = vunpack.c.l.b16 %v358
    %v1623 = vunpack.c.h.b16 %v358
    %v1624 = vunpack.c.l.b16 %v359
    %v1625 = vunpack.c.h.b16 %v359
    %v1626 = vunpack.c.l.b16 %v360
    %v1627 = vunpack.c.h.b16 %v360
    %v1628 = vunpack.c.l.b16 %v361
    %v1629 = vunpack.c.h.b16 %v361
    %v1630 = vpack.c.b16 %v1618, %v1614
    %v1631 = vpack.c.b16 %v1619, %v1615
    %v1632 = vpack.c.b16 %v1620, %v1616
    %v1633 = vpack.c.b16 %v1621, %v1617
    %v1634 = vpack.c.b16 %v1626, %v1622
    %v1635 = vpack.c.b16 %v1627, %v1623
    %v1636 = vpack.c.b16 %v1628, %v1624
    %v1637 = vpack.c.b16 %v1629, %v1625
    %v1774 = vunpack.c.l.b16 %v362
    %v1775 = vunpack.c.h.b16 %v362
    %v1776 = vunpack.c.l.b16 %v363
    %v1777 = vunpack.c.h.b16 %v363
    %v1778 = vunpack.c.l.b16 %v364
    %v1779 = vunpack.c.h.b16 %v364
    %v1780 = vunpack.c.l.b16 %v365
    %v1781 = vunpack.c.h.b16 %v365
    %v1782 = vunpack.c.l.b16 %v366
    %v1783 = vunpack.c.h.b16 %v366
    %v1784 = vunpack.c.l.b16 %v367
    %v1785 = vunpack.c.h.b16 %v367
    %v1786 = vunpack.c.l.b16 %v368
    %v1787 = vunpack.c.h.b16 %v368
    %v1788 = vunpack.c.l.b16 %v369
    %v1789 = vunpack.c.h.b16 %v369
    %v1790 = vunpack.c.l.b16 %v370
    %v1791 = vunpack.c.h.b16 %v370
    %v1792 = vunpack.c.l.b16 %v371
    %v1793 = vunpack.c.h.b16 %v371
    %v1794 = vunpack.c.l.b16 %v372
    %v1795 = vunpack.c.h.b16 %v372
    %v1796 = vunpack.c.l.b16 %v373
    %v1797 = vunpack.c.h.b16 %v373
    %v1798 = vunpack.c.l.b16 %v374
    %v1799 = vunpack.c.h.b16 %v374
    %v1800 = vunpack.c.l.b16 %v375
    %v1801 = vunpack.c.h.b16 %v375
    %v1802 = vunpack.c.l.b16 %v376
    %v1803 = vunpack.c.h.b16 %v376
    %v1804 = vunpack.c.l.b16 %v377
    %v1805 = vunpack.c.h.b16 %v377
    %v1806 = vunpack.c.l.b16 %v378
    %v1807 = vunpack.c.h.b16 %v378
    %v1808 = vunpack.c.l.b16 %v379
    %v1809 = vunpack.c.h.b16 %v379
    %v1810 = vunpack.c.l.b16 %v380
    %v1811 = vunpack.c.h.b16 %v380
    %v1812 = vunpack.c.l.b16 %v381
    %v1813 = vunpack.c.h.b16 %v381
    %v1814 = vunpack.c.l.b16 %v382
    %v1815 = vunpack.c.h.b16 %v382
    %v1816 = vunpack.c.l.b16 %v383
    %v1817 = vunpack.c.h.b16 %v383
    %v1818 = vunpack.c.l.b16 %v384
    %v1819 = vunpack.c.h.b16 %v384
    %v1820 = vunpack.c.l.b16 %v385
    %v1821 = vunpack.c.h.b16 %v385
    %v1822 = vunpack.c.l.b16 %v386
    %v1823 = vunpack.c.h.b16 %v386
    %v1824 = vunpack.c.l.b16 %v387
    %v1825 = vunpack.c.h.b16 %v387
    %v1826 = vunpack.c.l.b16 %v388
    %v1827 = vunpack.c.h.b16 %v388
    %v1828 = vunpack.c.l.b16 %v389
    %v1829 = vunpack.c.h.b16 %v389
    %v1830 = vunpack.c.l.b16 %v390
    %v1831 = vunpack.c.h.b16 %v390
    %v1832 = vunpack.c.l.b16 %v391
    %v1833 = vunpack.c.h.b16 %v391
    %v1834 = vunpack.c.l.b16 %v392
    %v1835 = vunpack.c.h.b16 %v392
    %v1836 = vunpack.c.l.b16 %v393
    %v1837 = vunpack.c.h.b16 %v393
    %v1838 = vunpack.c.l.b16 %v394
    %v1839 = vunpack.c.h.b16 %v394
    %v1840 = vunpack.c.l.b16 %v395
    %v1841 = vunpack.c.h.b16 %v395
    %v1842 = vunpack.c.l.b16 %v396
    %v1843 = vunpack.c.h.b16 %v396
    %v1844 = vunpack.c.l.b16 %v397
    %v1845 = vunpack.c.h.b16 %v397
    %v1846 = vunpack.c.l.b16 %v398
    %v1847 = vunpack.c.h.b16 %v398
    %v1848 = vunpack.c.l.b16 %v399
    %v1849 = vunpack.c.h.b16 %v399
    %v1850 = vunpack.c.l.b16 %v400
    %v1851 = vunpack.c.h.b16 %v400
    %v1852 = vunpack.c.l.b16 %v401
    %v1853 = vunpack.c.h.b16 %v401
    %v1854 = vunpack.c.l.b16 %v402
    %v1855 = vunpack.c.h.b16 %v402
    %v1856 = vunpack.c.l.b16 %v403
    %v1857 = vunpack.c.h.b16 %v403
    %v1858 = vunpack.c.l.b16 %v404
    %v1859 = vunpack.c.h.b16 %v404
    %v1860 = vunpack.c.l.b16 %v405
    %v1861 = vunpack.c.h.b16 %v405
    %v1862 = vunpack.c.l.b16 %v406
    %v1863 = vunpack.c.h.b16 %v406
    %v1864 = vunpack.c.l.b16 %v407
    %v1865 = vunpack.c.h.b16 %v407
    %v1866 = vunpack.c.l.b16 %v408
    %v1867 = vunpack.c.h.b16 %v408
    %v1868 = vunpack.c.l.b16 %v409
    %v1869 = vunpack.c.h.b16 %v409
    %v1870 = vunpack.c.l.b16 %v410
    %v1871 = vunpack.c.h.b16 %v410
    %v1872 = vunpack.c.l.b16 %v411
    %v1873 = vunpack.c.h.b16 %v411
    %v1874 = vunpack.c.l.b16 %v412
    %v1875 = vunpack.c.h.b16 %v412
    %v1876 = vunpack.c.l.b16 %v413
    %v1877 = vunpack.c.h.b16 %v413
    %v1878 = vunpack.c.l.b16 %v414
    %v1879 = vunpack.c.h.b16 %v414
    %v1880 = vunpack.c.l.b16 %v415
    %v1881 = vunpack.c.h.b16 %v415
    %v1882 = vunpack.c.l.b16 %v416
    %v1883 = vunpack.c.h.b16 %v416
    %v1884 = vunpack.c.l.b16 %v417
    %v1885 = vunpack.c.h.b16 %v417
    %v1886 = vunpack.c.l.b16 %v418
    %v1887 = vunpack.c.h.b16 %v418
    %v1888 = vunpack.c.l.b16 %v419
    %v1889 = vunpack.c.h.b16 %v419
    %v1890 = vunpack.c.l.b16 %v420
    %v1891 = vunpack.c.h.b16 %v420
    %v1892 = vunpack.c.l.b16 %v421
    %v1893 = vunpack.c.h.b16 %v421
    %v1894 = vunpack.c.l.b16 %v422
    %v1895 = vunpack.c.h.b16 %v422
    %v1896 = vunpack.c.l.b16 %v423
    %v1897 = vunpack.c.h.b16 %v423
    %v1898 = vunpack.c.l.b16 %v424
    %v1899 = vunpack.c.h.b16 %v424
    %v1900 = vunpack.c.l.b16 %v425
    %v1901 = vunpack.c.h.b16 %v425
    %v1902 = vunpack.c.l.b16 %v426
    %v1903 = vunpack.c.h.b16 %v426
    %v1904 = vunpack.c.l.b16 %v427
    %v1905 = vunpack.c.h.b16 %v427
    %v1906 = vunpack.c.l.b16 %v428
    %v1907 = vunpack.c.h.b16 %v428
    %v1908 = vunpack.c.l.b16 %v429
    %v1909 = vunpack.c.h.b16 %v429
    %v1910 = vunpack.c.l.b16 %v430
    %v1911 = vunpack.c.h.b16 %v430
    %v1912 = vunpack.c.l.b16 %v431
    %v1913 = vunpack.c.h.b16 %v431
    %v1914 = vunpack.c.l.b16 %v432
    %v1915 = vunpack.c.h.b16 %v432
    %v1916 = vunpack.c.l.b16 %v433
    %v1917 = vunpack.c.h.b16 %v433
    %v1918 = vunpack.c.l.b16 %v434
    %v1919 = vunpack.c.h.b16 %v434
    %v1920 = vunpack.c.l.b16 %v435
    %v1921 = vunpack.c.h.b16 %v435
    %v1922 = vunpack.c.l.b16 %v436
    %v1923 = vunpack.c.h.b16 %v436
    %v1924 = vunpack.c.l.b16 %v437
    %v1925 = vunpack.c.h.b16 %v437
    %v1926 = vunpack.c.l.b16 %v438
    %v1927 = vunpack.c.h.b16 %v438
    %v1928 = vunpack.c.l.b16 %v439
    %v1929 = vunpack.c.h.b16 %v439
    %v1930 = vunpack.c.l.b16 %v440
    %v1931 = vunpack.c.h.b16 %v440
    %v1932 = vunpack.c.l.b16 %v441
    %v1933 = vunpack.c.h.b16 %v441
    %v1934 = vunpack.c.l.b16 %v442
    %v1935 = vunpack.c.h.b16 %v442
    %v1936 = vunpack.c.l.b16 %v443
    %v1937 = vunpack.c.h.b16 %v443
    %v1938 = vunpack.c.l.b16 %v444
    %v1939 = vunpack.c.h.b16 %v444
    %v1940 = vunpack.c.l.b16 %v445
    %v1941 = vunpack.c.h.b16 %v445
    %v1942 = vunpack.c.l.b16 %v446
    %v1943 = vunpack.c.h.b16 %v446
    %v1944 = vunpack.c.l.b16 %v447
    %v1945 = vunpack.c.h.b16 %v447
    %v1946 = vunpack.c.l.b16 %v448
    %v1947 = vunpack.c.h.b16 %v448
    %v1948 = vunpack.c.l.b16 %v449
    %v1949 = vunpack.c.h.b16 %v449
    %v1950 = vunpack.c.l.b16 %v450
    %v1951 = vunpack.c.h.b16 %v450
    %v1952 = vunpack.c.l.b16 %v451
    %v1953 = vunpack.c.h.b16 %v451
    %v1954 = vunpack.c.l.b16 %v452
    %v1955 = vunpack.c.h.b16 %v452
    %v1956 = vunpack.c.l.b16 %v453
    %v1957 = vunpack.c.h.b16 %v453
    %v1958 = vunpack.c.l.b16 %v454
    %v1959 = vunpack.c.h.b16 %v454
    %v1960 = vunpack.c.l.b16 %v455
    %v1961 = vunpack.c.h.b16 %v455
    %v1962 = vunpack.c.l.b16 %v456
    %v1963 = vunpack.c.h.b16 %v456
    %v1964 = vunpack.c.l.b16 %v457
    %v1965 = vunpack.c.h.b16 %v457
    %v1966 = vunpack.c.l.b16 %v458
    %v1967 = vunpack.c.h.b16 %v458
    %v1968 = vunpack.c.l.b16 %v459
    %v1969 = vunpack.c.h.b16 %v459
    %v1970 = vunpack.c.l.b16 %v460
    %v1971 = vunpack.c.h.b16 %v460
    %v1972 = vunpack.c.l.b16 %v461
    %v1973 = vunpack.c.h.b16 %v461
    %v1974 = vunpack.c.l.b16 %v462
    %v1975 = vunpack.c.h.b16 %v462
    %v1976 = vunpack.c.l.b16 %v463
    %v1977 = vunpack.c.h.b16 %v463
    %v1978 = vunpack.c.l.b16 %v464
    %v1979 = vunpack.c.h.b16 %v464
    %v1980 = vunpack.c.l.b16 %v465
    %v1981 = vunpack.c.h.b16 %v465
    %v1982 = vunpack.c.l.b16 %v466
    %v1983 = vunpack.c.h.b16 %v466
    %v1984 = vunpack.c.l.b16 %v467
    %v1985 = vunpack.c.h.b16 %v467
    %v1986 = vunpack.c.l.b16 %v468
    %v1987 = vunpack.c.h.b16 %v468
    %v1988 = vunpack.c.l.b16 %v469
    %v1989 = vunpack.c.h.b16 %v469
    %v1990 = vunpack.c.l.b16 %v470
    %v1991 = vunpack.c.h.b16 %v470
    %v1992 = vunpack.c.l.b16 %v471
    %v1993 = vunpack.c.h.b16 %v471
    %v1994 = vunpack.c.l.b16 %v472
    %v1995 = vunpack.c.h.b16 %v472
    %v1996 = vunpack.c.l.b16 %v473
    %v1997 = vunpack.c.h.b16 %v473
    %v1998 = vunpack.c.l.b16 %v474
    %v1999 = vunpack.c.h.b16 %v474
    %v2000 = vunpack.c.l.b16 %v475
    %v2001 = vunpack.c.h.b16 %v475
    %v2002 = vunpack.c.l.b16 %v476
    %v2003 = vunpack.c.h.b16 %v476
    %v2004 = vunpack.c.l.b16 %v477
    %v2005 = vunpack.c.h.b16 %v477
    %v2006 = vunpack.c.l.b16 %v478
    %v2007 = vunpack.c.h.b16 %v478
    %v2008 = vunpack.c.l.b16 %v479
    %v2009 = vunpack.c.h.b16 %v479
    %v2010 = vunpack.c.l.b16 %v480
    %v2011 = vunpack.c.h.b16 %v480
    %v2012 = vunpack.c.l.b16 %v481
    %v2013 = vunpack.c.h.b16 %v481
    %v2014 = vunpack.c.l.b16 %v482
    %v2015 = vunpack.c.h.b16 %v482
    %v2016 = vunpack.c.l.b16 %v483
    %v2017 = vunpack.c.h.b16 %v483
    %v2018 = vunpack.c.l.b16 %v484
    %v2019 = vunpack.c.h.b16 %v484
    %v2020 = vunpack.c.l.b16 %v485
    %v2021 = vunpack.c.h.b16 %v485
    %v2022 = vunpack.c.l.b16 %v486
    %v2023 = vunpack.c.h.b16 %v486
    %v2024 = vunpack.c.l.b16 %v487
    %v2025 = vunpack.c.h.b16 %v487
    %v2026 = vunpack.c.l.b16 %v488
    %v2027 = vunpack.c.h.b16 %v488
    %v2028 = vunpack.c.l.b16 %v489
    %v2029 = vunpack.c.h.b16 %v489
    %v2030 = vpack.c.b16 %v1778, %v1774
    %v2031 = vpack.c.b16 %v1779, %v1775
    %v2032 = vpack.c.b16 %v1780, %v1776
    %v2033 = vpack.c.b16 %v1781, %v1777
    %v2034 = vpack.c.b16 %v1786, %v1782
    %v2035 = vpack.c.b16 %v1787, %v1783
    %v2036 = vpack.c.b16 %v1788, %v1784
    %v2037 = vpack.c.b16 %v1789, %v1785
    %v2038 = vpack.c.b16 %v1794, %v1790
    %v2039 = vpack.c.b16 %v1795, %v1791
    %v2040 = vpack.c.b16 %v1796, %v1792
    %v2041 = vpack.c.b16 %v1797, %v1793
    %v2042 = vpack.c.b16 %v1802, %v1798
    %v2043 = vpack.c.b16 %v1803, %v1799
    %v2044 = vpack.c.b16 %v1804, %v1800
    %v2045 = vpack.c.b16 %v1805, %v1801
    %v2046 = vpack.c.b16 %v1810, %v1806
    %v2047 = vpack.c.b16 %v1811, %v1807
    %v2048 = vpack.c.b16 %v1812, %v1808
    %v2049 = vpack.c.b16 %v1813, %v1809
    %v2050 = vpack.c.b16 %v1818, %v1814
    %v2051 = vpack.c.b16 %v1819, %v1815
    %v2052 = vpack.c.b16 %v1820, %v1816
    %v2053 = vpack.c.b16 %v1821, %v1817
    %v2054 = vpack.c.b16 %v1826, %v1822
    %v2055 = vpack.c.b16 %v1827, %v1823
    %v2056 = vpack.c.b16 %v1828, %v1824
    %v2057 = vpack.c.b16 %v1829, %v1825
    %v2058 = vpack.c.b16 %v1834, %v1830
    %v2059 = vpack.c.b16 %v1835, %v1831
    %v2060 = vpack.c.b16 %v1836, %v1832
    %v2061 = vpack.c.b16 %v1837, %v1833
    %v2062 = vpack.c.b16 %v1842, %v1838
    %v2063 = vpack.c.b16 %v1843, %v1839
    %v2064 = vpack.c.b16 %v1844, %v1840
    %v2065 = vpack.c.b16 %v1845, %v1841
    %v2066 = vpack.c.b16 %v1850, %v1846
    %v2067 = vpack.c.b16 %v1851, %v1847
    %v2068 = vpack.c.b16 %v1852, %v1848
    %v2069 = vpack.c.b16 %v1853, %v1849
    %v2070 = vpack.c.b16 %v1858, %v1854
    %v2071 = vpack.c.b16 %v1859, %v1855
    %v2072 = vpack.c.b16 %v1860, %v1856
    %v2073 = vpack.c.b16 %v1861, %v1857
    %v2074 = vpack.c.b16 %v1866, %v1862
    %v2075 = vpack.c.b16 %v1867, %v1863
    %v2076 = vpack.c.b16 %v1868, %v1864
    %v2077 = vpack.c.b16 %v1869, %v1865
    %v2078 = vpack.c.b16 %v1874, %v1870
    %v2079 = vpack.c.b16 %v1875, %v1871
    %v2080 = vpack.c.b16 %v1876, %v1872
    %v2081 = vpack.c.b16 %v1877, %v1873
    %v2082 = vpack.c.b16 %v1882, %v1878
    %v2083 = vpack.c.b16 %v1883, %v1879
    %v2084 = vpack.c.b16 %v1884, %v1880
    %v2085 = vpack.c.b16 %v1885, %v1881
    %v2086 = vpack.c.b16 %v1890, %v1886
    %v2087 = vpack.c.b16 %v1891, %v1887
    %v2088 = vpack.c.b16 %v1892, %v1888
    %v2089 = vpack.c.b16 %v1893, %v1889
    %v2090 = vpack.c.b16 %v1898, %v1894
    %v2091 = vpack.c.b16 %v1899, %v1895
    %v2092 = vpack.c.b16 %v1900, %v1896
    %v2093 = vpack.c.b16 %v1901, %v1897
    %v2094 = vpack.c.b16 %v1906, %v1902
    %v2095 = vpack.c.b16 %v1907, %v1903
    %v2096 = vpack.c.b16 %v1908, %v1904
    %v2097 = vpack.c.b16 %v1909, %v1905
    %v2098 = vpack.c.b16 %v1914, %v1910
    %v2099 = vpack.c.b16 %v1915, %v1911
    %v2100 = vpack.c.b16 %v1916, %v1912
    %v2101 = vpack.c.b16 %v1917, %v1913
    %v2102 = vpack.c.b16 %v1922, %v1918
    %v2103 = vpack.c.b16 %v1923, %v1919
    %v2104 = vpack.c.b16 %v1924, %v1920
    %v2105 = vpack.c.b16 %v1925, %v1921
    %v2106 = vpack.c.b16 %v1930, %v1926
    %v2107 = vpack.c.b16 %v1931, %v1927
    %v2108 = vpack.c.b16 %v1932, %v1928
    %v2109 = vpack.c.b16 %v1933, %v1929
    %v2110 = vpack.c.b16 %v1938, %v1934
    %v2111 = vpack.c.b16 %v1939, %v1935
    %v2112 = vpack.c.b16 %v1940, %v1936
    %v2113 = vpack.c.b16 %v1941, %v1937
    %v2114 = vpack.c.b16 %v1946, %v1942
    %v2115 = vpack.c.b16 %v1947, %v1943
    %v2116 = vpack.c.b16 %v1948, %v1944
    %v2117 = vpack.c.b16 %v1949, %v1945
    %v2118 = vpack.c.b16 %v1954, %v1950
    %v2119 = vpack.c.b16 %v1955, %v1951
    %v2120 = vpack.c.b16 %v1956, %v1952
    %v2121 = vpack.c.b16 %v1957, %v1953
    %v2122 = vpack.c.b16 %v1962, %v1958
    %v2123 = vpack.c.b16 %v1963, %v1959
    %v2124 = vpack.c.b16 %v1964, %v1960
    %v2125 = vpack.c.b16 %v1965, %v1961
    %v2126 = vpack.c.b16 %v1970, %v1966
    %v2127 = vpack.c.b16 %v1971, %v1967
    %v2128 = vpack.c.b16 %v1972, %v1968
    %v2129 = vpack.c.b16 %v1973, %v1969
    %v2130 = vpack.c.b16 %v1978, %v1974
    %v2131 = vpack.c.b16 %v1979, %v1975
    %v2132 = vpack.c.b16 %v1980, %v1976
    %v2133 = vpack.c.b16 %v1981, %v1977
    %v2134 = vpack.c.b16 %v1986, %v1982
    %v2135 = vpack.c.b16 %v1987, %v1983
    %v2136 = vpack.c.b16 %v1988, %v1984
    %v2137 = vpack.c.b16 %v1989, %v1985
    %v2138 = vpack.c.b16 %v1994, %v1990
    %v2139 = vpack.c.b16 %v1995, %v1991
    %v2140 = vpack.c.b16 %v1996, %v1992
    %v2141 = vpack.c.b16 %v1997, %v1993
    %v2142 = vpack.c.b16 %v2002, %v1998
    %v2143 = vpack.c.b16 %v2003, %v1999
    %v2144 = vpack.c.b16 %v2004, %v2000
    %v2145 = vpack.c.b16 %v2005, %v2001
    %v2146 = vpack.c.b16 %v2010, %v2006
    %v2147 = vpack.c.b16 %v2011, %v2007
    %v2148 = vpack.c.b16 %v2012, %v2008
    %v2149 = vpack.c.b16 %v2013, %v2009
    %v2150 = vpack.c.b16 %v2018, %v2014
    %v2151 = vpack.c.b16 %v2019, %v2015
    %v2152 = vpack.c.b16 %v2020, %v2016
    %v2153 = vpack.c.b16 %v2021, %v2017
    %v2154 = vpack.c.b16 %v2026, %v2022
    %v2155 = vpack.c.b16 %v2027, %v2023
    %v2156 = vpack.c.b16 %v2028, %v2024
    %v2157 = vpack.c.b16 %v2029, %v2025
    %2286 = vmatprep.subr.bf16.mxu0 %v2031
    %2287 = vmatpush1.bf16.msra.mxu0 %v2030
    %2288 = vmatprep.subr.bf16.mxu0 %v2035
    %2289 = vmatpush1.bf16.msra.mxu0 %v2034
    %2290 = vmatprep.subr.bf16.mxu0 %v2039
    %2291 = vmatpush1.bf16.msra.mxu0 %v2038
    %2292 = vmatprep.subr.bf16.mxu0 %v2043
    %2293 = vmatpush1.bf16.msra.mxu0 %v2042
    %2294 = vmatprep.subr.bf16.mxu0 %v2047
    %2295 = vmatpush1.bf16.msra.mxu0 %v2046
    %2296 = vmatprep.subr.bf16.mxu0 %v2051
    %2297 = vmatpush1.bf16.msra.mxu0 %v2050
    %2298 = vmatprep.subr.bf16.mxu0 %v2055
    %2299 = vmatpush1.bf16.msra.mxu0 %v2054
    %2300 = vmatprep.subr.bf16.mxu0 %v2059
    %2301 = vmatpush1.bf16.msra.mxu0 %v2058
    %2302 = vmatprep.subr.bf16.mxu0 %v2063
    %2303 = vmatpush1.bf16.msra.mxu0 %v2062
    %2304 = vmatprep.subr.bf16.mxu0 %v2067
    %2305 = vmatpush1.bf16.msra.mxu0 %v2066
    %2306 = vmatprep.subr.bf16.mxu0 %v2071
    %2307 = vmatpush1.bf16.msra.mxu0 %v2070
    %2308 = vmatprep.subr.bf16.mxu0 %v2075
    %2309 = vmatpush1.bf16.msra.mxu0 %v2074
    %2310 = vmatprep.subr.bf16.mxu0 %v2079
    %2311 = vmatpush1.bf16.msra.mxu0 %v2078
    %2312 = vmatprep.subr.bf16.mxu0 %v2083
    %2313 = vmatpush1.bf16.msra.mxu0 %v2082
    %2314 = vmatprep.subr.bf16.mxu0 %v2087
    %2315 = vmatpush1.bf16.msra.mxu0 %v2086
    %2316 = vmatprep.subr.bf16.mxu0 %v2091
    %2317 = vmatpush1.bf16.msra.mxu0 %v2090
    %2318 = vmatprep.mubr.bf16.mxu0 %v1631
    %2319 = vmatmul.mubr.bf16.gmra.mrb[0].mxu0 %v1630
    %v2320 = vpop.f32.mrb[0].mxu0
    %v2321 = vadd.f32 %v1482, %v2320
    %v2322 = vpop.f32.mrb[0].mxu0
    %v2323 = vadd.f32 %v1484, %v2322
    %v2324 = vpop.f32.mrb[0].mxu0
    %v2325 = vadd.f32 %v1486, %v2324
    %v2326 = vpop.f32.mrb[0].mxu0
    %v2327 = vadd.f32 %v1488, %v2326
    %2328 = vmatprep.mubr.bf16.mxu0 %v1635
    %2329 = vmatmul.mubr.bf16.gmra.mrb[0].mxu0 %v1634
    %v2330 = vpop.f32.mrb[0].mxu0
    %v2331 = vadd.f32 %v1492, %v2330
    %v2332 = vpop.f32.mrb[0].mxu0
    %v2333 = vadd.f32 %v1494, %v2332
    %v2334 = vpop.f32.mrb[0].mxu0
    %v2335 = vadd.f32 %v1496, %v2334
    %v2336 = vpop.f32.mrb[0].mxu0
    %v2337 = vadd.f32 %v1498, %v2336
    %2338 = vdwg.mxu0
    %2339 = vmatprep.subr.bf16.mxu0 %v2095
    %2340 = vmatpush1.bf16.msra.mxu0 %v2094
    %2341 = vmatprep.subr.bf16.mxu0 %v2099
    %2342 = vmatpush1.bf16.msra.mxu0 %v2098
    %2343 = vmatprep.subr.bf16.mxu0 %v2103
    %2344 = vmatpush1.bf16.msra.mxu0 %v2102
    %2345 = vmatprep.subr.bf16.mxu0 %v2107
    %2346 = vmatpush1.bf16.msra.mxu0 %v2106
    %2347 = vmatprep.subr.bf16.mxu0 %v2111
    %2348 = vmatpush1.bf16.msra.mxu0 %v2110
    %2349 = vmatprep.subr.bf16.mxu0 %v2115
    %2350 = vmatpush1.bf16.msra.mxu0 %v2114
    %2351 = vmatprep.subr.bf16.mxu0 %v2119
    %2352 = vmatpush1.bf16.msra.mxu0 %v2118
    %2353 = vmatprep.subr.bf16.mxu0 %v2123
    %2354 = vmatpush1.bf16.msra.mxu0 %v2122
    %2355 = vmatprep.subr.bf16.mxu0 %v2127
    %2356 = vmatpush1.bf16.msra.mxu0 %v2126
    %2357 = vmatprep.subr.bf16.mxu0 %v2131
    %2358 = vmatpush1.bf16.msra.mxu0 %v2130
    %2359 = vmatprep.subr.bf16.mxu0 %v2135
    %2360 = vmatpush1.bf16.msra.mxu0 %v2134
    %2361 = vmatprep.subr.bf16.mxu0 %v2139
    %2362 = vmatpush1.bf16.msra.mxu0 %v2138
    %2363 = vmatprep.subr.bf16.mxu0 %v2143
    %2364 = vmatpush1.bf16.msra.mxu0 %v2142
    %2365 = vmatprep.subr.bf16.mxu0 %v2147
    %2366 = vmatpush1.bf16.msra.mxu0 %v2146
    %2367 = vmatprep.subr.bf16.mxu0 %v2151
    %2368 = vmatpush1.bf16.msra.mxu0 %v2150
    %2369 = vmatprep.subr.bf16.mxu0 %v2155
    %2370 = vmatpush1.bf16.msra.mxu0 %v2154
    %2371 = vmatprep.mubr.bf16.mxu0 %v1633
    %2372 = vmatmul.mubr.bf16.gmra.mrb[0].mxu0 %v1632
    %v2373 = vpop.f32.mrb[0].mxu0
    %v2374 = vadd.f32 %v2321, %v2373
    %v2375 = vpop.f32.mrb[0].mxu0
    %v2376 = vadd.f32 %v2323, %v2375
    %v2377 = vpop.f32.mrb[0].mxu0
    %v2378 = vadd.f32 %v2325, %v2377
    %v2379 = vpop.f32.mrb[0].mxu0
    %v2380 = vadd.f32 %v2327, %v2379
    %2381 = vmatprep.mubr.bf16.mxu0 %v1637
    %2382 = vmatmul.mubr.bf16.gmra.mrb[0].mxu0 %v1636
    %v2383 = vpop.f32.mrb[0].mxu0
    %v2384 = vadd.f32 %v2331, %v2383
    %v2385 = vpop.f32.mrb[0].mxu0
    %v2386 = vadd.f32 %v2333, %v2385
    %v2387 = vpop.f32.mrb[0].mxu0
    %v2388 = vadd.f32 %v2335, %v2387
    %v2389 = vpop.f32.mrb[0].mxu0
    %v2390 = vadd.f32 %v2337, %v2389
    %2391 = vdwg.mxu0
    %2392 = vmatprep.subr.bf16.mxu0 %v2033
    %2393 = vmatpush1.bf16.msra.mxu0 %v2032
    %2394 = vmatprep.subr.bf16.mxu0 %v2037
    %2395 = vmatpush1.bf16.msra.mxu0 %v2036
    %2396 = vmatprep.subr.bf16.mxu0 %v2041
    %2397 = vmatpush1.bf16.msra.mxu0 %v2040
    %2398 = vmatprep.subr.bf16.mxu0 %v2045
    %2399 = vmatpush1.bf16.msra.mxu0 %v2044
    %2400 = vmatprep.subr.bf16.mxu0 %v2049
    %2401 = vmatpush1.bf16.msra.mxu0 %v2048
    %2402 = vmatprep.subr.bf16.mxu0 %v2053
    %2403 = vmatpush1.bf16.msra.mxu0 %v2052
    %2404 = vmatprep.subr.bf16.mxu0 %v2057
    %2405 = vmatpush1.bf16.msra.mxu0 %v2056
    %2406 = vmatprep.subr.bf16.mxu0 %v2061
    %2407 = vmatpush1.bf16.msra.mxu0 %v2060
    %2408 = vmatprep.subr.bf16.mxu0 %v2065
    %2409 = vmatpush1.bf16.msra.mxu0 %v2064
    %2410 = vmatprep.subr.bf16.mxu0 %v2069
    %2411 = vmatpush1.bf16.msra.mxu0 %v2068
    %2412 = vmatprep.subr.bf16.mxu0 %v2073
    %2413 = vmatpush1.bf16.msra.mxu0 %v2072
    %2414 = vmatprep.subr.bf16.mxu0 %v2077
    %2415 = vmatpush1.bf16.msra.mxu0 %v2076
    %2416 = vmatprep.subr.bf16.mxu0 %v2081
    %2417 = vmatpush1.bf16.msra.mxu0 %v2080
    %2418 = vmatprep.subr.bf16.mxu0 %v2085
    %2419 = vmatpush1.bf16.msra.mxu0 %v2084
    %2420 = vmatprep.subr.bf16.mxu0 %v2089
    %2421 = vmatpush1.bf16.msra.mxu0 %v2088
    %2422 = vmatprep.subr.bf16.mxu0 %v2093
    %2423 = vmatpush1.bf16.msra.mxu0 %v2092
    %2424 = vmatprep.mubr.bf16.mxu0 %v1631
    %2425 = vmatmul.mubr.bf16.gmra.mrb[0].mxu0 %v1630
    %v2426 = vpop.f32.mrb[0].mxu0
    %v2427 = vadd.f32 %v1588, %v2426
    %v2428 = vpop.f32.mrb[0].mxu0
    %v2429 = vadd.f32 %v1590, %v2428
    %v2430 = vpop.f32.mrb[0].mxu0
    %v2431 = vadd.f32 %v1592, %v2430
    %v2432 = vpop.f32.mrb[0].mxu0
    %v2433 = vadd.f32 %v1594, %v2432
    %2434 = vmatprep.mubr.bf16.mxu0 %v1635
    %2435 = vmatmul.mubr.bf16.gmra.mrb[0].mxu0 %v1634
    %v2436 = vpop.f32.mrb[0].mxu0
    %v2437 = vadd.f32 %v1598, %v2436
    %v2438 = vpop.f32.mrb[0].mxu0
    %v2439 = vadd.f32 %v1600, %v2438
    %v2440 = vpop.f32.mrb[0].mxu0
    %v2441 = vadd.f32 %v1602, %v2440
    %v2442 = vpop.f32.mrb[0].mxu0
    %v2443 = vadd.f32 %v1604, %v2442
    %2444 = vdwg.mxu0
    %2445 = vmatprep.subr.bf16.mxu0 %v2097
    %2446 = vmatpush1.bf16.msra.mxu0 %v2096
    %2447 = vmatprep.subr.bf16.mxu0 %v2101
    %2448 = vmatpush1.bf16.msra.mxu0 %v2100
    %2449 = vmatprep.subr.bf16.mxu0 %v2105
    %2450 = vmatpush1.bf16.msra.mxu0 %v2104
    %2451 = vmatprep.subr.bf16.mxu0 %v2109
    %2452 = vmatpush1.bf16.msra.mxu0 %v2108
    %2453 = vmatprep.subr.bf16.mxu0 %v2113
    %2454 = vmatpush1.bf16.msra.mxu0 %v2112
    %2455 = vmatprep.subr.bf16.mxu0 %v2117
    %2456 = vmatpush1.bf16.msra.mxu0 %v2116
    %2457 = vmatprep.subr.bf16.mxu0 %v2121
    %2458 = vmatpush1.bf16.msra.mxu0 %v2120
    %2459 = vmatprep.subr.bf16.mxu0 %v2125
    %2460 = vmatpush1.bf16.msra.mxu0 %v2124
    %2461 = vmatprep.subr.bf16.mxu0 %v2129
    %2462 = vmatpush1.bf16.msra.mxu0 %v2128
    %2463 = vmatprep.subr.bf16.mxu0 %v2133
    %2464 = vmatpush1.bf16.msra.mxu0 %v2132
    %2465 = vmatprep.subr.bf16.mxu0 %v2137
    %2466 = vmatpush1.bf16.msra.mxu0 %v2136
    %2467 = vmatprep.subr.bf16.mxu0 %v2141
    %2468 = vmatpush1.bf16.msra.mxu0 %v2140
    %2469 = vmatprep.subr.bf16.mxu0 %v2145
    %2470 = vmatpush1.bf16.msra.mxu0 %v2144
    %2471 = vmatprep.subr.bf16.mxu0 %v2149
    %2472 = vmatpush1.bf16.msra.mxu0 %v2148
    %2473 = vmatprep.subr.bf16.mxu0 %v2153
    %2474 = vmatpush1.bf16.msra.mxu0 %v2152
    %2475 = vmatprep.subr.bf16.mxu0 %v2157
    %2476 = vmatpush1.bf16.msra.mxu0 %v2156
    %2477 = vmatprep.mubr.bf16.mxu0 %v1633
    %2478 = vmatmul.mubr.bf16.gmra.mrb[0].mxu0 %v1632
    %v2479 = vpop.f32.mrb[0].mxu0
    %v2480 = vadd.f32 %v2427, %v2479
    %v2481 = vpop.f32.mrb[0].mxu0
    %v2482 = vadd.f32 %v2429, %v2481
    %v2483 = vpop.f32.mrb[0].mxu0
    %v2484 = vadd.f32 %v2431, %v2483
    %v2485 = vpop.f32.mrb[0].mxu0
    %v2486 = vadd.f32 %v2433, %v2485
    %2487 = vmatprep.mubr.bf16.mxu0 %v1637
    %2488 = vmatmul.mubr.bf16.gmra.mrb[0].mxu0 %v1636
    %v2489 = vpop.f32.mrb[0].mxu0
    %v2490 = vadd.f32 %v2437, %v2489
    %v2491 = vpop.f32.mrb[0].mxu0
    %v2492 = vadd.f32 %v2439, %v2491
    %v2493 = vpop.f32.mrb[0].mxu0
    %v2494 = vadd.f32 %v2441, %v2493
    %v2495 = vpop.f32.mrb[0].mxu0
    %v2496 = vadd.f32 %v2443, %v2495
    %2497 = vdwg.mxu0
    %v2498 = vld [vmem:[#allocation2] sm:$0xee]
    %v2499 = vld [vmem:[#allocation2 + $0x8] sm:$0xee]
    %v2500 = vld [vmem:[#allocation2 + $0x30] sm:$0xee]
    %v2501 = vld [vmem:[#allocation2 + $0x38] sm:$0xee]
    %vm2510 = vcmask 1042432
    %vm2511 = vcmask 1046532
    %vm2512 = vmor %vm2510, %vm2511
    %v2513 = vrot.slane %v2498, 5
    %v2514 = vrot.slane %v2513, 4
    %v2515 = vrot.slane %v356, 5
    %v2516 = vsel %vm2512, %v2514, %v2515
    %v2517 = vrot.slane %v2499, 5
    %v2518 = vrot.slane %v2517, 4
    %v2519 = vrot.slane %v357, 5
    %v2520 = vsel %vm2512, %v2518, %v2519
    %v2521 = vrot.slane %v2515, 4
    %v2522 = vrot.slane %v490, 5
    %v2523 = vsel %vm2512, %v2521, %v2522
    %v2524 = vrot.slane %v2519, 4
    %v2525 = vrot.slane %v491, 5
    %v2526 = vsel %vm2512, %v2524, %v2525
    %v2527 = vrot.slane %v2500, 5
    %v2528 = vrot.slane %v2527, 4
    %v2529 = vrot.slane %v360, 5
    %v2530 = vsel %vm2512, %v2528, %v2529
    %v2531 = vrot.slane %v2501, 5
    %v2532 = vrot.slane %v2531, 4
    %v2533 = vrot.slane %v361, 5
    %v2534 = vsel %vm2512, %v2532, %v2533
    %v2535 = vrot.slane %v2529, 4
    %v2536 = vrot.slane %v492, 5
    %v2537 = vsel %vm2512, %v2535, %v2536
    %v2538 = vrot.slane %v2533, 4
    %v2539 = vrot.slane %v493, 5
    %v2540 = vsel %vm2512, %v2538, %v2539
    %s2541 = scalar_lea.vmem [#allocation6], 2048
    %v2542 = vld [vmem:[%s2541] sm:$0xff]
    %v2543 = vld [vmem:[%s2541 + $0x8] sm:$0xff]
    %v2544 = vld [vmem:[%s2541 + $0x10] sm:$0xff]
    %v2545 = vld [vmem:[%s2541 + $0x18] sm:$0xff]
    %v2546 = vld [vmem:[%s2541 + $0x20] sm:$0xff]
    %v2547 = vld [vmem:[%s2541 + $0x28] sm:$0xff]
    %v2548 = vld [vmem:[%s2541 + $0x30] sm:$0xff]
    %v2549 = vld [vmem:[%s2541 + $0x38] sm:$0xff]
    %v2550 = vld [vmem:[%s2541 + $0x40] sm:$0xff]
    %v2551 = vld [vmem:[%s2541 + $0x48] sm:$0xff]
    %v2552 = vld [vmem:[%s2541 + $0x50] sm:$0xff]
    %v2553 = vld [vmem:[%s2541 + $0x58] sm:$0xff]
    %v2554 = vld [vmem:[%s2541 + $0x60] sm:$0xff]
    %v2555 = vld [vmem:[%s2541 + $0x68] sm:$0xff]
    %v2556 = vld [vmem:[%s2541 + $0x70] sm:$0xff]
    %v2557 = vld [vmem:[%s2541 + $0x78] sm:$0xff]
    %v2558 = vld [vmem:[%s2541 + $0x80] sm:$0xff]
    %v2559 = vld [vmem:[%s2541 + $0x88] sm:$0xff]
    %v2560 = vld [vmem:[%s2541 + $0x90] sm:$0xff]
    %v2561 = vld [vmem:[%s2541 + $0x98] sm:$0xff]
    %v2562 = vld [vmem:[%s2541 + $0xa0] sm:$0xff]
    %v2563 = vld [vmem:[%s2541 + $0xa8] sm:$0xff]
    %v2564 = vld [vmem:[%s2541 + $0xb0] sm:$0xff]
    %v2565 = vld [vmem:[%s2541 + $0xb8] sm:$0xff]
    %v2566 = vld [vmem:[%s2541 + $0xc0] sm:$0xff]
    %v2567 = vld [vmem:[%s2541 + $0xc8] sm:$0xff]
    %v2568 = vld [vmem:[%s2541 + $0xd0] sm:$0xff]
    %v2569 = vld [vmem:[%s2541 + $0xd8] sm:$0xff]
    %v2570 = vld [vmem:[%s2541 + $0xe0] sm:$0xff]
    %v2571 = vld [vmem:[%s2541 + $0xe8] sm:$0xff]
    %v2572 = vld [vmem:[%s2541 + $0xf0] sm:$0xff]
    %v2573 = vld [vmem:[%s2541 + $0xf8] sm:$0xff]
    %v2574 = vld [vmem:[%s2541 + $0x100] sm:$0xff]
    %v2575 = vld [vmem:[%s2541 + $0x108] sm:$0xff]
    %v2576 = vld [vmem:[%s2541 + $0x110] sm:$0xff]
    %v2577 = vld [vmem:[%s2541 + $0x118] sm:$0xff]
    %v2578 = vld [vmem:[%s2541 + $0x120] sm:$0xff]
    %v2579 = vld [vmem:[%s2541 + $0x128] sm:$0xff]
    %v2580 = vld [vmem:[%s2541 + $0x130] sm:$0xff]
    %v2581 = vld [vmem:[%s2541 + $0x138] sm:$0xff]
    %v2582 = vld [vmem:[%s2541 + $0x140] sm:$0xff]
    %v2583 = vld [vmem:[%s2541 + $0x148] sm:$0xff]
    %v2584 = vld [vmem:[%s2541 + $0x150] sm:$0xff]
    %v2585 = vld [vmem:[%s2541 + $0x158] sm:$0xff]
    %v2586 = vld [vmem:[%s2541 + $0x160] sm:$0xff]
    %v2587 = vld [vmem:[%s2541 + $0x168] sm:$0xff]
    %v2588 = vld [vmem:[%s2541 + $0x170] sm:$0xff]
    %v2589 = vld [vmem:[%s2541 + $0x178] sm:$0xff]
    %v2590 = vld [vmem:[%s2541 + $0x180] sm:$0xff]
    %v2591 = vld [vmem:[%s2541 + $0x188] sm:$0xff]
    %v2592 = vld [vmem:[%s2541 + $0x190] sm:$0xff]
    %v2593 = vld [vmem:[%s2541 + $0x198] sm:$0xff]
    %v2594 = vld [vmem:[%s2541 + $0x1a0] sm:$0xff]
    %v2595 = vld [vmem:[%s2541 + $0x1a8] sm:$0xff]
    %v2596 = vld [vmem:[%s2541 + $0x1b0] sm:$0xff]
    %v2597 = vld [vmem:[%s2541 + $0x1b8] sm:$0xff]
    %v2598 = vld [vmem:[%s2541 + $0x1c0] sm:$0xff]
    %v2599 = vld [vmem:[%s2541 + $0x1c8] sm:$0xff]
    %v2600 = vld [vmem:[%s2541 + $0x1d0] sm:$0xff]
    %v2601 = vld [vmem:[%s2541 + $0x1d8] sm:$0xff]
    %v2602 = vld [vmem:[%s2541 + $0x1e0] sm:$0xff]
    %v2603 = vld [vmem:[%s2541 + $0x1e8] sm:$0xff]
    %v2604 = vld [vmem:[%s2541 + $0x1f0] sm:$0xff]
    %v2605 = vld [vmem:[%s2541 + $0x1f8] sm:$0xff]
    %v2606 = vld [vmem:[%s2541 + $0x200] sm:$0xff]
    %v2607 = vld [vmem:[%s2541 + $0x208] sm:$0xff]
    %v2608 = vld [vmem:[%s2541 + $0x210] sm:$0xff]
    %v2609 = vld [vmem:[%s2541 + $0x218] sm:$0xff]
    %v2610 = vld [vmem:[%s2541 + $0x220] sm:$0xff]
    %v2611 = vld [vmem:[%s2541 + $0x228] sm:$0xff]
    %v2612 = vld [vmem:[%s2541 + $0x230] sm:$0xff]
    %v2613 = vld [vmem:[%s2541 + $0x238] sm:$0xff]
    %v2614 = vld [vmem:[%s2541 + $0x240] sm:$0xff]
    %v2615 = vld [vmem:[%s2541 + $0x248] sm:$0xff]
    %v2616 = vld [vmem:[%s2541 + $0x250] sm:$0xff]
    %v2617 = vld [vmem:[%s2541 + $0x258] sm:$0xff]
    %v2618 = vld [vmem:[%s2541 + $0x260] sm:$0xff]
    %v2619 = vld [vmem:[%s2541 + $0x268] sm:$0xff]
    %v2620 = vld [vmem:[%s2541 + $0x270] sm:$0xff]
    %v2621 = vld [vmem:[%s2541 + $0x278] sm:$0xff]
    %v2622 = vld [vmem:[%s2541 + $0x280] sm:$0xff]
    %v2623 = vld [vmem:[%s2541 + $0x288] sm:$0xff]
    %v2624 = vld [vmem:[%s2541 + $0x290] sm:$0xff]
    %v2625 = vld [vmem:[%s2541 + $0x298] sm:$0xff]
    %v2626 = vld [vmem:[%s2541 + $0x2a0] sm:$0xff]
    %v2627 = vld [vmem:[%s2541 + $0x2a8] sm:$0xff]
    %v2628 = vld [vmem:[%s2541 + $0x2b0] sm:$0xff]
    %v2629 = vld [vmem:[%s2541 + $0x2b8] sm:$0xff]
    %v2630 = vld [vmem:[%s2541 + $0x2c0] sm:$0xff]
    %v2631 = vld [vmem:[%s2541 + $0x2c8] sm:$0xff]
    %v2632 = vld [vmem:[%s2541 + $0x2d0] sm:$0xff]
    %v2633 = vld [vmem:[%s2541 + $0x2d8] sm:$0xff]
    %v2634 = vld [vmem:[%s2541 + $0x2e0] sm:$0xff]
    %v2635 = vld [vmem:[%s2541 + $0x2e8] sm:$0xff]
    %v2636 = vld [vmem:[%s2541 + $0x2f0] sm:$0xff]
    %v2637 = vld [vmem:[%s2541 + $0x2f8] sm:$0xff]
    %v2638 = vld [vmem:[%s2541 + $0x300] sm:$0xff]
    %v2639 = vld [vmem:[%s2541 + $0x308] sm:$0xff]
    %v2640 = vld [vmem:[%s2541 + $0x310] sm:$0xff]
    %v2641 = vld [vmem:[%s2541 + $0x318] sm:$0xff]
    %v2642 = vld [vmem:[%s2541 + $0x320] sm:$0xff]
    %v2643 = vld [vmem:[%s2541 + $0x328] sm:$0xff]
    %v2644 = vld [vmem:[%s2541 + $0x330] sm:$0xff]
    %v2645 = vld [vmem:[%s2541 + $0x338] sm:$0xff]
    %v2646 = vld [vmem:[%s2541 + $0x340] sm:$0xff]
    %v2647 = vld [vmem:[%s2541 + $0x348] sm:$0xff]
    %v2648 = vld [vmem:[%s2541 + $0x350] sm:$0xff]
    %v2649 = vld [vmem:[%s2541 + $0x358] sm:$0xff]
    %v2650 = vld [vmem:[%s2541 + $0x360] sm:$0xff]
    %v2651 = vld [vmem:[%s2541 + $0x368] sm:$0xff]
    %v2652 = vld [vmem:[%s2541 + $0x370] sm:$0xff]
    %v2653 = vld [vmem:[%s2541 + $0x378] sm:$0xff]
    %v2654 = vld [vmem:[%s2541 + $0x380] sm:$0xff]
    %v2655 = vld [vmem:[%s2541 + $0x388] sm:$0xff]
    %v2656 = vld [vmem:[%s2541 + $0x390] sm:$0xff]
    %v2657 = vld [vmem:[%s2541 + $0x398] sm:$0xff]
    %v2658 = vld [vmem:[%s2541 + $0x3a0] sm:$0xff]
    %v2659 = vld [vmem:[%s2541 + $0x3a8] sm:$0xff]
    %v2660 = vld [vmem:[%s2541 + $0x3b0] sm:$0xff]
    %v2661 = vld [vmem:[%s2541 + $0x3b8] sm:$0xff]
    %v2662 = vld [vmem:[%s2541 + $0x3c0] sm:$0xff]
    %v2663 = vld [vmem:[%s2541 + $0x3c8] sm:$0xff]
    %v2664 = vld [vmem:[%s2541 + $0x3d0] sm:$0xff]
    %v2665 = vld [vmem:[%s2541 + $0x3d8] sm:$0xff]
    %v2666 = vld [vmem:[%s2541 + $0x3e0] sm:$0xff]
    %v2667 = vld [vmem:[%s2541 + $0x3e8] sm:$0xff]
    %v2668 = vld [vmem:[%s2541 + $0x3f0] sm:$0xff]
    %v2669 = vld [vmem:[%s2541 + $0x3f8] sm:$0xff]
    %v2670 = vunpack.c.l.b16 %v2516
    %v2671 = vunpack.c.h.b16 %v2516
    %v2672 = vunpack.c.l.b16 %v2520
    %v2673 = vunpack.c.h.b16 %v2520
    %v2674 = vunpack.c.l.b16 %v2523
    %v2675 = vunpack.c.h.b16 %v2523
    %v2676 = vunpack.c.l.b16 %v2526
    %v2677 = vunpack.c.h.b16 %v2526
    %v2678 = vunpack.c.l.b16 %v2530
    %v2679 = vunpack.c.h.b16 %v2530
    %v2680 = vunpack.c.l.b16 %v2534
    %v2681 = vunpack.c.h.b16 %v2534
    %v2682 = vunpack.c.l.b16 %v2537
    %v2683 = vunpack.c.h.b16 %v2537
    %v2684 = vunpack.c.l.b16 %v2540
    %v2685 = vunpack.c.h.b16 %v2540
    %v2686 = vpack.c.b16 %v2674, %v2670
    %v2687 = vpack.c.b16 %v2675, %v2671
    %v2688 = vpack.c.b16 %v2676, %v2672
    %v2689 = vpack.c.b16 %v2677, %v2673
    %v2690 = vpack.c.b16 %v2682, %v2678
    %v2691 = vpack.c.b16 %v2683, %v2679
    %v2692 = vpack.c.b16 %v2684, %v2680
    %v2693 = vpack.c.b16 %v2685, %v2681
    %v2830 = vunpack.c.l.b16 %v2542
    %v2831 = vunpack.c.h.b16 %v2542
    %v2832 = vunpack.c.l.b16 %v2543
    %v2833 = vunpack.c.h.b16 %v2543
    %v2834 = vunpack.c.l.b16 %v2544
    %v2835 = vunpack.c.h.b16 %v2544
    %v2836 = vunpack.c.l.b16 %v2545
    %v2837 = vunpack.c.h.b16 %v2545
    %v2838 = vunpack.c.l.b16 %v2546
    %v2839 = vunpack.c.h.b16 %v2546
    %v2840 = vunpack.c.l.b16 %v2547
    %v2841 = vunpack.c.h.b16 %v2547
    %v2842 = vunpack.c.l.b16 %v2548
    %v2843 = vunpack.c.h.b16 %v2548
    %v2844 = vunpack.c.l.b16 %v2549
    %v2845 = vunpack.c.h.b16 %v2549
    %v2846 = vunpack.c.l.b16 %v2550
    %v2847 = vunpack.c.h.b16 %v2550
    %v2848 = vunpack.c.l.b16 %v2551
    %v2849 = vunpack.c.h.b16 %v2551
    %v2850 = vunpack.c.l.b16 %v2552
    %v2851 = vunpack.c.h.b16 %v2552
    %v2852 = vunpack.c.l.b16 %v2553
    %v2853 = vunpack.c.h.b16 %v2553
    %v2854 = vunpack.c.l.b16 %v2554
    %v2855 = vunpack.c.h.b16 %v2554
    %v2856 = vunpack.c.l.b16 %v2555
    %v2857 = vunpack.c.h.b16 %v2555
    %v2858 = vunpack.c.l.b16 %v2556
    %v2859 = vunpack.c.h.b16 %v2556
    %v2860 = vunpack.c.l.b16 %v2557
    %v2861 = vunpack.c.h.b16 %v2557
    %v2862 = vunpack.c.l.b16 %v2558
    %v2863 = vunpack.c.h.b16 %v2558
    %v2864 = vunpack.c.l.b16 %v2559
    %v2865 = vunpack.c.h.b16 %v2559
    %v2866 = vunpack.c.l.b16 %v2560
    %v2867 = vunpack.c.h.b16 %v2560
    %v2868 = vunpack.c.l.b16 %v2561
    %v2869 = vunpack.c.h.b16 %v2561
    %v2870 = vunpack.c.l.b16 %v2562
    %v2871 = vunpack.c.h.b16 %v2562
    %v2872 = vunpack.c.l.b16 %v2563
    %v2873 = vunpack.c.h.b16 %v2563
    %v2874 = vunpack.c.l.b16 %v2564
    %v2875 = vunpack.c.h.b16 %v2564
    %v2876 = vunpack.c.l.b16 %v2565
    %v2877 = vunpack.c.h.b16 %v2565
    %v2878 = vunpack.c.l.b16 %v2566
    %v2879 = vunpack.c.h.b16 %v2566
    %v2880 = vunpack.c.l.b16 %v2567
    %v2881 = vunpack.c.h.b16 %v2567
    %v2882 = vunpack.c.l.b16 %v2568
    %v2883 = vunpack.c.h.b16 %v2568
    %v2884 = vunpack.c.l.b16 %v2569
    %v2885 = vunpack.c.h.b16 %v2569
    %v2886 = vunpack.c.l.b16 %v2570
    %v2887 = vunpack.c.h.b16 %v2570
    %v2888 = vunpack.c.l.b16 %v2571
    %v2889 = vunpack.c.h.b16 %v2571
    %v2890 = vunpack.c.l.b16 %v2572
    %v2891 = vunpack.c.h.b16 %v2572
    %v2892 = vunpack.c.l.b16 %v2573
    %v2893 = vunpack.c.h.b16 %v2573
    %v2894 = vunpack.c.l.b16 %v2574
    %v2895 = vunpack.c.h.b16 %v2574
    %v2896 = vunpack.c.l.b16 %v2575
    %v2897 = vunpack.c.h.b16 %v2575
    %v2898 = vunpack.c.l.b16 %v2576
    %v2899 = vunpack.c.h.b16 %v2576
    %v2900 = vunpack.c.l.b16 %v2577
    %v2901 = vunpack.c.h.b16 %v2577
    %v2902 = vunpack.c.l.b16 %v2578
    %v2903 = vunpack.c.h.b16 %v2578
    %v2904 = vunpack.c.l.b16 %v2579
    %v2905 = vunpack.c.h.b16 %v2579
    %v2906 = vunpack.c.l.b16 %v2580
    %v2907 = vunpack.c.h.b16 %v2580
    %v2908 = vunpack.c.l.b16 %v2581
    %v2909 = vunpack.c.h.b16 %v2581
    %v2910 = vunpack.c.l.b16 %v2582
    %v2911 = vunpack.c.h.b16 %v2582
    %v2912 = vunpack.c.l.b16 %v2583
    %v2913 = vunpack.c.h.b16 %v2583
    %v2914 = vunpack.c.l.b16 %v2584
    %v2915 = vunpack.c.h.b16 %v2584
    %v2916 = vunpack.c.l.b16 %v2585
    %v2917 = vunpack.c.h.b16 %v2585
    %v2918 = vunpack.c.l.b16 %v2586
    %v2919 = vunpack.c.h.b16 %v2586
    %v2920 = vunpack.c.l.b16 %v2587
    %v2921 = vunpack.c.h.b16 %v2587
    %v2922 = vunpack.c.l.b16 %v2588
    %v2923 = vunpack.c.h.b16 %v2588
    %v2924 = vunpack.c.l.b16 %v2589
    %v2925 = vunpack.c.h.b16 %v2589
    %v2926 = vunpack.c.l.b16 %v2590
    %v2927 = vunpack.c.h.b16 %v2590
    %v2928 = vunpack.c.l.b16 %v2591
    %v2929 = vunpack.c.h.b16 %v2591
    %v2930 = vunpack.c.l.b16 %v2592
    %v2931 = vunpack.c.h.b16 %v2592
    %v2932 = vunpack.c.l.b16 %v2593
    %v2933 = vunpack.c.h.b16 %v2593
    %v2934 = vunpack.c.l.b16 %v2594
    %v2935 = vunpack.c.h.b16 %v2594
    %v2936 = vunpack.c.l.b16 %v2595
    %v2937 = vunpack.c.h.b16 %v2595
    %v2938 = vunpack.c.l.b16 %v2596
    %v2939 = vunpack.c.h.b16 %v2596
    %v2940 = vunpack.c.l.b16 %v2597
    %v2941 = vunpack.c.h.b16 %v2597
    %v2942 = vunpack.c.l.b16 %v2598
    %v2943 = vunpack.c.h.b16 %v2598
    %v2944 = vunpack.c.l.b16 %v2599
    %v2945 = vunpack.c.h.b16 %v2599
    %v2946 = vunpack.c.l.b16 %v2600
    %v2947 = vunpack.c.h.b16 %v2600
    %v2948 = vunpack.c.l.b16 %v2601
    %v2949 = vunpack.c.h.b16 %v2601
    %v2950 = vunpack.c.l.b16 %v2602
    %v2951 = vunpack.c.h.b16 %v2602
    %v2952 = vunpack.c.l.b16 %v2603
    %v2953 = vunpack.c.h.b16 %v2603
    %v2954 = vunpack.c.l.b16 %v2604
    %v2955 = vunpack.c.h.b16 %v2604
    %v2956 = vunpack.c.l.b16 %v2605
    %v2957 = vunpack.c.h.b16 %v2605
    %v2958 = vunpack.c.l.b16 %v2606
    %v2959 = vunpack.c.h.b16 %v2606
    %v2960 = vunpack.c.l.b16 %v2607
    %v2961 = vunpack.c.h.b16 %v2607
    %v2962 = vunpack.c.l.b16 %v2608
    %v2963 = vunpack.c.h.b16 %v2608
    %v2964 = vunpack.c.l.b16 %v2609
    %v2965 = vunpack.c.h.b16 %v2609
    %v2966 = vunpack.c.l.b16 %v2610
    %v2967 = vunpack.c.h.b16 %v2610
    %v2968 = vunpack.c.l.b16 %v2611
    %v2969 = vunpack.c.h.b16 %v2611
    %v2970 = vunpack.c.l.b16 %v2612
    %v2971 = vunpack.c.h.b16 %v2612
    %v2972 = vunpack.c.l.b16 %v2613
    %v2973 = vunpack.c.h.b16 %v2613
    %v2974 = vunpack.c.l.b16 %v2614
    %v2975 = vunpack.c.h.b16 %v2614
    %v2976 = vunpack.c.l.b16 %v2615
    %v2977 = vunpack.c.h.b16 %v2615
    %v2978 = vunpack.c.l.b16 %v2616
    %v2979 = vunpack.c.h.b16 %v2616
    %v2980 = vunpack.c.l.b16 %v2617
    %v2981 = vunpack.c.h.b16 %v2617
    %v2982 = vunpack.c.l.b16 %v2618
    %v2983 = vunpack.c.h.b16 %v2618
    %v2984 = vunpack.c.l.b16 %v2619
    %v2985 = vunpack.c.h.b16 %v2619
    %v2986 = vunpack.c.l.b16 %v2620
    %v2987 = vunpack.c.h.b16 %v2620
    %v2988 = vunpack.c.l.b16 %v2621
    %v2989 = vunpack.c.h.b16 %v2621
    %v2990 = vunpack.c.l.b16 %v2622
    %v2991 = vunpack.c.h.b16 %v2622
    %v2992 = vunpack.c.l.b16 %v2623
    %v2993 = vunpack.c.h.b16 %v2623
    %v2994 = vunpack.c.l.b16 %v2624
    %v2995 = vunpack.c.h.b16 %v2624
    %v2996 = vunpack.c.l.b16 %v2625
    %v2997 = vunpack.c.h.b16 %v2625
    %v2998 = vunpack.c.l.b16 %v2626
    %v2999 = vunpack.c.h.b16 %v2626
    %v3000 = vunpack.c.l.b16 %v2627
    %v3001 = vunpack.c.h.b16 %v2627
    %v3002 = vunpack.c.l.b16 %v2628
    %v3003 = vunpack.c.h.b16 %v2628
    %v3004 = vunpack.c.l.b16 %v2629
    %v3005 = vunpack.c.h.b16 %v2629
    %v3006 = vunpack.c.l.b16 %v2630
    %v3007 = vunpack.c.h.b16 %v2630
    %v3008 = vunpack.c.l.b16 %v2631
    %v3009 = vunpack.c.h.b16 %v2631
    %v3010 = vunpack.c.l.b16 %v2632
    %v3011 = vunpack.c.h.b16 %v2632
    %v3012 = vunpack.c.l.b16 %v2633
    %v3013 = vunpack.c.h.b16 %v2633
    %v3014 = vunpack.c.l.b16 %v2634
    %v3015 = vunpack.c.h.b16 %v2634
    %v3016 = vunpack.c.l.b16 %v2635
    %v3017 = vunpack.c.h.b16 %v2635
    %v3018 = vunpack.c.l.b16 %v2636
    %v3019 = vunpack.c.h.b16 %v2636
    %v3020 = vunpack.c.l.b16 %v2637
    %v3021 = vunpack.c.h.b16 %v2637
    %v3022 = vunpack.c.l.b16 %v2638
    %v3023 = vunpack.c.h.b16 %v2638
    %v3024 = vunpack.c.l.b16 %v2639
    %v3025 = vunpack.c.h.b16 %v2639
    %v3026 = vunpack.c.l.b16 %v2640
    %v3027 = vunpack.c.h.b16 %v2640
    %v3028 = vunpack.c.l.b16 %v2641
    %v3029 = vunpack.c.h.b16 %v2641
    %v3030 = vunpack.c.l.b16 %v2642
    %v3031 = vunpack.c.h.b16 %v2642
    %v3032 = vunpack.c.l.b16 %v2643
    %v3033 = vunpack.c.h.b16 %v2643
    %v3034 = vunpack.c.l.b16 %v2644
    %v3035 = vunpack.c.h.b16 %v2644
    %v3036 = vunpack.c.l.b16 %v2645
    %v3037 = vunpack.c.h.b16 %v2645
    %v3038 = vunpack.c.l.b16 %v2646
    %v3039 = vunpack.c.h.b16 %v2646
    %v3040 = vunpack.c.l.b16 %v2647
    %v3041 = vunpack.c.h.b16 %v2647
    %v3042 = vunpack.c.l.b16 %v2648
    %v3043 = vunpack.c.h.b16 %v2648
    %v3044 = vunpack.c.l.b16 %v2649
    %v3045 = vunpack.c.h.b16 %v2649
    %v3046 = vunpack.c.l.b16 %v2650
    %v3047 = vunpack.c.h.b16 %v2650
    %v3048 = vunpack.c.l.b16 %v2651
    %v3049 = vunpack.c.h.b16 %v2651
    %v3050 = vunpack.c.l.b16 %v2652
    %v3051 = vunpack.c.h.b16 %v2652
    %v3052 = vunpack.c.l.b16 %v2653
    %v3053 = vunpack.c.h.b16 %v2653
    %v3054 = vunpack.c.l.b16 %v2654
    %v3055 = vunpack.c.h.b16 %v2654
    %v3056 = vunpack.c.l.b16 %v2655
    %v3057 = vunpack.c.h.b16 %v2655
    %v3058 = vunpack.c.l.b16 %v2656
    %v3059 = vunpack.c.h.b16 %v2656
    %v3060 = vunpack.c.l.b16 %v2657
    %v3061 = vunpack.c.h.b16 %v2657
    %v3062 = vunpack.c.l.b16 %v2658
    %v3063 = vunpack.c.h.b16 %v2658
    %v3064 = vunpack.c.l.b16 %v2659
    %v3065 = vunpack.c.h.b16 %v2659
    %v3066 = vunpack.c.l.b16 %v2660
    %v3067 = vunpack.c.h.b16 %v2660
    %v3068 = vunpack.c.l.b16 %v2661
    %v3069 = vunpack.c.h.b16 %v2661
    %v3070 = vunpack.c.l.b16 %v2662
    %v3071 = vunpack.c.h.b16 %v2662
    %v3072 = vunpack.c.l.b16 %v2663
    %v3073 = vunpack.c.h.b16 %v2663
    %v3074 = vunpack.c.l.b16 %v2664
    %v3075 = vunpack.c.h.b16 %v2664
    %v3076 = vunpack.c.l.b16 %v2665
    %v3077 = vunpack.c.h.b16 %v2665
    %v3078 = vunpack.c.l.b16 %v2666
    %v3079 = vunpack.c.h.b16 %v2666
    %v3080 = vunpack.c.l.b16 %v2667
    %v3081 = vunpack.c.h.b16 %v2667
    %v3082 = vunpack.c.l.b16 %v2668
    %v3083 = vunpack.c.h.b16 %v2668
    %v3084 = vunpack.c.l.b16 %v2669
    %v3085 = vunpack.c.h.b16 %v2669
    %v3086 = vpack.c.b16 %v2834, %v2830
    %v3087 = vpack.c.b16 %v2835, %v2831
    %v3088 = vpack.c.b16 %v2836, %v2832
    %v3089 = vpack.c.b16 %v2837, %v2833
    %v3090 = vpack.c.b16 %v2842, %v2838
    %v3091 = vpack.c.b16 %v2843, %v2839
    %v3092 = vpack.c.b16 %v2844, %v2840
    %v3093 = vpack.c.b16 %v2845, %v2841
    %v3094 = vpack.c.b16 %v2850, %v2846
    %v3095 = vpack.c.b16 %v2851, %v2847
    %v3096 = vpack.c.b16 %v2852, %v2848
    %v3097 = vpack.c.b16 %v2853, %v2849
    %v3098 = vpack.c.b16 %v2858, %v2854
    %v3099 = vpack.c.b16 %v2859, %v2855
    %v3100 = vpack.c.b16 %v2860, %v2856
    %v3101 = vpack.c.b16 %v2861, %v2857
    %v3102 = vpack.c.b16 %v2866, %v2862
    %v3103 = vpack.c.b16 %v2867, %v2863
    %v3104 = vpack.c.b16 %v2868, %v2864
    %v3105 = vpack.c.b16 %v2869, %v2865
    %v3106 = vpack.c.b16 %v2874, %v2870
    %v3107 = vpack.c.b16 %v2875, %v2871
    %v3108 = vpack.c.b16 %v2876, %v2872
    %v3109 = vpack.c.b16 %v2877, %v2873
    %v3110 = vpack.c.b16 %v2882, %v2878
    %v3111 = vpack.c.b16 %v2883, %v2879
    %v3112 = vpack.c.b16 %v2884, %v2880
    %v3113 = vpack.c.b16 %v2885, %v2881
    %v3114 = vpack.c.b16 %v2890, %v2886
    %v3115 = vpack.c.b16 %v2891, %v2887
    %v3116 = vpack.c.b16 %v2892, %v2888
    %v3117 = vpack.c.b16 %v2893, %v2889
    %v3118 = vpack.c.b16 %v2898, %v2894
    %v3119 = vpack.c.b16 %v2899, %v2895
    %v3120 = vpack.c.b16 %v2900, %v2896
    %v3121 = vpack.c.b16 %v2901, %v2897
    %v3122 = vpack.c.b16 %v2906, %v2902
    %v3123 = vpack.c.b16 %v2907, %v2903
    %v3124 = vpack.c.b16 %v2908, %v2904
    %v3125 = vpack.c.b16 %v2909, %v2905
    %v3126 = vpack.c.b16 %v2914, %v2910
    %v3127 = vpack.c.b16 %v2915, %v2911
    %v3128 = vpack.c.b16 %v2916, %v2912
    %v3129 = vpack.c.b16 %v2917, %v2913
    %v3130 = vpack.c.b16 %v2922, %v2918
    %v3131 = vpack.c.b16 %v2923, %v2919
    %v3132 = vpack.c.b16 %v2924, %v2920
    %v3133 = vpack.c.b16 %v2925, %v2921
    %v3134 = vpack.c.b16 %v2930, %v2926
    %v3135 = vpack.c.b16 %v2931, %v2927
    %v3136 = vpack.c.b16 %v2932, %v2928
    %v3137 = vpack.c.b16 %v2933, %v2929
    %v3138 = vpack.c.b16 %v2938, %v2934
    %v3139 = vpack.c.b16 %v2939, %v2935
    %v3140 = vpack.c.b16 %v2940, %v2936
    %v3141 = vpack.c.b16 %v2941, %v2937
    %v3142 = vpack.c.b16 %v2946, %v2942
    %v3143 = vpack.c.b16 %v2947, %v2943
    %v3144 = vpack.c.b16 %v2948, %v2944
    %v3145 = vpack.c.b16 %v2949, %v2945
    %v3146 = vpack.c.b16 %v2954, %v2950
    %v3147 = vpack.c.b16 %v2955, %v2951
    %v3148 = vpack.c.b16 %v2956, %v2952
    %v3149 = vpack.c.b16 %v2957, %v2953
    %v3150 = vpack.c.b16 %v2962, %v2958
    %v3151 = vpack.c.b16 %v2963, %v2959
    %v3152 = vpack.c.b16 %v2964, %v2960
    %v3153 = vpack.c.b16 %v2965, %v2961
    %v3154 = vpack.c.b16 %v2970, %v2966
    %v3155 = vpack.c.b16 %v2971, %v2967
    %v3156 = vpack.c.b16 %v2972, %v2968
    %v3157 = vpack.c.b16 %v2973, %v2969
    %v3158 = vpack.c.b16 %v2978, %v2974
    %v3159 = vpack.c.b16 %v2979, %v2975
    %v3160 = vpack.c.b16 %v2980, %v2976
    %v3161 = vpack.c.b16 %v2981, %v2977
    %v3162 = vpack.c.b16 %v2986, %v2982
    %v3163 = vpack.c.b16 %v2987, %v2983
    %v3164 = vpack.c.b16 %v2988, %v2984
    %v3165 = vpack.c.b16 %v2989, %v2985
    %v3166 = vpack.c.b16 %v2994, %v2990
    %v3167 = vpack.c.b16 %v2995, %v2991
    %v3168 = vpack.c.b16 %v2996, %v2992
    %v3169 = vpack.c.b16 %v2997, %v2993
    %v3170 = vpack.c.b16 %v3002, %v2998
    %v3171 = vpack.c.b16 %v3003, %v2999
    %v3172 = vpack.c.b16 %v3004, %v3000
    %v3173 = vpack.c.b16 %v3005, %v3001
    %v3174 = vpack.c.b16 %v3010, %v3006
    %v3175 = vpack.c.b16 %v3011, %v3007
    %v3176 = vpack.c.b16 %v3012, %v3008
    %v3177 = vpack.c.b16 %v3013, %v3009
    %v3178 = vpack.c.b16 %v3018, %v3014
    %v3179 = vpack.c.b16 %v3019, %v3015
    %v3180 = vpack.c.b16 %v3020, %v3016
    %v3181 = vpack.c.b16 %v3021, %v3017
    %v3182 = vpack.c.b16 %v3026, %v3022
    %v3183 = vpack.c.b16 %v3027, %v3023
    %v3184 = vpack.c.b16 %v3028, %v3024
    %v3185 = vpack.c.b16 %v3029, %v3025
    %v3186 = vpack.c.b16 %v3034, %v3030
    %v3187 = vpack.c.b16 %v3035, %v3031
    %v3188 = vpack.c.b16 %v3036, %v3032
    %v3189 = vpack.c.b16 %v3037, %v3033
    %v3190 = vpack.c.b16 %v3042, %v3038
    %v3191 = vpack.c.b16 %v3043, %v3039
    %v3192 = vpack.c.b16 %v3044, %v3040
    %v3193 = vpack.c.b16 %v3045, %v3041
    %v3194 = vpack.c.b16 %v3050, %v3046
    %v3195 = vpack.c.b16 %v3051, %v3047
    %v3196 = vpack.c.b16 %v3052, %v3048
    %v3197 = vpack.c.b16 %v3053, %v3049
    %v3198 = vpack.c.b16 %v3058, %v3054
    %v3199 = vpack.c.b16 %v3059, %v3055
    %v3200 = vpack.c.b16 %v3060, %v3056
    %v3201 = vpack.c.b16 %v3061, %v3057
    %v3202 = vpack.c.b16 %v3066, %v3062
    %v3203 = vpack.c.b16 %v3067, %v3063
    %v3204 = vpack.c.b16 %v3068, %v3064
    %v3205 = vpack.c.b16 %v3069, %v3065
    %v3206 = vpack.c.b16 %v3074, %v3070
    %v3207 = vpack.c.b16 %v3075, %v3071
    %v3208 = vpack.c.b16 %v3076, %v3072
    %v3209 = vpack.c.b16 %v3077, %v3073
    %v3210 = vpack.c.b16 %v3082, %v3078
    %v3211 = vpack.c.b16 %v3083, %v3079
    %v3212 = vpack.c.b16 %v3084, %v3080
    %v3213 = vpack.c.b16 %v3085, %v3081
    %3342 = vmatprep.subr.bf16.mxu0 %v3087
    %3343 = vmatpush1.bf16.msra.mxu0 %v3086
    %3344 = vmatprep.subr.bf16.mxu0 %v3091
    %3345 = vmatpush1.bf16.msra.mxu0 %v3090
    %3346 = vmatprep.subr.bf16.mxu0 %v3095
    %3347 = vmatpush1.bf16.msra.mxu0 %v3094
    %3348 = vmatprep.subr.bf16.mxu0 %v3099
    %3349 = vmatpush1.bf16.msra.mxu0 %v3098
    %3350 = vmatprep.subr.bf16.mxu0 %v3103
    %3351 = vmatpush1.bf16.msra.mxu0 %v3102
    %3352 = vmatprep.subr.bf16.mxu0 %v3107
    %3353 = vmatpush1.bf16.msra.mxu0 %v3106
    %3354 = vmatprep.subr.bf16.mxu0 %v3111
    %3355 = vmatpush1.bf16.msra.mxu0 %v3110
    %3356 = vmatprep.subr.bf16.mxu0 %v3115
    %3357 = vmatpush1.bf16.msra.mxu0 %v3114
    %3358 = vmatprep.subr.bf16.mxu0 %v3119
    %3359 = vmatpush1.bf16.msra.mxu0 %v3118
    %3360 = vmatprep.subr.bf16.mxu0 %v3123
    %3361 = vmatpush1.bf16.msra.mxu0 %v3122
    %3362 = vmatprep.subr.bf16.mxu0 %v3127
    %3363 = vmatpush1.bf16.msra.mxu0 %v3126
    %3364 = vmatprep.subr.bf16.mxu0 %v3131
    %3365 = vmatpush1.bf16.msra.mxu0 %v3130
    %3366 = vmatprep.subr.bf16.mxu0 %v3135
    %3367 = vmatpush1.bf16.msra.mxu0 %v3134
    %3368 = vmatprep.subr.bf16.mxu0 %v3139
    %3369 = vmatpush1.bf16.msra.mxu0 %v3138
    %3370 = vmatprep.subr.bf16.mxu0 %v3143
    %3371 = vmatpush1.bf16.msra.mxu0 %v3142
    %3372 = vmatprep.subr.bf16.mxu0 %v3147
    %3373 = vmatpush1.bf16.msra.mxu0 %v3146
    %3374 = vmatprep.mubr.bf16.mxu0 %v2687
    %3375 = vmatmul.mubr.bf16.gmra.mrb[0].mxu0 %v2686
    %v3376 = vpop.f32.mrb[0].mxu0
    %v3377 = vadd.f32 0.0, %v3376
    %v3378 = vpop.f32.mrb[0].mxu0
    %v3379 = vadd.f32 0.0, %v3378
    %v3380 = vpop.f32.mrb[0].mxu0
    %v3381 = vadd.f32 0.0, %v3380
    %v3382 = vpop.f32.mrb[0].mxu0
    %v3383 = vadd.f32 0.0, %v3382
    %3384 = vmatprep.mubr.bf16.mxu0 %v2691
    %3385 = vmatmul.mubr.bf16.gmra.mrb[0].mxu0 %v2690
    %v3386 = vpop.f32.mrb[0].mxu0
    %v3387 = vadd.f32 0.0, %v3386
    %v3388 = vpop.f32.mrb[0].mxu0
    %v3389 = vadd.f32 0.0, %v3388
    %v3390 = vpop.f32.mrb[0].mxu0
    %v3391 = vadd.f32 0.0, %v3390
    %v3392 = vpop.f32.mrb[0].mxu0
    %v3393 = vadd.f32 0.0, %v3392
    %3394 = vdwg.mxu0
    %3395 = vmatprep.subr.bf16.mxu0 %v3151
    %3396 = vmatpush1.bf16.msra.mxu0 %v3150
    %3397 = vmatprep.subr.bf16.mxu0 %v3155
    %3398 = vmatpush1.bf16.msra.mxu0 %v3154
    %3399 = vmatprep.subr.bf16.mxu0 %v3159
    %3400 = vmatpush1.bf16.msra.mxu0 %v3158
    %3401 = vmatprep.subr.bf16.mxu0 %v3163
    %3402 = vmatpush1.bf16.msra.mxu0 %v3162
    %3403 = vmatprep.subr.bf16.mxu0 %v3167
    %3404 = vmatpush1.bf16.msra.mxu0 %v3166
    %3405 = vmatprep.subr.bf16.mxu0 %v3171
    %3406 = vmatpush1.bf16.msra.mxu0 %v3170
    %3407 = vmatprep.subr.bf16.mxu0 %v3175
    %3408 = vmatpush1.bf16.msra.mxu0 %v3174
    %3409 = vmatprep.subr.bf16.mxu0 %v3179
    %3410 = vmatpush1.bf16.msra.mxu0 %v3178
    %3411 = vmatprep.subr.bf16.mxu0 %v3183
    %3412 = vmatpush1.bf16.msra.mxu0 %v3182
    %3413 = vmatprep.subr.bf16.mxu0 %v3187
    %3414 = vmatpush1.bf16.msra.mxu0 %v3186
    %3415 = vmatprep.subr.bf16.mxu0 %v3191
    %3416 = vmatpush1.bf16.msra.mxu0 %v3190
    %3417 = vmatprep.subr.bf16.mxu0 %v3195
    %3418 = vmatpush1.bf16.msra.mxu0 %v3194
    %3419 = vmatprep.subr.bf16.mxu0 %v3199
    %3420 = vmatpush1.bf16.msra.mxu0 %v3198
    %3421 = vmatprep.subr.bf16.mxu0 %v3203
    %3422 = vmatpush1.bf16.msra.mxu0 %v3202
    %3423 = vmatprep.subr.bf16.mxu0 %v3207
    %3424 = vmatpush1.bf16.msra.mxu0 %v3206
    %3425 = vmatprep.subr.bf16.mxu0 %v3211
    %3426 = vmatpush1.bf16.msra.mxu0 %v3210
    %3427 = vmatprep.mubr.bf16.mxu0 %v2689
    %3428 = vmatmul.mubr.bf16.gmra.mrb[0].mxu0 %v2688
    %v3429 = vpop.f32.mrb[0].mxu0
    %v3430 = vadd.f32 %v3377, %v3429
    %v3431 = vpop.f32.mrb[0].mxu0
    %v3432 = vadd.f32 %v3379, %v3431
    %v3433 = vpop.f32.mrb[0].mxu0
    %v3434 = vadd.f32 %v3381, %v3433
    %v3435 = vpop.f32.mrb[0].mxu0
    %v3436 = vadd.f32 %v3383, %v3435
    %3437 = vmatprep.mubr.bf16.mxu0 %v2693
    %3438 = vmatmul.mubr.bf16.gmra.mrb[0].mxu0 %v2692
    %v3439 = vpop.f32.mrb[0].mxu0
    %v3440 = vadd.f32 %v3387, %v3439
    %v3441 = vpop.f32.mrb[0].mxu0
    %v3442 = vadd.f32 %v3389, %v3441
    %v3443 = vpop.f32.mrb[0].mxu0
    %v3444 = vadd.f32 %v3391, %v3443
    %v3445 = vpop.f32.mrb[0].mxu0
    %v3446 = vadd.f32 %v3393, %v3445
    %3447 = vdwg.mxu0
    %3448 = vmatprep.subr.bf16.mxu0 %v3089
    %3449 = vmatpush1.bf16.msra.mxu0 %v3088
    %3450 = vmatprep.subr.bf16.mxu0 %v3093
    %3451 = vmatpush1.bf16.msra.mxu0 %v3092
    %3452 = vmatprep.subr.bf16.mxu0 %v3097
    %3453 = vmatpush1.bf16.msra.mxu0 %v3096
    %3454 = vmatprep.subr.bf16.mxu0 %v3101
    %3455 = vmatpush1.bf16.msra.mxu0 %v3100
    %3456 = vmatprep.subr.bf16.mxu0 %v3105
    %3457 = vmatpush1.bf16.msra.mxu0 %v3104
    %3458 = vmatprep.subr.bf16.mxu0 %v3109
    %3459 = vmatpush1.bf16.msra.mxu0 %v3108
    %3460 = vmatprep.subr.bf16.mxu0 %v3113
    %3461 = vmatpush1.bf16.msra.mxu0 %v3112
    %3462 = vmatprep.subr.bf16.mxu0 %v3117
    %3463 = vmatpush1.bf16.msra.mxu0 %v3116
    %3464 = vmatprep.subr.bf16.mxu0 %v3121
    %3465 = vmatpush1.bf16.msra.mxu0 %v3120
    %3466 = vmatprep.subr.bf16.mxu0 %v3125
    %3467 = vmatpush1.bf16.msra.mxu0 %v3124
    %3468 = vmatprep.subr.bf16.mxu0 %v3129
    %3469 = vmatpush1.bf16.msra.mxu0 %v3128
    %3470 = vmatprep.subr.bf16.mxu0 %v3133
    %3471 = vmatpush1.bf16.msra.mxu0 %v3132
    %3472 = vmatprep.subr.bf16.mxu0 %v3137
    %3473 = vmatpush1.bf16.msra.mxu0 %v3136
    %3474 = vmatprep.subr.bf16.mxu0 %v3141
    %3475 = vmatpush1.bf16.msra.mxu0 %v3140
    %3476 = vmatprep.subr.bf16.mxu0 %v3145
    %3477 = vmatpush1.bf16.msra.mxu0 %v3144
    %3478 = vmatprep.subr.bf16.mxu0 %v3149
    %3479 = vmatpush1.bf16.msra.mxu0 %v3148
    %3480 = vmatprep.mubr.bf16.mxu0 %v2687
    %3481 = vmatmul.mubr.bf16.gmra.mrb[0].mxu0 %v2686
    %v3482 = vpop.f32.mrb[0].mxu0
    %v3483 = vadd.f32 0.0, %v3482
    %v3484 = vpop.f32.mrb[0].mxu0
    %v3485 = vadd.f32 0.0, %v3484
    %v3486 = vpop.f32.mrb[0].mxu0
    %v3487 = vadd.f32 0.0, %v3486
    %v3488 = vpop.f32.mrb[0].mxu0
    %v3489 = vadd.f32 0.0, %v3488
    %3490 = vmatprep.mubr.bf16.mxu0 %v2691
    %3491 = vmatmul.mubr.bf16.gmra.mrb[0].mxu0 %v2690
    %v3492 = vpop.f32.mrb[0].mxu0
    %v3493 = vadd.f32 0.0, %v3492
    %v3494 = vpop.f32.mrb[0].mxu0
    %v3495 = vadd.f32 0.0, %v3494
    %v3496 = vpop.f32.mrb[0].mxu0
    %v3497 = vadd.f32 0.0, %v3496
    %v3498 = vpop.f32.mrb[0].mxu0
    %v3499 = vadd.f32 0.0, %v3498
    %3500 = vdwg.mxu0
    %3501 = vmatprep.subr.bf16.mxu0 %v3153
    %3502 = vmatpush1.bf16.msra.mxu0 %v3152
    %3503 = vmatprep.subr.bf16.mxu0 %v3157
    %3504 = vmatpush1.bf16.msra.mxu0 %v3156
    %3505 = vmatprep.subr.bf16.mxu0 %v3161
    %3506 = vmatpush1.bf16.msra.mxu0 %v3160
    %3507 = vmatprep.subr.bf16.mxu0 %v3165
    %3508 = vmatpush1.bf16.msra.mxu0 %v3164
    %3509 = vmatprep.subr.bf16.mxu0 %v3169
    %3510 = vmatpush1.bf16.msra.mxu0 %v3168
    %3511 = vmatprep.subr.bf16.mxu0 %v3173
    %3512 = vmatpush1.bf16.msra.mxu0 %v3172
    %3513 = vmatprep.subr.bf16.mxu0 %v3177
    %3514 = vmatpush1.bf16.msra.mxu0 %v3176
    %3515 = vmatprep.subr.bf16.mxu0 %v3181
    %3516 = vmatpush1.bf16.msra.mxu0 %v3180
    %3517 = vmatprep.subr.bf16.mxu0 %v3185
    %3518 = vmatpush1.bf16.msra.mxu0 %v3184
    %3519 = vmatprep.subr.bf16.mxu0 %v3189
    %3520 = vmatpush1.bf16.msra.mxu0 %v3188
    %3521 = vmatprep.subr.bf16.mxu0 %v3193
    %3522 = vmatpush1.bf16.msra.mxu0 %v3192
    %3523 = vmatprep.subr.bf16.mxu0 %v3197
    %3524 = vmatpush1.bf16.msra.mxu0 %v3196
    %3525 = vmatprep.subr.bf16.mxu0 %v3201
    %3526 = vmatpush1.bf16.msra.mxu0 %v3200
    %3527 = vmatprep.subr.bf16.mxu0 %v3205
    %3528 = vmatpush1.bf16.msra.mxu0 %v3204
    %3529 = vmatprep.subr.bf16.mxu0 %v3209
    %3530 = vmatpush1.bf16.msra.mxu0 %v3208
    %3531 = vmatprep.subr.bf16.mxu0 %v3213
    %3532 = vmatpush1.bf16.msra.mxu0 %v3212
    %3533 = vmatprep.mubr.bf16.mxu0 %v2689
    %3534 = vmatmul.mubr.bf16.gmra.mrb[0].mxu0 %v2688
    %v3535 = vpop.f32.mrb[0].mxu0
    %v3536 = vadd.f32 %v3483, %v3535
    %v3537 = vpop.f32.mrb[0].mxu0
    %v3538 = vadd.f32 %v3485, %v3537
    %v3539 = vpop.f32.mrb[0].mxu0
    %v3540 = vadd.f32 %v3487, %v3539
    %v3541 = vpop.f32.mrb[0].mxu0
    %v3542 = vadd.f32 %v3489, %v3541
    %3543 = vmatprep.mubr.bf16.mxu0 %v2693
    %3544 = vmatmul.mubr.bf16.gmra.mrb[0].mxu0 %v2692
    %v3545 = vpop.f32.mrb[0].mxu0
    %v3546 = vadd.f32 %v3493, %v3545
    %v3547 = vpop.f32.mrb[0].mxu0
    %v3548 = vadd.f32 %v3495, %v3547
    %v3549 = vpop.f32.mrb[0].mxu0
    %v3550 = vadd.f32 %v3497, %v3549
    %v3551 = vpop.f32.mrb[0].mxu0
    %v3552 = vadd.f32 %v3499, %v3551
    %3553 = vdwg.mxu0
    %v3554 = vadd.f32 %v2374, %v3430
    %v3555 = vadd.f32 %v2376, %v3432
    %v3556 = vadd.f32 %v2480, %v3536
    %v3557 = vadd.f32 %v2482, %v3538
    %v3558 = vadd.f32 %v2378, %v3434
    %v3559 = vadd.f32 %v2380, %v3436
    %v3560 = vadd.f32 %v2484, %v3540
    %v3561 = vadd.f32 %v2486, %v3542
    %v3562 = vadd.f32 %v2384, %v3440
    %v3563 = vadd.f32 %v2386, %v3442
    %v3564 = vadd.f32 %v2490, %v3546
    %v3565 = vadd.f32 %v2492, %v3548
    %v3566 = vadd.f32 %v2388, %v3444
    %v3567 = vadd.f32 %v2390, %v3446
    %v3568 = vadd.f32 %v2494, %v3550
    %v3569 = vadd.f32 %v2496, %v3552
    %v3570 = vld [vmem:[#allocation8] sm:$0xf]
    %v3572 = vlaneseq
    %v3573 = vshrl.u32 %v3572, 7
    %v3574 = vsub.s32 0, %v3573
    %v3575 = vrot.slane %v3570, %v3574
    %v3576 = vlaneseq
    %v3577 = vshrl.u32 %v3576, 7
    %v3578 = vsub.s32 1, %v3577
    %v3579 = vrot.slane %v3570, %v3578
    %v3580 = vlaneseq
    %v3581 = vshrl.u32 %v3580, 7
    %v3582 = vsub.s32 2, %v3581
    %v3583 = vrot.slane %v3570, %v3582
    %v3584 = vlaneseq
    %v3585 = vshrl.u32 %v3584, 7
    %v3586 = vsub.s32 3, %v3585
    %v3587 = vrot.slane %v3570, %v3586
    %v3592 = vmul.f32 %v3554, %v3575
    %v3593 = vmul.f32 %v3555, %v3579
    %v3594 = vmul.f32 %v3556, %v3583
    %v3595 = vmul.f32 %v3557, %v3587
    %v3596 = vmul.f32 %v3558, %v3575
    %v3597 = vmul.f32 %v3559, %v3579
    %v3598 = vmul.f32 %v3560, %v3583
    %v3599 = vmul.f32 %v3561, %v3587
    %v3600 = vmul.f32 %v3562, %v3575
    %v3601 = vmul.f32 %v3563, %v3579
    %v3602 = vmul.f32 %v3564, %v3583
    %v3603 = vmul.f32 %v3565, %v3587
    %v3604 = vmul.f32 %v3566, %v3575
    %v3605 = vmul.f32 %v3567, %v3579
    %v3606 = vmul.f32 %v3568, %v3583
    %v3607 = vmul.f32 %v3569, %v3587
    %v3608 = vld [vmem:[#allocation9] sm:$0xf]
    %v3610 = vlaneseq
    %v3611 = vshrl.u32 %v3610, 7
    %v3612 = vsub.s32 0, %v3611
    %v3613 = vrot.slane %v3608, %v3612
    %v3614 = vlaneseq
    %v3615 = vshrl.u32 %v3614, 7
    %v3616 = vsub.s32 1, %v3615
    %v3617 = vrot.slane %v3608, %v3616
    %v3618 = vlaneseq
    %v3619 = vshrl.u32 %v3618, 7
    %v3620 = vsub.s32 2, %v3619
    %v3621 = vrot.slane %v3608, %v3620
    %v3622 = vlaneseq
    %v3623 = vshrl.u32 %v3622, 7
    %v3624 = vsub.s32 3, %v3623
    %v3625 = vrot.slane %v3608, %v3624
    %v3630 = vadd.f32 %v3592, %v3613
    %v3631 = vadd.f32 %v3593, %v3617
    %v3632 = vadd.f32 %v3594, %v3621
    %v3633 = vadd.f32 %v3595, %v3625
    %v3634 = vadd.f32 %v3596, %v3613
    %v3635 = vadd.f32 %v3597, %v3617
    %v3636 = vadd.f32 %v3598, %v3621
    %v3637 = vadd.f32 %v3599, %v3625
    %v3638 = vadd.f32 %v3600, %v3613
    %v3639 = vadd.f32 %v3601, %v3617
    %v3640 = vadd.f32 %v3602, %v3621
    %v3641 = vadd.f32 %v3603, %v3625
    %v3642 = vadd.f32 %v3604, %v3613
    %v3643 = vadd.f32 %v3605, %v3617
    %v3644 = vadd.f32 %v3606, %v3621
    %v3645 = vadd.f32 %v3607, %v3625
    %v3646 = vmax.f32 %v3630, 0.0
    %v3647 = vmax.f32 %v3631, 0.0
    %v3648 = vmax.f32 %v3632, 0.0
    %v3649 = vmax.f32 %v3633, 0.0
    %v3650 = vmax.f32 %v3634, 0.0
    %v3651 = vmax.f32 %v3635, 0.0
    %v3652 = vmax.f32 %v3636, 0.0
    %v3653 = vmax.f32 %v3637, 0.0
    %v3654 = vmax.f32 %v3638, 0.0
    %v3655 = vmax.f32 %v3639, 0.0
    %v3656 = vmax.f32 %v3640, 0.0
    %v3657 = vmax.f32 %v3641, 0.0
    %v3658 = vmax.f32 %v3642, 0.0
    %v3659 = vmax.f32 %v3643, 0.0
    %v3660 = vmax.f32 %v3644, 0.0
    %v3661 = vmax.f32 %v3645, 0.0
    %v3662 = vpack.c.bf16 %v3650, %v3646
    %v3663 = vpack.c.bf16 %v3651, %v3647
    %v3664 = vpack.c.bf16 %v3652, %v3648
    %v3665 = vpack.c.bf16 %v3653, %v3649
    %v3666 = vpack.c.bf16 %v3658, %v3654
    %v3667 = vpack.c.bf16 %v3659, %v3655
    %v3668 = vpack.c.bf16 %v3660, %v3656
    %v3669 = vpack.c.bf16 %v3661, %v3657
    %v3678 = vunpack.c.l.b16 %v3662
    %v3679 = vunpack.c.l.b16 %v3663
    %v3680 = vunpack.c.l.b16 %v3664
    %v3681 = vunpack.c.l.b16 %v3665
    %v3682 = vunpack.c.h.b16 %v3662
    %v3683 = vunpack.c.h.b16 %v3663
    %v3684 = vunpack.c.h.b16 %v3664
    %v3685 = vunpack.c.h.b16 %v3665
    %v3686 = vunpack.c.l.b16 %v3666
    %v3687 = vunpack.c.l.b16 %v3667
    %v3688 = vunpack.c.l.b16 %v3668
    %v3689 = vunpack.c.l.b16 %v3669
    %v3690 = vunpack.c.h.b16 %v3666
    %v3691 = vunpack.c.h.b16 %v3667
    %v3692 = vunpack.c.h.b16 %v3668
    %v3693 = vunpack.c.h.b16 %v3669
    %v3694 = vpack.c.b16 %v3679, %v3678
    %v3695 = vpack.c.b16 %v3681, %v3680
    %v3696 = vpack.c.b16 %v3683, %v3682
    %v3697 = vpack.c.b16 %v3685, %v3684
    %v3698 = vpack.c.b16 %v3687, %v3686
    %v3699 = vpack.c.b16 %v3689, %v3688
    %v3700 = vpack.c.b16 %v3691, %v3690
    %v3701 = vpack.c.b16 %v3693, %v3692
    %v3703 = vshrl.u32 %v3694, 16
    %v3705 = vrot.slane %v3703, 7
    %v3706 = vshll.u32 %v3694, 16
    %v3708 = vor.u32 %v3705, %v3706
    %v3710 = vshrl.u32 %v3695, 16
    %v3712 = vrot.slane %v3710, 7
    %v3713 = vshll.u32 %v3695, 16
    %v3715 = vor.u32 %v3712, %v3713
    %v3716 = vrot.slane %v3705, 4
    %v3718 = vshrl.u32 %v3696, 16
    %v3720 = vrot.slane %v3718, 7
    %v3721 = vshll.u32 %v3696, 16
    %v3723 = vor.u32 %v3720, %v3721
    %v3724 = vsel %vm240, %v3716, %v3723
    %v3725 = vrot.slane %v3712, 4
    %v3727 = vshrl.u32 %v3697, 16
    %v3729 = vrot.slane %v3727, 7
    %v3730 = vshll.u32 %v3697, 16
    %v3732 = vor.u32 %v3729, %v3730
    %v3733 = vsel %vm240, %v3725, %v3732
    %v3734 = vrot.slane %v3720, 4
    %v3735 = vrot.slane %v3729, 4
    %v3737 = vshrl.u32 %v3698, 16
    %v3739 = vrot.slane %v3737, 7
    %v3740 = vshll.u32 %v3698, 16
    %v3742 = vor.u32 %v3739, %v3740
    %v3744 = vshrl.u32 %v3699, 16
    %v3746 = vrot.slane %v3744, 7
    %v3747 = vshll.u32 %v3699, 16
    %v3749 = vor.u32 %v3746, %v3747
    %v3750 = vrot.slane %v3739, 4
    %v3752 = vshrl.u32 %v3700, 16
    %v3754 = vrot.slane %v3752, 7
    %v3755 = vshll.u32 %v3700, 16
    %v3757 = vor.u32 %v3754, %v3755
    %v3758 = vsel %vm240, %v3750, %v3757
    %v3759 = vrot.slane %v3746, 4
    %v3761 = vshrl.u32 %v3701, 16
    %v3763 = vrot.slane %v3761, 7
    %v3764 = vshll.u32 %v3701, 16
    %v3766 = vor.u32 %v3763, %v3764
    %v3767 = vsel %vm240, %v3759, %v3766
    %v3768 = vrot.slane %v3754, 4
    %v3769 = vrot.slane %v3763, 4
    %v3782 = vsel %vm325, %v3708, %v354
    %3783 = vst [vmem:[#allocation2] sm:$0xff] %v3782
    %v3784 = vld [vmem:[#allocation2 + $0x8] sm:$0xff]
    %v3785 = vsel %vm325, %v3715, %v3784
    %3786 = vst [vmem:[#allocation2 + $0x8] sm:$0xff] %v3785
    %3787 = vst [vmem:[#allocation2 + $0x10] sm:$0xff] %v3724
    %3788 = vst [vmem:[#allocation2 + $0x18] sm:$0xff] %v3733
    %v3789 = vld [vmem:[#allocation2 + $0x20] sm:$0x11]
    %v3790 = vsel %vm153, %v3734, %v3789
    %3791 = vst [vmem:[#allocation2 + $0x20] sm:$0x11] %v3790
    %v3792 = vld [vmem:[#allocation2 + $0x28] sm:$0x11]
    %v3793 = vsel %vm153, %v3735, %v3792
    %3794 = vst [vmem:[#allocation2 + $0x28] sm:$0x11] %v3793
    %v3795 = vld [vmem:[#allocation2 + $0x30] sm:$0xff]
    %v3796 = vsel %vm325, %v3742, %v3795
    %3797 = vst [vmem:[#allocation2 + $0x30] sm:$0xff] %v3796
    %v3798 = vld [vmem:[#allocation2 + $0x38] sm:$0xff]
    %v3799 = vsel %vm325, %v3749, %v3798
    %3800 = vst [vmem:[#allocation2 + $0x38] sm:$0xff] %v3799
    %3801 = vst [vmem:[#allocation2 + $0x40] sm:$0xff] %v3758
    %3802 = vst [vmem:[#allocation2 + $0x48] sm:$0xff] %v3767
    %v3803 = vld [vmem:[#allocation2 + $0x50] sm:$0x11]
    %v3804 = vsel %vm153, %v3768, %v3803
    %3805 = vst [vmem:[#allocation2 + $0x50] sm:$0x11] %v3804
    %v3806 = vld [vmem:[#allocation2 + $0x58] sm:$0x11]
    %v3807 = vsel %vm153, %v3769, %v3806
    %3808 = vst [vmem:[#allocation2 + $0x58] sm:$0x11] %v3807
    %v3809 = vld [vmem:[#allocation2] sm:$0xff]
    %v3810 = vld [vmem:[#allocation2 + $0x8] sm:$0xff]
    %v3811 = vld [vmem:[#allocation2 + $0x10] sm:$0xff]
    %v3812 = vld [vmem:[#allocation2 + $0x18] sm:$0xff]
    %v3813 = vld [vmem:[#allocation2 + $0x30] sm:$0xff]
    %v3814 = vld [vmem:[#allocation2 + $0x38] sm:$0xff]
    %v3815 = vld [vmem:[#allocation2 + $0x40] sm:$0xff]
    %v3816 = vld [vmem:[#allocation2 + $0x48] sm:$0xff]
    %v3817 = vld [vmem:[#allocation11] sm:$0xff]
    %v3818 = vld [vmem:[#allocation11 + $0x8] sm:$0xff]
    %v3819 = vld [vmem:[#allocation11 + $0x10] sm:$0xff]
    %v3820 = vld [vmem:[#allocation11 + $0x18] sm:$0xff]
    %v3821 = vld [vmem:[#allocation11 + $0x20] sm:$0xff]
    %v3822 = vld [vmem:[#allocation11 + $0x28] sm:$0xff]
    %v3823 = vld [vmem:[#allocation11 + $0x30] sm:$0xff]
    %v3824 = vld [vmem:[#allocation11 + $0x38] sm:$0xff]
    %v3825 = vld [vmem:[#allocation11 + $0x40] sm:$0xff]
    %v3826 = vld [vmem:[#allocation11 + $0x48] sm:$0xff]
    %v3827 = vld [vmem:[#allocation11 + $0x50] sm:$0xff]
    %v3828 = vld [vmem:[#allocation11 + $0x58] sm:$0xff]
    %v3829 = vld [vmem:[#allocation11 + $0x60] sm:$0xff]
    %v3830 = vld [vmem:[#allocation11 + $0x68] sm:$0xff]
    %v3831 = vld [vmem:[#allocation11 + $0x70] sm:$0xff]
    %v3832 = vld [vmem:[#allocation11 + $0x78] sm:$0xff]
    %v3833 = vld [vmem:[#allocation11 + $0x80] sm:$0xff]
    %v3834 = vld [vmem:[#allocation11 + $0x88] sm:$0xff]
    %v3835 = vld [vmem:[#allocation11 + $0x90] sm:$0xff]
    %v3836 = vld [vmem:[#allocation11 + $0x98] sm:$0xff]
    %v3837 = vld [vmem:[#allocation11 + $0xa0] sm:$0xff]
    %v3838 = vld [vmem:[#allocation11 + $0xa8] sm:$0xff]
    %v3839 = vld [vmem:[#allocation11 + $0xb0] sm:$0xff]
    %v3840 = vld [vmem:[#allocation11 + $0xb8] sm:$0xff]
    %v3841 = vld [vmem:[#allocation11 + $0xc0] sm:$0xff]
    %v3842 = vld [vmem:[#allocation11 + $0xc8] sm:$0xff]
    %v3843 = vld [vmem:[#allocation11 + $0xd0] sm:$0xff]
    %v3844 = vld [vmem:[#allocation11 + $0xd8] sm:$0xff]
    %v3845 = vld [vmem:[#allocation11 + $0xe0] sm:$0xff]
    %v3846 = vld [vmem:[#allocation11 + $0xe8] sm:$0xff]
    %v3847 = vld [vmem:[#allocation11 + $0xf0] sm:$0xff]
    %v3848 = vld [vmem:[#allocation11 + $0xf8] sm:$0xff]
    %v3849 = vld [vmem:[#allocation11 + $0x100] sm:$0xff]
    %v3850 = vld [vmem:[#allocation11 + $0x108] sm:$0xff]
    %v3851 = vld [vmem:[#allocation11 + $0x110] sm:$0xff]
    %v3852 = vld [vmem:[#allocation11 + $0x118] sm:$0xff]
    %v3853 = vld [vmem:[#allocation11 + $0x120] sm:$0xff]
    %v3854 = vld [vmem:[#allocation11 + $0x128] sm:$0xff]
    %v3855 = vld [vmem:[#allocation11 + $0x130] sm:$0xff]
    %v3856 = vld [vmem:[#allocation11 + $0x138] sm:$0xff]
    %v3857 = vld [vmem:[#allocation11 + $0x140] sm:$0xff]
    %v3858 = vld [vmem:[#allocation11 + $0x148] sm:$0xff]
    %v3859 = vld [vmem:[#allocation11 + $0x150] sm:$0xff]
    %v3860 = vld [vmem:[#allocation11 + $0x158] sm:$0xff]
    %v3861 = vld [vmem:[#allocation11 + $0x160] sm:$0xff]
    %v3862 = vld [vmem:[#allocation11 + $0x168] sm:$0xff]
    %v3863 = vld [vmem:[#allocation11 + $0x170] sm:$0xff]
    %v3864 = vld [vmem:[#allocation11 + $0x178] sm:$0xff]
    %v3865 = vld [vmem:[#allocation11 + $0x180] sm:$0xff]
    %v3866 = vld [vmem:[#allocation11 + $0x188] sm:$0xff]
    %v3867 = vld [vmem:[#allocation11 + $0x190] sm:$0xff]
    %v3868 = vld [vmem:[#allocation11 + $0x198] sm:$0xff]
    %v3869 = vld [vmem:[#allocation11 + $0x1a0] sm:$0xff]
    %v3870 = vld [vmem:[#allocation11 + $0x1a8] sm:$0xff]
    %v3871 = vld [vmem:[#allocation11 + $0x1b0] sm:$0xff]
    %v3872 = vld [vmem:[#allocation11 + $0x1b8] sm:$0xff]
    %v3873 = vld [vmem:[#allocation11 + $0x1c0] sm:$0xff]
    %v3874 = vld [vmem:[#allocation11 + $0x1c8] sm:$0xff]
    %v3875 = vld [vmem:[#allocation11 + $0x1d0] sm:$0xff]
    %v3876 = vld [vmem:[#allocation11 + $0x1d8] sm:$0xff]
    %v3877 = vld [vmem:[#allocation11 + $0x1e0] sm:$0xff]
    %v3878 = vld [vmem:[#allocation11 + $0x1e8] sm:$0xff]
    %v3879 = vld [vmem:[#allocation11 + $0x1f0] sm:$0xff]
    %v3880 = vld [vmem:[#allocation11 + $0x1f8] sm:$0xff]
    %v3881 = vld [vmem:[#allocation11 + $0x200] sm:$0xff]
    %v3882 = vld [vmem:[#allocation11 + $0x208] sm:$0xff]
    %v3883 = vld [vmem:[#allocation11 + $0x210] sm:$0xff]
    %v3884 = vld [vmem:[#allocation11 + $0x218] sm:$0xff]
    %v3885 = vld [vmem:[#allocation11 + $0x220] sm:$0xff]
    %v3886 = vld [vmem:[#allocation11 + $0x228] sm:$0xff]
    %v3887 = vld [vmem:[#allocation11 + $0x230] sm:$0xff]
    %v3888 = vld [vmem:[#allocation11 + $0x238] sm:$0xff]
    %v3889 = vld [vmem:[#allocation11 + $0x240] sm:$0xff]
    %v3890 = vld [vmem:[#allocation11 + $0x248] sm:$0xff]
    %v3891 = vld [vmem:[#allocation11 + $0x250] sm:$0xff]
    %v3892 = vld [vmem:[#allocation11 + $0x258] sm:$0xff]
    %v3893 = vld [vmem:[#allocation11 + $0x260] sm:$0xff]
    %v3894 = vld [vmem:[#allocation11 + $0x268] sm:$0xff]
    %v3895 = vld [vmem:[#allocation11 + $0x270] sm:$0xff]
    %v3896 = vld [vmem:[#allocation11 + $0x278] sm:$0xff]
    %v3897 = vld [vmem:[#allocation11 + $0x280] sm:$0xff]
    %v3898 = vld [vmem:[#allocation11 + $0x288] sm:$0xff]
    %v3899 = vld [vmem:[#allocation11 + $0x290] sm:$0xff]
    %v3900 = vld [vmem:[#allocation11 + $0x298] sm:$0xff]
    %v3901 = vld [vmem:[#allocation11 + $0x2a0] sm:$0xff]
    %v3902 = vld [vmem:[#allocation11 + $0x2a8] sm:$0xff]
    %v3903 = vld [vmem:[#allocation11 + $0x2b0] sm:$0xff]
    %v3904 = vld [vmem:[#allocation11 + $0x2b8] sm:$0xff]
    %v3905 = vld [vmem:[#allocation11 + $0x2c0] sm:$0xff]
    %v3906 = vld [vmem:[#allocation11 + $0x2c8] sm:$0xff]
    %v3907 = vld [vmem:[#allocation11 + $0x2d0] sm:$0xff]
    %v3908 = vld [vmem:[#allocation11 + $0x2d8] sm:$0xff]
    %v3909 = vld [vmem:[#allocation11 + $0x2e0] sm:$0xff]
    %v3910 = vld [vmem:[#allocation11 + $0x2e8] sm:$0xff]
    %v3911 = vld [vmem:[#allocation11 + $0x2f0] sm:$0xff]
    %v3912 = vld [vmem:[#allocation11 + $0x2f8] sm:$0xff]
    %v3913 = vld [vmem:[#allocation11 + $0x300] sm:$0xff]
    %v3914 = vld [vmem:[#allocation11 + $0x308] sm:$0xff]
    %v3915 = vld [vmem:[#allocation11 + $0x310] sm:$0xff]
    %v3916 = vld [vmem:[#allocation11 + $0x318] sm:$0xff]
    %v3917 = vld [vmem:[#allocation11 + $0x320] sm:$0xff]
    %v3918 = vld [vmem:[#allocation11 + $0x328] sm:$0xff]
    %v3919 = vld [vmem:[#allocation11 + $0x330] sm:$0xff]
    %v3920 = vld [vmem:[#allocation11 + $0x338] sm:$0xff]
    %v3921 = vld [vmem:[#allocation11 + $0x340] sm:$0xff]
    %v3922 = vld [vmem:[#allocation11 + $0x348] sm:$0xff]
    %v3923 = vld [vmem:[#allocation11 + $0x350] sm:$0xff]
    %v3924 = vld [vmem:[#allocation11 + $0x358] sm:$0xff]
    %v3925 = vld [vmem:[#allocation11 + $0x360] sm:$0xff]
    %v3926 = vld [vmem:[#allocation11 + $0x368] sm:$0xff]
    %v3927 = vld [vmem:[#allocation11 + $0x370] sm:$0xff]
    %v3928 = vld [vmem:[#allocation11 + $0x378] sm:$0xff]
    %v3929 = vld [vmem:[#allocation11 + $0x380] sm:$0xff]
    %v3930 = vld [vmem:[#allocation11 + $0x388] sm:$0xff]
    %v3931 = vld [vmem:[#allocation11 + $0x390] sm:$0xff]
    %v3932 = vld [vmem:[#allocation11 + $0x398] sm:$0xff]
    %v3933 = vld [vmem:[#allocation11 + $0x3a0] sm:$0xff]
    %v3934 = vld [vmem:[#allocation11 + $0x3a8] sm:$0xff]
    %v3935 = vld [vmem:[#allocation11 + $0x3b0] sm:$0xff]
    %v3936 = vld [vmem:[#allocation11 + $0x3b8] sm:$0xff]
    %v3937 = vld [vmem:[#allocation11 + $0x3c0] sm:$0xff]
    %v3938 = vld [vmem:[#allocation11 + $0x3c8] sm:$0xff]
    %v3939 = vld [vmem:[#allocation11 + $0x3d0] sm:$0xff]
    %v3940 = vld [vmem:[#allocation11 + $0x3d8] sm:$0xff]
    %v3941 = vld [vmem:[#allocation11 + $0x3e0] sm:$0xff]
    %v3942 = vld [vmem:[#allocation11 + $0x3e8] sm:$0xff]
    %v3943 = vld [vmem:[#allocation11 + $0x3f0] sm:$0xff]
    %v3944 = vld [vmem:[#allocation11 + $0x3f8] sm:$0xff]
    %v3945 = vld [vmem:[#allocation2 + $0x20] sm:$0x11]
    %v3946 = vld [vmem:[#allocation2 + $0x28] sm:$0x11]
    %v3947 = vld [vmem:[#allocation2 + $0x50] sm:$0x11]
    %v3948 = vld [vmem:[#allocation2 + $0x58] sm:$0x11]
    %v3950 = vshrl.u32 %v3809, 16
    %v3952 = vrot.slane %v3950, 4
    %v3953 = vshll.u32 %v3809, 16
    %v3955 = vrot.slane %v3953, 5
    %v3956 = vor.u32 %v3952, %v3955
    %v3957 = vrot.slane %v3956, 4
    %v3959 = vshll.u32 %v3811, 16
    %v3961 = vrot.slane %v3959, 5
    %v3962 = vsel %vm496, %v3957, %v3961
    %v3964 = vshrl.u32 %v3810, 16
    %v3966 = vrot.slane %v3964, 4
    %v3967 = vshll.u32 %v3810, 16
    %v3969 = vrot.slane %v3967, 5
    %v3970 = vor.u32 %v3966, %v3969
    %v3971 = vrot.slane %v3970, 4
    %v3973 = vshll.u32 %v3812, 16
    %v3975 = vrot.slane %v3973, 5
    %v3976 = vsel %vm496, %v3971, %v3975
    %v3977 = vshrl.u32 %v3811, 16
    %v3979 = vrot.slane %v3977, 4
    %v3980 = vor.u32 %v3979, %v3961
    %v3981 = vrot.slane %v3980, 4
    %v3983 = vshll.u32 %v3945, 16
    %v3985 = vrot.slane %v3983, 5
    %v3986 = vsel %vm496, %v3981, %v3985
    %v3987 = vshrl.u32 %v3812, 16
    %v3989 = vrot.slane %v3987, 4
    %v3990 = vor.u32 %v3989, %v3975
    %v3991 = vrot.slane %v3990, 4
    %v3993 = vshll.u32 %v3946, 16
    %v3995 = vrot.slane %v3993, 5
    %v3996 = vsel %vm496, %v3991, %v3995
    %v3998 = vshrl.u32 %v3813, 16
    %v4000 = vrot.slane %v3998, 4
    %v4001 = vshll.u32 %v3813, 16
    %v4003 = vrot.slane %v4001, 5
    %v4004 = vor.u32 %v4000, %v4003
    %v4005 = vrot.slane %v4004, 4
    %v4007 = vshll.u32 %v3815, 16
    %v4009 = vrot.slane %v4007, 5
    %v4010 = vsel %vm496, %v4005, %v4009
    %v4012 = vshrl.u32 %v3814, 16
    %v4014 = vrot.slane %v4012, 4
    %v4015 = vshll.u32 %v3814, 16
    %v4017 = vrot.slane %v4015, 5
    %v4018 = vor.u32 %v4014, %v4017
    %v4019 = vrot.slane %v4018, 4
    %v4021 = vshll.u32 %v3816, 16
    %v4023 = vrot.slane %v4021, 5
    %v4024 = vsel %vm496, %v4019, %v4023
    %v4025 = vshrl.u32 %v3815, 16
    %v4027 = vrot.slane %v4025, 4
    %v4028 = vor.u32 %v4027, %v4009
    %v4029 = vrot.slane %v4028, 4
    %v4031 = vshll.u32 %v3947, 16
    %v4033 = vrot.slane %v4031, 5
    %v4034 = vsel %vm496, %v4029, %v4033
    %v4035 = vshrl.u32 %v3816, 16
    %v4037 = vrot.slane %v4035, 4
    %v4038 = vor.u32 %v4037, %v4023
    %v4039 = vrot.slane %v4038, 4
    %v4041 = vshll.u32 %v3948, 16
    %v4043 = vrot.slane %v4041, 5
    %v4044 = vsel %vm496, %v4039, %v4043
    %s4045 = scalar_lea.vmem [#allocation11], 1024
    %v4046 = vld [vmem:[%s4045] sm:$0xff]
    %v4047 = vld [vmem:[%s4045 + $0x8] sm:$0xff]
    %v4048 = vld [vmem:[%s4045 + $0x10] sm:$0xff]
    %v4049 = vld [vmem:[%s4045 + $0x18] sm:$0xff]
    %v4050 = vld [vmem:[%s4045 + $0x20] sm:$0xff]
    %v4051 = vld [vmem:[%s4045 + $0x28] sm:$0xff]
    %v4052 = vld [vmem:[%s4045 + $0x30] sm:$0xff]
    %v4053 = vld [vmem:[%s4045 + $0x38] sm:$0xff]
    %v4054 = vld [vmem:[%s4045 + $0x40] sm:$0xff]
    %v4055 = vld [vmem:[%s4045 + $0x48] sm:$0xff]
    %v4056 = vld [vmem:[%s4045 + $0x50] sm:$0xff]
    %v4057 = vld [vmem:[%s4045 + $0x58] sm:$0xff]
    %v4058 = vld [vmem:[%s4045 + $0x60] sm:$0xff]
    %v4059 = vld [vmem:[%s4045 + $0x68] sm:$0xff]
    %v4060 = vld [vmem:[%s4045 + $0x70] sm:$0xff]
    %v4061 = vld [vmem:[%s4045 + $0x78] sm:$0xff]
    %v4062 = vld [vmem:[%s4045 + $0x80] sm:$0xff]
    %v4063 = vld [vmem:[%s4045 + $0x88] sm:$0xff]
    %v4064 = vld [vmem:[%s4045 + $0x90] sm:$0xff]
    %v4065 = vld [vmem:[%s4045 + $0x98] sm:$0xff]
    %v4066 = vld [vmem:[%s4045 + $0xa0] sm:$0xff]
    %v4067 = vld [vmem:[%s4045 + $0xa8] sm:$0xff]
    %v4068 = vld [vmem:[%s4045 + $0xb0] sm:$0xff]
    %v4069 = vld [vmem:[%s4045 + $0xb8] sm:$0xff]
    %v4070 = vld [vmem:[%s4045 + $0xc0] sm:$0xff]
    %v4071 = vld [vmem:[%s4045 + $0xc8] sm:$0xff]
    %v4072 = vld [vmem:[%s4045 + $0xd0] sm:$0xff]
    %v4073 = vld [vmem:[%s4045 + $0xd8] sm:$0xff]
    %v4074 = vld [vmem:[%s4045 + $0xe0] sm:$0xff]
    %v4075 = vld [vmem:[%s4045 + $0xe8] sm:$0xff]
    %v4076 = vld [vmem:[%s4045 + $0xf0] sm:$0xff]
    %v4077 = vld [vmem:[%s4045 + $0xf8] sm:$0xff]
    %v4078 = vld [vmem:[%s4045 + $0x100] sm:$0xff]
    %v4079 = vld [vmem:[%s4045 + $0x108] sm:$0xff]
    %v4080 = vld [vmem:[%s4045 + $0x110] sm:$0xff]
    %v4081 = vld [vmem:[%s4045 + $0x118] sm:$0xff]
    %v4082 = vld [vmem:[%s4045 + $0x120] sm:$0xff]
    %v4083 = vld [vmem:[%s4045 + $0x128] sm:$0xff]
    %v4084 = vld [vmem:[%s4045 + $0x130] sm:$0xff]
    %v4085 = vld [vmem:[%s4045 + $0x138] sm:$0xff]
    %v4086 = vld [vmem:[%s4045 + $0x140] sm:$0xff]
    %v4087 = vld [vmem:[%s4045 + $0x148] sm:$0xff]
    %v4088 = vld [vmem:[%s4045 + $0x150] sm:$0xff]
    %v4089 = vld [vmem:[%s4045 + $0x158] sm:$0xff]
    %v4090 = vld [vmem:[%s4045 + $0x160] sm:$0xff]
    %v4091 = vld [vmem:[%s4045 + $0x168] sm:$0xff]
    %v4092 = vld [vmem:[%s4045 + $0x170] sm:$0xff]
    %v4093 = vld [vmem:[%s4045 + $0x178] sm:$0xff]
    %v4094 = vld [vmem:[%s4045 + $0x180] sm:$0xff]
    %v4095 = vld [vmem:[%s4045 + $0x188] sm:$0xff]
    %v4096 = vld [vmem:[%s4045 + $0x190] sm:$0xff]
    %v4097 = vld [vmem:[%s4045 + $0x198] sm:$0xff]
    %v4098 = vld [vmem:[%s4045 + $0x1a0] sm:$0xff]
    %v4099 = vld [vmem:[%s4045 + $0x1a8] sm:$0xff]
    %v4100 = vld [vmem:[%s4045 + $0x1b0] sm:$0xff]
    %v4101 = vld [vmem:[%s4045 + $0x1b8] sm:$0xff]
    %v4102 = vld [vmem:[%s4045 + $0x1c0] sm:$0xff]
    %v4103 = vld [vmem:[%s4045 + $0x1c8] sm:$0xff]
    %v4104 = vld [vmem:[%s4045 + $0x1d0] sm:$0xff]
    %v4105 = vld [vmem:[%s4045 + $0x1d8] sm:$0xff]
    %v4106 = vld [vmem:[%s4045 + $0x1e0] sm:$0xff]
    %v4107 = vld [vmem:[%s4045 + $0x1e8] sm:$0xff]
    %v4108 = vld [vmem:[%s4045 + $0x1f0] sm:$0xff]
    %v4109 = vld [vmem:[%s4045 + $0x1f8] sm:$0xff]
    %v4110 = vld [vmem:[%s4045 + $0x200] sm:$0xff]
    %v4111 = vld [vmem:[%s4045 + $0x208] sm:$0xff]
    %v4112 = vld [vmem:[%s4045 + $0x210] sm:$0xff]
    %v4113 = vld [vmem:[%s4045 + $0x218] sm:$0xff]
    %v4114 = vld [vmem:[%s4045 + $0x220] sm:$0xff]
    %v4115 = vld [vmem:[%s4045 + $0x228] sm:$0xff]
    %v4116 = vld [vmem:[%s4045 + $0x230] sm:$0xff]
    %v4117 = vld [vmem:[%s4045 + $0x238] sm:$0xff]
    %v4118 = vld [vmem:[%s4045 + $0x240] sm:$0xff]
    %v4119 = vld [vmem:[%s4045 + $0x248] sm:$0xff]
    %v4120 = vld [vmem:[%s4045 + $0x250] sm:$0xff]
    %v4121 = vld [vmem:[%s4045 + $0x258] sm:$0xff]
    %v4122 = vld [vmem:[%s4045 + $0x260] sm:$0xff]
    %v4123 = vld [vmem:[%s4045 + $0x268] sm:$0xff]
    %v4124 = vld [vmem:[%s4045 + $0x270] sm:$0xff]
    %v4125 = vld [vmem:[%s4045 + $0x278] sm:$0xff]
    %v4126 = vld [vmem:[%s4045 + $0x280] sm:$0xff]
    %v4127 = vld [vmem:[%s4045 + $0x288] sm:$0xff]
    %v4128 = vld [vmem:[%s4045 + $0x290] sm:$0xff]
    %v4129 = vld [vmem:[%s4045 + $0x298] sm:$0xff]
    %v4130 = vld [vmem:[%s4045 + $0x2a0] sm:$0xff]
    %v4131 = vld [vmem:[%s4045 + $0x2a8] sm:$0xff]
    %v4132 = vld [vmem:[%s4045 + $0x2b0] sm:$0xff]
    %v4133 = vld [vmem:[%s4045 + $0x2b8] sm:$0xff]
    %v4134 = vld [vmem:[%s4045 + $0x2c0] sm:$0xff]
    %v4135 = vld [vmem:[%s4045 + $0x2c8] sm:$0xff]
    %v4136 = vld [vmem:[%s4045 + $0x2d0] sm:$0xff]
    %v4137 = vld [vmem:[%s4045 + $0x2d8] sm:$0xff]
    %v4138 = vld [vmem:[%s4045 + $0x2e0] sm:$0xff]
    %v4139 = vld [vmem:[%s4045 + $0x2e8] sm:$0xff]
    %v4140 = vld [vmem:[%s4045 + $0x2f0] sm:$0xff]
    %v4141 = vld [vmem:[%s4045 + $0x2f8] sm:$0xff]
    %v4142 = vld [vmem:[%s4045 + $0x300] sm:$0xff]
    %v4143 = vld [vmem:[%s4045 + $0x308] sm:$0xff]
    %v4144 = vld [vmem:[%s4045 + $0x310] sm:$0xff]
    %v4145 = vld [vmem:[%s4045 + $0x318] sm:$0xff]
    %v4146 = vld [vmem:[%s4045 + $0x320] sm:$0xff]
    %v4147 = vld [vmem:[%s4045 + $0x328] sm:$0xff]
    %v4148 = vld [vmem:[%s4045 + $0x330] sm:$0xff]
    %v4149 = vld [vmem:[%s4045 + $0x338] sm:$0xff]
    %v4150 = vld [vmem:[%s4045 + $0x340] sm:$0xff]
    %v4151 = vld [vmem:[%s4045 + $0x348] sm:$0xff]
    %v4152 = vld [vmem:[%s4045 + $0x350] sm:$0xff]
    %v4153 = vld [vmem:[%s4045 + $0x358] sm:$0xff]
    %v4154 = vld [vmem:[%s4045 + $0x360] sm:$0xff]
    %v4155 = vld [vmem:[%s4045 + $0x368] sm:$0xff]
    %v4156 = vld [vmem:[%s4045 + $0x370] sm:$0xff]
    %v4157 = vld [vmem:[%s4045 + $0x378] sm:$0xff]
    %v4158 = vld [vmem:[%s4045 + $0x380] sm:$0xff]
    %v4159 = vld [vmem:[%s4045 + $0x388] sm:$0xff]
    %v4160 = vld [vmem:[%s4045 + $0x390] sm:$0xff]
    %v4161 = vld [vmem:[%s4045 + $0x398] sm:$0xff]
    %v4162 = vld [vmem:[%s4045 + $0x3a0] sm:$0xff]
    %v4163 = vld [vmem:[%s4045 + $0x3a8] sm:$0xff]
    %v4164 = vld [vmem:[%s4045 + $0x3b0] sm:$0xff]
    %v4165 = vld [vmem:[%s4045 + $0x3b8] sm:$0xff]
    %v4166 = vld [vmem:[%s4045 + $0x3c0] sm:$0xff]
    %v4167 = vld [vmem:[%s4045 + $0x3c8] sm:$0xff]
    %v4168 = vld [vmem:[%s4045 + $0x3d0] sm:$0xff]
    %v4169 = vld [vmem:[%s4045 + $0x3d8] sm:$0xff]
    %v4170 = vld [vmem:[%s4045 + $0x3e0] sm:$0xff]
    %v4171 = vld [vmem:[%s4045 + $0x3e8] sm:$0xff]
    %v4172 = vld [vmem:[%s4045 + $0x3f0] sm:$0xff]
    %v4173 = vld [vmem:[%s4045 + $0x3f8] sm:$0xff]
    %v4174 = vunpack.c.l.b16 %v3962
    %v4175 = vunpack.c.h.b16 %v3962
    %v4176 = vunpack.c.l.b16 %v3976
    %v4177 = vunpack.c.h.b16 %v3976
    %v4178 = vunpack.c.l.b16 %v3986
    %v4179 = vunpack.c.h.b16 %v3986
    %v4180 = vunpack.c.l.b16 %v3996
    %v4181 = vunpack.c.h.b16 %v3996
    %v4182 = vunpack.c.l.b16 %v4010
    %v4183 = vunpack.c.h.b16 %v4010
    %v4184 = vunpack.c.l.b16 %v4024
    %v4185 = vunpack.c.h.b16 %v4024
    %v4186 = vunpack.c.l.b16 %v4034
    %v4187 = vunpack.c.h.b16 %v4034
    %v4188 = vunpack.c.l.b16 %v4044
    %v4189 = vunpack.c.h.b16 %v4044
    %v4190 = vpack.c.b16 %v4178, %v4174
    %v4191 = vpack.c.b16 %v4179, %v4175
    %v4192 = vpack.c.b16 %v4180, %v4176
    %v4193 = vpack.c.b16 %v4181, %v4177
    %v4194 = vpack.c.b16 %v4186, %v4182
    %v4195 = vpack.c.b16 %v4187, %v4183
    %v4196 = vpack.c.b16 %v4188, %v4184
    %v4197 = vpack.c.b16 %v4189, %v4185
    %v4334 = vunpack.c.l.b16 %v4046
    %v4335 = vunpack.c.h.b16 %v4046
    %v4336 = vunpack.c.l.b16 %v4047
    %v4337 = vunpack.c.h.b16 %v4047
    %v4338 = vunpack.c.l.b16 %v4048
    %v4339 = vunpack.c.h.b16 %v4048
    %v4340 = vunpack.c.l.b16 %v4049
    %v4341 = vunpack.c.h.b16 %v4049
    %v4342 = vunpack.c.l.b16 %v4050
    %v4343 = vunpack.c.h.b16 %v4050
    %v4344 = vunpack.c.l.b16 %v4051
    %v4345 = vunpack.c.h.b16 %v4051
    %v4346 = vunpack.c.l.b16 %v4052
    %v4347 = vunpack.c.h.b16 %v4052
    %v4348 = vunpack.c.l.b16 %v4053
    %v4349 = vunpack.c.h.b16 %v4053
    %v4350 = vunpack.c.l.b16 %v4054
    %v4351 = vunpack.c.h.b16 %v4054
    %v4352 = vunpack.c.l.b16 %v4055
    %v4353 = vunpack.c.h.b16 %v4055
    %v4354 = vunpack.c.l.b16 %v4056
    %v4355 = vunpack.c.h.b16 %v4056
    %v4356 = vunpack.c.l.b16 %v4057
    %v4357 = vunpack.c.h.b16 %v4057
    %v4358 = vunpack.c.l.b16 %v4058
    %v4359 = vunpack.c.h.b16 %v4058
    %v4360 = vunpack.c.l.b16 %v4059
    %v4361 = vunpack.c.h.b16 %v4059
    %v4362 = vunpack.c.l.b16 %v4060
    %v4363 = vunpack.c.h.b16 %v4060
    %v4364 = vunpack.c.l.b16 %v4061
    %v4365 = vunpack.c.h.b16 %v4061
    %v4366 = vunpack.c.l.b16 %v4062
    %v4367 = vunpack.c.h.b16 %v4062
    %v4368 = vunpack.c.l.b16 %v4063
    %v4369 = vunpack.c.h.b16 %v4063
    %v4370 = vunpack.c.l.b16 %v4064
    %v4371 = vunpack.c.h.b16 %v4064
    %v4372 = vunpack.c.l.b16 %v4065
    %v4373 = vunpack.c.h.b16 %v4065
    %v4374 = vunpack.c.l.b16 %v4066
    %v4375 = vunpack.c.h.b16 %v4066
    %v4376 = vunpack.c.l.b16 %v4067
    %v4377 = vunpack.c.h.b16 %v4067
    %v4378 = vunpack.c.l.b16 %v4068
    %v4379 = vunpack.c.h.b16 %v4068
    %v4380 = vunpack.c.l.b16 %v4069
    %v4381 = vunpack.c.h.b16 %v4069
    %v4382 = vunpack.c.l.b16 %v4070
    %v4383 = vunpack.c.h.b16 %v4070
    %v4384 = vunpack.c.l.b16 %v4071
    %v4385 = vunpack.c.h.b16 %v4071
    %v4386 = vunpack.c.l.b16 %v4072
    %v4387 = vunpack.c.h.b16 %v4072
    %v4388 = vunpack.c.l.b16 %v4073
    %v4389 = vunpack.c.h.b16 %v4073
    %v4390 = vunpack.c.l.b16 %v4074
    %v4391 = vunpack.c.h.b16 %v4074
    %v4392 = vunpack.c.l.b16 %v4075
    %v4393 = vunpack.c.h.b16 %v4075
    %v4394 = vunpack.c.l.b16 %v4076
    %v4395 = vunpack.c.h.b16 %v4076
    %v4396 = vunpack.c.l.b16 %v4077
    %v4397 = vunpack.c.h.b16 %v4077
    %v4398 = vunpack.c.l.b16 %v4078
    %v4399 = vunpack.c.h.b16 %v4078
    %v4400 = vunpack.c.l.b16 %v4079
    %v4401 = vunpack.c.h.b16 %v4079
    %v4402 = vunpack.c.l.b16 %v4080
    %v4403 = vunpack.c.h.b16 %v4080
    %v4404 = vunpack.c.l.b16 %v4081
    %v4405 = vunpack.c.h.b16 %v4081
    %v4406 = vunpack.c.l.b16 %v4082
    %v4407 = vunpack.c.h.b16 %v4082
    %v4408 = vunpack.c.l.b16 %v4083
    %v4409 = vunpack.c.h.b16 %v4083
    %v4410 = vunpack.c.l.b16 %v4084
    %v4411 = vunpack.c.h.b16 %v4084
    %v4412 = vunpack.c.l.b16 %v4085
    %v4413 = vunpack.c.h.b16 %v4085
    %v4414 = vunpack.c.l.b16 %v4086
    %v4415 = vunpack.c.h.b16 %v4086
    %v4416 = vunpack.c.l.b16 %v4087
    %v4417 = vunpack.c.h.b16 %v4087
    %v4418 = vunpack.c.l.b16 %v4088
    %v4419 = vunpack.c.h.b16 %v4088
    %v4420 = vunpack.c.l.b16 %v4089
    %v4421 = vunpack.c.h.b16 %v4089
    %v4422 = vunpack.c.l.b16 %v4090
    %v4423 = vunpack.c.h.b16 %v4090
    %v4424 = vunpack.c.l.b16 %v4091
    %v4425 = vunpack.c.h.b16 %v4091
    %v4426 = vunpack.c.l.b16 %v4092
    %v4427 = vunpack.c.h.b16 %v4092
    %v4428 = vunpack.c.l.b16 %v4093
    %v4429 = vunpack.c.h.b16 %v4093
    %v4430 = vunpack.c.l.b16 %v4094
    %v4431 = vunpack.c.h.b16 %v4094
    %v4432 = vunpack.c.l.b16 %v4095
    %v4433 = vunpack.c.h.b16 %v4095
    %v4434 = vunpack.c.l.b16 %v4096
    %v4435 = vunpack.c.h.b16 %v4096
    %v4436 = vunpack.c.l.b16 %v4097
    %v4437 = vunpack.c.h.b16 %v4097
    %v4438 = vunpack.c.l.b16 %v4098
    %v4439 = vunpack.c.h.b16 %v4098
    %v4440 = vunpack.c.l.b16 %v4099
    %v4441 = vunpack.c.h.b16 %v4099
    %v4442 = vunpack.c.l.b16 %v4100
    %v4443 = vunpack.c.h.b16 %v4100
    %v4444 = vunpack.c.l.b16 %v4101
    %v4445 = vunpack.c.h.b16 %v4101
    %v4446 = vunpack.c.l.b16 %v4102
    %v4447 = vunpack.c.h.b16 %v4102
    %v4448 = vunpack.c.l.b16 %v4103
    %v4449 = vunpack.c.h.b16 %v4103
    %v4450 = vunpack.c.l.b16 %v4104
    %v4451 = vunpack.c.h.b16 %v4104
    %v4452 = vunpack.c.l.b16 %v4105
    %v4453 = vunpack.c.h.b16 %v4105
    %v4454 = vunpack.c.l.b16 %v4106
    %v4455 = vunpack.c.h.b16 %v4106
    %v4456 = vunpack.c.l.b16 %v4107
    %v4457 = vunpack.c.h.b16 %v4107
    %v4458 = vunpack.c.l.b16 %v4108
    %v4459 = vunpack.c.h.b16 %v4108
    %v4460 = vunpack.c.l.b16 %v4109
    %v4461 = vunpack.c.h.b16 %v4109
    %v4462 = vunpack.c.l.b16 %v4110
    %v4463 = vunpack.c.h.b16 %v4110
    %v4464 = vunpack.c.l.b16 %v4111
    %v4465 = vunpack.c.h.b16 %v4111
    %v4466 = vunpack.c.l.b16 %v4112
    %v4467 = vunpack.c.h.b16 %v4112
    %v4468 = vunpack.c.l.b16 %v4113
    %v4469 = vunpack.c.h.b16 %v4113
    %v4470 = vunpack.c.l.b16 %v4114
    %v4471 = vunpack.c.h.b16 %v4114
    %v4472 = vunpack.c.l.b16 %v4115
    %v4473 = vunpack.c.h.b16 %v4115
    %v4474 = vunpack.c.l.b16 %v4116
    %v4475 = vunpack.c.h.b16 %v4116
    %v4476 = vunpack.c.l.b16 %v4117
    %v4477 = vunpack.c.h.b16 %v4117
    %v4478 = vunpack.c.l.b16 %v4118
    %v4479 = vunpack.c.h.b16 %v4118
    %v4480 = vunpack.c.l.b16 %v4119
    %v4481 = vunpack.c.h.b16 %v4119
    %v4482 = vunpack.c.l.b16 %v4120
    %v4483 = vunpack.c.h.b16 %v4120
    %v4484 = vunpack.c.l.b16 %v4121
    %v4485 = vunpack.c.h.b16 %v4121
    %v4486 = vunpack.c.l.b16 %v4122
    %v4487 = vunpack.c.h.b16 %v4122
    %v4488 = vunpack.c.l.b16 %v4123
    %v4489 = vunpack.c.h.b16 %v4123
    %v4490 = vunpack.c.l.b16 %v4124
    %v4491 = vunpack.c.h.b16 %v4124
    %v4492 = vunpack.c.l.b16 %v4125
    %v4493 = vunpack.c.h.b16 %v4125
    %v4494 = vunpack.c.l.b16 %v4126
    %v4495 = vunpack.c.h.b16 %v4126
    %v4496 = vunpack.c.l.b16 %v4127
    %v4497 = vunpack.c.h.b16 %v4127
    %v4498 = vunpack.c.l.b16 %v4128
    %v4499 = vunpack.c.h.b16 %v4128
    %v4500 = vunpack.c.l.b16 %v4129
    %v4501 = vunpack.c.h.b16 %v4129
    %v4502 = vunpack.c.l.b16 %v4130
    %v4503 = vunpack.c.h.b16 %v4130
    %v4504 = vunpack.c.l.b16 %v4131
    %v4505 = vunpack.c.h.b16 %v4131
    %v4506 = vunpack.c.l.b16 %v4132
    %v4507 = vunpack.c.h.b16 %v4132
    %v4508 = vunpack.c.l.b16 %v4133
    %v4509 = vunpack.c.h.b16 %v4133
    %v4510 = vunpack.c.l.b16 %v4134
    %v4511 = vunpack.c.h.b16 %v4134
    %v4512 = vunpack.c.l.b16 %v4135
    %v4513 = vunpack.c.h.b16 %v4135
    %v4514 = vunpack.c.l.b16 %v4136
    %v4515 = vunpack.c.h.b16 %v4136
    %v4516 = vunpack.c.l.b16 %v4137
    %v4517 = vunpack.c.h.b16 %v4137
    %v4518 = vunpack.c.l.b16 %v4138
    %v4519 = vunpack.c.h.b16 %v4138
    %v4520 = vunpack.c.l.b16 %v4139
    %v4521 = vunpack.c.h.b16 %v4139
    %v4522 = vunpack.c.l.b16 %v4140
    %v4523 = vunpack.c.h.b16 %v4140
    %v4524 = vunpack.c.l.b16 %v4141
    %v4525 = vunpack.c.h.b16 %v4141
    %v4526 = vunpack.c.l.b16 %v4142
    %v4527 = vunpack.c.h.b16 %v4142
    %v4528 = vunpack.c.l.b16 %v4143
    %v4529 = vunpack.c.h.b16 %v4143
    %v4530 = vunpack.c.l.b16 %v4144
    %v4531 = vunpack.c.h.b16 %v4144
    %v4532 = vunpack.c.l.b16 %v4145
    %v4533 = vunpack.c.h.b16 %v4145
    %v4534 = vunpack.c.l.b16 %v4146
    %v4535 = vunpack.c.h.b16 %v4146
    %v4536 = vunpack.c.l.b16 %v4147
    %v4537 = vunpack.c.h.b16 %v4147
    %v4538 = vunpack.c.l.b16 %v4148
    %v4539 = vunpack.c.h.b16 %v4148
    %v4540 = vunpack.c.l.b16 %v4149
    %v4541 = vunpack.c.h.b16 %v4149
    %v4542 = vunpack.c.l.b16 %v4150
    %v4543 = vunpack.c.h.b16 %v4150
    %v4544 = vunpack.c.l.b16 %v4151
    %v4545 = vunpack.c.h.b16 %v4151
    %v4546 = vunpack.c.l.b16 %v4152
    %v4547 = vunpack.c.h.b16 %v4152
    %v4548 = vunpack.c.l.b16 %v4153
    %v4549 = vunpack.c.h.b16 %v4153
    %v4550 = vunpack.c.l.b16 %v4154
    %v4551 = vunpack.c.h.b16 %v4154
    %v4552 = vunpack.c.l.b16 %v4155
    %v4553 = vunpack.c.h.b16 %v4155
    %v4554 = vunpack.c.l.b16 %v4156
    %v4555 = vunpack.c.h.b16 %v4156
    %v4556 = vunpack.c.l.b16 %v4157
    %v4557 = vunpack.c.h.b16 %v4157
    %v4558 = vunpack.c.l.b16 %v4158
    %v4559 = vunpack.c.h.b16 %v4158
    %v4560 = vunpack.c.l.b16 %v4159
    %v4561 = vunpack.c.h.b16 %v4159
    %v4562 = vunpack.c.l.b16 %v4160
    %v4563 = vunpack.c.h.b16 %v4160
    %v4564 = vunpack.c.l.b16 %v4161
    %v4565 = vunpack.c.h.b16 %v4161
    %v4566 = vunpack.c.l.b16 %v4162
    %v4567 = vunpack.c.h.b16 %v4162
    %v4568 = vunpack.c.l.b16 %v4163
    %v4569 = vunpack.c.h.b16 %v4163
    %v4570 = vunpack.c.l.b16 %v4164
    %v4571 = vunpack.c.h.b16 %v4164
    %v4572 = vunpack.c.l.b16 %v4165
    %v4573 = vunpack.c.h.b16 %v4165
    %v4574 = vunpack.c.l.b16 %v4166
    %v4575 = vunpack.c.h.b16 %v4166
    %v4576 = vunpack.c.l.b16 %v4167
    %v4577 = vunpack.c.h.b16 %v4167
    %v4578 = vunpack.c.l.b16 %v4168
    %v4579 = vunpack.c.h.b16 %v4168
    %v4580 = vunpack.c.l.b16 %v4169
    %v4581 = vunpack.c.h.b16 %v4169
    %v4582 = vunpack.c.l.b16 %v4170
    %v4583 = vunpack.c.h.b16 %v4170
    %v4584 = vunpack.c.l.b16 %v4171
    %v4585 = vunpack.c.h.b16 %v4171
    %v4586 = vunpack.c.l.b16 %v4172
    %v4587 = vunpack.c.h.b16 %v4172
    %v4588 = vunpack.c.l.b16 %v4173
    %v4589 = vunpack.c.h.b16 %v4173
    %v4590 = vpack.c.b16 %v4338, %v4334
    %v4591 = vpack.c.b16 %v4339, %v4335
    %v4592 = vpack.c.b16 %v4340, %v4336
    %v4593 = vpack.c.b16 %v4341, %v4337
    %v4594 = vpack.c.b16 %v4346, %v4342
    %v4595 = vpack.c.b16 %v4347, %v4343
    %v4596 = vpack.c.b16 %v4348, %v4344
    %v4597 = vpack.c.b16 %v4349, %v4345
    %v4598 = vpack.c.b16 %v4354, %v4350
    %v4599 = vpack.c.b16 %v4355, %v4351
    %v4600 = vpack.c.b16 %v4356, %v4352
    %v4601 = vpack.c.b16 %v4357, %v4353
    %v4602 = vpack.c.b16 %v4362, %v4358
    %v4603 = vpack.c.b16 %v4363, %v4359
    %v4604 = vpack.c.b16 %v4364, %v4360
    %v4605 = vpack.c.b16 %v4365, %v4361
    %v4606 = vpack.c.b16 %v4370, %v4366
    %v4607 = vpack.c.b16 %v4371, %v4367
    %v4608 = vpack.c.b16 %v4372, %v4368
    %v4609 = vpack.c.b16 %v4373, %v4369
    %v4610 = vpack.c.b16 %v4378, %v4374
    %v4611 = vpack.c.b16 %v4379, %v4375
    %v4612 = vpack.c.b16 %v4380, %v4376
    %v4613 = vpack.c.b16 %v4381, %v4377
    %v4614 = vpack.c.b16 %v4386, %v4382
    %v4615 = vpack.c.b16 %v4387, %v4383
    %v4616 = vpack.c.b16 %v4388, %v4384
    %v4617 = vpack.c.b16 %v4389, %v4385
    %v4618 = vpack.c.b16 %v4394, %v4390
    %v4619 = vpack.c.b16 %v4395, %v4391
    %v4620 = vpack.c.b16 %v4396, %v4392
    %v4621 = vpack.c.b16 %v4397, %v4393
    %v4622 = vpack.c.b16 %v4402, %v4398
    %v4623 = vpack.c.b16 %v4403, %v4399
    %v4624 = vpack.c.b16 %v4404, %v4400
    %v4625 = vpack.c.b16 %v4405, %v4401
    %v4626 = vpack.c.b16 %v4410, %v4406
    %v4627 = vpack.c.b16 %v4411, %v4407
    %v4628 = vpack.c.b16 %v4412, %v4408
    %v4629 = vpack.c.b16 %v4413, %v4409
    %v4630 = vpack.c.b16 %v4418, %v4414
    %v4631 = vpack.c.b16 %v4419, %v4415
    %v4632 = vpack.c.b16 %v4420, %v4416
    %v4633 = vpack.c.b16 %v4421, %v4417
    %v4634 = vpack.c.b16 %v4426, %v4422
    %v4635 = vpack.c.b16 %v4427, %v4423
    %v4636 = vpack.c.b16 %v4428, %v4424
    %v4637 = vpack.c.b16 %v4429, %v4425
    %v4638 = vpack.c.b16 %v4434, %v4430
    %v4639 = vpack.c.b16 %v4435, %v4431
    %v4640 = vpack.c.b16 %v4436, %v4432
    %v4641 = vpack.c.b16 %v4437, %v4433
    %v4642 = vpack.c.b16 %v4442, %v4438
    %v4643 = vpack.c.b16 %v4443, %v4439
    %v4644 = vpack.c.b16 %v4444, %v4440
    %v4645 = vpack.c.b16 %v4445, %v4441
    %v4646 = vpack.c.b16 %v4450, %v4446
    %v4647 = vpack.c.b16 %v4451, %v4447
    %v4648 = vpack.c.b16 %v4452, %v4448
    %v4649 = vpack.c.b16 %v4453, %v4449
    %v4650 = vpack.c.b16 %v4458, %v4454
    %v4651 = vpack.c.b16 %v4459, %v4455
    %v4652 = vpack.c.b16 %v4460, %v4456
    %v4653 = vpack.c.b16 %v4461, %v4457
    %v4654 = vpack.c.b16 %v4466, %v4462
    %v4655 = vpack.c.b16 %v4467, %v4463
    %v4656 = vpack.c.b16 %v4468, %v4464
    %v4657 = vpack.c.b16 %v4469, %v4465
    %v4658 = vpack.c.b16 %v4474, %v4470
    %v4659 = vpack.c.b16 %v4475, %v4471
    %v4660 = vpack.c.b16 %v4476, %v4472
    %v4661 = vpack.c.b16 %v4477, %v4473
    %v4662 = vpack.c.b16 %v4482, %v4478
    %v4663 = vpack.c.b16 %v4483, %v4479
    %v4664 = vpack.c.b16 %v4484, %v4480
    %v4665 = vpack.c.b16 %v4485, %v4481
    %v4666 = vpack.c.b16 %v4490, %v4486
    %v4667 = vpack.c.b16 %v4491, %v4487
    %v4668 = vpack.c.b16 %v4492, %v4488
    %v4669 = vpack.c.b16 %v4493, %v4489
    %v4670 = vpack.c.b16 %v4498, %v4494
    %v4671 = vpack.c.b16 %v4499, %v4495
    %v4672 = vpack.c.b16 %v4500, %v4496
    %v4673 = vpack.c.b16 %v4501, %v4497
    %v4674 = vpack.c.b16 %v4506, %v4502
    %v4675 = vpack.c.b16 %v4507, %v4503
    %v4676 = vpack.c.b16 %v4508, %v4504
    %v4677 = vpack.c.b16 %v4509, %v4505
    %v4678 = vpack.c.b16 %v4514, %v4510
    %v4679 = vpack.c.b16 %v4515, %v4511
    %v4680 = vpack.c.b16 %v4516, %v4512
    %v4681 = vpack.c.b16 %v4517, %v4513
    %v4682 = vpack.c.b16 %v4522, %v4518
    %v4683 = vpack.c.b16 %v4523, %v4519
    %v4684 = vpack.c.b16 %v4524, %v4520
    %v4685 = vpack.c.b16 %v4525, %v4521
    %v4686 = vpack.c.b16 %v4530, %v4526
    %v4687 = vpack.c.b16 %v4531, %v4527
    %v4688 = vpack.c.b16 %v4532, %v4528
    %v4689 = vpack.c.b16 %v4533, %v4529
    %v4690 = vpack.c.b16 %v4538, %v4534
    %v4691 = vpack.c.b16 %v4539, %v4535
    %v4692 = vpack.c.b16 %v4540, %v4536
    %v4693 = vpack.c.b16 %v4541, %v4537
    %v4694 = vpack.c.b16 %v4546, %v4542
    %v4695 = vpack.c.b16 %v4547, %v4543
    %v4696 = vpack.c.b16 %v4548, %v4544
    %v4697 = vpack.c.b16 %v4549, %v4545
    %v4698 = vpack.c.b16 %v4554, %v4550
    %v4699 = vpack.c.b16 %v4555, %v4551
    %v4700 = vpack.c.b16 %v4556, %v4552
    %v4701 = vpack.c.b16 %v4557, %v4553
    %v4702 = vpack.c.b16 %v4562, %v4558
    %v4703 = vpack.c.b16 %v4563, %v4559
    %v4704 = vpack.c.b16 %v4564, %v4560
    %v4705 = vpack.c.b16 %v4565, %v4561
    %v4706 = vpack.c.b16 %v4570, %v4566
    %v4707 = vpack.c.b16 %v4571, %v4567
    %v4708 = vpack.c.b16 %v4572, %v4568
    %v4709 = vpack.c.b16 %v4573, %v4569
    %v4710 = vpack.c.b16 %v4578, %v4574
    %v4711 = vpack.c.b16 %v4579, %v4575
    %v4712 = vpack.c.b16 %v4580, %v4576
    %v4713 = vpack.c.b16 %v4581, %v4577
    %v4714 = vpack.c.b16 %v4586, %v4582
    %v4715 = vpack.c.b16 %v4587, %v4583
    %v4716 = vpack.c.b16 %v4588, %v4584
    %v4717 = vpack.c.b16 %v4589, %v4585
    %4846 = vmatprep.subr.bf16.mxu0 %v4591
    %4847 = vmatpush1.bf16.msra.mxu0 %v4590
    %4848 = vmatprep.subr.bf16.mxu0 %v4595
    %4849 = vmatpush1.bf16.msra.mxu0 %v4594
    %4850 = vmatprep.subr.bf16.mxu0 %v4599
    %4851 = vmatpush1.bf16.msra.mxu0 %v4598
    %4852 = vmatprep.subr.bf16.mxu0 %v4603
    %4853 = vmatpush1.bf16.msra.mxu0 %v4602
    %4854 = vmatprep.subr.bf16.mxu0 %v4607
    %4855 = vmatpush1.bf16.msra.mxu0 %v4606
    %4856 = vmatprep.subr.bf16.mxu0 %v4611
    %4857 = vmatpush1.bf16.msra.mxu0 %v4610
    %4858 = vmatprep.subr.bf16.mxu0 %v4615
    %4859 = vmatpush1.bf16.msra.mxu0 %v4614
    %4860 = vmatprep.subr.bf16.mxu0 %v4619
    %4861 = vmatpush1.bf16.msra.mxu0 %v4618
    %4862 = vmatprep.subr.bf16.mxu0 %v4623
    %4863 = vmatpush1.bf16.msra.mxu0 %v4622
    %4864 = vmatprep.subr.bf16.mxu0 %v4627
    %4865 = vmatpush1.bf16.msra.mxu0 %v4626
    %4866 = vmatprep.subr.bf16.mxu0 %v4631
    %4867 = vmatpush1.bf16.msra.mxu0 %v4630
    %4868 = vmatprep.subr.bf16.mxu0 %v4635
    %4869 = vmatpush1.bf16.msra.mxu0 %v4634
    %4870 = vmatprep.subr.bf16.mxu0 %v4639
    %4871 = vmatpush1.bf16.msra.mxu0 %v4638
    %4872 = vmatprep.subr.bf16.mxu0 %v4643
    %4873 = vmatpush1.bf16.msra.mxu0 %v4642
    %4874 = vmatprep.subr.bf16.mxu0 %v4647
    %4875 = vmatpush1.bf16.msra.mxu0 %v4646
    %4876 = vmatprep.subr.bf16.mxu0 %v4651
    %4877 = vmatpush1.bf16.msra.mxu0 %v4650
    %4878 = vmatprep.mubr.bf16.mxu0 %v4191
    %4879 = vmatmul.mubr.bf16.gmra.mrb[0].mxu0 %v4190
    %v4880 = vpop.f32.mrb[0].mxu0
    %v4881 = vadd.f32 0.0, %v4880
    %v4882 = vpop.f32.mrb[0].mxu0
    %v4883 = vadd.f32 0.0, %v4882
    %v4884 = vpop.f32.mrb[0].mxu0
    %v4885 = vadd.f32 0.0, %v4884
    %v4886 = vpop.f32.mrb[0].mxu0
    %v4887 = vadd.f32 0.0, %v4886
    %4888 = vmatprep.mubr.bf16.mxu0 %v4195
    %4889 = vmatmul.mubr.bf16.gmra.mrb[0].mxu0 %v4194
    %v4890 = vpop.f32.mrb[0].mxu0
    %v4891 = vadd.f32 0.0, %v4890
    %v4892 = vpop.f32.mrb[0].mxu0
    %v4893 = vadd.f32 0.0, %v4892
    %v4894 = vpop.f32.mrb[0].mxu0
    %v4895 = vadd.f32 0.0, %v4894
    %v4896 = vpop.f32.mrb[0].mxu0
    %v4897 = vadd.f32 0.0, %v4896
    %4898 = vdwg.mxu0
    %4899 = vmatprep.subr.bf16.mxu0 %v4655
    %4900 = vmatpush1.bf16.msra.mxu0 %v4654
    %4901 = vmatprep.subr.bf16.mxu0 %v4659
    %4902 = vmatpush1.bf16.msra.mxu0 %v4658
    %4903 = vmatprep.subr.bf16.mxu0 %v4663
    %4904 = vmatpush1.bf16.msra.mxu0 %v4662
    %4905 = vmatprep.subr.bf16.mxu0 %v4667
    %4906 = vmatpush1.bf16.msra.mxu0 %v4666
    %4907 = vmatprep.subr.bf16.mxu0 %v4671
    %4908 = vmatpush1.bf16.msra.mxu0 %v4670
    %4909 = vmatprep.subr.bf16.mxu0 %v4675
    %4910 = vmatpush1.bf16.msra.mxu0 %v4674
    %4911 = vmatprep.subr.bf16.mxu0 %v4679
    %4912 = vmatpush1.bf16.msra.mxu0 %v4678
    %4913 = vmatprep.subr.bf16.mxu0 %v4683
    %4914 = vmatpush1.bf16.msra.mxu0 %v4682
    %4915 = vmatprep.subr.bf16.mxu0 %v4687
    %4916 = vmatpush1.bf16.msra.mxu0 %v4686
    %4917 = vmatprep.subr.bf16.mxu0 %v4691
    %4918 = vmatpush1.bf16.msra.mxu0 %v4690
    %4919 = vmatprep.subr.bf16.mxu0 %v4695
    %4920 = vmatpush1.bf16.msra.mxu0 %v4694
    %4921 = vmatprep.subr.bf16.mxu0 %v4699
    %4922 = vmatpush1.bf16.msra.mxu0 %v4698
    %4923 = vmatprep.subr.bf16.mxu0 %v4703
    %4924 = vmatpush1.bf16.msra.mxu0 %v4702
    %4925 = vmatprep.subr.bf16.mxu0 %v4707
    %4926 = vmatpush1.bf16.msra.mxu0 %v4706
    %4927 = vmatprep.subr.bf16.mxu0 %v4711
    %4928 = vmatpush1.bf16.msra.mxu0 %v4710
    %4929 = vmatprep.subr.bf16.mxu0 %v4715
    %4930 = vmatpush1.bf16.msra.mxu0 %v4714
    %4931 = vmatprep.mubr.bf16.mxu0 %v4193
    %4932 = vmatmul.mubr.bf16.gmra.mrb[0].mxu0 %v4192
    %v4933 = vpop.f32.mrb[0].mxu0
    %v4934 = vadd.f32 %v4881, %v4933
    %v4935 = vpop.f32.mrb[0].mxu0
    %v4936 = vadd.f32 %v4883, %v4935
    %v4937 = vpop.f32.mrb[0].mxu0
    %v4938 = vadd.f32 %v4885, %v4937
    %v4939 = vpop.f32.mrb[0].mxu0
    %v4940 = vadd.f32 %v4887, %v4939
    %4941 = vmatprep.mubr.bf16.mxu0 %v4197
    %4942 = vmatmul.mubr.bf16.gmra.mrb[0].mxu0 %v4196
    %v4943 = vpop.f32.mrb[0].mxu0
    %v4944 = vadd.f32 %v4891, %v4943
    %v4945 = vpop.f32.mrb[0].mxu0
    %v4946 = vadd.f32 %v4893, %v4945
    %v4947 = vpop.f32.mrb[0].mxu0
    %v4948 = vadd.f32 %v4895, %v4947
    %v4949 = vpop.f32.mrb[0].mxu0
    %v4950 = vadd.f32 %v4897, %v4949
    %4951 = vdwg.mxu0
    %4952 = vmatprep.subr.bf16.mxu0 %v4593
    %4953 = vmatpush1.bf16.msra.mxu0 %v4592
    %4954 = vmatprep.subr.bf16.mxu0 %v4597
    %4955 = vmatpush1.bf16.msra.mxu0 %v4596
    %4956 = vmatprep.subr.bf16.mxu0 %v4601
    %4957 = vmatpush1.bf16.msra.mxu0 %v4600
    %4958 = vmatprep.subr.bf16.mxu0 %v4605
    %4959 = vmatpush1.bf16.msra.mxu0 %v4604
    %4960 = vmatprep.subr.bf16.mxu0 %v4609
    %4961 = vmatpush1.bf16.msra.mxu0 %v4608
    %4962 = vmatprep.subr.bf16.mxu0 %v4613
    %4963 = vmatpush1.bf16.msra.mxu0 %v4612
    %4964 = vmatprep.subr.bf16.mxu0 %v4617
    %4965 = vmatpush1.bf16.msra.mxu0 %v4616
    %4966 = vmatprep.subr.bf16.mxu0 %v4621
    %4967 = vmatpush1.bf16.msra.mxu0 %v4620
    %4968 = vmatprep.subr.bf16.mxu0 %v4625
    %4969 = vmatpush1.bf16.msra.mxu0 %v4624
    %4970 = vmatprep.subr.bf16.mxu0 %v4629
    %4971 = vmatpush1.bf16.msra.mxu0 %v4628
    %4972 = vmatprep.subr.bf16.mxu0 %v4633
    %4973 = vmatpush1.bf16.msra.mxu0 %v4632
    %4974 = vmatprep.subr.bf16.mxu0 %v4637
    %4975 = vmatpush1.bf16.msra.mxu0 %v4636
    %4976 = vmatprep.subr.bf16.mxu0 %v4641
    %4977 = vmatpush1.bf16.msra.mxu0 %v4640
    %4978 = vmatprep.subr.bf16.mxu0 %v4645
    %4979 = vmatpush1.bf16.msra.mxu0 %v4644
    %4980 = vmatprep.subr.bf16.mxu0 %v4649
    %4981 = vmatpush1.bf16.msra.mxu0 %v4648
    %4982 = vmatprep.subr.bf16.mxu0 %v4653
    %4983 = vmatpush1.bf16.msra.mxu0 %v4652
    %4984 = vmatprep.mubr.bf16.mxu0 %v4191
    %4985 = vmatmul.mubr.bf16.gmra.mrb[0].mxu0 %v4190
    %v4986 = vpop.f32.mrb[0].mxu0
    %v4987 = vadd.f32 0.0, %v4986
    %v4988 = vpop.f32.mrb[0].mxu0
    %v4989 = vadd.f32 0.0, %v4988
    %v4990 = vpop.f32.mrb[0].mxu0
    %v4991 = vadd.f32 0.0, %v4990
    %v4992 = vpop.f32.mrb[0].mxu0
    %v4993 = vadd.f32 0.0, %v4992
    %4994 = vmatprep.mubr.bf16.mxu0 %v4195
    %4995 = vmatmul.mubr.bf16.gmra.mrb[0].mxu0 %v4194
    %v4996 = vpop.f32.mrb[0].mxu0
    %v4997 = vadd.f32 0.0, %v4996
    %v4998 = vpop.f32.mrb[0].mxu0
    %v4999 = vadd.f32 0.0, %v4998
    %v5000 = vpop.f32.mrb[0].mxu0
    %v5001 = vadd.f32 0.0, %v5000
    %v5002 = vpop.f32.mrb[0].mxu0
    %v5003 = vadd.f32 0.0, %v5002
    %5004 = vdwg.mxu0
    %5005 = vmatprep.subr.bf16.mxu0 %v4657
    %5006 = vmatpush1.bf16.msra.mxu0 %v4656
    %5007 = vmatprep.subr.bf16.mxu0 %v4661
    %5008 = vmatpush1.bf16.msra.mxu0 %v4660
    %5009 = vmatprep.subr.bf16.mxu0 %v4665
    %5010 = vmatpush1.bf16.msra.mxu0 %v4664
    %5011 = vmatprep.subr.bf16.mxu0 %v4669
    %5012 = vmatpush1.bf16.msra.mxu0 %v4668
    %5013 = vmatprep.subr.bf16.mxu0 %v4673
    %5014 = vmatpush1.bf16.msra.mxu0 %v4672
    %5015 = vmatprep.subr.bf16.mxu0 %v4677
    %5016 = vmatpush1.bf16.msra.mxu0 %v4676
    %5017 = vmatprep.subr.bf16.mxu0 %v4681
    %5018 = vmatpush1.bf16.msra.mxu0 %v4680
    %5019 = vmatprep.subr.bf16.mxu0 %v4685
    %5020 = vmatpush1.bf16.msra.mxu0 %v4684
    %5021 = vmatprep.subr.bf16.mxu0 %v4689
    %5022 = vmatpush1.bf16.msra.mxu0 %v4688
    %5023 = vmatprep.subr.bf16.mxu0 %v4693
    %5024 = vmatpush1.bf16.msra.mxu0 %v4692
    %5025 = vmatprep.subr.bf16.mxu0 %v4697
    %5026 = vmatpush1.bf16.msra.mxu0 %v4696
    %5027 = vmatprep.subr.bf16.mxu0 %v4701
    %5028 = vmatpush1.bf16.msra.mxu0 %v4700
    %5029 = vmatprep.subr.bf16.mxu0 %v4705
    %5030 = vmatpush1.bf16.msra.mxu0 %v4704
    %5031 = vmatprep.subr.bf16.mxu0 %v4709
    %5032 = vmatpush1.bf16.msra.mxu0 %v4708
    %5033 = vmatprep.subr.bf16.mxu0 %v4713
    %5034 = vmatpush1.bf16.msra.mxu0 %v4712
    %5035 = vmatprep.subr.bf16.mxu0 %v4717
    %5036 = vmatpush1.bf16.msra.mxu0 %v4716
    %5037 = vmatprep.mubr.bf16.mxu0 %v4193
    %5038 = vmatmul.mubr.bf16.gmra.mrb[0].mxu0 %v4192
    %v5039 = vpop.f32.mrb[0].mxu0
    %v5040 = vadd.f32 %v4987, %v5039
    %v5041 = vpop.f32.mrb[0].mxu0
    %v5042 = vadd.f32 %v4989, %v5041
    %v5043 = vpop.f32.mrb[0].mxu0
    %v5044 = vadd.f32 %v4991, %v5043
    %v5045 = vpop.f32.mrb[0].mxu0
    %v5046 = vadd.f32 %v4993, %v5045
    %5047 = vmatprep.mubr.bf16.mxu0 %v4197
    %5048 = vmatmul.mubr.bf16.gmra.mrb[0].mxu0 %v4196
    %v5049 = vpop.f32.mrb[0].mxu0
    %v5050 = vadd.f32 %v4997, %v5049
    %v5051 = vpop.f32.mrb[0].mxu0
    %v5052 = vadd.f32 %v4999, %v5051
    %v5053 = vpop.f32.mrb[0].mxu0
    %v5054 = vadd.f32 %v5001, %v5053
    %v5055 = vpop.f32.mrb[0].mxu0
    %v5056 = vadd.f32 %v5003, %v5055
    %5057 = vdwg.mxu0
    %v5066 = vunpack.c.l.b16 %v3809
    %v5067 = vunpack.c.h.b16 %v3809
    %v5068 = vunpack.c.l.b16 %v3810
    %v5069 = vunpack.c.h.b16 %v3810
    %v5070 = vunpack.c.l.b16 %v3811
    %v5071 = vunpack.c.h.b16 %v3811
    %v5072 = vunpack.c.l.b16 %v3812
    %v5073 = vunpack.c.h.b16 %v3812
    %v5074 = vunpack.c.l.b16 %v3813
    %v5075 = vunpack.c.h.b16 %v3813
    %v5076 = vunpack.c.l.b16 %v3814
    %v5077 = vunpack.c.h.b16 %v3814
    %v5078 = vunpack.c.l.b16 %v3815
    %v5079 = vunpack.c.h.b16 %v3815
    %v5080 = vunpack.c.l.b16 %v3816
    %v5081 = vunpack.c.h.b16 %v3816
    %v5082 = vpack.c.b16 %v5070, %v5066
    %v5083 = vpack.c.b16 %v5071, %v5067
    %v5084 = vpack.c.b16 %v5072, %v5068
    %v5085 = vpack.c.b16 %v5073, %v5069
    %v5086 = vpack.c.b16 %v5078, %v5074
    %v5087 = vpack.c.b16 %v5079, %v5075
    %v5088 = vpack.c.b16 %v5080, %v5076
    %v5089 = vpack.c.b16 %v5081, %v5077
    %v5226 = vunpack.c.l.b16 %v3817
    %v5227 = vunpack.c.h.b16 %v3817
    %v5228 = vunpack.c.l.b16 %v3818
    %v5229 = vunpack.c.h.b16 %v3818
    %v5230 = vunpack.c.l.b16 %v3819
    %v5231 = vunpack.c.h.b16 %v3819
    %v5232 = vunpack.c.l.b16 %v3820
    %v5233 = vunpack.c.h.b16 %v3820
    %v5234 = vunpack.c.l.b16 %v3821
    %v5235 = vunpack.c.h.b16 %v3821
    %v5236 = vunpack.c.l.b16 %v3822
    %v5237 = vunpack.c.h.b16 %v3822
    %v5238 = vunpack.c.l.b16 %v3823
    %v5239 = vunpack.c.h.b16 %v3823
    %v5240 = vunpack.c.l.b16 %v3824
    %v5241 = vunpack.c.h.b16 %v3824
    %v5242 = vunpack.c.l.b16 %v3825
    %v5243 = vunpack.c.h.b16 %v3825
    %v5244 = vunpack.c.l.b16 %v3826
    %v5245 = vunpack.c.h.b16 %v3826
    %v5246 = vunpack.c.l.b16 %v3827
    %v5247 = vunpack.c.h.b16 %v3827
    %v5248 = vunpack.c.l.b16 %v3828
    %v5249 = vunpack.c.h.b16 %v3828
    %v5250 = vunpack.c.l.b16 %v3829
    %v5251 = vunpack.c.h.b16 %v3829
    %v5252 = vunpack.c.l.b16 %v3830
    %v5253 = vunpack.c.h.b16 %v3830
    %v5254 = vunpack.c.l.b16 %v3831
    %v5255 = vunpack.c.h.b16 %v3831
    %v5256 = vunpack.c.l.b16 %v3832
    %v5257 = vunpack.c.h.b16 %v3832
    %v5258 = vunpack.c.l.b16 %v3833
    %v5259 = vunpack.c.h.b16 %v3833
    %v5260 = vunpack.c.l.b16 %v3834
    %v5261 = vunpack.c.h.b16 %v3834
    %v5262 = vunpack.c.l.b16 %v3835
    %v5263 = vunpack.c.h.b16 %v3835
    %v5264 = vunpack.c.l.b16 %v3836
    %v5265 = vunpack.c.h.b16 %v3836
    %v5266 = vunpack.c.l.b16 %v3837
    %v5267 = vunpack.c.h.b16 %v3837
    %v5268 = vunpack.c.l.b16 %v3838
    %v5269 = vunpack.c.h.b16 %v3838
    %v5270 = vunpack.c.l.b16 %v3839
    %v5271 = vunpack.c.h.b16 %v3839
    %v5272 = vunpack.c.l.b16 %v3840
    %v5273 = vunpack.c.h.b16 %v3840
    %v5274 = vunpack.c.l.b16 %v3841
    %v5275 = vunpack.c.h.b16 %v3841
    %v5276 = vunpack.c.l.b16 %v3842
    %v5277 = vunpack.c.h.b16 %v3842
    %v5278 = vunpack.c.l.b16 %v3843
    %v5279 = vunpack.c.h.b16 %v3843
    %v5280 = vunpack.c.l.b16 %v3844
    %v5281 = vunpack.c.h.b16 %v3844
    %v5282 = vunpack.c.l.b16 %v3845
    %v5283 = vunpack.c.h.b16 %v3845
    %v5284 = vunpack.c.l.b16 %v3846
    %v5285 = vunpack.c.h.b16 %v3846
    %v5286 = vunpack.c.l.b16 %v3847
    %v5287 = vunpack.c.h.b16 %v3847
    %v5288 = vunpack.c.l.b16 %v3848
    %v5289 = vunpack.c.h.b16 %v3848
    %v5290 = vunpack.c.l.b16 %v3849
    %v5291 = vunpack.c.h.b16 %v3849
    %v5292 = vunpack.c.l.b16 %v3850
    %v5293 = vunpack.c.h.b16 %v3850
    %v5294 = vunpack.c.l.b16 %v3851
    %v5295 = vunpack.c.h.b16 %v3851
    %v5296 = vunpack.c.l.b16 %v3852
    %v5297 = vunpack.c.h.b16 %v3852
    %v5298 = vunpack.c.l.b16 %v3853
    %v5299 = vunpack.c.h.b16 %v3853
    %v5300 = vunpack.c.l.b16 %v3854
    %v5301 = vunpack.c.h.b16 %v3854
    %v5302 = vunpack.c.l.b16 %v3855
    %v5303 = vunpack.c.h.b16 %v3855
    %v5304 = vunpack.c.l.b16 %v3856
    %v5305 = vunpack.c.h.b16 %v3856
    %v5306 = vunpack.c.l.b16 %v3857
    %v5307 = vunpack.c.h.b16 %v3857
    %v5308 = vunpack.c.l.b16 %v3858
    %v5309 = vunpack.c.h.b16 %v3858
    %v5310 = vunpack.c.l.b16 %v3859
    %v5311 = vunpack.c.h.b16 %v3859
    %v5312 = vunpack.c.l.b16 %v3860
    %v5313 = vunpack.c.h.b16 %v3860
    %v5314 = vunpack.c.l.b16 %v3861
    %v5315 = vunpack.c.h.b16 %v3861
    %v5316 = vunpack.c.l.b16 %v3862
    %v5317 = vunpack.c.h.b16 %v3862
    %v5318 = vunpack.c.l.b16 %v3863
    %v5319 = vunpack.c.h.b16 %v3863
    %v5320 = vunpack.c.l.b16 %v3864
    %v5321 = vunpack.c.h.b16 %v3864
    %v5322 = vunpack.c.l.b16 %v3865
    %v5323 = vunpack.c.h.b16 %v3865
    %v5324 = vunpack.c.l.b16 %v3866
    %v5325 = vunpack.c.h.b16 %v3866
    %v5326 = vunpack.c.l.b16 %v3867
    %v5327 = vunpack.c.h.b16 %v3867
    %v5328 = vunpack.c.l.b16 %v3868
    %v5329 = vunpack.c.h.b16 %v3868
    %v5330 = vunpack.c.l.b16 %v3869
    %v5331 = vunpack.c.h.b16 %v3869
    %v5332 = vunpack.c.l.b16 %v3870
    %v5333 = vunpack.c.h.b16 %v3870
    %v5334 = vunpack.c.l.b16 %v3871
    %v5335 = vunpack.c.h.b16 %v3871
    %v5336 = vunpack.c.l.b16 %v3872
    %v5337 = vunpack.c.h.b16 %v3872
    %v5338 = vunpack.c.l.b16 %v3873
    %v5339 = vunpack.c.h.b16 %v3873
    %v5340 = vunpack.c.l.b16 %v3874
    %v5341 = vunpack.c.h.b16 %v3874
    %v5342 = vunpack.c.l.b16 %v3875
    %v5343 = vunpack.c.h.b16 %v3875
    %v5344 = vunpack.c.l.b16 %v3876
    %v5345 = vunpack.c.h.b16 %v3876
    %v5346 = vunpack.c.l.b16 %v3877
    %v5347 = vunpack.c.h.b16 %v3877
    %v5348 = vunpack.c.l.b16 %v3878
    %v5349 = vunpack.c.h.b16 %v3878
    %v5350 = vunpack.c.l.b16 %v3879
    %v5351 = vunpack.c.h.b16 %v3879
    %v5352 = vunpack.c.l.b16 %v3880
    %v5353 = vunpack.c.h.b16 %v3880
    %v5354 = vunpack.c.l.b16 %v3881
    %v5355 = vunpack.c.h.b16 %v3881
    %v5356 = vunpack.c.l.b16 %v3882
    %v5357 = vunpack.c.h.b16 %v3882
    %v5358 = vunpack.c.l.b16 %v3883
    %v5359 = vunpack.c.h.b16 %v3883
    %v5360 = vunpack.c.l.b16 %v3884
    %v5361 = vunpack.c.h.b16 %v3884
    %v5362 = vunpack.c.l.b16 %v3885
    %v5363 = vunpack.c.h.b16 %v3885
    %v5364 = vunpack.c.l.b16 %v3886
    %v5365 = vunpack.c.h.b16 %v3886
    %v5366 = vunpack.c.l.b16 %v3887
    %v5367 = vunpack.c.h.b16 %v3887
    %v5368 = vunpack.c.l.b16 %v3888
    %v5369 = vunpack.c.h.b16 %v3888
    %v5370 = vunpack.c.l.b16 %v3889
    %v5371 = vunpack.c.h.b16 %v3889
    %v5372 = vunpack.c.l.b16 %v3890
    %v5373 = vunpack.c.h.b16 %v3890
    %v5374 = vunpack.c.l.b16 %v3891
    %v5375 = vunpack.c.h.b16 %v3891
    %v5376 = vunpack.c.l.b16 %v3892
    %v5377 = vunpack.c.h.b16 %v3892
    %v5378 = vunpack.c.l.b16 %v3893
    %v5379 = vunpack.c.h.b16 %v3893
    %v5380 = vunpack.c.l.b16 %v3894
    %v5381 = vunpack.c.h.b16 %v3894
    %v5382 = vunpack.c.l.b16 %v3895
    %v5383 = vunpack.c.h.b16 %v3895
    %v5384 = vunpack.c.l.b16 %v3896
    %v5385 = vunpack.c.h.b16 %v3896
    %v5386 = vunpack.c.l.b16 %v3897
    %v5387 = vunpack.c.h.b16 %v3897
    %v5388 = vunpack.c.l.b16 %v3898
    %v5389 = vunpack.c.h.b16 %v3898
    %v5390 = vunpack.c.l.b16 %v3899
    %v5391 = vunpack.c.h.b16 %v3899
    %v5392 = vunpack.c.l.b16 %v3900
    %v5393 = vunpack.c.h.b16 %v3900
    %v5394 = vunpack.c.l.b16 %v3901
    %v5395 = vunpack.c.h.b16 %v3901
    %v5396 = vunpack.c.l.b16 %v3902
    %v5397 = vunpack.c.h.b16 %v3902
    %v5398 = vunpack.c.l.b16 %v3903
    %v5399 = vunpack.c.h.b16 %v3903
    %v5400 = vunpack.c.l.b16 %v3904
    %v5401 = vunpack.c.h.b16 %v3904
    %v5402 = vunpack.c.l.b16 %v3905
    %v5403 = vunpack.c.h.b16 %v3905
    %v5404 = vunpack.c.l.b16 %v3906
    %v5405 = vunpack.c.h.b16 %v3906
    %v5406 = vunpack.c.l.b16 %v3907
    %v5407 = vunpack.c.h.b16 %v3907
    %v5408 = vunpack.c.l.b16 %v3908
    %v5409 = vunpack.c.h.b16 %v3908
    %v5410 = vunpack.c.l.b16 %v3909
    %v5411 = vunpack.c.h.b16 %v3909
    %v5412 = vunpack.c.l.b16 %v3910
    %v5413 = vunpack.c.h.b16 %v3910
    %v5414 = vunpack.c.l.b16 %v3911
    %v5415 = vunpack.c.h.b16 %v3911
    %v5416 = vunpack.c.l.b16 %v3912
    %v5417 = vunpack.c.h.b16 %v3912
    %v5418 = vunpack.c.l.b16 %v3913
    %v5419 = vunpack.c.h.b16 %v3913
    %v5420 = vunpack.c.l.b16 %v3914
    %v5421 = vunpack.c.h.b16 %v3914
    %v5422 = vunpack.c.l.b16 %v3915
    %v5423 = vunpack.c.h.b16 %v3915
    %v5424 = vunpack.c.l.b16 %v3916
    %v5425 = vunpack.c.h.b16 %v3916
    %v5426 = vunpack.c.l.b16 %v3917
    %v5427 = vunpack.c.h.b16 %v3917
    %v5428 = vunpack.c.l.b16 %v3918
    %v5429 = vunpack.c.h.b16 %v3918
    %v5430 = vunpack.c.l.b16 %v3919
    %v5431 = vunpack.c.h.b16 %v3919
    %v5432 = vunpack.c.l.b16 %v3920
    %v5433 = vunpack.c.h.b16 %v3920
    %v5434 = vunpack.c.l.b16 %v3921
    %v5435 = vunpack.c.h.b16 %v3921
    %v5436 = vunpack.c.l.b16 %v3922
    %v5437 = vunpack.c.h.b16 %v3922
    %v5438 = vunpack.c.l.b16 %v3923
    %v5439 = vunpack.c.h.b16 %v3923
    %v5440 = vunpack.c.l.b16 %v3924
    %v5441 = vunpack.c.h.b16 %v3924
    %v5442 = vunpack.c.l.b16 %v3925
    %v5443 = vunpack.c.h.b16 %v3925
    %v5444 = vunpack.c.l.b16 %v3926
    %v5445 = vunpack.c.h.b16 %v3926
    %v5446 = vunpack.c.l.b16 %v3927
    %v5447 = vunpack.c.h.b16 %v3927
    %v5448 = vunpack.c.l.b16 %v3928
    %v5449 = vunpack.c.h.b16 %v3928
    %v5450 = vunpack.c.l.b16 %v3929
    %v5451 = vunpack.c.h.b16 %v3929
    %v5452 = vunpack.c.l.b16 %v3930
    %v5453 = vunpack.c.h.b16 %v3930
    %v5454 = vunpack.c.l.b16 %v3931
    %v5455 = vunpack.c.h.b16 %v3931
    %v5456 = vunpack.c.l.b16 %v3932
    %v5457 = vunpack.c.h.b16 %v3932
    %v5458 = vunpack.c.l.b16 %v3933
    %v5459 = vunpack.c.h.b16 %v3933
    %v5460 = vunpack.c.l.b16 %v3934
    %v5461 = vunpack.c.h.b16 %v3934
    %v5462 = vunpack.c.l.b16 %v3935
    %v5463 = vunpack.c.h.b16 %v3935
    %v5464 = vunpack.c.l.b16 %v3936
    %v5465 = vunpack.c.h.b16 %v3936
    %v5466 = vunpack.c.l.b16 %v3937
    %v5467 = vunpack.c.h.b16 %v3937
    %v5468 = vunpack.c.l.b16 %v3938
    %v5469 = vunpack.c.h.b16 %v3938
    %v5470 = vunpack.c.l.b16 %v3939
    %v5471 = vunpack.c.h.b16 %v3939
    %v5472 = vunpack.c.l.b16 %v3940
    %v5473 = vunpack.c.h.b16 %v3940
    %v5474 = vunpack.c.l.b16 %v3941
    %v5475 = vunpack.c.h.b16 %v3941
    %v5476 = vunpack.c.l.b16 %v3942
    %v5477 = vunpack.c.h.b16 %v3942
    %v5478 = vunpack.c.l.b16 %v3943
    %v5479 = vunpack.c.h.b16 %v3943
    %v5480 = vunpack.c.l.b16 %v3944
    %v5481 = vunpack.c.h.b16 %v3944
    %v5482 = vpack.c.b16 %v5230, %v5226
    %v5483 = vpack.c.b16 %v5231, %v5227
    %v5484 = vpack.c.b16 %v5232, %v5228
    %v5485 = vpack.c.b16 %v5233, %v5229
    %v5486 = vpack.c.b16 %v5238, %v5234
    %v5487 = vpack.c.b16 %v5239, %v5235
    %v5488 = vpack.c.b16 %v5240, %v5236
    %v5489 = vpack.c.b16 %v5241, %v5237
    %v5490 = vpack.c.b16 %v5246, %v5242
    %v5491 = vpack.c.b16 %v5247, %v5243
    %v5492 = vpack.c.b16 %v5248, %v5244
    %v5493 = vpack.c.b16 %v5249, %v5245
    %v5494 = vpack.c.b16 %v5254, %v5250
    %v5495 = vpack.c.b16 %v5255, %v5251
    %v5496 = vpack.c.b16 %v5256, %v5252
    %v5497 = vpack.c.b16 %v5257, %v5253
    %v5498 = vpack.c.b16 %v5262, %v5258
    %v5499 = vpack.c.b16 %v5263, %v5259
    %v5500 = vpack.c.b16 %v5264, %v5260
    %v5501 = vpack.c.b16 %v5265, %v5261
    %v5502 = vpack.c.b16 %v5270, %v5266
    %v5503 = vpack.c.b16 %v5271, %v5267
    %v5504 = vpack.c.b16 %v5272, %v5268
    %v5505 = vpack.c.b16 %v5273, %v5269
    %v5506 = vpack.c.b16 %v5278, %v5274
    %v5507 = vpack.c.b16 %v5279, %v5275
    %v5508 = vpack.c.b16 %v5280, %v5276
    %v5509 = vpack.c.b16 %v5281, %v5277
    %v5510 = vpack.c.b16 %v5286, %v5282
    %v5511 = vpack.c.b16 %v5287, %v5283
    %v5512 = vpack.c.b16 %v5288, %v5284
    %v5513 = vpack.c.b16 %v5289, %v5285
    %v5514 = vpack.c.b16 %v5294, %v5290
    %v5515 = vpack.c.b16 %v5295, %v5291
    %v5516 = vpack.c.b16 %v5296, %v5292
    %v5517 = vpack.c.b16 %v5297, %v5293
    %v5518 = vpack.c.b16 %v5302, %v5298
    %v5519 = vpack.c.b16 %v5303, %v5299
    %v5520 = vpack.c.b16 %v5304, %v5300
    %v5521 = vpack.c.b16 %v5305, %v5301
    %v5522 = vpack.c.b16 %v5310, %v5306
    %v5523 = vpack.c.b16 %v5311, %v5307
    %v5524 = vpack.c.b16 %v5312, %v5308
    %v5525 = vpack.c.b16 %v5313, %v5309
    %v5526 = vpack.c.b16 %v5318, %v5314
    %v5527 = vpack.c.b16 %v5319, %v5315
    %v5528 = vpack.c.b16 %v5320, %v5316
    %v5529 = vpack.c.b16 %v5321, %v5317
    %v5530 = vpack.c.b16 %v5326, %v5322
    %v5531 = vpack.c.b16 %v5327, %v5323
    %v5532 = vpack.c.b16 %v5328, %v5324
    %v5533 = vpack.c.b16 %v5329, %v5325
    %v5534 = vpack.c.b16 %v5334, %v5330
    %v5535 = vpack.c.b16 %v5335, %v5331
    %v5536 = vpack.c.b16 %v5336, %v5332
    %v5537 = vpack.c.b16 %v5337, %v5333
    %v5538 = vpack.c.b16 %v5342, %v5338
    %v5539 = vpack.c.b16 %v5343, %v5339
    %v5540 = vpack.c.b16 %v5344, %v5340
    %v5541 = vpack.c.b16 %v5345, %v5341
    %v5542 = vpack.c.b16 %v5350, %v5346
    %v5543 = vpack.c.b16 %v5351, %v5347
    %v5544 = vpack.c.b16 %v5352, %v5348
    %v5545 = vpack.c.b16 %v5353, %v5349
    %v5546 = vpack.c.b16 %v5358, %v5354
    %v5547 = vpack.c.b16 %v5359, %v5355
    %v5548 = vpack.c.b16 %v5360, %v5356
    %v5549 = vpack.c.b16 %v5361, %v5357
    %v5550 = vpack.c.b16 %v5366, %v5362
    %v5551 = vpack.c.b16 %v5367, %v5363
    %v5552 = vpack.c.b16 %v5368, %v5364
    %v5553 = vpack.c.b16 %v5369, %v5365
    %v5554 = vpack.c.b16 %v5374, %v5370
    %v5555 = vpack.c.b16 %v5375, %v5371
    %v5556 = vpack.c.b16 %v5376, %v5372
    %v5557 = vpack.c.b16 %v5377, %v5373
    %v5558 = vpack.c.b16 %v5382, %v5378
    %v5559 = vpack.c.b16 %v5383, %v5379
    %v5560 = vpack.c.b16 %v5384, %v5380
    %v5561 = vpack.c.b16 %v5385, %v5381
    %v5562 = vpack.c.b16 %v5390, %v5386
    %v5563 = vpack.c.b16 %v5391, %v5387
    %v5564 = vpack.c.b16 %v5392, %v5388
    %v5565 = vpack.c.b16 %v5393, %v5389
    %v5566 = vpack.c.b16 %v5398, %v5394
    %v5567 = vpack.c.b16 %v5399, %v5395
    %v5568 = vpack.c.b16 %v5400, %v5396
    %v5569 = vpack.c.b16 %v5401, %v5397
    %v5570 = vpack.c.b16 %v5406, %v5402
    %v5571 = vpack.c.b16 %v5407, %v5403
    %v5572 = vpack.c.b16 %v5408, %v5404
    %v5573 = vpack.c.b16 %v5409, %v5405
    %v5574 = vpack.c.b16 %v5414, %v5410
    %v5575 = vpack.c.b16 %v5415, %v5411
    %v5576 = vpack.c.b16 %v5416, %v5412
    %v5577 = vpack.c.b16 %v5417, %v5413
    %v5578 = vpack.c.b16 %v5422, %v5418
    %v5579 = vpack.c.b16 %v5423, %v5419
    %v5580 = vpack.c.b16 %v5424, %v5420
    %v5581 = vpack.c.b16 %v5425, %v5421
    %v5582 = vpack.c.b16 %v5430, %v5426
    %v5583 = vpack.c.b16 %v5431, %v5427
    %v5584 = vpack.c.b16 %v5432, %v5428
    %v5585 = vpack.c.b16 %v5433, %v5429
    %v5586 = vpack.c.b16 %v5438, %v5434
    %v5587 = vpack.c.b16 %v5439, %v5435
    %v5588 = vpack.c.b16 %v5440, %v5436
    %v5589 = vpack.c.b16 %v5441, %v5437
    %v5590 = vpack.c.b16 %v5446, %v5442
    %v5591 = vpack.c.b16 %v5447, %v5443
    %v5592 = vpack.c.b16 %v5448, %v5444
    %v5593 = vpack.c.b16 %v5449, %v5445
    %v5594 = vpack.c.b16 %v5454, %v5450
    %v5595 = vpack.c.b16 %v5455, %v5451
    %v5596 = vpack.c.b16 %v5456, %v5452
    %v5597 = vpack.c.b16 %v5457, %v5453
    %v5598 = vpack.c.b16 %v5462, %v5458
    %v5599 = vpack.c.b16 %v5463, %v5459
    %v5600 = vpack.c.b16 %v5464, %v5460
    %v5601 = vpack.c.b16 %v5465, %v5461
    %v5602 = vpack.c.b16 %v5470, %v5466
    %v5603 = vpack.c.b16 %v5471, %v5467
    %v5604 = vpack.c.b16 %v5472, %v5468
    %v5605 = vpack.c.b16 %v5473, %v5469
    %v5606 = vpack.c.b16 %v5478, %v5474
    %v5607 = vpack.c.b16 %v5479, %v5475
    %v5608 = vpack.c.b16 %v5480, %v5476
    %v5609 = vpack.c.b16 %v5481, %v5477
    %5738 = vmatprep.subr.bf16.mxu0 %v5483
    %5739 = vmatpush1.bf16.msra.mxu0 %v5482
    %5740 = vmatprep.subr.bf16.mxu0 %v5487
    %5741 = vmatpush1.bf16.msra.mxu0 %v5486
    %5742 = vmatprep.subr.bf16.mxu0 %v5491
    %5743 = vmatpush1.bf16.msra.mxu0 %v5490
    %5744 = vmatprep.subr.bf16.mxu0 %v5495
    %5745 = vmatpush1.bf16.msra.mxu0 %v5494
    %5746 = vmatprep.subr.bf16.mxu0 %v5499
    %5747 = vmatpush1.bf16.msra.mxu0 %v5498
    %5748 = vmatprep.subr.bf16.mxu0 %v5503
    %5749 = vmatpush1.bf16.msra.mxu0 %v5502
    %5750 = vmatprep.subr.bf16.mxu0 %v5507
    %5751 = vmatpush1.bf16.msra.mxu0 %v5506
    %5752 = vmatprep.subr.bf16.mxu0 %v5511
    %5753 = vmatpush1.bf16.msra.mxu0 %v5510
    %5754 = vmatprep.subr.bf16.mxu0 %v5515
    %5755 = vmatpush1.bf16.msra.mxu0 %v5514
    %5756 = vmatprep.subr.bf16.mxu0 %v5519
    %5757 = vmatpush1.bf16.msra.mxu0 %v5518
    %5758 = vmatprep.subr.bf16.mxu0 %v5523
    %5759 = vmatpush1.bf16.msra.mxu0 %v5522
    %5760 = vmatprep.subr.bf16.mxu0 %v5527
    %5761 = vmatpush1.bf16.msra.mxu0 %v5526
    %5762 = vmatprep.subr.bf16.mxu0 %v5531
    %5763 = vmatpush1.bf16.msra.mxu0 %v5530
    %5764 = vmatprep.subr.bf16.mxu0 %v5535
    %5765 = vmatpush1.bf16.msra.mxu0 %v5534
    %5766 = vmatprep.subr.bf16.mxu0 %v5539
    %5767 = vmatpush1.bf16.msra.mxu0 %v5538
    %5768 = vmatprep.subr.bf16.mxu0 %v5543
    %5769 = vmatpush1.bf16.msra.mxu0 %v5542
    %5770 = vmatprep.mubr.bf16.mxu0 %v5083
    %5771 = vmatmul.mubr.bf16.gmra.mrb[0].mxu0 %v5082
    %v5772 = vpop.f32.mrb[0].mxu0
    %v5773 = vadd.f32 %v4934, %v5772
    %v5774 = vpop.f32.mrb[0].mxu0
    %v5775 = vadd.f32 %v4936, %v5774
    %v5776 = vpop.f32.mrb[0].mxu0
    %v5777 = vadd.f32 %v4938, %v5776
    %v5778 = vpop.f32.mrb[0].mxu0
    %v5779 = vadd.f32 %v4940, %v5778
    %5780 = vmatprep.mubr.bf16.mxu0 %v5087
    %5781 = vmatmul.mubr.bf16.gmra.mrb[0].mxu0 %v5086
    %v5782 = vpop.f32.mrb[0].mxu0
    %v5783 = vadd.f32 %v4944, %v5782
    %v5784 = vpop.f32.mrb[0].mxu0
    %v5785 = vadd.f32 %v4946, %v5784
    %v5786 = vpop.f32.mrb[0].mxu0
    %v5787 = vadd.f32 %v4948, %v5786
    %v5788 = vpop.f32.mrb[0].mxu0
    %v5789 = vadd.f32 %v4950, %v5788
    %5790 = vdwg.mxu0
    %5791 = vmatprep.subr.bf16.mxu0 %v5547
    %5792 = vmatpush1.bf16.msra.mxu0 %v5546
    %5793 = vmatprep.subr.bf16.mxu0 %v5551
    %5794 = vmatpush1.bf16.msra.mxu0 %v5550
    %5795 = vmatprep.subr.bf16.mxu0 %v5555
    %5796 = vmatpush1.bf16.msra.mxu0 %v5554
    %5797 = vmatprep.subr.bf16.mxu0 %v5559
    %5798 = vmatpush1.bf16.msra.mxu0 %v5558
    %5799 = vmatprep.subr.bf16.mxu0 %v5563
    %5800 = vmatpush1.bf16.msra.mxu0 %v5562
    %5801 = vmatprep.subr.bf16.mxu0 %v5567
    %5802 = vmatpush1.bf16.msra.mxu0 %v5566
    %5803 = vmatprep.subr.bf16.mxu0 %v5571
    %5804 = vmatpush1.bf16.msra.mxu0 %v5570
    %5805 = vmatprep.subr.bf16.mxu0 %v5575
    %5806 = vmatpush1.bf16.msra.mxu0 %v5574
    %5807 = vmatprep.subr.bf16.mxu0 %v5579
    %5808 = vmatpush1.bf16.msra.mxu0 %v5578
    %5809 = vmatprep.subr.bf16.mxu0 %v5583
    %5810 = vmatpush1.bf16.msra.mxu0 %v5582
    %5811 = vmatprep.subr.bf16.mxu0 %v5587
    %5812 = vmatpush1.bf16.msra.mxu0 %v5586
    %5813 = vmatprep.subr.bf16.mxu0 %v5591
    %5814 = vmatpush1.bf16.msra.mxu0 %v5590
    %5815 = vmatprep.subr.bf16.mxu0 %v5595
    %5816 = vmatpush1.bf16.msra.mxu0 %v5594
    %5817 = vmatprep.subr.bf16.mxu0 %v5599
    %5818 = vmatpush1.bf16.msra.mxu0 %v5598
    %5819 = vmatprep.subr.bf16.mxu0 %v5603
    %5820 = vmatpush1.bf16.msra.mxu0 %v5602
    %5821 = vmatprep.subr.bf16.mxu0 %v5607
    %5822 = vmatpush1.bf16.msra.mxu0 %v5606
    %5823 = vmatprep.mubr.bf16.mxu0 %v5085
    %5824 = vmatmul.mubr.bf16.gmra.mrb[0].mxu0 %v5084
    %v5825 = vpop.f32.mrb[0].mxu0
    %v5826 = vadd.f32 %v5773, %v5825
    %v5827 = vpop.f32.mrb[0].mxu0
    %v5828 = vadd.f32 %v5775, %v5827
    %v5829 = vpop.f32.mrb[0].mxu0
    %v5830 = vadd.f32 %v5777, %v5829
    %v5831 = vpop.f32.mrb[0].mxu0
    %v5832 = vadd.f32 %v5779, %v5831
    %5833 = vmatprep.mubr.bf16.mxu0 %v5089
    %5834 = vmatmul.mubr.bf16.gmra.mrb[0].mxu0 %v5088
    %v5835 = vpop.f32.mrb[0].mxu0
    %v5836 = vadd.f32 %v5783, %v5835
    %v5837 = vpop.f32.mrb[0].mxu0
    %v5838 = vadd.f32 %v5785, %v5837
    %v5839 = vpop.f32.mrb[0].mxu0
    %v5840 = vadd.f32 %v5787, %v5839
    %v5841 = vpop.f32.mrb[0].mxu0
    %v5842 = vadd.f32 %v5789, %v5841
    %5843 = vdwg.mxu0
    %5844 = vmatprep.subr.bf16.mxu0 %v5485
    %5845 = vmatpush1.bf16.msra.mxu0 %v5484
    %5846 = vmatprep.subr.bf16.mxu0 %v5489
    %5847 = vmatpush1.bf16.msra.mxu0 %v5488
    %5848 = vmatprep.subr.bf16.mxu0 %v5493
    %5849 = vmatpush1.bf16.msra.mxu0 %v5492
    %5850 = vmatprep.subr.bf16.mxu0 %v5497
    %5851 = vmatpush1.bf16.msra.mxu0 %v5496
    %5852 = vmatprep.subr.bf16.mxu0 %v5501
    %5853 = vmatpush1.bf16.msra.mxu0 %v5500
    %5854 = vmatprep.subr.bf16.mxu0 %v5505
    %5855 = vmatpush1.bf16.msra.mxu0 %v5504
    %5856 = vmatprep.subr.bf16.mxu0 %v5509
    %5857 = vmatpush1.bf16.msra.mxu0 %v5508
    %5858 = vmatprep.subr.bf16.mxu0 %v5513
    %5859 = vmatpush1.bf16.msra.mxu0 %v5512
    %5860 = vmatprep.subr.bf16.mxu0 %v5517
    %5861 = vmatpush1.bf16.msra.mxu0 %v5516
    %5862 = vmatprep.subr.bf16.mxu0 %v5521
    %5863 = vmatpush1.bf16.msra.mxu0 %v5520
    %5864 = vmatprep.subr.bf16.mxu0 %v5525
    %5865 = vmatpush1.bf16.msra.mxu0 %v5524
    %5866 = vmatprep.subr.bf16.mxu0 %v5529
    %5867 = vmatpush1.bf16.msra.mxu0 %v5528
    %5868 = vmatprep.subr.bf16.mxu0 %v5533
    %5869 = vmatpush1.bf16.msra.mxu0 %v5532
    %5870 = vmatprep.subr.bf16.mxu0 %v5537
    %5871 = vmatpush1.bf16.msra.mxu0 %v5536
    %5872 = vmatprep.subr.bf16.mxu0 %v5541
    %5873 = vmatpush1.bf16.msra.mxu0 %v5540
    %5874 = vmatprep.subr.bf16.mxu0 %v5545
    %5875 = vmatpush1.bf16.msra.mxu0 %v5544
    %5876 = vmatprep.mubr.bf16.mxu0 %v5083
    %5877 = vmatmul.mubr.bf16.gmra.mrb[0].mxu0 %v5082
    %v5878 = vpop.f32.mrb[0].mxu0
    %v5879 = vadd.f32 %v5040, %v5878
    %v5880 = vpop.f32.mrb[0].mxu0
    %v5881 = vadd.f32 %v5042, %v5880
    %v5882 = vpop.f32.mrb[0].mxu0
    %v5883 = vadd.f32 %v5044, %v5882
    %v5884 = vpop.f32.mrb[0].mxu0
    %v5885 = vadd.f32 %v5046, %v5884
    %5886 = vmatprep.mubr.bf16.mxu0 %v5087
    %5887 = vmatmul.mubr.bf16.gmra.mrb[0].mxu0 %v5086
    %v5888 = vpop.f32.mrb[0].mxu0
    %v5889 = vadd.f32 %v5050, %v5888
    %v5890 = vpop.f32.mrb[0].mxu0
    %v5891 = vadd.f32 %v5052, %v5890
    %v5892 = vpop.f32.mrb[0].mxu0
    %v5893 = vadd.f32 %v5054, %v5892
    %v5894 = vpop.f32.mrb[0].mxu0
    %v5895 = vadd.f32 %v5056, %v5894
    %5896 = vdwg.mxu0
    %5897 = vmatprep.subr.bf16.mxu0 %v5549
    %5898 = vmatpush1.bf16.msra.mxu0 %v5548
    %5899 = vmatprep.subr.bf16.mxu0 %v5553
    %5900 = vmatpush1.bf16.msra.mxu0 %v5552
    %5901 = vmatprep.subr.bf16.mxu0 %v5557
    %5902 = vmatpush1.bf16.msra.mxu0 %v5556
    %5903 = vmatprep.subr.bf16.mxu0 %v5561
    %5904 = vmatpush1.bf16.msra.mxu0 %v5560
    %5905 = vmatprep.subr.bf16.mxu0 %v5565
    %5906 = vmatpush1.bf16.msra.mxu0 %v5564
    %5907 = vmatprep.subr.bf16.mxu0 %v5569
    %5908 = vmatpush1.bf16.msra.mxu0 %v5568
    %5909 = vmatprep.subr.bf16.mxu0 %v5573
    %5910 = vmatpush1.bf16.msra.mxu0 %v5572
    %5911 = vmatprep.subr.bf16.mxu0 %v5577
    %5912 = vmatpush1.bf16.msra.mxu0 %v5576
    %5913 = vmatprep.subr.bf16.mxu0 %v5581
    %5914 = vmatpush1.bf16.msra.mxu0 %v5580
    %5915 = vmatprep.subr.bf16.mxu0 %v5585
    %5916 = vmatpush1.bf16.msra.mxu0 %v5584
    %5917 = vmatprep.subr.bf16.mxu0 %v5589
    %5918 = vmatpush1.bf16.msra.mxu0 %v5588
    %5919 = vmatprep.subr.bf16.mxu0 %v5593
    %5920 = vmatpush1.bf16.msra.mxu0 %v5592
    %5921 = vmatprep.subr.bf16.mxu0 %v5597
    %5922 = vmatpush1.bf16.msra.mxu0 %v5596
    %5923 = vmatprep.subr.bf16.mxu0 %v5601
    %5924 = vmatpush1.bf16.msra.mxu0 %v5600
    %5925 = vmatprep.subr.bf16.mxu0 %v5605
    %5926 = vmatpush1.bf16.msra.mxu0 %v5604
    %5927 = vmatprep.subr.bf16.mxu0 %v5609
    %5928 = vmatpush1.bf16.msra.mxu0 %v5608
    %5929 = vmatprep.mubr.bf16.mxu0 %v5085
    %5930 = vmatmul.mubr.bf16.gmra.mrb[0].mxu0 %v5084
    %v5931 = vpop.f32.mrb[0].mxu0
    %v5932 = vadd.f32 %v5879, %v5931
    %v5933 = vpop.f32.mrb[0].mxu0
    %v5934 = vadd.f32 %v5881, %v5933
    %v5935 = vpop.f32.mrb[0].mxu0
    %v5936 = vadd.f32 %v5883, %v5935
    %v5937 = vpop.f32.mrb[0].mxu0
    %v5938 = vadd.f32 %v5885, %v5937
    %5939 = vmatprep.mubr.bf16.mxu0 %v5089
    %5940 = vmatmul.mubr.bf16.gmra.mrb[0].mxu0 %v5088
    %v5941 = vpop.f32.mrb[0].mxu0
    %v5942 = vadd.f32 %v5889, %v5941
    %v5943 = vpop.f32.mrb[0].mxu0
    %v5944 = vadd.f32 %v5891, %v5943
    %v5945 = vpop.f32.mrb[0].mxu0
    %v5946 = vadd.f32 %v5893, %v5945
    %v5947 = vpop.f32.mrb[0].mxu0
    %v5948 = vadd.f32 %v5895, %v5947
    %5949 = vdwg.mxu0
    %v5950 = vld [vmem:[#allocation2] sm:$0xee]
    %v5951 = vld [vmem:[#allocation2 + $0x8] sm:$0xee]
    %v5952 = vld [vmem:[#allocation2 + $0x30] sm:$0xee]
    %v5953 = vld [vmem:[#allocation2 + $0x38] sm:$0xee]
    %v5962 = vrot.slane %v5950, 5
    %v5963 = vrot.slane %v5962, 4
    %v5964 = vrot.slane %v3811, 5
    %v5965 = vsel %vm2512, %v5963, %v5964
    %v5966 = vrot.slane %v5951, 5
    %v5967 = vrot.slane %v5966, 4
    %v5968 = vrot.slane %v3812, 5
    %v5969 = vsel %vm2512, %v5967, %v5968
    %v5970 = vrot.slane %v5964, 4
    %v5971 = vrot.slane %v3945, 5
    %v5972 = vsel %vm2512, %v5970, %v5971
    %v5973 = vrot.slane %v5968, 4
    %v5974 = vrot.slane %v3946, 5
    %v5975 = vsel %vm2512, %v5973, %v5974
    %v5976 = vrot.slane %v5952, 5
    %v5977 = vrot.slane %v5976, 4
    %v5978 = vrot.slane %v3815, 5
    %v5979 = vsel %vm2512, %v5977, %v5978
    %v5980 = vrot.slane %v5953, 5
    %v5981 = vrot.slane %v5980, 4
    %v5982 = vrot.slane %v3816, 5
    %v5983 = vsel %vm2512, %v5981, %v5982
    %v5984 = vrot.slane %v5978, 4
    %v5985 = vrot.slane %v3947, 5
    %v5986 = vsel %vm2512, %v5984, %v5985
    %v5987 = vrot.slane %v5982, 4
    %v5988 = vrot.slane %v3948, 5
    %v5989 = vsel %vm2512, %v5987, %v5988
    %s5990 = scalar_lea.vmem [#allocation11], 2048
    %v5991 = vld [vmem:[%s5990] sm:$0xff]
    %v5992 = vld [vmem:[%s5990 + $0x8] sm:$0xff]
    %v5993 = vld [vmem:[%s5990 + $0x10] sm:$0xff]
    %v5994 = vld [vmem:[%s5990 + $0x18] sm:$0xff]
    %v5995 = vld [vmem:[%s5990 + $0x20] sm:$0xff]
    %v5996 = vld [vmem:[%s5990 + $0x28] sm:$0xff]
    %v5997 = vld [vmem:[%s5990 + $0x30] sm:$0xff]
    %v5998 = vld [vmem:[%s5990 + $0x38] sm:$0xff]
    %v5999 = vld [vmem:[%s5990 + $0x40] sm:$0xff]
    %v6000 = vld [vmem:[%s5990 + $0x48] sm:$0xff]
    %v6001 = vld [vmem:[%s5990 + $0x50] sm:$0xff]
    %v6002 = vld [vmem:[%s5990 + $0x58] sm:$0xff]
    %v6003 = vld [vmem:[%s5990 + $0x60] sm:$0xff]
    %v6004 = vld [vmem:[%s5990 + $0x68] sm:$0xff]
    %v6005 = vld [vmem:[%s5990 + $0x70] sm:$0xff]
    %v6006 = vld [vmem:[%s5990 + $0x78] sm:$0xff]
    %v6007 = vld [vmem:[%s5990 + $0x80] sm:$0xff]
    %v6008 = vld [vmem:[%s5990 + $0x88] sm:$0xff]
    %v6009 = vld [vmem:[%s5990 + $0x90] sm:$0xff]
    %v6010 = vld [vmem:[%s5990 + $0x98] sm:$0xff]
    %v6011 = vld [vmem:[%s5990 + $0xa0] sm:$0xff]
    %v6012 = vld [vmem:[%s5990 + $0xa8] sm:$0xff]
    %v6013 = vld [vmem:[%s5990 + $0xb0] sm:$0xff]
    %v6014 = vld [vmem:[%s5990 + $0xb8] sm:$0xff]
    %v6015 = vld [vmem:[%s5990 + $0xc0] sm:$0xff]
    %v6016 = vld [vmem:[%s5990 + $0xc8] sm:$0xff]
    %v6017 = vld [vmem:[%s5990 + $0xd0] sm:$0xff]
    %v6018 = vld [vmem:[%s5990 + $0xd8] sm:$0xff]
    %v6019 = vld [vmem:[%s5990 + $0xe0] sm:$0xff]
    %v6020 = vld [vmem:[%s5990 + $0xe8] sm:$0xff]
    %v6021 = vld [vmem:[%s5990 + $0xf0] sm:$0xff]
    %v6022 = vld [vmem:[%s5990 + $0xf8] sm:$0xff]
    %v6023 = vld [vmem:[%s5990 + $0x100] sm:$0xff]
    %v6024 = vld [vmem:[%s5990 + $0x108] sm:$0xff]
    %v6025 = vld [vmem:[%s5990 + $0x110] sm:$0xff]
    %v6026 = vld [vmem:[%s5990 + $0x118] sm:$0xff]
    %v6027 = vld [vmem:[%s5990 + $0x120] sm:$0xff]
    %v6028 = vld [vmem:[%s5990 + $0x128] sm:$0xff]
    %v6029 = vld [vmem:[%s5990 + $0x130] sm:$0xff]
    %v6030 = vld [vmem:[%s5990 + $0x138] sm:$0xff]
    %v6031 = vld [vmem:[%s5990 + $0x140] sm:$0xff]
    %v6032 = vld [vmem:[%s5990 + $0x148] sm:$0xff]
    %v6033 = vld [vmem:[%s5990 + $0x150] sm:$0xff]
    %v6034 = vld [vmem:[%s5990 + $0x158] sm:$0xff]
    %v6035 = vld [vmem:[%s5990 + $0x160] sm:$0xff]
    %v6036 = vld [vmem:[%s5990 + $0x168] sm:$0xff]
    %v6037 = vld [vmem:[%s5990 + $0x170] sm:$0xff]
    %v6038 = vld [vmem:[%s5990 + $0x178] sm:$0xff]
    %v6039 = vld [vmem:[%s5990 + $0x180] sm:$0xff]
    %v6040 = vld [vmem:[%s5990 + $0x188] sm:$0xff]
    %v6041 = vld [vmem:[%s5990 + $0x190] sm:$0xff]
    %v6042 = vld [vmem:[%s5990 + $0x198] sm:$0xff]
    %v6043 = vld [vmem:[%s5990 + $0x1a0] sm:$0xff]
    %v6044 = vld [vmem:[%s5990 + $0x1a8] sm:$0xff]
    %v6045 = vld [vmem:[%s5990 + $0x1b0] sm:$0xff]
    %v6046 = vld [vmem:[%s5990 + $0x1b8] sm:$0xff]
    %v6047 = vld [vmem:[%s5990 + $0x1c0] sm:$0xff]
    %v6048 = vld [vmem:[%s5990 + $0x1c8] sm:$0xff]
    %v6049 = vld [vmem:[%s5990 + $0x1d0] sm:$0xff]
    %v6050 = vld [vmem:[%s5990 + $0x1d8] sm:$0xff]
    %v6051 = vld [vmem:[%s5990 + $0x1e0] sm:$0xff]
    %v6052 = vld [vmem:[%s5990 + $0x1e8] sm:$0xff]
    %v6053 = vld [vmem:[%s5990 + $0x1f0] sm:$0xff]
    %v6054 = vld [vmem:[%s5990 + $0x1f8] sm:$0xff]
    %v6055 = vld [vmem:[%s5990 + $0x200] sm:$0xff]
    %v6056 = vld [vmem:[%s5990 + $0x208] sm:$0xff]
    %v6057 = vld [vmem:[%s5990 + $0x210] sm:$0xff]
    %v6058 = vld [vmem:[%s5990 + $0x218] sm:$0xff]
    %v6059 = vld [vmem:[%s5990 + $0x220] sm:$0xff]
    %v6060 = vld [vmem:[%s5990 + $0x228] sm:$0xff]
    %v6061 = vld [vmem:[%s5990 + $0x230] sm:$0xff]
    %v6062 = vld [vmem:[%s5990 + $0x238] sm:$0xff]
    %v6063 = vld [vmem:[%s5990 + $0x240] sm:$0xff]
    %v6064 = vld [vmem:[%s5990 + $0x248] sm:$0xff]
    %v6065 = vld [vmem:[%s5990 + $0x250] sm:$0xff]
    %v6066 = vld [vmem:[%s5990 + $0x258] sm:$0xff]
    %v6067 = vld [vmem:[%s5990 + $0x260] sm:$0xff]
    %v6068 = vld [vmem:[%s5990 + $0x268] sm:$0xff]
    %v6069 = vld [vmem:[%s5990 + $0x270] sm:$0xff]
    %v6070 = vld [vmem:[%s5990 + $0x278] sm:$0xff]
    %v6071 = vld [vmem:[%s5990 + $0x280] sm:$0xff]
    %v6072 = vld [vmem:[%s5990 + $0x288] sm:$0xff]
    %v6073 = vld [vmem:[%s5990 + $0x290] sm:$0xff]
    %v6074 = vld [vmem:[%s5990 + $0x298] sm:$0xff]
    %v6075 = vld [vmem:[%s5990 + $0x2a0] sm:$0xff]
    %v6076 = vld [vmem:[%s5990 + $0x2a8] sm:$0xff]
    %v6077 = vld [vmem:[%s5990 + $0x2b0] sm:$0xff]
    %v6078 = vld [vmem:[%s5990 + $0x2b8] sm:$0xff]
    %v6079 = vld [vmem:[%s5990 + $0x2c0] sm:$0xff]
    %v6080 = vld [vmem:[%s5990 + $0x2c8] sm:$0xff]
    %v6081 = vld [vmem:[%s5990 + $0x2d0] sm:$0xff]
    %v6082 = vld [vmem:[%s5990 + $0x2d8] sm:$0xff]
    %v6083 = vld [vmem:[%s5990 + $0x2e0] sm:$0xff]
    %v6084 = vld [vmem:[%s5990 + $0x2e8] sm:$0xff]
    %v6085 = vld [vmem:[%s5990 + $0x2f0] sm:$0xff]
    %v6086 = vld [vmem:[%s5990 + $0x2f8] sm:$0xff]
    %v6087 = vld [vmem:[%s5990 + $0x300] sm:$0xff]
    %v6088 = vld [vmem:[%s5990 + $0x308] sm:$0xff]
    %v6089 = vld [vmem:[%s5990 + $0x310] sm:$0xff]
    %v6090 = vld [vmem:[%s5990 + $0x318] sm:$0xff]
    %v6091 = vld [vmem:[%s5990 + $0x320] sm:$0xff]
    %v6092 = vld [vmem:[%s5990 + $0x328] sm:$0xff]
    %v6093 = vld [vmem:[%s5990 + $0x330] sm:$0xff]
    %v6094 = vld [vmem:[%s5990 + $0x338] sm:$0xff]
    %v6095 = vld [vmem:[%s5990 + $0x340] sm:$0xff]
    %v6096 = vld [vmem:[%s5990 + $0x348] sm:$0xff]
    %v6097 = vld [vmem:[%s5990 + $0x350] sm:$0xff]
    %v6098 = vld [vmem:[%s5990 + $0x358] sm:$0xff]
    %v6099 = vld [vmem:[%s5990 + $0x360] sm:$0xff]
    %v6100 = vld [vmem:[%s5990 + $0x368] sm:$0xff]
    %v6101 = vld [vmem:[%s5990 + $0x370] sm:$0xff]
    %v6102 = vld [vmem:[%s5990 + $0x378] sm:$0xff]
    %v6103 = vld [vmem:[%s5990 + $0x380] sm:$0xff]
    %v6104 = vld [vmem:[%s5990 + $0x388] sm:$0xff]
    %v6105 = vld [vmem:[%s5990 + $0x390] sm:$0xff]
    %v6106 = vld [vmem:[%s5990 + $0x398] sm:$0xff]
    %v6107 = vld [vmem:[%s5990 + $0x3a0] sm:$0xff]
    %v6108 = vld [vmem:[%s5990 + $0x3a8] sm:$0xff]
    %v6109 = vld [vmem:[%s5990 + $0x3b0] sm:$0xff]
    %v6110 = vld [vmem:[%s5990 + $0x3b8] sm:$0xff]
    %v6111 = vld [vmem:[%s5990 + $0x3c0] sm:$0xff]
    %v6112 = vld [vmem:[%s5990 + $0x3c8] sm:$0xff]
    %v6113 = vld [vmem:[%s5990 + $0x3d0] sm:$0xff]
    %v6114 = vld [vmem:[%s5990 + $0x3d8] sm:$0xff]
    %v6115 = vld [vmem:[%s5990 + $0x3e0] sm:$0xff]
    %v6116 = vld [vmem:[%s5990 + $0x3e8] sm:$0xff]
    %v6117 = vld [vmem:[%s5990 + $0x3f0] sm:$0xff]
    %v6118 = vld [vmem:[%s5990 + $0x3f8] sm:$0xff]
    %v6119 = vunpack.c.l.b16 %v5965
    %v6120 = vunpack.c.h.b16 %v5965
    %v6121 = vunpack.c.l.b16 %v5969
    %v6122 = vunpack.c.h.b16 %v5969
    %v6123 = vunpack.c.l.b16 %v5972
    %v6124 = vunpack.c.h.b16 %v5972
    %v6125 = vunpack.c.l.b16 %v5975
    %v6126 = vunpack.c.h.b16 %v5975
    %v6127 = vunpack.c.l.b16 %v5979
    %v6128 = vunpack.c.h.b16 %v5979
    %v6129 = vunpack.c.l.b16 %v5983
    %v6130 = vunpack.c.h.b16 %v5983
    %v6131 = vunpack.c.l.b16 %v5986
    %v6132 = vunpack.c.h.b16 %v5986
    %v6133 = vunpack.c.l.b16 %v5989
    %v6134 = vunpack.c.h.b16 %v5989
    %v6135 = vpack.c.b16 %v6123, %v6119
    %v6136 = vpack.c.b16 %v6124, %v6120
    %v6137 = vpack.c.b16 %v6125, %v6121
    %v6138 = vpack.c.b16 %v6126, %v6122
    %v6139 = vpack.c.b16 %v6131, %v6127
    %v6140 = vpack.c.b16 %v6132, %v6128
    %v6141 = vpack.c.b16 %v6133, %v6129
    %v6142 = vpack.c.b16 %v6134, %v6130
    %v6279 = vunpack.c.l.b16 %v5991
    %v6280 = vunpack.c.h.b16 %v5991
    %v6281 = vunpack.c.l.b16 %v5992
    %v6282 = vunpack.c.h.b16 %v5992
    %v6283 = vunpack.c.l.b16 %v5993
    %v6284 = vunpack.c.h.b16 %v5993
    %v6285 = vunpack.c.l.b16 %v5994
    %v6286 = vunpack.c.h.b16 %v5994
    %v6287 = vunpack.c.l.b16 %v5995
    %v6288 = vunpack.c.h.b16 %v5995
    %v6289 = vunpack.c.l.b16 %v5996
    %v6290 = vunpack.c.h.b16 %v5996
    %v6291 = vunpack.c.l.b16 %v5997
    %v6292 = vunpack.c.h.b16 %v5997
    %v6293 = vunpack.c.l.b16 %v5998
    %v6294 = vunpack.c.h.b16 %v5998
    %v6295 = vunpack.c.l.b16 %v5999
    %v6296 = vunpack.c.h.b16 %v5999
    %v6297 = vunpack.c.l.b16 %v6000
    %v6298 = vunpack.c.h.b16 %v6000
    %v6299 = vunpack.c.l.b16 %v6001
    %v6300 = vunpack.c.h.b16 %v6001
    %v6301 = vunpack.c.l.b16 %v6002
    %v6302 = vunpack.c.h.b16 %v6002
    %v6303 = vunpack.c.l.b16 %v6003
    %v6304 = vunpack.c.h.b16 %v6003
    %v6305 = vunpack.c.l.b16 %v6004
    %v6306 = vunpack.c.h.b16 %v6004
    %v6307 = vunpack.c.l.b16 %v6005
    %v6308 = vunpack.c.h.b16 %v6005
    %v6309 = vunpack.c.l.b16 %v6006
    %v6310 = vunpack.c.h.b16 %v6006
    %v6311 = vunpack.c.l.b16 %v6007
    %v6312 = vunpack.c.h.b16 %v6007
    %v6313 = vunpack.c.l.b16 %v6008
    %v6314 = vunpack.c.h.b16 %v6008
    %v6315 = vunpack.c.l.b16 %v6009
    %v6316 = vunpack.c.h.b16 %v6009
    %v6317 = vunpack.c.l.b16 %v6010
    %v6318 = vunpack.c.h.b16 %v6010
    %v6319 = vunpack.c.l.b16 %v6011
    %v6320 = vunpack.c.h.b16 %v6011
    %v6321 = vunpack.c.l.b16 %v6012
    %v6322 = vunpack.c.h.b16 %v6012
    %v6323 = vunpack.c.l.b16 %v6013
    %v6324 = vunpack.c.h.b16 %v6013
    %v6325 = vunpack.c.l.b16 %v6014
    %v6326 = vunpack.c.h.b16 %v6014
    %v6327 = vunpack.c.l.b16 %v6015
    %v6328 = vunpack.c.h.b16 %v6015
    %v6329 = vunpack.c.l.b16 %v6016
    %v6330 = vunpack.c.h.b16 %v6016
    %v6331 = vunpack.c.l.b16 %v6017
    %v6332 = vunpack.c.h.b16 %v6017
    %v6333 = vunpack.c.l.b16 %v6018
    %v6334 = vunpack.c.h.b16 %v6018
    %v6335 = vunpack.c.l.b16 %v6019
    %v6336 = vunpack.c.h.b16 %v6019
    %v6337 = vunpack.c.l.b16 %v6020
    %v6338 = vunpack.c.h.b16 %v6020
    %v6339 = vunpack.c.l.b16 %v6021
    %v6340 = vunpack.c.h.b16 %v6021
    %v6341 = vunpack.c.l.b16 %v6022
    %v6342 = vunpack.c.h.b16 %v6022
    %v6343 = vunpack.c.l.b16 %v6023
    %v6344 = vunpack.c.h.b16 %v6023
    %v6345 = vunpack.c.l.b16 %v6024
    %v6346 = vunpack.c.h.b16 %v6024
    %v6347 = vunpack.c.l.b16 %v6025
    %v6348 = vunpack.c.h.b16 %v6025
    %v6349 = vunpack.c.l.b16 %v6026
    %v6350 = vunpack.c.h.b16 %v6026
    %v6351 = vunpack.c.l.b16 %v6027
    %v6352 = vunpack.c.h.b16 %v6027
    %v6353 = vunpack.c.l.b16 %v6028
    %v6354 = vunpack.c.h.b16 %v6028
    %v6355 = vunpack.c.l.b16 %v6029
    %v6356 = vunpack.c.h.b16 %v6029
    %v6357 = vunpack.c.l.b16 %v6030
    %v6358 = vunpack.c.h.b16 %v6030
    %v6359 = vunpack.c.l.b16 %v6031
    %v6360 = vunpack.c.h.b16 %v6031
    %v6361 = vunpack.c.l.b16 %v6032
    %v6362 = vunpack.c.h.b16 %v6032
    %v6363 = vunpack.c.l.b16 %v6033
    %v6364 = vunpack.c.h.b16 %v6033
    %v6365 = vunpack.c.l.b16 %v6034
    %v6366 = vunpack.c.h.b16 %v6034
    %v6367 = vunpack.c.l.b16 %v6035
    %v6368 = vunpack.c.h.b16 %v6035
    %v6369 = vunpack.c.l.b16 %v6036
    %v6370 = vunpack.c.h.b16 %v6036
    %v6371 = vunpack.c.l.b16 %v6037
    %v6372 = vunpack.c.h.b16 %v6037
    %v6373 = vunpack.c.l.b16 %v6038
    %v6374 = vunpack.c.h.b16 %v6038
    %v6375 = vunpack.c.l.b16 %v6039
    %v6376 = vunpack.c.h.b16 %v6039
    %v6377 = vunpack.c.l.b16 %v6040
    %v6378 = vunpack.c.h.b16 %v6040
    %v6379 = vunpack.c.l.b16 %v6041
    %v6380 = vunpack.c.h.b16 %v6041
    %v6381 = vunpack.c.l.b16 %v6042
    %v6382 = vunpack.c.h.b16 %v6042
    %v6383 = vunpack.c.l.b16 %v6043
    %v6384 = vunpack.c.h.b16 %v6043
    %v6385 = vunpack.c.l.b16 %v6044
    %v6386 = vunpack.c.h.b16 %v6044
    %v6387 = vunpack.c.l.b16 %v6045
    %v6388 = vunpack.c.h.b16 %v6045
    %v6389 = vunpack.c.l.b16 %v6046
    %v6390 = vunpack.c.h.b16 %v6046
    %v6391 = vunpack.c.l.b16 %v6047
    %v6392 = vunpack.c.h.b16 %v6047
    %v6393 = vunpack.c.l.b16 %v6048
    %v6394 = vunpack.c.h.b16 %v6048
    %v6395 = vunpack.c.l.b16 %v6049
    %v6396 = vunpack.c.h.b16 %v6049
    %v6397 = vunpack.c.l.b16 %v6050
    %v6398 = vunpack.c.h.b16 %v6050
    %v6399 = vunpack.c.l.b16 %v6051
    %v6400 = vunpack.c.h.b16 %v6051
    %v6401 = vunpack.c.l.b16 %v6052
    %v6402 = vunpack.c.h.b16 %v6052
    %v6403 = vunpack.c.l.b16 %v6053
    %v6404 = vunpack.c.h.b16 %v6053
    %v6405 = vunpack.c.l.b16 %v6054
    %v6406 = vunpack.c.h.b16 %v6054
    %v6407 = vunpack.c.l.b16 %v6055
    %v6408 = vunpack.c.h.b16 %v6055
    %v6409 = vunpack.c.l.b16 %v6056
    %v6410 = vunpack.c.h.b16 %v6056
    %v6411 = vunpack.c.l.b16 %v6057
    %v6412 = vunpack.c.h.b16 %v6057
    %v6413 = vunpack.c.l.b16 %v6058
    %v6414 = vunpack.c.h.b16 %v6058
    %v6415 = vunpack.c.l.b16 %v6059
    %v6416 = vunpack.c.h.b16 %v6059
    %v6417 = vunpack.c.l.b16 %v6060
    %v6418 = vunpack.c.h.b16 %v6060
    %v6419 = vunpack.c.l.b16 %v6061
    %v6420 = vunpack.c.h.b16 %v6061
    %v6421 = vunpack.c.l.b16 %v6062
    %v6422 = vunpack.c.h.b16 %v6062
    %v6423 = vunpack.c.l.b16 %v6063
    %v6424 = vunpack.c.h.b16 %v6063
    %v6425 = vunpack.c.l.b16 %v6064
    %v6426 = vunpack.c.h.b16 %v6064
    %v6427 = vunpack.c.l.b16 %v6065
    %v6428 = vunpack.c.h.b16 %v6065
    %v6429 = vunpack.c.l.b16 %v6066
    %v6430 = vunpack.c.h.b16 %v6066
    %v6431 = vunpack.c.l.b16 %v6067
    %v6432 = vunpack.c.h.b16 %v6067
    %v6433 = vunpack.c.l.b16 %v6068
    %v6434 = vunpack.c.h.b16 %v6068
    %v6435 = vunpack.c.l.b16 %v6069
    %v6436 = vunpack.c.h.b16 %v6069
    %v6437 = vunpack.c.l.b16 %v6070
    %v6438 = vunpack.c.h.b16 %v6070
    %v6439 = vunpack.c.l.b16 %v6071
    %v6440 = vunpack.c.h.b16 %v6071
    %v6441 = vunpack.c.l.b16 %v6072
    %v6442 = vunpack.c.h.b16 %v6072
    %v6443 = vunpack.c.l.b16 %v6073
    %v6444 = vunpack.c.h.b16 %v6073
    %v6445 = vunpack.c.l.b16 %v6074
    %v6446 = vunpack.c.h.b16 %v6074
    %v6447 = vunpack.c.l.b16 %v6075
    %v6448 = vunpack.c.h.b16 %v6075
    %v6449 = vunpack.c.l.b16 %v6076
    %v6450 = vunpack.c.h.b16 %v6076
    %v6451 = vunpack.c.l.b16 %v6077
    %v6452 = vunpack.c.h.b16 %v6077
    %v6453 = vunpack.c.l.b16 %v6078
    %v6454 = vunpack.c.h.b16 %v6078
    %v6455 = vunpack.c.l.b16 %v6079
    %v6456 = vunpack.c.h.b16 %v6079
    %v6457 = vunpack.c.l.b16 %v6080
    %v6458 = vunpack.c.h.b16 %v6080
    %v6459 = vunpack.c.l.b16 %v6081
    %v6460 = vunpack.c.h.b16 %v6081
    %v6461 = vunpack.c.l.b16 %v6082
    %v6462 = vunpack.c.h.b16 %v6082
    %v6463 = vunpack.c.l.b16 %v6083
    %v6464 = vunpack.c.h.b16 %v6083
    %v6465 = vunpack.c.l.b16 %v6084
    %v6466 = vunpack.c.h.b16 %v6084
    %v6467 = vunpack.c.l.b16 %v6085
    %v6468 = vunpack.c.h.b16 %v6085
    %v6469 = vunpack.c.l.b16 %v6086
    %v6470 = vunpack.c.h.b16 %v6086
    %v6471 = vunpack.c.l.b16 %v6087
    %v6472 = vunpack.c.h.b16 %v6087
    %v6473 = vunpack.c.l.b16 %v6088
    %v6474 = vunpack.c.h.b16 %v6088
    %v6475 = vunpack.c.l.b16 %v6089
    %v6476 = vunpack.c.h.b16 %v6089
    %v6477 = vunpack.c.l.b16 %v6090
    %v6478 = vunpack.c.h.b16 %v6090
    %v6479 = vunpack.c.l.b16 %v6091
    %v6480 = vunpack.c.h.b16 %v6091
    %v6481 = vunpack.c.l.b16 %v6092
    %v6482 = vunpack.c.h.b16 %v6092
    %v6483 = vunpack.c.l.b16 %v6093
    %v6484 = vunpack.c.h.b16 %v6093
    %v6485 = vunpack.c.l.b16 %v6094
    %v6486 = vunpack.c.h.b16 %v6094
    %v6487 = vunpack.c.l.b16 %v6095
    %v6488 = vunpack.c.h.b16 %v6095
    %v6489 = vunpack.c.l.b16 %v6096
    %v6490 = vunpack.c.h.b16 %v6096
    %v6491 = vunpack.c.l.b16 %v6097
    %v6492 = vunpack.c.h.b16 %v6097
    %v6493 = vunpack.c.l.b16 %v6098
    %v6494 = vunpack.c.h.b16 %v6098
    %v6495 = vunpack.c.l.b16 %v6099
    %v6496 = vunpack.c.h.b16 %v6099
    %v6497 = vunpack.c.l.b16 %v6100
    %v6498 = vunpack.c.h.b16 %v6100
    %v6499 = vunpack.c.l.b16 %v6101
    %v6500 = vunpack.c.h.b16 %v6101
    %v6501 = vunpack.c.l.b16 %v6102
    %v6502 = vunpack.c.h.b16 %v6102
    %v6503 = vunpack.c.l.b16 %v6103
    %v6504 = vunpack.c.h.b16 %v6103
    %v6505 = vunpack.c.l.b16 %v6104
    %v6506 = vunpack.c.h.b16 %v6104
    %v6507 = vunpack.c.l.b16 %v6105
    %v6508 = vunpack.c.h.b16 %v6105
    %v6509 = vunpack.c.l.b16 %v6106
    %v6510 = vunpack.c.h.b16 %v6106
    %v6511 = vunpack.c.l.b16 %v6107
    %v6512 = vunpack.c.h.b16 %v6107
    %v6513 = vunpack.c.l.b16 %v6108
    %v6514 = vunpack.c.h.b16 %v6108
    %v6515 = vunpack.c.l.b16 %v6109
    %v6516 = vunpack.c.h.b16 %v6109
    %v6517 = vunpack.c.l.b16 %v6110
    %v6518 = vunpack.c.h.b16 %v6110
    %v6519 = vunpack.c.l.b16 %v6111
    %v6520 = vunpack.c.h.b16 %v6111
    %v6521 = vunpack.c.l.b16 %v6112
    %v6522 = vunpack.c.h.b16 %v6112
    %v6523 = vunpack.c.l.b16 %v6113
    %v6524 = vunpack.c.h.b16 %v6113
    %v6525 = vunpack.c.l.b16 %v6114
    %v6526 = vunpack.c.h.b16 %v6114
    %v6527 = vunpack.c.l.b16 %v6115
    %v6528 = vunpack.c.h.b16 %v6115
    %v6529 = vunpack.c.l.b16 %v6116
    %v6530 = vunpack.c.h.b16 %v6116
    %v6531 = vunpack.c.l.b16 %v6117
    %v6532 = vunpack.c.h.b16 %v6117
    %v6533 = vunpack.c.l.b16 %v6118
    %v6534 = vunpack.c.h.b16 %v6118
    %v6535 = vpack.c.b16 %v6283, %v6279
    %v6536 = vpack.c.b16 %v6284, %v6280
    %v6537 = vpack.c.b16 %v6285, %v6281
    %v6538 = vpack.c.b16 %v6286, %v6282
    %v6539 = vpack.c.b16 %v6291, %v6287
    %v6540 = vpack.c.b16 %v6292, %v6288
    %v6541 = vpack.c.b16 %v6293, %v6289
    %v6542 = vpack.c.b16 %v6294, %v6290
    %v6543 = vpack.c.b16 %v6299, %v6295
    %v6544 = vpack.c.b16 %v6300, %v6296
    %v6545 = vpack.c.b16 %v6301, %v6297
    %v6546 = vpack.c.b16 %v6302, %v6298
    %v6547 = vpack.c.b16 %v6307, %v6303
    %v6548 = vpack.c.b16 %v6308, %v6304
    %v6549 = vpack.c.b16 %v6309, %v6305
    %v6550 = vpack.c.b16 %v6310, %v6306
    %v6551 = vpack.c.b16 %v6315, %v6311
    %v6552 = vpack.c.b16 %v6316, %v6312
    %v6553 = vpack.c.b16 %v6317, %v6313
    %v6554 = vpack.c.b16 %v6318, %v6314
    %v6555 = vpack.c.b16 %v6323, %v6319
    %v6556 = vpack.c.b16 %v6324, %v6320
    %v6557 = vpack.c.b16 %v6325, %v6321
    %v6558 = vpack.c.b16 %v6326, %v6322
    %v6559 = vpack.c.b16 %v6331, %v6327
    %v6560 = vpack.c.b16 %v6332, %v6328
    %v6561 = vpack.c.b16 %v6333, %v6329
    %v6562 = vpack.c.b16 %v6334, %v6330
    %v6563 = vpack.c.b16 %v6339, %v6335
    %v6564 = vpack.c.b16 %v6340, %v6336
    %v6565 = vpack.c.b16 %v6341, %v6337
    %v6566 = vpack.c.b16 %v6342, %v6338
    %v6567 = vpack.c.b16 %v6347, %v6343
    %v6568 = vpack.c.b16 %v6348, %v6344
    %v6569 = vpack.c.b16 %v6349, %v6345
    %v6570 = vpack.c.b16 %v6350, %v6346
    %v6571 = vpack.c.b16 %v6355, %v6351
    %v6572 = vpack.c.b16 %v6356, %v6352
    %v6573 = vpack.c.b16 %v6357, %v6353
    %v6574 = vpack.c.b16 %v6358, %v6354
    %v6575 = vpack.c.b16 %v6363, %v6359
    %v6576 = vpack.c.b16 %v6364, %v6360
    %v6577 = vpack.c.b16 %v6365, %v6361
    %v6578 = vpack.c.b16 %v6366, %v6362
    %v6579 = vpack.c.b16 %v6371, %v6367
    %v6580 = vpack.c.b16 %v6372, %v6368
    %v6581 = vpack.c.b16 %v6373, %v6369
    %v6582 = vpack.c.b16 %v6374, %v6370
    %v6583 = vpack.c.b16 %v6379, %v6375
    %v6584 = vpack.c.b16 %v6380, %v6376
    %v6585 = vpack.c.b16 %v6381, %v6377
    %v6586 = vpack.c.b16 %v6382, %v6378
    %v6587 = vpack.c.b16 %v6387, %v6383
    %v6588 = vpack.c.b16 %v6388, %v6384
    %v6589 = vpack.c.b16 %v6389, %v6385
    %v6590 = vpack.c.b16 %v6390, %v6386
    %v6591 = vpack.c.b16 %v6395, %v6391
    %v6592 = vpack.c.b16 %v6396, %v6392
    %v6593 = vpack.c.b16 %v6397, %v6393
    %v6594 = vpack.c.b16 %v6398, %v6394
    %v6595 = vpack.c.b16 %v6403, %v6399
    %v6596 = vpack.c.b16 %v6404, %v6400
    %v6597 = vpack.c.b16 %v6405, %v6401
    %v6598 = vpack.c.b16 %v6406, %v6402
    %v6599 = vpack.c.b16 %v6411, %v6407
    %v6600 = vpack.c.b16 %v6412, %v6408
    %v6601 = vpack.c.b16 %v6413, %v6409
    %v6602 = vpack.c.b16 %v6414, %v6410
    %v6603 = vpack.c.b16 %v6419, %v6415
    %v6604 = vpack.c.b16 %v6420, %v6416
    %v6605 = vpack.c.b16 %v6421, %v6417
    %v6606 = vpack.c.b16 %v6422, %v6418
    %v6607 = vpack.c.b16 %v6427, %v6423
    %v6608 = vpack.c.b16 %v6428, %v6424
    %v6609 = vpack.c.b16 %v6429, %v6425
    %v6610 = vpack.c.b16 %v6430, %v6426
    %v6611 = vpack.c.b16 %v6435, %v6431
    %v6612 = vpack.c.b16 %v6436, %v6432
    %v6613 = vpack.c.b16 %v6437, %v6433
    %v6614 = vpack.c.b16 %v6438, %v6434
    %v6615 = vpack.c.b16 %v6443, %v6439
    %v6616 = vpack.c.b16 %v6444, %v6440
    %v6617 = vpack.c.b16 %v6445, %v6441
    %v6618 = vpack.c.b16 %v6446, %v6442
    %v6619 = vpack.c.b16 %v6451, %v6447
    %v6620 = vpack.c.b16 %v6452, %v6448
    %v6621 = vpack.c.b16 %v6453, %v6449
    %v6622 = vpack.c.b16 %v6454, %v6450
    %v6623 = vpack.c.b16 %v6459, %v6455
    %v6624 = vpack.c.b16 %v6460, %v6456
    %v6625 = vpack.c.b16 %v6461, %v6457
    %v6626 = vpack.c.b16 %v6462, %v6458
    %v6627 = vpack.c.b16 %v6467, %v6463
    %v6628 = vpack.c.b16 %v6468, %v6464
    %v6629 = vpack.c.b16 %v6469, %v6465
    %v6630 = vpack.c.b16 %v6470, %v6466
    %v6631 = vpack.c.b16 %v6475, %v6471
    %v6632 = vpack.c.b16 %v6476, %v6472
    %v6633 = vpack.c.b16 %v6477, %v6473
    %v6634 = vpack.c.b16 %v6478, %v6474
    %v6635 = vpack.c.b16 %v6483, %v6479
    %v6636 = vpack.c.b16 %v6484, %v6480
    %v6637 = vpack.c.b16 %v6485, %v6481
    %v6638 = vpack.c.b16 %v6486, %v6482
    %v6639 = vpack.c.b16 %v6491, %v6487
    %v6640 = vpack.c.b16 %v6492, %v6488
    %v6641 = vpack.c.b16 %v6493, %v6489
    %v6642 = vpack.c.b16 %v6494, %v6490
    %v6643 = vpack.c.b16 %v6499, %v6495
    %v6644 = vpack.c.b16 %v6500, %v6496
    %v6645 = vpack.c.b16 %v6501, %v6497
    %v6646 = vpack.c.b16 %v6502, %v6498
    %v6647 = vpack.c.b16 %v6507, %v6503
    %v6648 = vpack.c.b16 %v6508, %v6504
    %v6649 = vpack.c.b16 %v6509, %v6505
    %v6650 = vpack.c.b16 %v6510, %v6506
    %v6651 = vpack.c.b16 %v6515, %v6511
    %v6652 = vpack.c.b16 %v6516, %v6512
    %v6653 = vpack.c.b16 %v6517, %v6513
    %v6654 = vpack.c.b16 %v6518, %v6514
    %v6655 = vpack.c.b16 %v6523, %v6519
    %v6656 = vpack.c.b16 %v6524, %v6520
    %v6657 = vpack.c.b16 %v6525, %v6521
    %v6658 = vpack.c.b16 %v6526, %v6522
    %v6659 = vpack.c.b16 %v6531, %v6527
    %v6660 = vpack.c.b16 %v6532, %v6528
    %v6661 = vpack.c.b16 %v6533, %v6529
    %v6662 = vpack.c.b16 %v6534, %v6530
    %6791 = vmatprep.subr.bf16.mxu0 %v6536
    %6792 = vmatpush1.bf16.msra.mxu0 %v6535
    %6793 = vmatprep.subr.bf16.mxu0 %v6540
    %6794 = vmatpush1.bf16.msra.mxu0 %v6539
    %6795 = vmatprep.subr.bf16.mxu0 %v6544
    %6796 = vmatpush1.bf16.msra.mxu0 %v6543
    %6797 = vmatprep.subr.bf16.mxu0 %v6548
    %6798 = vmatpush1.bf16.msra.mxu0 %v6547
    %6799 = vmatprep.subr.bf16.mxu0 %v6552
    %6800 = vmatpush1.bf16.msra.mxu0 %v6551
    %6801 = vmatprep.subr.bf16.mxu0 %v6556
    %6802 = vmatpush1.bf16.msra.mxu0 %v6555
    %6803 = vmatprep.subr.bf16.mxu0 %v6560
    %6804 = vmatpush1.bf16.msra.mxu0 %v6559
    %6805 = vmatprep.subr.bf16.mxu0 %v6564
    %6806 = vmatpush1.bf16.msra.mxu0 %v6563
    %6807 = vmatprep.subr.bf16.mxu0 %v6568
    %6808 = vmatpush1.bf16.msra.mxu0 %v6567
    %6809 = vmatprep.subr.bf16.mxu0 %v6572
    %6810 = vmatpush1.bf16.msra.mxu0 %v6571
    %6811 = vmatprep.subr.bf16.mxu0 %v6576
    %6812 = vmatpush1.bf16.msra.mxu0 %v6575
    %6813 = vmatprep.subr.bf16.mxu0 %v6580
    %6814 = vmatpush1.bf16.msra.mxu0 %v6579
    %6815 = vmatprep.subr.bf16.mxu0 %v6584
    %6816 = vmatpush1.bf16.msra.mxu0 %v6583
    %6817 = vmatprep.subr.bf16.mxu0 %v6588
    %6818 = vmatpush1.bf16.msra.mxu0 %v6587
    %6819 = vmatprep.subr.bf16.mxu0 %v6592
    %6820 = vmatpush1.bf16.msra.mxu0 %v6591
    %6821 = vmatprep.subr.bf16.mxu0 %v6596
    %6822 = vmatpush1.bf16.msra.mxu0 %v6595
    %6823 = vmatprep.mubr.bf16.mxu0 %v6136
    %6824 = vmatmul.mubr.bf16.gmra.mrb[0].mxu0 %v6135
    %v6825 = vpop.f32.mrb[0].mxu0
    %v6826 = vadd.f32 0.0, %v6825
    %v6827 = vpop.f32.mrb[0].mxu0
    %v6828 = vadd.f32 0.0, %v6827
    %v6829 = vpop.f32.mrb[0].mxu0
    %v6830 = vadd.f32 0.0, %v6829
    %v6831 = vpop.f32.mrb[0].mxu0
    %v6832 = vadd.f32 0.0, %v6831
    %6833 = vmatprep.mubr.bf16.mxu0 %v6140
    %6834 = vmatmul.mubr.bf16.gmra.mrb[0].mxu0 %v6139
    %v6835 = vpop.f32.mrb[0].mxu0
    %v6836 = vadd.f32 0.0, %v6835
    %v6837 = vpop.f32.mrb[0].mxu0
    %v6838 = vadd.f32 0.0, %v6837
    %v6839 = vpop.f32.mrb[0].mxu0
    %v6840 = vadd.f32 0.0, %v6839
    %v6841 = vpop.f32.mrb[0].mxu0
    %v6842 = vadd.f32 0.0, %v6841
    %6843 = vdwg.mxu0
    %6844 = vmatprep.subr.bf16.mxu0 %v6600
    %6845 = vmatpush1.bf16.msra.mxu0 %v6599
    %6846 = vmatprep.subr.bf16.mxu0 %v6604
    %6847 = vmatpush1.bf16.msra.mxu0 %v6603
    %6848 = vmatprep.subr.bf16.mxu0 %v6608
    %6849 = vmatpush1.bf16.msra.mxu0 %v6607
    %6850 = vmatprep.subr.bf16.mxu0 %v6612
    %6851 = vmatpush1.bf16.msra.mxu0 %v6611
    %6852 = vmatprep.subr.bf16.mxu0 %v6616
    %6853 = vmatpush1.bf16.msra.mxu0 %v6615
    %6854 = vmatprep.subr.bf16.mxu0 %v6620
    %6855 = vmatpush1.bf16.msra.mxu0 %v6619
    %6856 = vmatprep.subr.bf16.mxu0 %v6624
    %6857 = vmatpush1.bf16.msra.mxu0 %v6623
    %6858 = vmatprep.subr.bf16.mxu0 %v6628
    %6859 = vmatpush1.bf16.msra.mxu0 %v6627
    %6860 = vmatprep.subr.bf16.mxu0 %v6632
    %6861 = vmatpush1.bf16.msra.mxu0 %v6631
    %6862 = vmatprep.subr.bf16.mxu0 %v6636
    %6863 = vmatpush1.bf16.msra.mxu0 %v6635
    %6864 = vmatprep.subr.bf16.mxu0 %v6640
    %6865 = vmatpush1.bf16.msra.mxu0 %v6639
    %6866 = vmatprep.subr.bf16.mxu0 %v6644
    %6867 = vmatpush1.bf16.msra.mxu0 %v6643
    %6868 = vmatprep.subr.bf16.mxu0 %v6648
    %6869 = vmatpush1.bf16.msra.mxu0 %v6647
    %6870 = vmatprep.subr.bf16.mxu0 %v6652
    %6871 = vmatpush1.bf16.msra.mxu0 %v6651
    %6872 = vmatprep.subr.bf16.mxu0 %v6656
    %6873 = vmatpush1.bf16.msra.mxu0 %v6655
    %6874 = vmatprep.subr.bf16.mxu0 %v6660
    %6875 = vmatpush1.bf16.msra.mxu0 %v6659
    %6876 = vmatprep.mubr.bf16.mxu0 %v6138
    %6877 = vmatmul.mubr.bf16.gmra.mrb[0].mxu0 %v6137
    %v6878 = vpop.f32.mrb[0].mxu0
    %v6879 = vadd.f32 %v6826, %v6878
    %v6880 = vpop.f32.mrb[0].mxu0
    %v6881 = vadd.f32 %v6828, %v6880
    %v6882 = vpop.f32.mrb[0].mxu0
    %v6883 = vadd.f32 %v6830, %v6882
    %v6884 = vpop.f32.mrb[0].mxu0
    %v6885 = vadd.f32 %v6832, %v6884
    %6886 = vmatprep.mubr.bf16.mxu0 %v6142
    %6887 = vmatmul.mubr.bf16.gmra.mrb[0].mxu0 %v6141
    %v6888 = vpop.f32.mrb[0].mxu0
    %v6889 = vadd.f32 %v6836, %v6888
    %v6890 = vpop.f32.mrb[0].mxu0
    %v6891 = vadd.f32 %v6838, %v6890
    %v6892 = vpop.f32.mrb[0].mxu0
    %v6893 = vadd.f32 %v6840, %v6892
    %v6894 = vpop.f32.mrb[0].mxu0
    %v6895 = vadd.f32 %v6842, %v6894
    %6896 = vdwg.mxu0
    %6897 = vmatprep.subr.bf16.mxu0 %v6538
    %6898 = vmatpush1.bf16.msra.mxu0 %v6537
    %6899 = vmatprep.subr.bf16.mxu0 %v6542
    %6900 = vmatpush1.bf16.msra.mxu0 %v6541
    %6901 = vmatprep.subr.bf16.mxu0 %v6546
    %6902 = vmatpush1.bf16.msra.mxu0 %v6545
    %6903 = vmatprep.subr.bf16.mxu0 %v6550
    %6904 = vmatpush1.bf16.msra.mxu0 %v6549
    %6905 = vmatprep.subr.bf16.mxu0 %v6554
    %6906 = vmatpush1.bf16.msra.mxu0 %v6553
    %6907 = vmatprep.subr.bf16.mxu0 %v6558
    %6908 = vmatpush1.bf16.msra.mxu0 %v6557
    %6909 = vmatprep.subr.bf16.mxu0 %v6562
    %6910 = vmatpush1.bf16.msra.mxu0 %v6561
    %6911 = vmatprep.subr.bf16.mxu0 %v6566
    %6912 = vmatpush1.bf16.msra.mxu0 %v6565
    %6913 = vmatprep.subr.bf16.mxu0 %v6570
    %6914 = vmatpush1.bf16.msra.mxu0 %v6569
    %6915 = vmatprep.subr.bf16.mxu0 %v6574
    %6916 = vmatpush1.bf16.msra.mxu0 %v6573
    %6917 = vmatprep.subr.bf16.mxu0 %v6578
    %6918 = vmatpush1.bf16.msra.mxu0 %v6577
    %6919 = vmatprep.subr.bf16.mxu0 %v6582
    %6920 = vmatpush1.bf16.msra.mxu0 %v6581
    %6921 = vmatprep.subr.bf16.mxu0 %v6586
    %6922 = vmatpush1.bf16.msra.mxu0 %v6585
    %6923 = vmatprep.subr.bf16.mxu0 %v6590
    %6924 = vmatpush1.bf16.msra.mxu0 %v6589
    %6925 = vmatprep.subr.bf16.mxu0 %v6594
    %6926 = vmatpush1.bf16.msra.mxu0 %v6593
    %6927 = vmatprep.subr.bf16.mxu0 %v6598
    %6928 = vmatpush1.bf16.msra.mxu0 %v6597
    %6929 = vmatprep.mubr.bf16.mxu0 %v6136
    %6930 = vmatmul.mubr.bf16.gmra.mrb[0].mxu0 %v6135
    %v6931 = vpop.f32.mrb[0].mxu0
    %v6932 = vadd.f32 0.0, %v6931
    %v6933 = vpop.f32.mrb[0].mxu0
    %v6934 = vadd.f32 0.0, %v6933
    %v6935 = vpop.f32.mrb[0].mxu0
    %v6936 = vadd.f32 0.0, %v6935
    %v6937 = vpop.f32.mrb[0].mxu0
    %v6938 = vadd.f32 0.0, %v6937
    %6939 = vmatprep.mubr.bf16.mxu0 %v6140
    %6940 = vmatmul.mubr.bf16.gmra.mrb[0].mxu0 %v6139
    %v6941 = vpop.f32.mrb[0].mxu0
    %v6942 = vadd.f32 0.0, %v6941
    %v6943 = vpop.f32.mrb[0].mxu0
    %v6944 = vadd.f32 0.0, %v6943
    %v6945 = vpop.f32.mrb[0].mxu0
    %v6946 = vadd.f32 0.0, %v6945
    %v6947 = vpop.f32.mrb[0].mxu0
    %v6948 = vadd.f32 0.0, %v6947
    %6949 = vdwg.mxu0
    %6950 = vmatprep.subr.bf16.mxu0 %v6602
    %6951 = vmatpush1.bf16.msra.mxu0 %v6601
    %6952 = vmatprep.subr.bf16.mxu0 %v6606
    %6953 = vmatpush1.bf16.msra.mxu0 %v6605
    %6954 = vmatprep.subr.bf16.mxu0 %v6610
    %6955 = vmatpush1.bf16.msra.mxu0 %v6609
    %6956 = vmatprep.subr.bf16.mxu0 %v6614
    %6957 = vmatpush1.bf16.msra.mxu0 %v6613
    %6958 = vmatprep.subr.bf16.mxu0 %v6618
    %6959 = vmatpush1.bf16.msra.mxu0 %v6617
    %6960 = vmatprep.subr.bf16.mxu0 %v6622
    %6961 = vmatpush1.bf16.msra.mxu0 %v6621
    %6962 = vmatprep.subr.bf16.mxu0 %v6626
    %6963 = vmatpush1.bf16.msra.mxu0 %v6625
    %6964 = vmatprep.subr.bf16.mxu0 %v6630
    %6965 = vmatpush1.bf16.msra.mxu0 %v6629
    %6966 = vmatprep.subr.bf16.mxu0 %v6634
    %6967 = vmatpush1.bf16.msra.mxu0 %v6633
    %6968 = vmatprep.subr.bf16.mxu0 %v6638
    %6969 = vmatpush1.bf16.msra.mxu0 %v6637
    %6970 = vmatprep.subr.bf16.mxu0 %v6642
    %6971 = vmatpush1.bf16.msra.mxu0 %v6641
    %6972 = vmatprep.subr.bf16.mxu0 %v6646
    %6973 = vmatpush1.bf16.msra.mxu0 %v6645
    %6974 = vmatprep.subr.bf16.mxu0 %v6650
    %6975 = vmatpush1.bf16.msra.mxu0 %v6649
    %6976 = vmatprep.subr.bf16.mxu0 %v6654
    %6977 = vmatpush1.bf16.msra.mxu0 %v6653
    %6978 = vmatprep.subr.bf16.mxu0 %v6658
    %6979 = vmatpush1.bf16.msra.mxu0 %v6657
    %6980 = vmatprep.subr.bf16.mxu0 %v6662
    %6981 = vmatpush1.bf16.msra.mxu0 %v6661
    %6982 = vmatprep.mubr.bf16.mxu0 %v6138
    %6983 = vmatmul.mubr.bf16.gmra.mrb[0].mxu0 %v6137
    %v6984 = vpop.f32.mrb[0].mxu0
    %v6985 = vadd.f32 %v6932, %v6984
    %v6986 = vpop.f32.mrb[0].mxu0
    %v6987 = vadd.f32 %v6934, %v6986
    %v6988 = vpop.f32.mrb[0].mxu0
    %v6989 = vadd.f32 %v6936, %v6988
    %v6990 = vpop.f32.mrb[0].mxu0
    %v6991 = vadd.f32 %v6938, %v6990
    %6992 = vmatprep.mubr.bf16.mxu0 %v6142
    %6993 = vmatmul.mubr.bf16.gmra.mrb[0].mxu0 %v6141
    %v6994 = vpop.f32.mrb[0].mxu0
    %v6995 = vadd.f32 %v6942, %v6994
    %v6996 = vpop.f32.mrb[0].mxu0
    %v6997 = vadd.f32 %v6944, %v6996
    %v6998 = vpop.f32.mrb[0].mxu0
    %v6999 = vadd.f32 %v6946, %v6998
    %v7000 = vpop.f32.mrb[0].mxu0
    %v7001 = vadd.f32 %v6948, %v7000
    %7002 = vdwg.mxu0
    %v7003 = vadd.f32 %v5826, %v6879
    %v7004 = vadd.f32 %v5828, %v6881
    %v7005 = vadd.f32 %v5932, %v6985
    %v7006 = vadd.f32 %v5934, %v6987
    %v7007 = vadd.f32 %v5830, %v6883
    %v7008 = vadd.f32 %v5832, %v6885
    %v7009 = vadd.f32 %v5936, %v6989
    %v7010 = vadd.f32 %v5938, %v6991
    %v7011 = vadd.f32 %v5836, %v6889
    %v7012 = vadd.f32 %v5838, %v6891
    %v7013 = vadd.f32 %v5942, %v6995
    %v7014 = vadd.f32 %v5944, %v6997
    %v7015 = vadd.f32 %v5840, %v6893
    %v7016 = vadd.f32 %v5842, %v6895
    %v7017 = vadd.f32 %v5946, %v6999
    %v7018 = vadd.f32 %v5948, %v7001
    %v7019 = vadd.f32 %v7003, %v7007
    %v7020 = vrot.slane %v7019, 4
    %v7021 = vadd.f32 %v7019, %v7020
    %v7022 = vrot.slane %v7021, 2
    %v7023 = vadd.f32 %v7021, %v7022
    %v7024 = vrot.slane %v7023, 1
    %v7025 = vadd.f32 %v7023, %v7024
    %v7026 = vadd.f32 %v7004, %v7008
    %v7027 = vrot.slane %v7026, 4
    %v7028 = vadd.f32 %v7026, %v7027
    %v7029 = vrot.slane %v7028, 2
    %v7030 = vadd.f32 %v7028, %v7029
    %v7031 = vrot.slane %v7030, 1
    %v7032 = vadd.f32 %v7030, %v7031
    %v7033 = vadd.f32 %v7005, %v7009
    %v7034 = vrot.slane %v7033, 4
    %v7035 = vadd.f32 %v7033, %v7034
    %v7036 = vrot.slane %v7035, 2
    %v7037 = vadd.f32 %v7035, %v7036
    %v7038 = vrot.slane %v7037, 1
    %v7039 = vadd.f32 %v7037, %v7038
    %v7040 = vadd.f32 %v7006, %v7010
    %v7041 = vrot.slane %v7040, 4
    %v7042 = vadd.f32 %v7040, %v7041
    %v7043 = vrot.slane %v7042, 2
    %v7044 = vadd.f32 %v7042, %v7043
    %v7045 = vrot.slane %v7044, 1
    %v7046 = vadd.f32 %v7044, %v7045
    %v7047 = vadd.f32 %v7011, %v7015
    %v7048 = vrot.slane %v7047, 4
    %v7049 = vadd.f32 %v7047, %v7048
    %v7050 = vrot.slane %v7049, 2
    %v7051 = vadd.f32 %v7049, %v7050
    %v7052 = vrot.slane %v7051, 1
    %v7053 = vadd.f32 %v7051, %v7052
    %v7054 = vadd.f32 %v7012, %v7016
    %v7055 = vrot.slane %v7054, 4
    %v7056 = vadd.f32 %v7054, %v7055
    %v7057 = vrot.slane %v7056, 2
    %v7058 = vadd.f32 %v7056, %v7057
    %v7059 = vrot.slane %v7058, 1
    %v7060 = vadd.f32 %v7058, %v7059
    %v7061 = vadd.f32 %v7013, %v7017
    %v7062 = vrot.slane %v7061, 4
    %v7063 = vadd.f32 %v7061, %v7062
    %v7064 = vrot.slane %v7063, 2
    %v7065 = vadd.f32 %v7063, %v7064
    %v7066 = vrot.slane %v7065, 1
    %v7067 = vadd.f32 %v7065, %v7066
    %v7068 = vadd.f32 %v7014, %v7018
    %v7069 = vrot.slane %v7068, 4
    %v7070 = vadd.f32 %v7068, %v7069
    %v7071 = vrot.slane %v7070, 2
    %v7072 = vadd.f32 %v7070, %v7071
    %v7073 = vrot.slane %v7072, 1
    %v7074 = vadd.f32 %v7072, %v7073
    %v7075 = vld [vmem:[%s7] sm:$0xff]
    %v7076 = vld [vmem:[%s7 + $0x8] sm:$0xff]
    %v7077 = vld [vmem:[%s7 + $0x10] sm:$0xff]
    %v7078 = vld [vmem:[%s7 + $0x18] sm:$0xff]
    %v7079 = vld [vmem:[%s7 + $0x20] sm:$0xff]
    %v7080 = vld [vmem:[%s7 + $0x28] sm:$0xff]
    %v7081 = vld [vmem:[%s7 + $0x30] sm:$0xff]
    %v7082 = vld [vmem:[%s7 + $0x38] sm:$0xff]
    %v7083 = vld [vmem:[%s7 + $0x40] sm:$0xff]
    %v7084 = vld [vmem:[%s7 + $0x48] sm:$0xff]
    %v7085 = vld [vmem:[%s7 + $0x50] sm:$0xff]
    %v7086 = vld [vmem:[%s7 + $0x58] sm:$0xff]
    %v7087 = vld [vmem:[%s7 + $0x60] sm:$0xff]
    %v7088 = vld [vmem:[%s7 + $0x68] sm:$0xff]
    %v7089 = vld [vmem:[%s7 + $0x70] sm:$0xff]
    %v7090 = vld [vmem:[%s7 + $0x78] sm:$0xff]
    %v7091 = vld [vmem:[%s7 + $0x80] sm:$0xff]
    %v7092 = vld [vmem:[%s7 + $0x88] sm:$0xff]
    %v7093 = vld [vmem:[%s7 + $0x90] sm:$0xff]
    %v7094 = vld [vmem:[%s7 + $0x98] sm:$0xff]
    %v7095 = vld [vmem:[%s7 + $0xa0] sm:$0xff]
    %v7096 = vld [vmem:[%s7 + $0xa8] sm:$0xff]
    %v7097 = vld [vmem:[%s7 + $0xb0] sm:$0xff]
    %v7098 = vld [vmem:[%s7 + $0xb8] sm:$0xff]
    %v7099 = vld [vmem:[%s7 + $0xc0] sm:$0xff]
    %v7100 = vld [vmem:[%s7 + $0xc8] sm:$0xff]
    %v7101 = vld [vmem:[%s7 + $0xd0] sm:$0xff]
    %v7102 = vld [vmem:[%s7 + $0xd8] sm:$0xff]
    %v7103 = vld [vmem:[%s7 + $0xe0] sm:$0xff]
    %v7104 = vld [vmem:[%s7 + $0xe8] sm:$0xff]
    %v7105 = vld [vmem:[%s7 + $0xf0] sm:$0xff]
    %v7106 = vld [vmem:[%s7 + $0xf8] sm:$0xff]
    %v7107 = vld [vmem:[%s7 + $0x100] sm:$0xff]
    %v7108 = vld [vmem:[%s7 + $0x108] sm:$0xff]
    %v7109 = vld [vmem:[%s7 + $0x110] sm:$0xff]
    %v7110 = vld [vmem:[%s7 + $0x118] sm:$0xff]
    %v7111 = vld [vmem:[%s7 + $0x120] sm:$0xff]
    %v7112 = vld [vmem:[%s7 + $0x128] sm:$0xff]
    %v7113 = vld [vmem:[%s7 + $0x130] sm:$0xff]
    %v7114 = vld [vmem:[%s7 + $0x138] sm:$0xff]
    %v7115 = vld [vmem:[%s7 + $0x140] sm:$0xff]
    %v7116 = vld [vmem:[%s7 + $0x148] sm:$0xff]
    %v7117 = vld [vmem:[%s7 + $0x150] sm:$0xff]
    %v7118 = vld [vmem:[%s7 + $0x158] sm:$0xff]
    %v7119 = vld [vmem:[%s7 + $0x160] sm:$0xff]
    %v7120 = vld [vmem:[%s7 + $0x168] sm:$0xff]
    %v7121 = vld [vmem:[%s7 + $0x170] sm:$0xff]
    %v7122 = vld [vmem:[%s7 + $0x178] sm:$0xff]
    %v7123 = vld [vmem:[%s7 + $0x180] sm:$0xff]
    %v7124 = vld [vmem:[%s7 + $0x188] sm:$0xff]
    %v7125 = vld [vmem:[%s7 + $0x190] sm:$0xff]
    %v7126 = vld [vmem:[%s7 + $0x198] sm:$0xff]
    %v7127 = vld [vmem:[%s7 + $0x1a0] sm:$0xff]
    %v7128 = vld [vmem:[%s7 + $0x1a8] sm:$0xff]
    %v7129 = vld [vmem:[%s7 + $0x1b0] sm:$0xff]
    %v7130 = vld [vmem:[%s7 + $0x1b8] sm:$0xff]
    %v7131 = vld [vmem:[%s7 + $0x1c0] sm:$0xff]
    %v7132 = vld [vmem:[%s7 + $0x1c8] sm:$0xff]
    %v7133 = vld [vmem:[%s7 + $0x1d0] sm:$0xff]
    %v7134 = vld [vmem:[%s7 + $0x1d8] sm:$0xff]
    %v7135 = vld [vmem:[%s7 + $0x1e0] sm:$0xff]
    %v7136 = vld [vmem:[%s7 + $0x1e8] sm:$0xff]
    %v7137 = vld [vmem:[%s7 + $0x1f0] sm:$0xff]
    %v7138 = vld [vmem:[%s7 + $0x1f8] sm:$0xff]
    %v7139 = vld [vmem:[#allocation15] sm:$0x1]
    %v7141 = vlaneseq
    %v7142 = vshrl.u32 %v7141, 7
    %v7143 = vsub.s32 0, %v7142
    %v7144 = vrot.slane %v7139, %v7143
    %vm7154 = vcmask 1041409
    %v7155 = vsel %vm7154, %v7053, %v7025
    %v7156 = vsel %vm7154, %v7060, %v7032
    %v7157 = vsel %vm7154, %v7067, %v7039
    %v7158 = vsel %vm7154, %v7074, %v7046
    %7163 = vmatprep.subr.mxu0 0.0
    %7164 = vmatpush1.msra.mxu0 %v7075
    %7165 = vmatprep.subr.mxu0 0.0
    %7166 = vmatpush1.msra.mxu0 %v7076
    %7167 = vmatprep.subr.mxu0 0.0
    %7168 = vmatpush1.msra.mxu0 %v7077
    %7169 = vmatprep.subr.mxu0 0.0
    %7170 = vmatpush1.msra.mxu0 %v7078
    %7171 = vmatprep.subr.mxu0 0.0
    %7172 = vmatpush1.msra.mxu0 %v7079
    %7173 = vmatprep.subr.mxu0 0.0
    %7174 = vmatpush1.msra.mxu0 %v7080
    %7175 = vmatprep.subr.mxu0 0.0
    %7176 = vmatpush1.msra.mxu0 %v7081
    %7177 = vmatprep.subr.mxu0 0.0
    %7178 = vmatpush1.msra.mxu0 %v7082
    %7179 = vmatprep.subr.mxu0 0.0
    %7180 = vmatpush1.msra.mxu0 %v7083
    %7181 = vmatprep.subr.mxu0 0.0
    %7182 = vmatpush1.msra.mxu0 %v7084
    %7183 = vmatprep.subr.mxu0 0.0
    %7184 = vmatpush1.msra.mxu0 %v7085
    %7185 = vmatprep.subr.mxu0 0.0
    %7186 = vmatpush1.msra.mxu0 %v7086
    %7187 = vmatprep.subr.mxu0 0.0
    %7188 = vmatpush1.msra.mxu0 %v7087
    %7189 = vmatprep.subr.mxu0 0.0
    %7190 = vmatpush1.msra.mxu0 %v7088
    %7191 = vmatprep.subr.mxu0 0.0
    %7192 = vmatpush1.msra.mxu0 %v7089
    %7193 = vmatprep.subr.mxu0 0.0
    %7194 = vmatpush1.msra.mxu0 %v7090
    %7195 = vmatprep.subr.mxu0 0.0
    %7196 = vmatpush1.msra.mxu0 %v7091
    %7197 = vmatprep.subr.mxu0 0.0
    %7198 = vmatpush1.msra.mxu0 %v7092
    %7199 = vmatprep.subr.mxu0 0.0
    %7200 = vmatpush1.msra.mxu0 %v7093
    %7201 = vmatprep.subr.mxu0 0.0
    %7202 = vmatpush1.msra.mxu0 %v7094
    %7203 = vmatprep.subr.mxu0 0.0
    %7204 = vmatpush1.msra.mxu0 %v7095
    %7205 = vmatprep.subr.mxu0 0.0
    %7206 = vmatpush1.msra.mxu0 %v7096
    %7207 = vmatprep.subr.mxu0 0.0
    %7208 = vmatpush1.msra.mxu0 %v7097
    %7209 = vmatprep.subr.mxu0 0.0
    %7210 = vmatpush1.msra.mxu0 %v7098
    %7211 = vmatprep.subr.mxu0 0.0
    %7212 = vmatpush1.msra.mxu0 %v7099
    %7213 = vmatprep.subr.mxu0 0.0
    %7214 = vmatpush1.msra.mxu0 %v7100
    %7215 = vmatprep.subr.mxu0 0.0
    %7216 = vmatpush1.msra.mxu0 %v7101
    %7217 = vmatprep.subr.mxu0 0.0
    %7218 = vmatpush1.msra.mxu0 %v7102
    %7219 = vmatprep.subr.mxu0 0.0
    %7220 = vmatpush1.msra.mxu0 %v7103
    %7221 = vmatprep.subr.mxu0 0.0
    %7222 = vmatpush1.msra.mxu0 %v7104
    %7223 = vmatprep.subr.mxu0 0.0
    %7224 = vmatpush1.msra.mxu0 %v7105
    %7225 = vmatprep.subr.mxu0 0.0
    %7226 = vmatpush1.msra.mxu0 %v7106
    %7227 = vmatprep.mubr.f32.mxu0 %v7156
    %7228 = vmatmul.mubr.f32.gmra.mrb[0].mxu0 %v7155
    %v7229 = vpop.f32.mrb[0].mxu0
    %v7230 = vadd.f32 %v7144, %v7229
    %v7231 = vpop.f32.mrb[0].mxu0
    %7232 = vdwg.mxu0
    %7233 = vmatprep.subr.mxu0 0.0
    %7234 = vmatpush1.msra.mxu0 %v7107
    %7235 = vmatprep.subr.mxu0 0.0
    %7236 = vmatpush1.msra.mxu0 %v7108
    %7237 = vmatprep.subr.mxu0 0.0
    %7238 = vmatpush1.msra.mxu0 %v7109
    %7239 = vmatprep.subr.mxu0 0.0
    %7240 = vmatpush1.msra.mxu0 %v7110
    %7241 = vmatprep.subr.mxu0 0.0
    %7242 = vmatpush1.msra.mxu0 %v7111
    %7243 = vmatprep.subr.mxu0 0.0
    %7244 = vmatpush1.msra.mxu0 %v7112
    %7245 = vmatprep.subr.mxu0 0.0
    %7246 = vmatpush1.msra.mxu0 %v7113
    %7247 = vmatprep.subr.mxu0 0.0
    %7248 = vmatpush1.msra.mxu0 %v7114
    %7249 = vmatprep.subr.mxu0 0.0
    %7250 = vmatpush1.msra.mxu0 %v7115
    %7251 = vmatprep.subr.mxu0 0.0
    %7252 = vmatpush1.msra.mxu0 %v7116
    %7253 = vmatprep.subr.mxu0 0.0
    %7254 = vmatpush1.msra.mxu0 %v7117
    %7255 = vmatprep.subr.mxu0 0.0
    %7256 = vmatpush1.msra.mxu0 %v7118
    %7257 = vmatprep.subr.mxu0 0.0
    %7258 = vmatpush1.msra.mxu0 %v7119
    %7259 = vmatprep.subr.mxu0 0.0
    %7260 = vmatpush1.msra.mxu0 %v7120
    %7261 = vmatprep.subr.mxu0 0.0
    %7262 = vmatpush1.msra.mxu0 %v7121
    %7263 = vmatprep.subr.mxu0 0.0
    %7264 = vmatpush1.msra.mxu0 %v7122
    %7265 = vmatprep.subr.mxu0 0.0
    %7266 = vmatpush1.msra.mxu0 %v7123
    %7267 = vmatprep.subr.mxu0 0.0
    %7268 = vmatpush1.msra.mxu0 %v7124
    %7269 = vmatprep.subr.mxu0 0.0
    %7270 = vmatpush1.msra.mxu0 %v7125
    %7271 = vmatprep.subr.mxu0 0.0
    %7272 = vmatpush1.msra.mxu0 %v7126
    %7273 = vmatprep.subr.mxu0 0.0
    %7274 = vmatpush1.msra.mxu0 %v7127
    %7275 = vmatprep.subr.mxu0 0.0
    %7276 = vmatpush1.msra.mxu0 %v7128
    %7277 = vmatprep.subr.mxu0 0.0
    %7278 = vmatpush1.msra.mxu0 %v7129
    %7279 = vmatprep.subr.mxu0 0.0
    %7280 = vmatpush1.msra.mxu0 %v7130
    %7281 = vmatprep.subr.mxu0 0.0
    %7282 = vmatpush1.msra.mxu0 %v7131
    %7283 = vmatprep.subr.mxu0 0.0
    %7284 = vmatpush1.msra.mxu0 %v7132
    %7285 = vmatprep.subr.mxu0 0.0
    %7286 = vmatpush1.msra.mxu0 %v7133
    %7287 = vmatprep.subr.mxu0 0.0
    %7288 = vmatpush1.msra.mxu0 %v7134
    %7289 = vmatprep.subr.mxu0 0.0
    %7290 = vmatpush1.msra.mxu0 %v7135
    %7291 = vmatprep.subr.mxu0 0.0
    %7292 = vmatpush1.msra.mxu0 %v7136
    %7293 = vmatprep.subr.mxu0 0.0
    %7294 = vmatpush1.msra.mxu0 %v7137
    %7295 = vmatprep.subr.mxu0 0.0
    %7296 = vmatpush1.msra.mxu0 %v7138
    %7297 = vmatprep.mubr.f32.mxu0 %v7158
    %7298 = vmatmul.mubr.f32.gmra.mrb[0].mxu0 %v7157
    %v7299 = vpop.f32.mrb[0].mxu0
    %v7300 = vadd.f32 %v7230, %v7299
    %v7301 = vpop.f32.mrb[0].mxu0
    %7302 = vdwg.mxu0
    %v7303 = vmax.f32 %v7300, 0.0
    %v7304 = vld [vmem:[#allocation17] sm:$0xff]
    %v7306 = vcombine.high %v7304, %v7304
    %v7308 = vunpack.c.l.s4 1983009808
    %v7309 = vunpack.c.0.s8 %v7308
    %v7310 = vlaneseq
    %v7311 = vshrl.u32 %v7310, 7
    %v7312 = vsub.s32 %v7309, %v7311
    %v7313 = vrot.slane %v7304, %v7312
    %v7315 = vunpack.c.l.s4 1983009808
    %v7316 = vunpack.c.0.s8 %v7315
    %v7317 = vlaneseq
    %v7318 = vshrl.u32 %v7317, 7
    %v7319 = vsub.s32 %v7316, %v7318
    %v7320 = vrot.slane %v7306, %v7319
    %v7321 = vcombine.high %v7313, %v7313
    %v7322 = vcombine.high %v7320, %v7320
    %vm7323 = vcmask 15360
    %v7325 = vsel %vm7323, %v7303, 0
    %vm7327 = vcmask 1041408
    %v7328 = vsel %vm7327, %v7313, 0
    %v7330 = vsel %vm7327, %v7321, 0
    %v7332 = vsel %vm7327, %v7320, 0
    %v7334 = vsel %vm7327, %v7322, 0
    %7336 = vmatprep.subr.mxu0 %v7330
    %7337 = vmatpush1.msra.mxu0 %v7328
    %7338 = vmatprep.subr.mxu0 0.0
    %7339 = vmatpush1.msra.mxu0 0.0
    %7340 = vmatprep.subr.mxu0 0.0
    %7341 = vmatpush1.msra.mxu0 0.0
    %7342 = vmatprep.subr.mxu0 0.0
    %7343 = vmatpush1.msra.mxu0 0.0
    %7344 = vmatprep.subr.mxu0 0.0
    %7345 = vmatpush1.msra.mxu0 0.0
    %7346 = vmatprep.subr.mxu0 0.0
    %7347 = vmatpush1.msra.mxu0 0.0
    %7348 = vmatprep.subr.mxu0 0.0
    %7349 = vmatpush1.msra.mxu0 0.0
    %7350 = vmatprep.subr.mxu0 0.0
    %7351 = vmatpush1.msra.mxu0 0.0
    %7352 = vmatprep.subr.mxu0 0.0
    %7353 = vmatpush1.msra.mxu0 0.0
    %7354 = vmatprep.subr.mxu0 0.0
    %7355 = vmatpush1.msra.mxu0 0.0
    %7356 = vmatprep.subr.mxu0 0.0
    %7357 = vmatpush1.msra.mxu0 0.0
    %7358 = vmatprep.subr.mxu0 0.0
    %7359 = vmatpush1.msra.mxu0 0.0
    %7360 = vmatprep.subr.mxu0 0.0
    %7361 = vmatpush1.msra.mxu0 0.0
    %7362 = vmatprep.subr.mxu0 0.0
    %7363 = vmatpush1.msra.mxu0 0.0
    %7364 = vmatprep.subr.mxu0 0.0
    %7365 = vmatpush1.msra.mxu0 0.0
    %7366 = vmatprep.subr.mxu0 0.0
    %7367 = vmatpush1.msra.mxu0 0.0
    %7368 = vmatprep.subr.mxu0 0.0
    %7369 = vmatpush1.msra.mxu0 0.0
    %7370 = vmatprep.subr.mxu0 0.0
    %7371 = vmatpush1.msra.mxu0 0.0
    %7372 = vmatprep.subr.mxu0 0.0
    %7373 = vmatpush1.msra.mxu0 0.0
    %7374 = vmatprep.subr.mxu0 0.0
    %7375 = vmatpush1.msra.mxu0 0.0
    %7376 = vmatprep.subr.mxu0 0.0
    %7377 = vmatpush1.msra.mxu0 0.0
    %7378 = vmatprep.subr.mxu0 0.0
    %7379 = vmatpush1.msra.mxu0 0.0
    %7380 = vmatprep.subr.mxu0 0.0
    %7381 = vmatpush1.msra.mxu0 0.0
    %7382 = vmatprep.subr.mxu0 0.0
    %7383 = vmatpush1.msra.mxu0 0.0
    %7384 = vmatprep.subr.mxu0 0.0
    %7385 = vmatpush1.msra.mxu0 0.0
    %7386 = vmatprep.subr.mxu0 0.0
    %7387 = vmatpush1.msra.mxu0 0.0
    %7388 = vmatprep.subr.mxu0 0.0
    %7389 = vmatpush1.msra.mxu0 0.0
    %7390 = vmatprep.subr.mxu0 0.0
    %7391 = vmatpush1.msra.mxu0 0.0
    %7392 = vmatprep.subr.mxu0 0.0
    %7393 = vmatpush1.msra.mxu0 0.0
    %7394 = vmatprep.subr.mxu0 0.0
    %7395 = vmatpush1.msra.mxu0 0.0
    %7396 = vmatprep.subr.mxu0 0.0
    %7397 = vmatpush1.msra.mxu0 0.0
    %7398 = vmatprep.subr.mxu0 0.0
    %7399 = vmatpush1.msra.mxu0 0.0
    %7400 = vmatprep.mubr.f32.mxu0 0.0
    %7401 = vmatmul.mubr.f32.gmra.mrb[0].mxu0 %v7325
    %v7402 = vpop.f32.mrb[0].mxu0
    %v7403 = vadd.f32 0.0, %v7402
    %v7404 = vpop.f32.mrb[0].mxu0
    %v7405 = vadd.f32 0.0, %v7404
    %7406 = vdwg.mxu0
    %7407 = vmatprep.subr.mxu0 %v7334
    %7408 = vmatpush1.msra.mxu0 %v7332
    %7409 = vmatprep.subr.mxu0 0.0
    %7410 = vmatpush1.msra.mxu0 0.0
    %7411 = vmatprep.subr.mxu0 0.0
    %7412 = vmatpush1.msra.mxu0 0.0
    %7413 = vmatprep.subr.mxu0 0.0
    %7414 = vmatpush1.msra.mxu0 0.0
    %7415 = vmatprep.subr.mxu0 0.0
    %7416 = vmatpush1.msra.mxu0 0.0
    %7417 = vmatprep.subr.mxu0 0.0
    %7418 = vmatpush1.msra.mxu0 0.0
    %7419 = vmatprep.subr.mxu0 0.0
    %7420 = vmatpush1.msra.mxu0 0.0
    %7421 = vmatprep.subr.mxu0 0.0
    %7422 = vmatpush1.msra.mxu0 0.0
    %7423 = vmatprep.subr.mxu0 0.0
    %7424 = vmatpush1.msra.mxu0 0.0
    %7425 = vmatprep.subr.mxu0 0.0
    %7426 = vmatpush1.msra.mxu0 0.0
    %7427 = vmatprep.subr.mxu0 0.0
    %7428 = vmatpush1.msra.mxu0 0.0
    %7429 = vmatprep.subr.mxu0 0.0
    %7430 = vmatpush1.msra.mxu0 0.0
    %7431 = vmatprep.subr.mxu0 0.0
    %7432 = vmatpush1.msra.mxu0 0.0
    %7433 = vmatprep.subr.mxu0 0.0
    %7434 = vmatpush1.msra.mxu0 0.0
    %7435 = vmatprep.subr.mxu0 0.0
    %7436 = vmatpush1.msra.mxu0 0.0
    %7437 = vmatprep.subr.mxu0 0.0
    %7438 = vmatpush1.msra.mxu0 0.0
    %7439 = vmatprep.subr.mxu0 0.0
    %7440 = vmatpush1.msra.mxu0 0.0
    %7441 = vmatprep.subr.mxu0 0.0
    %7442 = vmatpush1.msra.mxu0 0.0
    %7443 = vmatprep.subr.mxu0 0.0
    %7444 = vmatpush1.msra.mxu0 0.0
    %7445 = vmatprep.subr.mxu0 0.0
    %7446 = vmatpush1.msra.mxu0 0.0
    %7447 = vmatprep.subr.mxu0 0.0
    %7448 = vmatpush1.msra.mxu0 0.0
    %7449 = vmatprep.subr.mxu0 0.0
    %7450 = vmatpush1.msra.mxu0 0.0
    %7451 = vmatprep.subr.mxu0 0.0
    %7452 = vmatpush1.msra.mxu0 0.0
    %7453 = vmatprep.subr.mxu0 0.0
    %7454 = vmatpush1.msra.mxu0 0.0
    %7455 = vmatprep.subr.mxu0 0.0
    %7456 = vmatpush1.msra.mxu0 0.0
    %7457 = vmatprep.subr.mxu0 0.0
    %7458 = vmatpush1.msra.mxu0 0.0
    %7459 = vmatprep.subr.mxu0 0.0
    %7460 = vmatpush1.msra.mxu0 0.0
    %7461 = vmatprep.subr.mxu0 0.0
    %7462 = vmatpush1.msra.mxu0 0.0
    %7463 = vmatprep.subr.mxu0 0.0
    %7464 = vmatpush1.msra.mxu0 0.0
    %7465 = vmatprep.subr.mxu0 0.0
    %7466 = vmatpush1.msra.mxu0 0.0
    %7467 = vmatprep.subr.mxu0 0.0
    %7468 = vmatpush1.msra.mxu0 0.0
    %7469 = vmatprep.subr.mxu0 0.0
    %7470 = vmatpush1.msra.mxu0 0.0
    %7471 = vmatprep.mubr.f32.mxu0 0.0
    %7472 = vmatmul.mubr.f32.gmra.mrb[0].mxu0 %v7325
    %v7473 = vpop.f32.mrb[0].mxu0
    %v7474 = vadd.f32 0.0, %v7473
    %v7475 = vpop.f32.mrb[0].mxu0
    %v7476 = vadd.f32 0.0, %v7475
    %7477 = vdwg.mxu0
    %v7478 = vxor.u32 %v7403, 2147483648
    %v7479 = vxor.u32 %v7405, 2147483648
    %v7480 = vxor.u32 %v7474, 2147483648
    %v7481 = vxor.u32 %v7476, 2147483648
    %v7482 = vmul.f32 %v7478, 1.442695
    %v7483 = vpow.pop %v7482
    %v7484 = vmul.f32 %v7479, 1.442695
    %v7485 = vpow.pop %v7484
    %v7486 = vmul.f32 %v7480, 1.442695
    %v7487 = vpow.pop %v7486
    %v7488 = vmul.f32 %v7481, 1.442695
    %v7489 = vpow.pop %v7488
    %v7490 = vadd.f32 %v7483, 1.0
    %v7491 = vadd.f32 %v7485, 1.0
    %v7492 = vadd.f32 %v7487, 1.0
    %v7493 = vadd.f32 %v7489, 1.0
    %v7494 = vrcp.pop %v7490
    %v7495 = vmul.f32 1.0, %v7494
    %v7496 = vrcp.pop %v7491
    %v7497 = vmul.f32 1.0, %v7496
    %v7498 = vrcp.pop %v7492
    %v7499 = vmul.f32 1.0, %v7498
    %v7500 = vrcp.pop %v7493
    %v7501 = vmul.f32 1.0, %v7500
    %v7502 = vld [vmem:[#allocation12] sm:$0xf]
    %v7504 = vlaneseq
    %v7505 = vshrl.u32 %v7504, 7
    %v7506 = vsub.s32 0, %v7505
    %v7507 = vrot.slane %v7502, %v7506
    %v7508 = vlaneseq
    %v7509 = vshrl.u32 %v7508, 7
    %v7510 = vsub.s32 1, %v7509
    %v7511 = vrot.slane %v7502, %v7510
    %v7512 = vlaneseq
    %v7513 = vshrl.u32 %v7512, 7
    %v7514 = vsub.s32 2, %v7513
    %v7515 = vrot.slane %v7502, %v7514
    %v7516 = vlaneseq
    %v7517 = vshrl.u32 %v7516, 7
    %v7518 = vsub.s32 3, %v7517
    %v7519 = vrot.slane %v7502, %v7518
    %v7524 = vmul.f32 %v7507, %v7495
    %v7525 = vmul.f32 %v7511, %v7497
    %v7526 = vmul.f32 %v7515, %v7499
    %v7527 = vmul.f32 %v7519, %v7501
    %v7532 = vcombine.low %v7524, %v7525
    %v7533 = vcombine.low %v7526, %v7527
    %v7535 = vunpack.c.l.s4 1966171168
    %v7536 = vunpack.c.0.s8 %v7535
    %v7537 = vlaneseq
    %v7538 = vshrl.u32 %v7537, 7
    %v7539 = vsub.s32 %v7536, %v7538
    %v7540 = vrot.slane %v7532, %v7539
    %v7542 = vunpack.c.l.s4 1966171168
    %v7543 = vunpack.c.0.s8 %v7542
    %v7544 = vlaneseq
    %v7545 = vshrl.u32 %v7544, 7
    %v7546 = vsub.s32 %v7543, %v7545
    %v7547 = vrot.slane %v7533, %v7546
    %v7548 = vcombine.low %v7540, %v7547
    %v7549 = vcombine.high %v7540, %v7547
    %v7551 = vunpack.c.l.s4 1966171168
    %v7552 = vunpack.c.0.s8 %v7551
    %v7553 = vlaneseq
    %v7554 = vshrl.u32 %v7553, 7
    %v7555 = vsub.s32 %v7552, %v7554
    %v7556 = vrot.slane %v7548, %v7555
    %v7558 = vunpack.c.l.s4 1966171168
    %v7559 = vunpack.c.0.s8 %v7558
    %v7560 = vlaneseq
    %v7561 = vshrl.u32 %v7560, 7
    %v7562 = vsub.s32 %v7559, %v7561
    %v7563 = vrot.slane %v7549, %v7562
    %v7564 = vld [vmem:[#allocation14] sm:$0xf]
    %v7566 = vlaneseq
    %v7567 = vshrl.u32 %v7566, 7
    %v7568 = vsub.s32 0, %v7567
    %v7569 = vrot.slane %v7564, %v7568
    %v7570 = vlaneseq
    %v7571 = vshrl.u32 %v7570, 7
    %v7572 = vsub.s32 1, %v7571
    %v7573 = vrot.slane %v7564, %v7572
    %v7574 = vlaneseq
    %v7575 = vshrl.u32 %v7574, 7
    %v7576 = vsub.s32 2, %v7575
    %v7577 = vrot.slane %v7564, %v7576
    %v7578 = vlaneseq
    %v7579 = vshrl.u32 %v7578, 7
    %v7580 = vsub.s32 3, %v7579
    %v7581 = vrot.slane %v7564, %v7580
    %v7586 = vmul.f32 %v7569, %v7495
    %v7587 = vmul.f32 %v7573, %v7497
    %v7588 = vmul.f32 %v7577, %v7499
    %v7589 = vmul.f32 %v7581, %v7501
    %v7594 = vcombine.low %v7586, %v7587
    %v7595 = vcombine.low %v7588, %v7589
    %v7597 = vunpack.c.l.s4 1966171168
    %v7598 = vunpack.c.0.s8 %v7597
    %v7599 = vlaneseq
    %v7600 = vshrl.u32 %v7599, 7
    %v7601 = vsub.s32 %v7598, %v7600
    %v7602 = vrot.slane %v7594, %v7601
    %v7604 = vunpack.c.l.s4 1966171168
    %v7605 = vunpack.c.0.s8 %v7604
    %v7606 = vlaneseq
    %v7607 = vshrl.u32 %v7606, 7
    %v7608 = vsub.s32 %v7605, %v7607
    %v7609 = vrot.slane %v7595, %v7608
    %v7610 = vcombine.low %v7602, %v7609
    %v7611 = vcombine.high %v7602, %v7609
    %v7613 = vunpack.c.l.s4 1966171168
    %v7614 = vunpack.c.0.s8 %v7613
    %v7615 = vlaneseq
    %v7616 = vshrl.u32 %v7615, 7
    %v7617 = vsub.s32 %v7614, %v7616
    %v7618 = vrot.slane %v7610, %v7617
    %v7620 = vunpack.c.l.s4 1966171168
    %v7621 = vunpack.c.0.s8 %v7620
    %v7622 = vlaneseq
    %v7623 = vshrl.u32 %v7622, 7
    %v7624 = vsub.s32 %v7621, %v7623
    %v7625 = vrot.slane %v7611, %v7624
    %v7626 = vlaneseq
    %v7627 = vshrl.u32 %v7626, 7
    %v7628 = vsub.s32 0, %v7627
    %v7629 = vrot.slane %v7556, %v7628
    %v7630 = vlaneseq
    %v7631 = vshrl.u32 %v7630, 7
    %v7632 = vsub.s32 1, %v7631
    %v7633 = vrot.slane %v7556, %v7632
    %v7634 = vlaneseq
    %v7635 = vshrl.u32 %v7634, 7
    %v7636 = vsub.s32 2, %v7635
    %v7637 = vrot.slane %v7556, %v7636
    %v7638 = vlaneseq
    %v7639 = vshrl.u32 %v7638, 7
    %v7640 = vsub.s32 3, %v7639
    %v7641 = vrot.slane %v7556, %v7640
    %v7642 = vlaneseq
    %v7643 = vshrl.u32 %v7642, 7
    %v7644 = vsub.s32 0, %v7643
    %v7645 = vrot.slane %v7563, %v7644
    %v7646 = vlaneseq
    %v7647 = vshrl.u32 %v7646, 7
    %v7648 = vsub.s32 1, %v7647
    %v7649 = vrot.slane %v7563, %v7648
    %v7650 = vlaneseq
    %v7651 = vshrl.u32 %v7650, 7
    %v7652 = vsub.s32 2, %v7651
    %v7653 = vrot.slane %v7563, %v7652
    %v7654 = vlaneseq
    %v7655 = vshrl.u32 %v7654, 7
    %v7656 = vsub.s32 3, %v7655
    %v7657 = vrot.slane %v7563, %v7656
    %v7666 = vmul.f32 %v7003, %v7629
    %v7667 = vmul.f32 %v7004, %v7633
    %v7668 = vmul.f32 %v7005, %v7637
    %v7669 = vmul.f32 %v7006, %v7641
    %v7670 = vmul.f32 %v7007, %v7629
    %v7671 = vmul.f32 %v7008, %v7633
    %v7672 = vmul.f32 %v7009, %v7637
    %v7673 = vmul.f32 %v7010, %v7641
    %v7674 = vmul.f32 %v7011, %v7645
    %v7675 = vmul.f32 %v7012, %v7649
    %v7676 = vmul.f32 %v7013, %v7653
    %v7677 = vmul.f32 %v7014, %v7657
    %v7678 = vmul.f32 %v7015, %v7645
    %v7679 = vmul.f32 %v7016, %v7649
    %v7680 = vmul.f32 %v7017, %v7653
    %v7681 = vmul.f32 %v7018, %v7657
    %v7682 = vlaneseq
    %v7683 = vshrl.u32 %v7682, 7
    %v7684 = vsub.s32 0, %v7683
    %v7685 = vrot.slane %v7618, %v7684
    %v7686 = vlaneseq
    %v7687 = vshrl.u32 %v7686, 7
    %v7688 = vsub.s32 1, %v7687
    %v7689 = vrot.slane %v7618, %v7688
    %v7690 = vlaneseq
    %v7691 = vshrl.u32 %v7690, 7
    %v7692 = vsub.s32 2, %v7691
    %v7693 = vrot.slane %v7618, %v7692
    %v7694 = vlaneseq
    %v7695 = vshrl.u32 %v7694, 7
    %v7696 = vsub.s32 3, %v7695
    %v7697 = vrot.slane %v7618, %v7696
    %v7698 = vlaneseq
    %v7699 = vshrl.u32 %v7698, 7
    %v7700 = vsub.s32 0, %v7699
    %v7701 = vrot.slane %v7625, %v7700
    %v7702 = vlaneseq
    %v7703 = vshrl.u32 %v7702, 7
    %v7704 = vsub.s32 1, %v7703
    %v7705 = vrot.slane %v7625, %v7704
    %v7706 = vlaneseq
    %v7707 = vshrl.u32 %v7706, 7
    %v7708 = vsub.s32 2, %v7707
    %v7709 = vrot.slane %v7625, %v7708
    %v7710 = vlaneseq
    %v7711 = vshrl.u32 %v7710, 7
    %v7712 = vsub.s32 3, %v7711
    %v7713 = vrot.slane %v7625, %v7712
    %v7722 = vadd.f32 %v7666, %v7685
    %v7723 = vadd.f32 %v7667, %v7689
    %v7724 = vadd.f32 %v7668, %v7693
    %v7725 = vadd.f32 %v7669, %v7697
    %v7726 = vadd.f32 %v7670, %v7685
    %v7727 = vadd.f32 %v7671, %v7689
    %v7728 = vadd.f32 %v7672, %v7693
    %v7729 = vadd.f32 %v7673, %v7697
    %v7730 = vadd.f32 %v7674, %v7701
    %v7731 = vadd.f32 %v7675, %v7705
    %v7732 = vadd.f32 %v7676, %v7709
    %v7733 = vadd.f32 %v7677, %v7713
    %v7734 = vadd.f32 %v7678, %v7701
    %v7735 = vadd.f32 %v7679, %v7705
    %v7736 = vadd.f32 %v7680, %v7709
    %v7737 = vadd.f32 %v7681, %v7713
    %v7738 = vld [vmem:[#allocation3] sm:$0xff]
    %v7739 = vld [vmem:[#allocation3 + $0x8] sm:$0xff]
    %v7740 = vld [vmem:[#allocation3 + $0x10] sm:$0xff]
    %v7741 = vld [vmem:[#allocation3 + $0x18] sm:$0xff]
    %v7742 = vld [vmem:[#allocation3 + $0x20] sm:$0xff]
    %v7743 = vld [vmem:[#allocation3 + $0x28] sm:$0xff]
    %v7744 = vld [vmem:[#allocation3 + $0x30] sm:$0xff]
    %v7745 = vld [vmem:[#allocation3 + $0x38] sm:$0xff]
    %v7746 = vld [vmem:[#allocation3 + $0x40] sm:$0xff]
    %v7747 = vld [vmem:[#allocation3 + $0x48] sm:$0xff]
    %v7748 = vld [vmem:[#allocation3 + $0x50] sm:$0xff]
    %v7749 = vld [vmem:[#allocation3 + $0x58] sm:$0xff]
    %v7750 = vld [vmem:[#allocation3 + $0x60] sm:$0xff]
    %v7751 = vld [vmem:[#allocation3 + $0x68] sm:$0xff]
    %v7752 = vld [vmem:[#allocation3 + $0x70] sm:$0xff]
    %v7753 = vld [vmem:[#allocation3 + $0x78] sm:$0xff]
    %v7754 = vadd.f32 %v7722, %v7738
    %v7755 = vadd.f32 %v7723, %v7739
    %v7756 = vadd.f32 %v7724, %v7740
    %v7757 = vadd.f32 %v7725, %v7741
    %v7758 = vadd.f32 %v7726, %v7742
    %v7759 = vadd.f32 %v7727, %v7743
    %v7760 = vadd.f32 %v7728, %v7744
    %v7761 = vadd.f32 %v7729, %v7745
    %v7762 = vadd.f32 %v7730, %v7746
    %v7763 = vadd.f32 %v7731, %v7747
    %v7764 = vadd.f32 %v7732, %v7748
    %v7765 = vadd.f32 %v7733, %v7749
    %v7766 = vadd.f32 %v7734, %v7750
    %v7767 = vadd.f32 %v7735, %v7751
    %v7768 = vadd.f32 %v7736, %v7752
    %v7769 = vadd.f32 %v7737, %v7753
    %v7770 = vmax.f32 %v7754, 0.0
    %v7771 = vmax.f32 %v7755, 0.0
    %v7772 = vmax.f32 %v7756, 0.0
    %v7773 = vmax.f32 %v7757, 0.0
    %v7774 = vmax.f32 %v7758, 0.0
    %v7775 = vmax.f32 %v7759, 0.0
    %v7776 = vmax.f32 %v7760, 0.0
    %v7777 = vmax.f32 %v7761, 0.0
    %v7778 = vmax.f32 %v7762, 0.0
    %v7779 = vmax.f32 %v7763, 0.0
    %v7780 = vmax.f32 %v7764, 0.0
    %v7781 = vmax.f32 %v7765, 0.0
    %v7782 = vmax.f32 %v7766, 0.0
    %v7783 = vmax.f32 %v7767, 0.0
    %v7784 = vmax.f32 %v7768, 0.0
    %v7785 = vmax.f32 %v7769, 0.0
    %7786 = vst [vmem:[#allocation18] sm:$0xff] %v7770
    %7787 = vst [vmem:[#allocation18 + $0x8] sm:$0xff] %v7771
    %7788 = vst [vmem:[#allocation18 + $0x10] sm:$0xff] %v7772
    %7789 = vst [vmem:[#allocation18 + $0x18] sm:$0xff] %v7773
    %7790 = vst [vmem:[#allocation18 + $0x20] sm:$0xff] %v7774
    %7791 = vst [vmem:[#allocation18 + $0x28] sm:$0xff] %v7775
    %7792 = vst [vmem:[#allocation18 + $0x30] sm:$0xff] %v7776
    %7793 = vst [vmem:[#allocation18 + $0x38] sm:$0xff] %v7777
    %7794 = vst [vmem:[#allocation18 + $0x40] sm:$0xff] %v7778
    %7795 = vst [vmem:[#allocation18 + $0x48] sm:$0xff] %v7779
    %7796 = vst [vmem:[#allocation18 + $0x50] sm:$0xff] %v7780
    %7797 = vst [vmem:[#allocation18 + $0x58] sm:$0xff] %v7781
    %7798 = vst [vmem:[#allocation18 + $0x60] sm:$0xff] %v7782
    %7799 = vst [vmem:[#allocation18 + $0x68] sm:$0xff] %v7783
    %7800 = vst [vmem:[#allocation18 + $0x70] sm:$0xff] %v7784
    %7801 = vst [vmem:[#allocation18 + $0x78] sm:$0xff] %v7785
    // Predicated region
    $region78: #{tpu_custom_call.1} parent=1 // pred_check
      _
    $region79: #{tpu_custom_call.1} parent=1 // pred_check_branch
      %7803 = sbr.rel (0) target = $region81
    $region80: #{tpu_custom_call.1} parent=1 // pred_region
      %s7805 = ssub.s32 2048, 2048
      %7806 = vsyncadd [#allocation5], %s7805
      %s7807 = sshll.u32 [#allocation18], 4
      %s7808 = int_to_ptr.vmem [resolvable:$true] %s7807
      %7813 = dma.vmem_to_hbm [thread:$0]  %s7808, 2048, %s10, [#allocation5], 512, 512, 32
    $region81: #{tpu_custom_call.1} parent=1 // pred_fallthru
      _
    // Predicated region
    $region82: #{tpu_custom_call.1} parent=1 // pred_check
      _
    $region83: #{tpu_custom_call.1} parent=1 // pred_check_branch
      %7815 = sbr.rel (0) target = $region85
    $region84: #{tpu_custom_call.1} parent=1 // pred_region
      %7816 = dma.done [#allocation5], 2048
    $region85: #{tpu_custom_call.1} parent=1 // pred_fallthru
      _
    %7817 = vsyncpa [#allocation4], 1
    %7818 = vsyncpa [#allocation7], 1
    %7819 = vsyncpa [#allocation10], 1
    %7820 = vsyncpa [#allocation13], 1
    %7821 = vsyncpa [#allocation16], 1
    %7822 = vsyncpa [#allocation5], 1

</llo_original>
